<compile_context>
chip_gen: v7x
topology: tpu7x:2x2x1
jax: 0.10.0
libtpu: 0.0.40
codegen_flags: <defaults>
</compile_context>

<pallas_src>
import functools

import jax
import jax.numpy as jnp
from jax.experimental import pallas as pl
from jax.experimental.pallas import tpu as pltpu

_XL = 8  # sublane-aligned left offset of the scratch interior (>= 1)


def _round_up(v, m):
    return -(-v // m) * m


def _padded_vmem_bytes(shape, dtype):
    """Rough VMEM footprint of `shape` after (sublane, lane) tile padding."""
    itemsize = jnp.dtype(dtype).itemsize
    s = [int(d) for d in shape]
    if len(s) >= 1:
        s[-1] = _round_up(s[-1], 128)
    if len(s) >= 2:
        s[-2] = _round_up(s[-2], 32 // itemsize)  # 8 (f32) / 16 (bf16) sublanes
    n = 1
    for d in s:
        n *= d
    return n * itemsize


def _feature_kernel(x_ref, w0_ref, b0_ref, wb_ref, bb_ref, o_ref,
                    x_buf, a_buf, y_buf, *, H, W, n_block, compute_dtype):
    """Fused Feature forward for one batch element.

    x_ref : (1, H, W, Cin_p)        un-padded input image (f32)
    w0_ref: (9*Cin_p, nf)           conv_first weights, tap-major (compute dt)
    b0_ref: (1, nf)                 conv_first bias (f32)
    wb_ref: (2*n_block, 9*nf, nf)   block conv weights, tap-major (compute dt)
    bb_ref: (2*n_block, 1, nf)      block conv biases (f32)
    o_ref : (1, H, W, nf)           output feature map
    x_buf : VMEM (H+2, WP, Cin_p)   haloed input        (zero halo)
    a_buf : VMEM (H+2, WP, nf)      running feature map (zero halo)
    y_buf : VMEM (H+2, WP, nf)      block intermediate  (zero halo)
    """
    nf = a_buf.shape[-1]
    c0 = _XL - 1          # leftmost column read by the dx = 0 tap

    def zero_halo(buf):
        # Zero ONLY the halo strips each step (interiors are fully overwritten
        # by every layer).  Do not guard with program_id == 0: under
        # "parallel" grid sharding each core must init its own scratch.
        _, wp, c = buf.shape
        zrow = jnp.zeros((1, wp, c), jnp.float32)
        zcol = jnp.zeros((H, 1, c), jnp.float32)
        buf[0:1, :, :] = zrow                          # top halo row
        buf[H + 1:H + 2, :, :] = zrow                  # bottom halo row
        buf[1:H + 1, c0:c0 + 1, :] = zcol              # left halo column
        buf[1:H + 1, _XL + W:_XL + W + 1, :] = zcol    # right halo column

    zero_halo(x_buf)
    zero_halo(a_buf)
    zero_halo(y_buf)

    # Build the 1-pixel zero halo in VMEM (no host-side jnp.pad / extra HBM pass).
    x_buf[1:H + 1, _XL:_XL + W, :] = x_ref[0]

    def conv3x3(buf, w_flat, bias):
        """One 3x3 conv as a single im2col matmul: (H*W, 9*C) @ (9*C, nf)."""
        taps = []
        for dy in range(3):
            for dx in range(3):
                t = buf[dy:dy + H, c0 + dx:c0 + dx + W, :]
                taps.append(t.astype(compute_dtype).reshape(H * W, -1))
        lhs = jnp.concatenate(taps, axis=-1)           # (H*W, 9*C) compute_dtype
        acc = jnp.dot(lhs, w_flat, preferred_element_type=jnp.float32)
        return acc + bias                              # f32 epilogue

    def store_interior(buf, val):
        # Sublane-aligned (offset _XL, width W) interior store.
        buf[1:H + 1, _XL:_XL + W, :] = val.reshape(H, W, -1)

    # ---- conv_first + ReLU --------------------------------------------------
    a = conv3x3(x_buf, w0_ref[...], b0_ref[...])
    store_interior(a_buf, jnp.maximum(a, 0.0))

    # ---- residual blocks: x = relu(conv2(relu(conv1(x))) + x) ---------------
    # Static unroll is intentional for small n_block (<= ~4); for deep stacks
    # switch to lax.fori_loop with pl.ds-indexed weight slices.
    for i in range(n_block):
        l1, l2 = 2 * i, 2 * i + 1

        y = conv3x3(a_buf, wb_ref[l1], bb_ref[l1])
        store_interior(y_buf, jnp.maximum(y, 0.0))

        identity = a_buf[1:H + 1, _XL:_XL + W, :].reshape(H * W, nf)
        z = conv3x3(y_buf, wb_ref[l2], bb_ref[l2])
        z = jnp.maximum(z + identity, 0.0)

        if i + 1 < n_block:
            store_interior(a_buf, z)
        else:
            # NOTE: a lane-dense (H, W*nf) output store would avoid masked vst
            # on the 32-lane last dim, but the (H*W, nf) -> (H, W*nf) relayout
            # is not a guaranteed-supported Mosaic reshape; writeback is only
            # H*W*nf*4 bytes/step and is not the bottleneck of this kernel.
            o_ref[0] = z.reshape(H, W, nf).astype(o_ref.dtype)


def feature_forward(x_nchw, params, *, compute_dtype=jnp.bfloat16):
    """Forward of `Feature`: relu(conv_first(x)) -> N residual blocks. NCHW in/out."""
    blocks = params["blocks"]
    n_block = len(blocks)
    assert n_block >= 1, "fused kernel expects at least one residual block"
    w0 = params["conv_first"]["w"]              # (3, 3, in_chl, nf) HWIO
    b0 = params["conv_first"]["b"]              # (nf,)
    nf = w0.shape[-1]

    N, cin, H, W = x_nchw.shape
    x = jnp.transpose(x_nchw, (0, 2, 3, 1))     # NCHW -> NHWC

    # Pad Cin to a multiple of 16 (bf16 packs 16 sublanes/tile); zero channels
    # are a numerical no-op.  The spatial halo is built in VMEM by the kernel.
    cin_p = max(16, _round_up(cin, 16))
    if cin_p != cin:
        x = jnp.pad(x, ((0, 0), (0, 0), (0, 0), (0, cin_p - cin)))
        w0 = jnp.pad(w0, ((0, 0), (0, 0), (0, cin_p - cin), (0, 0)))

    # Stack all block weights/biases once: order = [b0.w1, b0.w2, b1.w1, ...],
    # flattened tap-major so they feed the im2col matmul directly.
    L = 2 * n_block
    wb = jnp.stack([blk[k] for blk in blocks for k in ("w1", "w2")])
    bb = jnp.stack([blk[k] for blk in blocks for k in ("b1", "b2")])

    w0f = w0.reshape(9 * cin_p, nf).astype(compute_dtype)   # (144, nf)
    wbf = wb.reshape(L, 9 * nf, nf).astype(compute_dtype)   # (L, 9*nf, nf)
    b0f = b0.reshape(1, nf).astype(jnp.float32)
    bbf = bb.reshape(L, 1, nf).astype(jnp.float32)

    # Scratch width: interior at columns [_XL, _XL+W); taps read [_XL-1, _XL+W];
    # round up to a sublane multiple.
    wp = _round_up(_XL + W + 1, 8)

    # Explicit VMEM budget: pipeline blocks are double-buffered, scratch is
    # single-buffered, every last-dim < 128 is lane-padded (the nf=32 feature
    # maps inflate ~4x).  Cap below v7x's 64 MiB physical VMEM; at these sizes
    # this resolves to the 32 MiB default scoped limit.
    block_bytes = 2 * (
        _padded_vmem_bytes((1, H, W, cin_p), jnp.float32)
        + _padded_vmem_bytes((9 * cin_p, nf), compute_dtype)
        + _padded_vmem_bytes((1, nf), jnp.float32)
        + _padded_vmem_bytes((L, 9 * nf, nf), compute_dtype)
        + _padded_vmem_bytes((L, 1, nf), jnp.float32)
        + _padded_vmem_bytes((1, H, W, nf), jnp.float32))
    scratch_bytes = (_padded_vmem_bytes((H + 2, wp, cin_p), jnp.float32)
                     + 2 * _padded_vmem_bytes((H + 2, wp, nf), jnp.float32))
    vmem_limit = int(min(48 << 20, max(32 << 20, 2 * (block_bytes + scratch_bytes))))

    kernel = functools.partial(_feature_kernel, H=H, W=W, n_block=n_block,
                               compute_dtype=compute_dtype)

    out = pl.pallas_call(
        kernel,
        grid=(N,),
        in_specs=[
            pl.BlockSpec((1, H, W, cin_p), lambda n: (n, 0, 0, 0)),
            pl.BlockSpec((9 * cin_p, nf), lambda n: (0, 0)),
            pl.BlockSpec((1, nf), lambda n: (0, 0)),
            pl.BlockSpec((L, 9 * nf, nf), lambda n: (0, 0, 0)),
            pl.BlockSpec((L, 1, nf), lambda n: (0, 0, 0)),
        ],
        out_specs=pl.BlockSpec((1, H, W, nf), lambda n: (n, 0, 0, 0)),
        out_shape=jax.ShapeDtypeStruct((N, H, W, nf), jnp.float32),
        scratch_shapes=[
            pltpu.VMEM((H + 2, wp, cin_p), jnp.float32),   # haloed input
            pltpu.VMEM((H + 2, wp, nf), jnp.float32),      # running feature map
            pltpu.VMEM((H + 2, wp, nf), jnp.float32),      # block intermediate
        ],
        compiler_params=pltpu.CompilerParams(
            dimension_semantics=("parallel",),
            vmem_limit_bytes=vmem_limit,
        ),
    )(x, w0f, b0f, wbf, bbf)

    # TODO(synk): `self.unet = eval('UNet_down4(nf=nf)')` -- UNet_down4's
    # definition is not provided in the reference module, so the UNet stage is
    # omitted and the pre-UNet extracted features are returned.
    return jnp.transpose(out, (0, 3, 1, 2))     # NHWC -> NCHW


def init_feature_params(key, in_chl=3, nf=32, n_block=2):
    """Deterministic synthetic parameters matching the module's __init__ shapes."""
    def conv_params(k, cin, cout):
        kw, kb = jax.random.split(k)
        fan_in = cin * 3 * 3
        bound = 1.0 / jnp.sqrt(fan_in)
        w = jax.random.uniform(kw, (3, 3, cin, cout), jnp.float32, -bound, bound)
        b = jax.random.uniform(kb, (cout,), jnp.float32, -bound, bound)
        return w, b

    keys = jax.random.split(key, 1 + 2 * n_block)
    w0, b0 = conv_params(keys[0], in_chl, nf)
    blocks = []
    for i in range(n_block):
        w1, b1 = conv_params(keys[1 + 2 * i], nf, nf)
        w2, b2 = conv_params(keys[2 + 2 * i], nf, nf)
        blocks.append({"w1": w1, "b1": b1, "w2": w2, "b2": b2})
    return {"conv_first": {"w": w0, "b": b0}, "blocks": blocks}


def _feature_reference(x_nchw, params):
    """Pure-JAX (XLA conv) f32 reference of the same forward pass."""
    def conv(x, w, b):
        y = jax.lax.conv_general_dilated(
            x, w, window_strides=(1, 1), padding="SAME",
            dimension_numbers=("NHWC", "HWIO", "NHWC"))
        return y + b[None, None, None, :]

    x = jnp.transpose(x_nchw, (0, 2, 3, 1))
    x = jax.nn.relu(conv(x, params["conv_first"]["w"], params["conv_first"]["b"]))
    for blk in params["blocks"]:
        y = jax.nn.relu(conv(x, blk["w1"], blk["b1"]))
        x = jax.nn.relu(conv(y, blk["w2"], blk["b2"]) + x)
    return jnp.transpose(x, (0, 3, 1, 2))


if __name__ == "__main__":
    key = jax.random.PRNGKey(0)
    k_param, k_x = jax.random.split(key)

    N, in_chl, H, W = 2, 3, 16, 16
    nf, n_block = 32, 2

    params = init_feature_params(k_param, in_chl=in_chl, nf=nf, n_block=n_block)
    x = jax.random.normal(k_x, (N, in_chl, H, W), jnp.float32)

    fwd = jax.jit(feature_forward)
    out = fwd(x, params)
    jax.block_until_ready(out)

    assert out.shape == (N, nf, H, W), out.shape
    assert bool(jnp.all(jnp.isfinite(out)))

    # Numerical cross-check (loose tolerance: bf16 MXU inputs, f32 accumulation).
    ref = _feature_reference(x, params)
    max_err = float(jnp.max(jnp.abs(out - ref)))
    assert max_err < 1e-1, max_err

    print("KERNEL_OK")
</pallas_src>

<mosaic_0001>
module attributes {stable_mosaic.version = 11 : i64} {
  func.func @_feature_kernel(%arg0: i32, %arg1: memref<1x16x16x16xf32, #tpu.memory_space<vmem>>, %arg2: memref<144x32xbf16, #tpu.memory_space<vmem>>, %arg3: memref<1x32xf32, #tpu.memory_space<vmem>>, %arg4: memref<4x288x32xbf16, #tpu.memory_space<vmem>>, %arg5: memref<4x1x32xf32, #tpu.memory_space<vmem>>, %arg6: memref<1x16x16x32xf32, #tpu.memory_space<vmem>>, %arg7: memref<18x32x16xf32, #tpu.memory_space<vmem>>, %arg8: memref<18x32x32xf32, #tpu.memory_space<vmem>>, %arg9: memref<18x32x32xf32, #tpu.memory_space<vmem>>) attributes {dimension_semantics = [#tpu.dimension_semantics<parallel>], iteration_bounds = array<i64: 2>, scalar_prefetch = 0 : i64, scratch_operands = 3 : i64, tpu.core_type = #tpu.core_type<tc>, window_params = [{transform_indices = @transform_0, window_bounds = array<i64: 1, 16, 16, 16>}, {pipeline_mode = #tpu.pipeline_mode<synchronous>, transform_indices = @transform_1, window_bounds = array<i64: 144, 32>}, {pipeline_mode = #tpu.pipeline_mode<synchronous>, transform_indices = @transform_2, window_bounds = array<i64: 1, 32>}, {pipeline_mode = #tpu.pipeline_mode<synchronous>, transform_indices = @transform_3, window_bounds = array<i64: 4, 288, 32>}, {pipeline_mode = #tpu.pipeline_mode<synchronous>, transform_indices = @transform_4, window_bounds = array<i64: 4, 1, 32>}, {transform_indices = @transform_5, window_bounds = array<i64: 1, 16, 16, 32>}]} {
    %cst = arith.constant 0.000000e+00 : f32
    %0 = vector.broadcast %cst : f32 to vector<1x32x16xf32>
    %cst_0 = arith.constant 0.000000e+00 : f32
    %1 = vector.broadcast %cst_0 : f32 to vector<16x1x16xf32>
    %c0 = arith.constant 0 : index
    %c0_1 = arith.constant 0 : index
    %c0_2 = arith.constant 0 : index
    %2 = vector.load %arg7[%c0, %c0_1, %c0_2] : memref<18x32x16xf32, #tpu.memory_space<vmem>>, vector<1x32x16xf32>
    tpu.vector_store %arg7[%c0, %c0_1, %c0_2], %0 {strides = array<i32>} : memref<18x32x16xf32, #tpu.memory_space<vmem>>, vector<1x32x16xf32>,
    %c17 = arith.constant 17 : index
    %c0_3 = arith.constant 0 : index
    %c0_4 = arith.constant 0 : index
    %3 = vector.load %arg7[%c17, %c0_3, %c0_4] : memref<18x32x16xf32, #tpu.memory_space<vmem>>, vector<1x32x16xf32>
    tpu.vector_store %arg7[%c17, %c0_3, %c0_4], %0 {strides = array<i32>} : memref<18x32x16xf32, #tpu.memory_space<vmem>>, vector<1x32x16xf32>,
    %c1 = arith.constant 1 : index
    %c7 = arith.constant 7 : index
    %c0_5 = arith.constant 0 : index
    %4 = vector.load %arg7[%c1, %c7, %c0_5] : memref<18x32x16xf32, #tpu.memory_space<vmem>>, vector<16x1x16xf32>
    tpu.vector_store %arg7[%c1, %c7, %c0_5], %1 {strides = array<i32>} : memref<18x32x16xf32, #tpu.memory_space<vmem>>, vector<16x1x16xf32>,
    %c1_6 = arith.constant 1 : index
    %c24 = arith.constant 24 : index
    %c0_7 = arith.constant 0 : index
    %5 = vector.load %arg7[%c1_6, %c24, %c0_7] : memref<18x32x16xf32, #tpu.memory_space<vmem>>, vector<16x1x16xf32>
    tpu.vector_store %arg7[%c1_6, %c24, %c0_7], %1 {strides = array<i32>} : memref<18x32x16xf32, #tpu.memory_space<vmem>>, vector<16x1x16xf32>,
    %cst_8 = arith.constant 0.000000e+00 : f32
    %6 = vector.broadcast %cst_8 : f32 to vector<1x32x32xf32>
    %cst_9 = arith.constant 0.000000e+00 : f32
    %7 = vector.broadcast %cst_9 : f32 to vector<16x1x32xf32>
    %c0_10 = arith.constant 0 : index
    %c0_11 = arith.constant 0 : index
    %c0_12 = arith.constant 0 : index
    %8 = vector.load %arg8[%c0_10, %c0_11, %c0_12] : memref<18x32x32xf32, #tpu.memory_space<vmem>>, vector<1x32x32xf32>
    tpu.vector_store %arg8[%c0_10, %c0_11, %c0_12], %6 {strides = array<i32>} : memref<18x32x32xf32, #tpu.memory_space<vmem>>, vector<1x32x32xf32>,
    %c17_13 = arith.constant 17 : index
    %c0_14 = arith.constant 0 : index
    %c0_15 = arith.constant 0 : index
    %9 = vector.load %arg8[%c17_13, %c0_14, %c0_15] : memref<18x32x32xf32, #tpu.memory_space<vmem>>, vector<1x32x32xf32>
    tpu.vector_store %arg8[%c17_13, %c0_14, %c0_15], %6 {strides = array<i32>} : memref<18x32x32xf32, #tpu.memory_space<vmem>>, vector<1x32x32xf32>,
    %c1_16 = arith.constant 1 : index
    %c7_17 = arith.constant 7 : index
    %c0_18 = arith.constant 0 : index
    %10 = vector.load %arg8[%c1_16, %c7_17, %c0_18] : memref<18x32x32xf32, #tpu.memory_space<vmem>>, vector<16x1x32xf32>
    tpu.vector_store %arg8[%c1_16, %c7_17, %c0_18], %7 {strides = array<i32>} : memref<18x32x32xf32, #tpu.memory_space<vmem>>, vector<16x1x32xf32>,
    %c1_19 = arith.constant 1 : index
    %c24_20 = arith.constant 24 : index
    %c0_21 = arith.constant 0 : index
    %11 = vector.load %arg8[%c1_19, %c24_20, %c0_21] : memref<18x32x32xf32, #tpu.memory_space<vmem>>, vector<16x1x32xf32>
    tpu.vector_store %arg8[%c1_19, %c24_20, %c0_21], %7 {strides = array<i32>} : memref<18x32x32xf32, #tpu.memory_space<vmem>>, vector<16x1x32xf32>,
    %cst_22 = arith.constant 0.000000e+00 : f32
    %12 = vector.broadcast %cst_22 : f32 to vector<1x32x32xf32>
    %cst_23 = arith.constant 0.000000e+00 : f32
    %13 = vector.broadcast %cst_23 : f32 to vector<16x1x32xf32>
    %c0_24 = arith.constant 0 : index
    %c0_25 = arith.constant 0 : index
    %c0_26 = arith.constant 0 : index
    %14 = vector.load %arg9[%c0_24, %c0_25, %c0_26] : memref<18x32x32xf32, #tpu.memory_space<vmem>>, vector<1x32x32xf32>
    tpu.vector_store %arg9[%c0_24, %c0_25, %c0_26], %12 {strides = array<i32>} : memref<18x32x32xf32, #tpu.memory_space<vmem>>, vector<1x32x32xf32>,
    %c17_27 = arith.constant 17 : index
    %c0_28 = arith.constant 0 : index
    %c0_29 = arith.constant 0 : index
    %15 = vector.load %arg9[%c17_27, %c0_28, %c0_29] : memref<18x32x32xf32, #tpu.memory_space<vmem>>, vector<1x32x32xf32>
    tpu.vector_store %arg9[%c17_27, %c0_28, %c0_29], %12 {strides = array<i32>} : memref<18x32x32xf32, #tpu.memory_space<vmem>>, vector<1x32x32xf32>,
    %c1_30 = arith.constant 1 : index
    %c7_31 = arith.constant 7 : index
    %c0_32 = arith.constant 0 : index
    %16 = vector.load %arg9[%c1_30, %c7_31, %c0_32] : memref<18x32x32xf32, #tpu.memory_space<vmem>>, vector<16x1x32xf32>
    tpu.vector_store %arg9[%c1_30, %c7_31, %c0_32], %13 {strides = array<i32>} : memref<18x32x32xf32, #tpu.memory_space<vmem>>, vector<16x1x32xf32>,
    %c1_33 = arith.constant 1 : index
    %c24_34 = arith.constant 24 : index
    %c0_35 = arith.constant 0 : index
    %17 = vector.load %arg9[%c1_33, %c24_34, %c0_35] : memref<18x32x32xf32, #tpu.memory_space<vmem>>, vector<16x1x32xf32>
    tpu.vector_store %arg9[%c1_33, %c24_34, %c0_35], %13 {strides = array<i32>} : memref<18x32x32xf32, #tpu.memory_space<vmem>>, vector<16x1x32xf32>,
    %c0_36 = arith.constant 0 : index
    %c0_37 = arith.constant 0 : index
    %c0_38 = arith.constant 0 : index
    %c0_39 = arith.constant 0 : index
    %18 = vector.load %arg1[%c0_36, %c0_37, %c0_38, %c0_39] : memref<1x16x16x16xf32, #tpu.memory_space<vmem>>, vector<1x16x16x16xf32>
    %19 = vector.shape_cast %18 : vector<1x16x16x16xf32> to vector<16x16x16xf32>
    %c1_40 = arith.constant 1 : index
    %c8 = arith.constant 8 : index
    %c0_41 = arith.constant 0 : index
    %20 = vector.load %arg7[%c1_40, %c8, %c0_41] : memref<18x32x16xf32, #tpu.memory_space<vmem>>, vector<16x16x16xf32>
    tpu.vector_store %arg7[%c1_40, %c8, %c0_41], %19 {strides = array<i32>} : memref<18x32x16xf32, #tpu.memory_space<vmem>>, vector<16x16x16xf32>,
    %c0_42 = arith.constant 0 : index
    %c0_43 = arith.constant 0 : index
    %21 = vector.load %arg2[%c0_42, %c0_43] : memref<144x32xbf16, #tpu.memory_space<vmem>>, vector<144x32xbf16>
    %c0_44 = arith.constant 0 : index
    %c0_45 = arith.constant 0 : index
    %22 = vector.load %arg3[%c0_44, %c0_45] : memref<1x32xf32, #tpu.memory_space<vmem>>, vector<1x32xf32>
    %c0_46 = arith.constant 0 : index
    %c7_47 = arith.constant 7 : index
    %c0_48 = arith.constant 0 : index
    %23 = vector.load %arg7[%c0_46, %c7_47, %c0_48] : memref<18x32x16xf32, #tpu.memory_space<vmem>>, vector<16x16x16xf32>
    %24 = arith.truncf %23 : vector<16x16x16xf32> to vector<16x16x16xbf16>
    %25 = vector.shape_cast %24 : vector<16x16x16xbf16> to vector<256x16xbf16>
    %c0_49 = arith.constant 0 : index
    %c8_50 = arith.constant 8 : index
    %c0_51 = arith.constant 0 : index
    %26 = vector.load %arg7[%c0_49, %c8_50, %c0_51] : memref<18x32x16xf32, #tpu.memory_space<vmem>>, vector<16x16x16xf32>
    %27 = arith.truncf %26 : vector<16x16x16xf32> to vector<16x16x16xbf16>
    %28 = vector.shape_cast %27 : vector<16x16x16xbf16> to vector<256x16xbf16>
    %c0_52 = arith.constant 0 : index
    %c9 = arith.constant 9 : index
    %c0_53 = arith.constant 0 : index
    %29 = vector.load %arg7[%c0_52, %c9, %c0_53] : memref<18x32x16xf32, #tpu.memory_space<vmem>>, vector<16x16x16xf32>
    %30 = arith.truncf %29 : vector<16x16x16xf32> to vector<16x16x16xbf16>
    %31 = vector.shape_cast %30 : vector<16x16x16xbf16> to vector<256x16xbf16>
    %c1_54 = arith.constant 1 : index
    %c7_55 = arith.constant 7 : index
    %c0_56 = arith.constant 0 : index
    %32 = vector.load %arg7[%c1_54, %c7_55, %c0_56] : memref<18x32x16xf32, #tpu.memory_space<vmem>>, vector<16x16x16xf32>
    %33 = arith.truncf %32 : vector<16x16x16xf32> to vector<16x16x16xbf16>
    %34 = vector.shape_cast %33 : vector<16x16x16xbf16> to vector<256x16xbf16>
    %c1_57 = arith.constant 1 : index
    %c8_58 = arith.constant 8 : index
    %c0_59 = arith.constant 0 : index
    %35 = vector.load %arg7[%c1_57, %c8_58, %c0_59] : memref<18x32x16xf32, #tpu.memory_space<vmem>>, vector<16x16x16xf32>
    %36 = arith.truncf %35 : vector<16x16x16xf32> to vector<16x16x16xbf16>
    %37 = vector.shape_cast %36 : vector<16x16x16xbf16> to vector<256x16xbf16>
    %c1_60 = arith.constant 1 : index
    %c9_61 = arith.constant 9 : index
    %c0_62 = arith.constant 0 : index
    %38 = vector.load %arg7[%c1_60, %c9_61, %c0_62] : memref<18x32x16xf32, #tpu.memory_space<vmem>>, vector<16x16x16xf32>
    %39 = arith.truncf %38 : vector<16x16x16xf32> to vector<16x16x16xbf16>
    %40 = vector.shape_cast %39 : vector<16x16x16xbf16> to vector<256x16xbf16>
    %c2 = arith.constant 2 : index
    %c7_63 = arith.constant 7 : index
    %c0_64 = arith.constant 0 : index
    %41 = vector.load %arg7[%c2, %c7_63, %c0_64] : memref<18x32x16xf32, #tpu.memory_space<vmem>>, vector<16x16x16xf32>
    %42 = arith.truncf %41 : vector<16x16x16xf32> to vector<16x16x16xbf16>
    %43 = vector.shape_cast %42 : vector<16x16x16xbf16> to vector<256x16xbf16>
    %c2_65 = arith.constant 2 : index
    %c8_66 = arith.constant 8 : index
    %c0_67 = arith.constant 0 : index
    %44 = vector.load %arg7[%c2_65, %c8_66, %c0_67] : memref<18x32x16xf32, #tpu.memory_space<vmem>>, vector<16x16x16xf32>
    %45 = arith.truncf %44 : vector<16x16x16xf32> to vector<16x16x16xbf16>
    %46 = vector.shape_cast %45 : vector<16x16x16xbf16> to vector<256x16xbf16>
    %c2_68 = arith.constant 2 : index
    %c9_69 = arith.constant 9 : index
    %c0_70 = arith.constant 0 : index
    %47 = vector.load %arg7[%c2_68, %c9_69, %c0_70] : memref<18x32x16xf32, #tpu.memory_space<vmem>>, vector<16x16x16xf32>
    %48 = arith.truncf %47 : vector<16x16x16xf32> to vector<16x16x16xbf16>
    %49 = vector.shape_cast %48 : vector<16x16x16xbf16> to vector<256x16xbf16>
    %50 = tpu.concatenate %25, %28, %31, %34, %37, %40, %43, %46, %49 in 1 : vector<256x16xbf16>, vector<256x16xbf16>, vector<256x16xbf16>, vector<256x16xbf16>, vector<256x16xbf16>, vector<256x16xbf16>, vector<256x16xbf16>, vector<256x16xbf16>, vector<256x16xbf16> -> vector<256x144xbf16>
    %cst_71 = arith.constant dense<0.000000e+00> : vector<256x32xf32>
    %51 = tpu.matmul %50, %21, %cst_71 {dimension_numbers = #tpu.dot_dimension_numbers<[1], [0], [0], [1], [0, 0, 1, 1], [], []>} : vector<256x144xbf16>, vector<144x32xbf16>, vector<256x32xf32> -> vector<256x32xf32>
    %52 = vector.broadcast %22 : vector<1x32xf32> to vector<256x32xf32>
    %53 = arith.addf %51, %52 : vector<256x32xf32>
    %cst_72 = arith.constant 0.000000e+00 : f32
    %54 = vector.broadcast %cst_72 : f32 to vector<256x32xf32>
    %55 = arith.maximumf %53, %54 : vector<256x32xf32>
    %56 = vector.shape_cast %55 : vector<256x32xf32> to vector<16x16x32xf32>
    %c1_73 = arith.constant 1 : index
    %c8_74 = arith.constant 8 : index
    %c0_75 = arith.constant 0 : index
    %57 = vector.load %arg8[%c1_73, %c8_74, %c0_75] : memref<18x32x32xf32, #tpu.memory_space<vmem>>, vector<16x16x32xf32>
    tpu.vector_store %arg8[%c1_73, %c8_74, %c0_75], %56 {strides = array<i32>} : memref<18x32x32xf32, #tpu.memory_space<vmem>>, vector<16x16x32xf32>,
    %c0_76 = arith.constant 0 : index
    %c0_77 = arith.constant 0 : index
    %c0_78 = arith.constant 0 : index
    %58 = vector.load %arg4[%c0_76, %c0_77, %c0_78] : memref<4x288x32xbf16, #tpu.memory_space<vmem>>, vector<1x288x32xbf16>
    %59 = vector.shape_cast %58 : vector<1x288x32xbf16> to vector<288x32xbf16>
    %c0_79 = arith.constant 0 : index
    %c0_80 = arith.constant 0 : index
    %c0_81 = arith.constant 0 : index
    %60 = vector.load %arg5[%c0_79, %c0_80, %c0_81] : memref<4x1x32xf32, #tpu.memory_space<vmem>>, vector<1x1x32xf32>
    %61 = vector.shape_cast %60 : vector<1x1x32xf32> to vector<1x32xf32>
    %c0_82 = arith.constant 0 : index
    %c7_83 = arith.constant 7 : index
    %c0_84 = arith.constant 0 : index
    %62 = vector.load %arg8[%c0_82, %c7_83, %c0_84] : memref<18x32x32xf32, #tpu.memory_space<vmem>>, vector<16x16x32xf32>
    %63 = arith.truncf %62 : vector<16x16x32xf32> to vector<16x16x32xbf16>
    %64 = vector.shape_cast %63 : vector<16x16x32xbf16> to vector<256x32xbf16>
    %c0_85 = arith.constant 0 : index
    %c8_86 = arith.constant 8 : index
    %c0_87 = arith.constant 0 : index
    %65 = vector.load %arg8[%c0_85, %c8_86, %c0_87] : memref<18x32x32xf32, #tpu.memory_space<vmem>>, vector<16x16x32xf32>
    %66 = arith.truncf %65 : vector<16x16x32xf32> to vector<16x16x32xbf16>
    %67 = vector.shape_cast %66 : vector<16x16x32xbf16> to vector<256x32xbf16>
    %c0_88 = arith.constant 0 : index
    %c9_89 = arith.constant 9 : index
    %c0_90 = arith.constant 0 : index
    %68 = vector.load %arg8[%c0_88, %c9_89, %c0_90] : memref<18x32x32xf32, #tpu.memory_space<vmem>>, vector<16x16x32xf32>
    %69 = arith.truncf %68 : vector<16x16x32xf32> to vector<16x16x32xbf16>
    %70 = vector.shape_cast %69 : vector<16x16x32xbf16> to vector<256x32xbf16>
    %c1_91 = arith.constant 1 : index
    %c7_92 = arith.constant 7 : index
    %c0_93 = arith.constant 0 : index
    %71 = vector.load %arg8[%c1_91, %c7_92, %c0_93] : memref<18x32x32xf32, #tpu.memory_space<vmem>>, vector<16x16x32xf32>
    %72 = arith.truncf %71 : vector<16x16x32xf32> to vector<16x16x32xbf16>
    %73 = vector.shape_cast %72 : vector<16x16x32xbf16> to vector<256x32xbf16>
    %c1_94 = arith.constant 1 : index
    %c8_95 = arith.constant 8 : index
    %c0_96 = arith.constant 0 : index
    %74 = vector.load %arg8[%c1_94, %c8_95, %c0_96] : memref<18x32x32xf32, #tpu.memory_space<vmem>>, vector<16x16x32xf32>
    %75 = arith.truncf %74 : vector<16x16x32xf32> to vector<16x16x32xbf16>
    %76 = vector.shape_cast %75 : vector<16x16x32xbf16> to vector<256x32xbf16>
    %c1_97 = arith.constant 1 : index
    %c9_98 = arith.constant 9 : index
    %c0_99 = arith.constant 0 : index
    %77 = vector.load %arg8[%c1_97, %c9_98, %c0_99] : memref<18x32x32xf32, #tpu.memory_space<vmem>>, vector<16x16x32xf32>
    %78 = arith.truncf %77 : vector<16x16x32xf32> to vector<16x16x32xbf16>
    %79 = vector.shape_cast %78 : vector<16x16x32xbf16> to vector<256x32xbf16>
    %c2_100 = arith.constant 2 : index
    %c7_101 = arith.constant 7 : index
    %c0_102 = arith.constant 0 : index
    %80 = vector.load %arg8[%c2_100, %c7_101, %c0_102] : memref<18x32x32xf32, #tpu.memory_space<vmem>>, vector<16x16x32xf32>
    %81 = arith.truncf %80 : vector<16x16x32xf32> to vector<16x16x32xbf16>
    %82 = vector.shape_cast %81 : vector<16x16x32xbf16> to vector<256x32xbf16>
    %c2_103 = arith.constant 2 : index
    %c8_104 = arith.constant 8 : index
    %c0_105 = arith.constant 0 : index
    %83 = vector.load %arg8[%c2_103, %c8_104, %c0_105] : memref<18x32x32xf32, #tpu.memory_space<vmem>>, vector<16x16x32xf32>
    %84 = arith.truncf %83 : vector<16x16x32xf32> to vector<16x16x32xbf16>
    %85 = vector.shape_cast %84 : vector<16x16x32xbf16> to vector<256x32xbf16>
    %c2_106 = arith.constant 2 : index
    %c9_107 = arith.constant 9 : index
    %c0_108 = arith.constant 0 : index
    %86 = vector.load %arg8[%c2_106, %c9_107, %c0_108] : memref<18x32x32xf32, #tpu.memory_space<vmem>>, vector<16x16x32xf32>
    %87 = arith.truncf %86 : vector<16x16x32xf32> to vector<16x16x32xbf16>
    %88 = vector.shape_cast %87 : vector<16x16x32xbf16> to vector<256x32xbf16>
    %89 = tpu.concatenate %64, %67, %70, %73, %76, %79, %82, %85, %88 in 1 : vector<256x32xbf16>, vector<256x32xbf16>, vector<256x32xbf16>, vector<256x32xbf16>, vector<256x32xbf16>, vector<256x32xbf16>, vector<256x32xbf16>, vector<256x32xbf16>, vector<256x32xbf16> -> vector<256x288xbf16>
    %cst_109 = arith.constant dense<0.000000e+00> : vector<256x32xf32>
    %90 = tpu.matmul %89, %59, %cst_109 {dimension_numbers = #tpu.dot_dimension_numbers<[1], [0], [0], [1], [0, 0, 1, 1], [], []>} : vector<256x288xbf16>, vector<288x32xbf16>, vector<256x32xf32> -> vector<256x32xf32>
    %91 = vector.broadcast %61 : vector<1x32xf32> to vector<256x32xf32>
    %92 = arith.addf %90, %91 : vector<256x32xf32>
    %cst_110 = arith.constant 0.000000e+00 : f32
    %93 = vector.broadcast %cst_110 : f32 to vector<256x32xf32>
    %94 = arith.maximumf %92, %93 : vector<256x32xf32>
    %95 = vector.shape_cast %94 : vector<256x32xf32> to vector<16x16x32xf32>
    %c1_111 = arith.constant 1 : index
    %c8_112 = arith.constant 8 : index
    %c0_113 = arith.constant 0 : index
    %96 = vector.load %arg9[%c1_111, %c8_112, %c0_113] : memref<18x32x32xf32, #tpu.memory_space<vmem>>, vector<16x16x32xf32>
    tpu.vector_store %arg9[%c1_111, %c8_112, %c0_113], %95 {strides = array<i32>} : memref<18x32x32xf32, #tpu.memory_space<vmem>>, vector<16x16x32xf32>,
    %c1_114 = arith.constant 1 : index
    %c8_115 = arith.constant 8 : index
    %c0_116 = arith.constant 0 : index
    %97 = vector.load %arg8[%c1_114, %c8_115, %c0_116] : memref<18x32x32xf32, #tpu.memory_space<vmem>>, vector<16x16x32xf32>
    %98 = vector.shape_cast %97 : vector<16x16x32xf32> to vector<256x32xf32>
    %c1_117 = arith.constant 1 : index
    %c0_118 = arith.constant 0 : index
    %c0_119 = arith.constant 0 : index
    %99 = vector.load %arg4[%c1_117, %c0_118, %c0_119] : memref<4x288x32xbf16, #tpu.memory_space<vmem>>, vector<1x288x32xbf16>
    %100 = vector.shape_cast %99 : vector<1x288x32xbf16> to vector<288x32xbf16>
    %c1_120 = arith.constant 1 : index
    %c0_121 = arith.constant 0 : index
    %c0_122 = arith.constant 0 : index
    %101 = vector.load %arg5[%c1_120, %c0_121, %c0_122] : memref<4x1x32xf32, #tpu.memory_space<vmem>>, vector<1x1x32xf32>
    %102 = vector.shape_cast %101 : vector<1x1x32xf32> to vector<1x32xf32>
    %c0_123 = arith.constant 0 : index
    %c7_124 = arith.constant 7 : index
    %c0_125 = arith.constant 0 : index
    %103 = vector.load %arg9[%c0_123, %c7_124, %c0_125] : memref<18x32x32xf32, #tpu.memory_space<vmem>>, vector<16x16x32xf32>
    %104 = arith.truncf %103 : vector<16x16x32xf32> to vector<16x16x32xbf16>
    %105 = vector.shape_cast %104 : vector<16x16x32xbf16> to vector<256x32xbf16>
    %c0_126 = arith.constant 0 : index
    %c8_127 = arith.constant 8 : index
    %c0_128 = arith.constant 0 : index
    %106 = vector.load %arg9[%c0_126, %c8_127, %c0_128] : memref<18x32x32xf32, #tpu.memory_space<vmem>>, vector<16x16x32xf32>
    %107 = arith.truncf %106 : vector<16x16x32xf32> to vector<16x16x32xbf16>
    %108 = vector.shape_cast %107 : vector<16x16x32xbf16> to vector<256x32xbf16>
    %c0_129 = arith.constant 0 : index
    %c9_130 = arith.constant 9 : index
    %c0_131 = arith.constant 0 : index
    %109 = vector.load %arg9[%c0_129, %c9_130, %c0_131] : memref<18x32x32xf32, #tpu.memory_space<vmem>>, vector<16x16x32xf32>
    %110 = arith.truncf %109 : vector<16x16x32xf32> to vector<16x16x32xbf16>
    %111 = vector.shape_cast %110 : vector<16x16x32xbf16> to vector<256x32xbf16>
    %c1_132 = arith.constant 1 : index
    %c7_133 = arith.constant 7 : index
    %c0_134 = arith.constant 0 : index
    %112 = vector.load %arg9[%c1_132, %c7_133, %c0_134] : memref<18x32x32xf32, #tpu.memory_space<vmem>>, vector<16x16x32xf32>
    %113 = arith.truncf %112 : vector<16x16x32xf32> to vector<16x16x32xbf16>
    %114 = vector.shape_cast %113 : vector<16x16x32xbf16> to vector<256x32xbf16>
    %c1_135 = arith.constant 1 : index
    %c8_136 = arith.constant 8 : index
    %c0_137 = arith.constant 0 : index
    %115 = vector.load %arg9[%c1_135, %c8_136, %c0_137] : memref<18x32x32xf32, #tpu.memory_space<vmem>>, vector<16x16x32xf32>
    %116 = arith.truncf %115 : vector<16x16x32xf32> to vector<16x16x32xbf16>
    %117 = vector.shape_cast %116 : vector<16x16x32xbf16> to vector<256x32xbf16>
    %c1_138 = arith.constant 1 : index
    %c9_139 = arith.constant 9 : index
    %c0_140 = arith.constant 0 : index
    %118 = vector.load %arg9[%c1_138, %c9_139, %c0_140] : memref<18x32x32xf32, #tpu.memory_space<vmem>>, vector<16x16x32xf32>
    %119 = arith.truncf %118 : vector<16x16x32xf32> to vector<16x16x32xbf16>
    %120 = vector.shape_cast %119 : vector<16x16x32xbf16> to vector<256x32xbf16>
    %c2_141 = arith.constant 2 : index
    %c7_142 = arith.constant 7 : index
    %c0_143 = arith.constant 0 : index
    %121 = vector.load %arg9[%c2_141, %c7_142, %c0_143] : memref<18x32x32xf32, #tpu.memory_space<vmem>>, vector<16x16x32xf32>
    %122 = arith.truncf %121 : vector<16x16x32xf32> to vector<16x16x32xbf16>
    %123 = vector.shape_cast %122 : vector<16x16x32xbf16> to vector<256x32xbf16>
    %c2_144 = arith.constant 2 : index
    %c8_145 = arith.constant 8 : index
    %c0_146 = arith.constant 0 : index
    %124 = vector.load %arg9[%c2_144, %c8_145, %c0_146] : memref<18x32x32xf32, #tpu.memory_space<vmem>>, vector<16x16x32xf32>
    %125 = arith.truncf %124 : vector<16x16x32xf32> to vector<16x16x32xbf16>
    %126 = vector.shape_cast %125 : vector<16x16x32xbf16> to vector<256x32xbf16>
    %c2_147 = arith.constant 2 : index
    %c9_148 = arith.constant 9 : index
    %c0_149 = arith.constant 0 : index
    %127 = vector.load %arg9[%c2_147, %c9_148, %c0_149] : memref<18x32x32xf32, #tpu.memory_space<vmem>>, vector<16x16x32xf32>
    %128 = arith.truncf %127 : vector<16x16x32xf32> to vector<16x16x32xbf16>
    %129 = vector.shape_cast %128 : vector<16x16x32xbf16> to vector<256x32xbf16>
    %130 = tpu.concatenate %105, %108, %111, %114, %117, %120, %123, %126, %129 in 1 : vector<256x32xbf16>, vector<256x32xbf16>, vector<256x32xbf16>, vector<256x32xbf16>, vector<256x32xbf16>, vector<256x32xbf16>, vector<256x32xbf16>, vector<256x32xbf16>, vector<256x32xbf16> -> vector<256x288xbf16>
    %cst_150 = arith.constant dense<0.000000e+00> : vector<256x32xf32>
    %131 = tpu.matmul %130, %100, %cst_150 {dimension_numbers = #tpu.dot_dimension_numbers<[1], [0], [0], [1], [0, 0, 1, 1], [], []>} : vector<256x288xbf16>, vector<288x32xbf16>, vector<256x32xf32> -> vector<256x32xf32>
    %132 = vector.broadcast %102 : vector<1x32xf32> to vector<256x32xf32>
    %133 = arith.addf %131, %132 : vector<256x32xf32>
    %134 = arith.addf %133, %98 : vector<256x32xf32>
    %cst_151 = arith.constant 0.000000e+00 : f32
    %135 = vector.broadcast %cst_151 : f32 to vector<256x32xf32>
    %136 = arith.maximumf %134, %135 : vector<256x32xf32>
    %137 = vector.shape_cast %136 : vector<256x32xf32> to vector<16x16x32xf32>
    %c1_152 = arith.constant 1 : index
    %c8_153 = arith.constant 8 : index
    %c0_154 = arith.constant 0 : index
    %138 = vector.load %arg8[%c1_152, %c8_153, %c0_154] : memref<18x32x32xf32, #tpu.memory_space<vmem>>, vector<16x16x32xf32>
    tpu.vector_store %arg8[%c1_152, %c8_153, %c0_154], %137 {strides = array<i32>} : memref<18x32x32xf32, #tpu.memory_space<vmem>>, vector<16x16x32xf32>,
    %c2_155 = arith.constant 2 : index
    %c0_156 = arith.constant 0 : index
    %c0_157 = arith.constant 0 : index
    %139 = vector.load %arg4[%c2_155, %c0_156, %c0_157] : memref<4x288x32xbf16, #tpu.memory_space<vmem>>, vector<1x288x32xbf16>
    %140 = vector.shape_cast %139 : vector<1x288x32xbf16> to vector<288x32xbf16>
    %c2_158 = arith.constant 2 : index
    %c0_159 = arith.constant 0 : index
    %c0_160 = arith.constant 0 : index
    %141 = vector.load %arg5[%c2_158, %c0_159, %c0_160] : memref<4x1x32xf32, #tpu.memory_space<vmem>>, vector<1x1x32xf32>
    %142 = vector.shape_cast %141 : vector<1x1x32xf32> to vector<1x32xf32>
    %c0_161 = arith.constant 0 : index
    %c7_162 = arith.constant 7 : index
    %c0_163 = arith.constant 0 : index
    %143 = vector.load %arg8[%c0_161, %c7_162, %c0_163] : memref<18x32x32xf32, #tpu.memory_space<vmem>>, vector<16x16x32xf32>
    %144 = arith.truncf %143 : vector<16x16x32xf32> to vector<16x16x32xbf16>
    %145 = vector.shape_cast %144 : vector<16x16x32xbf16> to vector<256x32xbf16>
    %c0_164 = arith.constant 0 : index
    %c8_165 = arith.constant 8 : index
    %c0_166 = arith.constant 0 : index
    %146 = vector.load %arg8[%c0_164, %c8_165, %c0_166] : memref<18x32x32xf32, #tpu.memory_space<vmem>>, vector<16x16x32xf32>
    %147 = arith.truncf %146 : vector<16x16x32xf32> to vector<16x16x32xbf16>
    %148 = vector.shape_cast %147 : vector<16x16x32xbf16> to vector<256x32xbf16>
    %c0_167 = arith.constant 0 : index
    %c9_168 = arith.constant 9 : index
    %c0_169 = arith.constant 0 : index
    %149 = vector.load %arg8[%c0_167, %c9_168, %c0_169] : memref<18x32x32xf32, #tpu.memory_space<vmem>>, vector<16x16x32xf32>
    %150 = arith.truncf %149 : vector<16x16x32xf32> to vector<16x16x32xbf16>
    %151 = vector.shape_cast %150 : vector<16x16x32xbf16> to vector<256x32xbf16>
    %c1_170 = arith.constant 1 : index
    %c7_171 = arith.constant 7 : index
    %c0_172 = arith.constant 0 : index
    %152 = vector.load %arg8[%c1_170, %c7_171, %c0_172] : memref<18x32x32xf32, #tpu.memory_space<vmem>>, vector<16x16x32xf32>
    %153 = arith.truncf %152 : vector<16x16x32xf32> to vector<16x16x32xbf16>
    %154 = vector.shape_cast %153 : vector<16x16x32xbf16> to vector<256x32xbf16>
    %c1_173 = arith.constant 1 : index
    %c8_174 = arith.constant 8 : index
    %c0_175 = arith.constant 0 : index
    %155 = vector.load %arg8[%c1_173, %c8_174, %c0_175] : memref<18x32x32xf32, #tpu.memory_space<vmem>>, vector<16x16x32xf32>
    %156 = arith.truncf %155 : vector<16x16x32xf32> to vector<16x16x32xbf16>
    %157 = vector.shape_cast %156 : vector<16x16x32xbf16> to vector<256x32xbf16>
    %c1_176 = arith.constant 1 : index
    %c9_177 = arith.constant 9 : index
    %c0_178 = arith.constant 0 : index
    %158 = vector.load %arg8[%c1_176, %c9_177, %c0_178] : memref<18x32x32xf32, #tpu.memory_space<vmem>>, vector<16x16x32xf32>
    %159 = arith.truncf %158 : vector<16x16x32xf32> to vector<16x16x32xbf16>
    %160 = vector.shape_cast %159 : vector<16x16x32xbf16> to vector<256x32xbf16>
    %c2_179 = arith.constant 2 : index
    %c7_180 = arith.constant 7 : index
    %c0_181 = arith.constant 0 : index
    %161 = vector.load %arg8[%c2_179, %c7_180, %c0_181] : memref<18x32x32xf32, #tpu.memory_space<vmem>>, vector<16x16x32xf32>
    %162 = arith.truncf %161 : vector<16x16x32xf32> to vector<16x16x32xbf16>
    %163 = vector.shape_cast %162 : vector<16x16x32xbf16> to vector<256x32xbf16>
    %c2_182 = arith.constant 2 : index
    %c8_183 = arith.constant 8 : index
    %c0_184 = arith.constant 0 : index
    %164 = vector.load %arg8[%c2_182, %c8_183, %c0_184] : memref<18x32x32xf32, #tpu.memory_space<vmem>>, vector<16x16x32xf32>
    %165 = arith.truncf %164 : vector<16x16x32xf32> to vector<16x16x32xbf16>
    %166 = vector.shape_cast %165 : vector<16x16x32xbf16> to vector<256x32xbf16>
    %c2_185 = arith.constant 2 : index
    %c9_186 = arith.constant 9 : index
    %c0_187 = arith.constant 0 : index
    %167 = vector.load %arg8[%c2_185, %c9_186, %c0_187] : memref<18x32x32xf32, #tpu.memory_space<vmem>>, vector<16x16x32xf32>
    %168 = arith.truncf %167 : vector<16x16x32xf32> to vector<16x16x32xbf16>
    %169 = vector.shape_cast %168 : vector<16x16x32xbf16> to vector<256x32xbf16>
    %170 = tpu.concatenate %145, %148, %151, %154, %157, %160, %163, %166, %169 in 1 : vector<256x32xbf16>, vector<256x32xbf16>, vector<256x32xbf16>, vector<256x32xbf16>, vector<256x32xbf16>, vector<256x32xbf16>, vector<256x32xbf16>, vector<256x32xbf16>, vector<256x32xbf16> -> vector<256x288xbf16>
    %cst_188 = arith.constant dense<0.000000e+00> : vector<256x32xf32>
    %171 = tpu.matmul %170, %140, %cst_188 {dimension_numbers = #tpu.dot_dimension_numbers<[1], [0], [0], [1], [0, 0, 1, 1], [], []>} : vector<256x288xbf16>, vector<288x32xbf16>, vector<256x32xf32> -> vector<256x32xf32>
    %172 = vector.broadcast %142 : vector<1x32xf32> to vector<256x32xf32>
    %173 = arith.addf %171, %172 : vector<256x32xf32>
    %cst_189 = arith.constant 0.000000e+00 : f32
    %174 = vector.broadcast %cst_189 : f32 to vector<256x32xf32>
    %175 = arith.maximumf %173, %174 : vector<256x32xf32>
    %176 = vector.shape_cast %175 : vector<256x32xf32> to vector<16x16x32xf32>
    %c1_190 = arith.constant 1 : index
    %c8_191 = arith.constant 8 : index
    %c0_192 = arith.constant 0 : index
    %177 = vector.load %arg9[%c1_190, %c8_191, %c0_192] : memref<18x32x32xf32, #tpu.memory_space<vmem>>, vector<16x16x32xf32>
    tpu.vector_store %arg9[%c1_190, %c8_191, %c0_192], %176 {strides = array<i32>} : memref<18x32x32xf32, #tpu.memory_space<vmem>>, vector<16x16x32xf32>,
    %c1_193 = arith.constant 1 : index
    %c8_194 = arith.constant 8 : index
    %c0_195 = arith.constant 0 : index
    %178 = vector.load %arg8[%c1_193, %c8_194, %c0_195] : memref<18x32x32xf32, #tpu.memory_space<vmem>>, vector<16x16x32xf32>
    %179 = vector.shape_cast %178 : vector<16x16x32xf32> to vector<256x32xf32>
    %c3 = arith.constant 3 : index
    %c0_196 = arith.constant 0 : index
    %c0_197 = arith.constant 0 : index
    %180 = vector.load %arg4[%c3, %c0_196, %c0_197] : memref<4x288x32xbf16, #tpu.memory_space<vmem>>, vector<1x288x32xbf16>
    %181 = vector.shape_cast %180 : vector<1x288x32xbf16> to vector<288x32xbf16>
    %c3_198 = arith.constant 3 : index
    %c0_199 = arith.constant 0 : index
    %c0_200 = arith.constant 0 : index
    %182 = vector.load %arg5[%c3_198, %c0_199, %c0_200] : memref<4x1x32xf32, #tpu.memory_space<vmem>>, vector<1x1x32xf32>
    %183 = vector.shape_cast %182 : vector<1x1x32xf32> to vector<1x32xf32>
    %c0_201 = arith.constant 0 : index
    %c7_202 = arith.constant 7 : index
    %c0_203 = arith.constant 0 : index
    %184 = vector.load %arg9[%c0_201, %c7_202, %c0_203] : memref<18x32x32xf32, #tpu.memory_space<vmem>>, vector<16x16x32xf32>
    %185 = arith.truncf %184 : vector<16x16x32xf32> to vector<16x16x32xbf16>
    %186 = vector.shape_cast %185 : vector<16x16x32xbf16> to vector<256x32xbf16>
    %c0_204 = arith.constant 0 : index
    %c8_205 = arith.constant 8 : index
    %c0_206 = arith.constant 0 : index
    %187 = vector.load %arg9[%c0_204, %c8_205, %c0_206] : memref<18x32x32xf32, #tpu.memory_space<vmem>>, vector<16x16x32xf32>
    %188 = arith.truncf %187 : vector<16x16x32xf32> to vector<16x16x32xbf16>
    %189 = vector.shape_cast %188 : vector<16x16x32xbf16> to vector<256x32xbf16>
    %c0_207 = arith.constant 0 : index
    %c9_208 = arith.constant 9 : index
    %c0_209 = arith.constant 0 : index
    %190 = vector.load %arg9[%c0_207, %c9_208, %c0_209] : memref<18x32x32xf32, #tpu.memory_space<vmem>>, vector<16x16x32xf32>
    %191 = arith.truncf %190 : vector<16x16x32xf32> to vector<16x16x32xbf16>
    %192 = vector.shape_cast %191 : vector<16x16x32xbf16> to vector<256x32xbf16>
    %c1_210 = arith.constant 1 : index
    %c7_211 = arith.constant 7 : index
    %c0_212 = arith.constant 0 : index
    %193 = vector.load %arg9[%c1_210, %c7_211, %c0_212] : memref<18x32x32xf32, #tpu.memory_space<vmem>>, vector<16x16x32xf32>
    %194 = arith.truncf %193 : vector<16x16x32xf32> to vector<16x16x32xbf16>
    %195 = vector.shape_cast %194 : vector<16x16x32xbf16> to vector<256x32xbf16>
    %c1_213 = arith.constant 1 : index
    %c8_214 = arith.constant 8 : index
    %c0_215 = arith.constant 0 : index
    %196 = vector.load %arg9[%c1_213, %c8_214, %c0_215] : memref<18x32x32xf32, #tpu.memory_space<vmem>>, vector<16x16x32xf32>
    %197 = arith.truncf %196 : vector<16x16x32xf32> to vector<16x16x32xbf16>
    %198 = vector.shape_cast %197 : vector<16x16x32xbf16> to vector<256x32xbf16>
    %c1_216 = arith.constant 1 : index
    %c9_217 = arith.constant 9 : index
    %c0_218 = arith.constant 0 : index
    %199 = vector.load %arg9[%c1_216, %c9_217, %c0_218] : memref<18x32x32xf32, #tpu.memory_space<vmem>>, vector<16x16x32xf32>
    %200 = arith.truncf %199 : vector<16x16x32xf32> to vector<16x16x32xbf16>
    %201 = vector.shape_cast %200 : vector<16x16x32xbf16> to vector<256x32xbf16>
    %c2_219 = arith.constant 2 : index
    %c7_220 = arith.constant 7 : index
    %c0_221 = arith.constant 0 : index
    %202 = vector.load %arg9[%c2_219, %c7_220, %c0_221] : memref<18x32x32xf32, #tpu.memory_space<vmem>>, vector<16x16x32xf32>
    %203 = arith.truncf %202 : vector<16x16x32xf32> to vector<16x16x32xbf16>
    %204 = vector.shape_cast %203 : vector<16x16x32xbf16> to vector<256x32xbf16>
    %c2_222 = arith.constant 2 : index
    %c8_223 = arith.constant 8 : index
    %c0_224 = arith.constant 0 : index
    %205 = vector.load %arg9[%c2_222, %c8_223, %c0_224] : memref<18x32x32xf32, #tpu.memory_space<vmem>>, vector<16x16x32xf32>
    %206 = arith.truncf %205 : vector<16x16x32xf32> to vector<16x16x32xbf16>
    %207 = vector.shape_cast %206 : vector<16x16x32xbf16> to vector<256x32xbf16>
    %c2_225 = arith.constant 2 : index
    %c9_226 = arith.constant 9 : index
    %c0_227 = arith.constant 0 : index
    %208 = vector.load %arg9[%c2_225, %c9_226, %c0_227] : memref<18x32x32xf32, #tpu.memory_space<vmem>>, vector<16x16x32xf32>
    %209 = arith.truncf %208 : vector<16x16x32xf32> to vector<16x16x32xbf16>
    %210 = vector.shape_cast %209 : vector<16x16x32xbf16> to vector<256x32xbf16>
    %211 = tpu.concatenate %186, %189, %192, %195, %198, %201, %204, %207, %210 in 1 : vector<256x32xbf16>, vector<256x32xbf16>, vector<256x32xbf16>, vector<256x32xbf16>, vector<256x32xbf16>, vector<256x32xbf16>, vector<256x32xbf16>, vector<256x32xbf16>, vector<256x32xbf16> -> vector<256x288xbf16>
    %cst_228 = arith.constant dense<0.000000e+00> : vector<256x32xf32>
    %212 = tpu.matmul %211, %181, %cst_228 {dimension_numbers = #tpu.dot_dimension_numbers<[1], [0], [0], [1], [0, 0, 1, 1], [], []>} : vector<256x288xbf16>, vector<288x32xbf16>, vector<256x32xf32> -> vector<256x32xf32>
    %213 = vector.broadcast %183 : vector<1x32xf32> to vector<256x32xf32>
    %214 = arith.addf %212, %213 : vector<256x32xf32>
    %215 = arith.addf %214, %179 : vector<256x32xf32>
    %cst_229 = arith.constant 0.000000e+00 : f32
    %216 = vector.broadcast %cst_229 : f32 to vector<256x32xf32>
    %217 = arith.maximumf %215, %216 : vector<256x32xf32>
    %218 = vector.shape_cast %217 : vector<256x32xf32> to vector<16x16x32xf32>
    %c0_230 = arith.constant 0 : index
    %c0_231 = arith.constant 0 : index
    %c0_232 = arith.constant 0 : index
    %c0_233 = arith.constant 0 : index
    %219 = vector.load %arg6[%c0_230, %c0_231, %c0_232, %c0_233] : memref<1x16x16x32xf32, #tpu.memory_space<vmem>>, vector<1x16x16x32xf32>
    %220 = vector.shape_cast %219 : vector<1x16x16x32xf32> to vector<16x16x32xf32>
    %221 = vector.shape_cast %218 : vector<16x16x32xf32> to vector<1x16x16x32xf32>
    tpu.vector_store %arg6[%c0_230, %c0_231, %c0_232, %c0_233], %221 {strides = array<i32>} : memref<1x16x16x32xf32, #tpu.memory_space<vmem>>, vector<1x16x16x32xf32>,
    return
  }
  func.func @transform_0(%arg0: i32) -> (i32, i32, i32, i32) {
    %c0_i32 = arith.constant 0 : i32
    %c0_i32_0 = arith.constant 0 : i32
    %c0_i32_1 = arith.constant 0 : i32
    %c0_i32_2 = arith.constant 0 : i32
    return %arg0, %c0_i32, %c0_i32_0, %c0_i32_1 : i32, i32, i32, i32
  }
  func.func @transform_1(%arg0: i32) -> (i32, i32) {
    %c0_i32 = arith.constant 0 : i32
    %c0_i32_0 = arith.constant 0 : i32
    %c0_i32_1 = arith.constant 0 : i32
    return %c0_i32, %c0_i32_0 : i32, i32
  }
  func.func @transform_2(%arg0: i32) -> (i32, i32) {
    %c0_i32 = arith.constant 0 : i32
    %c0_i32_0 = arith.constant 0 : i32
    %c0_i32_1 = arith.constant 0 : i32
    return %c0_i32, %c0_i32_0 : i32, i32
  }
  func.func @transform_3(%arg0: i32) -> (i32, i32, i32) {
    %c0_i32 = arith.constant 0 : i32
    %c0_i32_0 = arith.constant 0 : i32
    %c0_i32_1 = arith.constant 0 : i32
    %c0_i32_2 = arith.constant 0 : i32
    return %c0_i32, %c0_i32_0, %c0_i32_1 : i32, i32, i32
  }
  func.func @transform_4(%arg0: i32) -> (i32, i32, i32) {
    %c0_i32 = arith.constant 0 : i32
    %c0_i32_0 = arith.constant 0 : i32
    %c0_i32_1 = arith.constant 0 : i32
    %c0_i32_2 = arith.constant 0 : i32
    return %c0_i32, %c0_i32_0, %c0_i32_1 : i32, i32, i32
  }
  func.func @transform_5(%arg0: i32) -> (i32, i32, i32, i32) {
    %c0_i32 = arith.constant 0 : i32
    %c0_i32_0 = arith.constant 0 : i32
    %c0_i32_1 = arith.constant 0 : i32
    %c0_i32_2 = arith.constant 0 : i32
    return %arg0, %c0_i32, %c0_i32_0, %c0_i32_1 : i32, i32, i32, i32
  }
}

</mosaic_0001>

<llo_original>
// kernel: feature_forward.1
$region0: #{feature_forward.1}
  #allocation0 [shape = 'u32[]', space=smem, size = 0x4, offset = 0x4, fixed_abs, tag = 'smem constant byte address 0x4 - core index']
  #allocation1 [shape = 'u32[144,128]{1,0:T(1,128)}', space=vmem, size = 0x12000, scoped, tag = 'internal scratch']
  #allocation2 [shape = 'f32[18,32,16]{2,1,0:T(8,128)}', space=vmem, size = 0x48000, scoped, tag = 'scratch operand']
  #allocation3 [shape = 'f32[18,32,32]{2,1,0:T(8,128)}', space=vmem, size = 0x48000, scoped, tag = 'scratch operand']
  #allocation4 [shape = 'f32[18,32,32]{2,1,0:T(8,128)}', space=vmem, size = 0x48000, scoped, tag = 'scratch operand']
  %s0 = inlined_call_operand.vmem [shape: f32[2,16,16,16], index: 0, kind: input, shape index: {}]
  %s1 = inlined_call_operand.vmem [shape: bf16[144,32], index: 1, kind: input, shape index: {}]
  %s2 = inlined_call_operand.vmem [shape: f32[1,32], index: 2, kind: input, shape index: {}]
  %s3 = inlined_call_operand.vmem [shape: bf16[4,288,32], index: 3, kind: input, shape index: {}]
  %s4 = inlined_call_operand.vmem [shape: f32[4,1,32], index: 4, kind: input, shape index: {}]
  %s5 = inlined_call_operand.hbm [shape: f32[2,16,16,32], index: 5, kind: output, shape index: {}]
  %s6 = sld [smem:[#allocation0]]
  $region53: #{feature_forward.1} parent=0
    _
  %s8 = ssub.s32 1, %s6
  %s9 = scalar_select 0, %s8, %s6
  $region1: #{feature_forward.1} parent=0
    #allocation5 [shape = 'u8[262144]{0}', space=vmem, size = 0x40000, scoped, tag = 'output window, operand 0']
    #allocation6 [shape = 's32[2]{0}', space=sflag, size = 0x8, scoped, tag = 'scoped memory for feature_forward.1']
    %10 = vsyncpa [#allocation6], 0
    %s11 = scalar_lea.sflag [#allocation6], 1
    %12 = vsyncpa %s11, 0
    loop: start=0, step=1, limit=4
    $region2: #{feature_forward.1} parent=1 // loop_pre_header
      _
    $region3: #{feature_forward.1} parent=1 // loop_header
      %s14 = sphi 0, %s18
      %p15 = scmp.ge.s32.totalorder %s14, 4
      %s24 = sphi 0, %s26
      %s27 = sphi 0, %s24
      %s28 = sphi 0, %s27
      %s44 = sphi 0, %s28
      %s48 = sphi 0, %s48
      %s50 = sphi 0, %s48
      %s51 = sphi 0, %s50
      %s65 = sphi 0, %s51
      %s69 = sphi 0, %s69
      %s71 = sphi 0, %s69
      %s72 = sphi 0, %s71
      %s86 = sphi 0, %s72
      %s90 = sphi 0, %s90
      %s92 = sphi 0, %s90
      %s93 = sphi 0, %s92
      %s107 = sphi 0, %s93
      %s111 = sphi 0, %s111
      %s113 = sphi 0, %s111
      %s114 = sphi 0, %s113
      %s128 = sphi 0, %s114
      %s134 = sphi 0, %s136
      %s137 = sphi 0, %s134
      %s138 = sphi 0, %s137
      %s154 = sphi 0, %s138
    $region4: #{feature_forward.1} parent=1 // loop_header_branch
      %17 = sbr.rel (%p15) target = $region8
    $region5: #{feature_forward.1} parent=1 // loop_body
      %s19 = ssub.s32 %s14, 1
      %s20 = ssub.s32 %s14, 2
      %s21 = sadd.s32 %s14, 1
      %s22 = ssub.s32 %s14, %s21
      %p23 = scmp.eq.s32.totalorder %s22, 0
      %s25 = sadd.s32 %s24, 1
      %s26 = scalar_select %p23, %s24, %s25
      %p29 = pneg %p23
      %p30 = scmp.eq.s32.totalorder %s14, 1
      %p31 = por %p29, %p30
      %p32 = scmp.ne.s32.totalorder %s24, %s27
      %p33 = scmp.eq.s32.totalorder %s14, 0
      %p34 = por %p32, %p33
      %p35 = scmp.ne.s32.totalorder %s24, %s27
      %p36 = scmp.eq.s32.totalorder %s19, 1
      %p37 = por %p35, %p36
      %p38 = scmp.ne.s32.totalorder %s27, %s28
      %p39 = scmp.eq.s32.totalorder %s19, 0
      %p40 = por %p38, %p39
      %p41 = scmp.ne.s32.totalorder %s27, %s28
      %p42 = scmp.eq.s32.totalorder %s20, 1
      %p43 = por %p41, %p42
      %p45 = scmp.ne.s32.totalorder %s28, %s44
      %p46 = scmp.eq.s32.totalorder %s20, 0
      %p47 = por %p45, %p46
      %s49 = sadd.s32 %s48, 1
      %p52 = scmp.eq.s32.totalorder %s14, 1
      %p53 = scmp.ne.s32.totalorder %s48, %s50
      %p54 = scmp.eq.s32.totalorder %s14, 0
      %p55 = por %p53, %p54
      %p56 = scmp.ne.s32.totalorder %s48, %s50
      %p57 = scmp.eq.s32.totalorder %s19, 1
      %p58 = por %p56, %p57
      %p59 = scmp.ne.s32.totalorder %s50, %s51
      %p60 = scmp.eq.s32.totalorder %s19, 0
      %p61 = por %p59, %p60
      %p62 = scmp.ne.s32.totalorder %s50, %s51
      %p63 = scmp.eq.s32.totalorder %s20, 1
      %p64 = por %p62, %p63
      %p66 = scmp.ne.s32.totalorder %s51, %s65
      %p67 = scmp.eq.s32.totalorder %s20, 0
      %p68 = por %p66, %p67
      %s70 = sadd.s32 %s69, 1
      %p73 = scmp.eq.s32.totalorder %s14, 1
      %p74 = scmp.ne.s32.totalorder %s69, %s71
      %p75 = scmp.eq.s32.totalorder %s14, 0
      %p76 = por %p74, %p75
      %p77 = scmp.ne.s32.totalorder %s69, %s71
      %p78 = scmp.eq.s32.totalorder %s19, 1
      %p79 = por %p77, %p78
      %p80 = scmp.ne.s32.totalorder %s71, %s72
      %p81 = scmp.eq.s32.totalorder %s19, 0
      %p82 = por %p80, %p81
      %p83 = scmp.ne.s32.totalorder %s71, %s72
      %p84 = scmp.eq.s32.totalorder %s20, 1
      %p85 = por %p83, %p84
      %p87 = scmp.ne.s32.totalorder %s72, %s86
      %p88 = scmp.eq.s32.totalorder %s20, 0
      %p89 = por %p87, %p88
      %s91 = sadd.s32 %s90, 1
      %p94 = scmp.eq.s32.totalorder %s14, 1
      %p95 = scmp.ne.s32.totalorder %s90, %s92
      %p96 = scmp.eq.s32.totalorder %s14, 0
      %p97 = por %p95, %p96
      %p98 = scmp.ne.s32.totalorder %s90, %s92
      %p99 = scmp.eq.s32.totalorder %s19, 1
      %p100 = por %p98, %p99
      %p101 = scmp.ne.s32.totalorder %s92, %s93
      %p102 = scmp.eq.s32.totalorder %s19, 0
      %p103 = por %p101, %p102
      %p104 = scmp.ne.s32.totalorder %s92, %s93
      %p105 = scmp.eq.s32.totalorder %s20, 1
      %p106 = por %p104, %p105
      %p108 = scmp.ne.s32.totalorder %s93, %s107
      %p109 = scmp.eq.s32.totalorder %s20, 0
      %p110 = por %p108, %p109
      %s112 = sadd.s32 %s111, 1
      %p115 = scmp.eq.s32.totalorder %s14, 1
      %p116 = scmp.ne.s32.totalorder %s111, %s113
      %p117 = scmp.eq.s32.totalorder %s14, 0
      %p118 = por %p116, %p117
      %p119 = scmp.ne.s32.totalorder %s111, %s113
      %p120 = scmp.eq.s32.totalorder %s19, 1
      %p121 = por %p119, %p120
      %p122 = scmp.ne.s32.totalorder %s113, %s114
      %p123 = scmp.eq.s32.totalorder %s19, 0
      %p124 = por %p122, %p123
      %p125 = scmp.ne.s32.totalorder %s113, %s114
      %p126 = scmp.eq.s32.totalorder %s20, 1
      %p127 = por %p125, %p126
      %p129 = scmp.ne.s32.totalorder %s114, %s128
      %p130 = scmp.eq.s32.totalorder %s20, 0
      %p131 = por %p129, %p130
      %s132 = ssub.s32 %s14, %s21
      %p133 = scmp.eq.s32.totalorder %s132, 0
      %s135 = sadd.s32 %s134, 1
      %s136 = scalar_select %p133, %s134, %s135
      %p139 = pneg %p133
      %p140 = scmp.eq.s32.totalorder %s14, 1
      %p141 = por %p139, %p140
      %p142 = scmp.ne.s32.totalorder %s134, %s137
      %p143 = scmp.eq.s32.totalorder %s14, 0
      %p144 = por %p142, %p143
      %p145 = scmp.ne.s32.totalorder %s134, %s137
      %p146 = scmp.eq.s32.totalorder %s19, 1
      %p147 = por %p145, %p146
      %p148 = scmp.ne.s32.totalorder %s137, %s138
      %p149 = scmp.eq.s32.totalorder %s19, 0
      %p150 = por %p148, %p149
      %p151 = scmp.ne.s32.totalorder %s137, %s138
      %p152 = scmp.eq.s32.totalorder %s20, 1
      %p153 = por %p151, %p152
      %p155 = scmp.ne.s32.totalorder %s138, %s154
      %p156 = scmp.eq.s32.totalorder %s20, 0
      %p157 = por %p155, %p156
      %p158 = scmp.le.s32.totalorder 1, %s14
      %p159 = scmp.lt.s32.totalorder %s14, 3
      %p160 = pnand %p158, %p159
      %p161 = pneg %p160
      // Predicated region
      $region9: #{feature_forward.1} parent=5 // pred_check
        _
      $region10: #{feature_forward.1} parent=5 // pred_check_branch
        %163 = sbr.rel (%p160) target = $region12
      $region11: #{feature_forward.1} parent=5 // pred_region
        %s164 = ssub.s32 %s14, 1
        // Predicated region
        $region13: #{feature_forward.1} parent=11 // pred_check
          %p165 = pneg %p61
        $region14: #{feature_forward.1} parent=11 // pred_check_branch
          %167 = sbr.rel (%p165) target = $region16
        $region15: #{feature_forward.1} parent=11 // pred_region
          _
        $region16: #{feature_forward.1} parent=11 // pred_fallthru
          _
        // Predicated region
        $region17: #{feature_forward.1} parent=11 // pred_check
          %p168 = pneg %p82
        $region18: #{feature_forward.1} parent=11 // pred_check_branch
          %170 = sbr.rel (%p168) target = $region20
        $region19: #{feature_forward.1} parent=11 // pred_region
          _
        $region20: #{feature_forward.1} parent=11 // pred_fallthru
          _
        // Predicated region
        $region21: #{feature_forward.1} parent=11 // pred_check
          %p171 = pneg %p103
        $region22: #{feature_forward.1} parent=11 // pred_check_branch
          %173 = sbr.rel (%p171) target = $region24
        $region23: #{feature_forward.1} parent=11 // pred_region
          _
        $region24: #{feature_forward.1} parent=11 // pred_fallthru
          _
        // Predicated region
        $region25: #{feature_forward.1} parent=11 // pred_check
          %p174 = pneg %p124
        $region26: #{feature_forward.1} parent=11 // pred_check_branch
          %176 = sbr.rel (%p174) target = $region28
        $region27: #{feature_forward.1} parent=11 // pred_region
          _
        $region28: #{feature_forward.1} parent=11 // pred_fallthru
          _
      $region12: #{feature_forward.1} parent=5 // pred_fallthru
        _
      %p177 = scmp.lt.s32.totalorder %s14, 2
      // Predicated region
      $region29: #{feature_forward.1} parent=5 // pred_check
        %p178 = pneg %p177
      $region30: #{feature_forward.1} parent=5 // pred_check_branch
        %180 = sbr.rel (%p178) target = $region32
      $region31: #{feature_forward.1} parent=5 // pred_region
        // Predicated region
        $region33: #{feature_forward.1} parent=31 // pred_check
          %p181 = pneg %p34
        $region34: #{feature_forward.1} parent=31 // pred_check_branch
          %183 = sbr.rel (%p181) target = $region36
        $region35: #{feature_forward.1} parent=31 // pred_region
          %p184 = scmp.lt.s32.totalorder %s14, 1
          %s185 = scalar_select %p184, %s14, 1
          %s186 = smul.addr %s185, 32
          %s187 = smul.addr %s186, 8
          %s188 = scalar_lea.vmem %s0, %s187
        $region36: #{feature_forward.1} parent=31 // pred_fallthru
          _
      $region32: #{feature_forward.1} parent=5 // pred_fallthru
        _
      %p189 = scmp.le.s32.totalorder 1, %s14
      %p190 = scmp.lt.s32.totalorder %s14, 3
      %p191 = pnand %p189, %p190
      %p192 = pneg %p191
      // Predicated region
      $region37: #{feature_forward.1} parent=5 // pred_check
        _
      $region38: #{feature_forward.1} parent=5 // pred_check_branch
        %194 = sbr.rel (%p191) target = $region40
      $region39: #{feature_forward.1} parent=5 // pred_region
        %s195 = ssub.s32 %s14, 1
        %p196 = scmp.lt.s32.totalorder %s19, 1
        %s197 = scalar_select %p196, %s19, 1
        %s198 = smul.addr %s197, 32
        %s199 = smul.addr %s198, 8
        %s200 = scalar_lea.vmem %s0, %s199
        %p201 = pneg %p40
        %p202 = pneg %p37
        %p203 = pneg %p61
        %p204 = pneg %p58
        %p205 = pneg %p82
        %p206 = pneg %p79
        %p207 = pneg %p103
        %p208 = pneg %p100
        %p209 = pneg %p124
        %p210 = pneg %p121
        %p211 = pneg %p150
        %p212 = pneg %p147
        %s213 = sand.u32 %s137, 1
        %s214 = scalar_lea.sflag [#allocation6], %s213
        %s215 = sand.u32 %s137, 1
        %s216 = smul.addr %s215, 256
        %s217 = scalar_lea.vmem [#allocation5], %s216
        %p218 = scmp.lt.s32.totalorder %s19, 1
        %s219 = scalar_select %p218, %s19, 1
        %s220 = smul.addr %s219, 32
        %s221 = smul.addr %s220, 8
        %s222 = scalar_lea.vmem %s0, %s221
        %vm224 = vcmask 130048
        %225 = vst.msk [vmem:[#allocation2] sm:$0xff] %vm224, 0.0
        %226 = vst.msk [vmem:[#allocation2 + $0x8] sm:$0xff] %vm224, 0.0
        %227 = vst.msk [vmem:[#allocation2 + $0x10] sm:$0xff] %vm224, 0.0
        %228 = vst.msk [vmem:[#allocation2 + $0x18] sm:$0xff] %vm224, 0.0
        %s229 = scalar_lea.vmem [#allocation2], 544
        %230 = vst.msk [vmem:[%s229] sm:$0xff] %vm224, 0.0
        %231 = vst.msk [vmem:[%s229 + $0x8] sm:$0xff] %vm224, 0.0
        %232 = vst.msk [vmem:[%s229 + $0x10] sm:$0xff] %vm224, 0.0
        %233 = vst.msk [vmem:[%s229 + $0x18] sm:$0xff] %vm224, 0.0
        %s234 = scalar_lea.vmem [#allocation2], 32
        %vm235 = vcmask 122880
        %236 = vst.msk [vmem:[%s234 + $0x7] sm:$0x1] %vm235, 0.0
        %237 = vst.msk [vmem:[%s234 + $0x27] sm:$0x1] %vm235, 0.0
        %238 = vst.msk [vmem:[%s234 + $0x47] sm:$0x1] %vm235, 0.0
        %239 = vst.msk [vmem:[%s234 + $0x67] sm:$0x1] %vm235, 0.0
        %240 = vst.msk [vmem:[%s234 + $0x87] sm:$0x1] %vm235, 0.0
        %241 = vst.msk [vmem:[%s234 + $0xa7] sm:$0x1] %vm235, 0.0
        %242 = vst.msk [vmem:[%s234 + $0xc7] sm:$0x1] %vm235, 0.0
        %243 = vst.msk [vmem:[%s234 + $0xe7] sm:$0x1] %vm235, 0.0
        %244 = vst.msk [vmem:[%s234 + $0x107] sm:$0x1] %vm235, 0.0
        %245 = vst.msk [vmem:[%s234 + $0x127] sm:$0x1] %vm235, 0.0
        %246 = vst.msk [vmem:[%s234 + $0x147] sm:$0x1] %vm235, 0.0
        %247 = vst.msk [vmem:[%s234 + $0x167] sm:$0x1] %vm235, 0.0
        %248 = vst.msk [vmem:[%s234 + $0x187] sm:$0x1] %vm235, 0.0
        %249 = vst.msk [vmem:[%s234 + $0x1a7] sm:$0x1] %vm235, 0.0
        %250 = vst.msk [vmem:[%s234 + $0x1c7] sm:$0x1] %vm235, 0.0
        %251 = vst.msk [vmem:[%s234 + $0x1e7] sm:$0x1] %vm235, 0.0
        %252 = vst.msk [vmem:[%s234 + $0x18] sm:$0x1] %vm235, 0.0
        %253 = vst.msk [vmem:[%s234 + $0x38] sm:$0x1] %vm235, 0.0
        %254 = vst.msk [vmem:[%s234 + $0x58] sm:$0x1] %vm235, 0.0
        %255 = vst.msk [vmem:[%s234 + $0x78] sm:$0x1] %vm235, 0.0
        %256 = vst.msk [vmem:[%s234 + $0x98] sm:$0x1] %vm235, 0.0
        %257 = vst.msk [vmem:[%s234 + $0xb8] sm:$0x1] %vm235, 0.0
        %258 = vst.msk [vmem:[%s234 + $0xd8] sm:$0x1] %vm235, 0.0
        %259 = vst.msk [vmem:[%s234 + $0xf8] sm:$0x1] %vm235, 0.0
        %260 = vst.msk [vmem:[%s234 + $0x118] sm:$0x1] %vm235, 0.0
        %261 = vst.msk [vmem:[%s234 + $0x138] sm:$0x1] %vm235, 0.0
        %262 = vst.msk [vmem:[%s234 + $0x158] sm:$0x1] %vm235, 0.0
        %263 = vst.msk [vmem:[%s234 + $0x178] sm:$0x1] %vm235, 0.0
        %264 = vst.msk [vmem:[%s234 + $0x198] sm:$0x1] %vm235, 0.0
        %265 = vst.msk [vmem:[%s234 + $0x1b8] sm:$0x1] %vm235, 0.0
        %266 = vst.msk [vmem:[%s234 + $0x1d8] sm:$0x1] %vm235, 0.0
        %267 = vst.msk [vmem:[%s234 + $0x1f8] sm:$0x1] %vm235, 0.0
        %vm268 = vcmask 261120
        %269 = vst.msk [vmem:[#allocation3] sm:$0xff] %vm268, 0.0
        %270 = vst.msk [vmem:[#allocation3 + $0x8] sm:$0xff] %vm268, 0.0
        %271 = vst.msk [vmem:[#allocation3 + $0x10] sm:$0xff] %vm268, 0.0
        %272 = vst.msk [vmem:[#allocation3 + $0x18] sm:$0xff] %vm268, 0.0
        %s273 = scalar_lea.vmem [#allocation3], 544
        %274 = vst.msk [vmem:[%s273] sm:$0xff] %vm268, 0.0
        %275 = vst.msk [vmem:[%s273 + $0x8] sm:$0xff] %vm268, 0.0
        %276 = vst.msk [vmem:[%s273 + $0x10] sm:$0xff] %vm268, 0.0
        %277 = vst.msk [vmem:[%s273 + $0x18] sm:$0xff] %vm268, 0.0
        %s278 = scalar_lea.vmem [#allocation3], 32
        %vm279 = vcmask 253952
        %280 = vst.msk [vmem:[%s278 + $0x7] sm:$0x1] %vm279, 0.0
        %281 = vst.msk [vmem:[%s278 + $0x27] sm:$0x1] %vm279, 0.0
        %282 = vst.msk [vmem:[%s278 + $0x47] sm:$0x1] %vm279, 0.0
        %283 = vst.msk [vmem:[%s278 + $0x67] sm:$0x1] %vm279, 0.0
        %284 = vst.msk [vmem:[%s278 + $0x87] sm:$0x1] %vm279, 0.0
        %285 = vst.msk [vmem:[%s278 + $0xa7] sm:$0x1] %vm279, 0.0
        %286 = vst.msk [vmem:[%s278 + $0xc7] sm:$0x1] %vm279, 0.0
        %287 = vst.msk [vmem:[%s278 + $0xe7] sm:$0x1] %vm279, 0.0
        %288 = vst.msk [vmem:[%s278 + $0x107] sm:$0x1] %vm279, 0.0
        %289 = vst.msk [vmem:[%s278 + $0x127] sm:$0x1] %vm279, 0.0
        %290 = vst.msk [vmem:[%s278 + $0x147] sm:$0x1] %vm279, 0.0
        %291 = vst.msk [vmem:[%s278 + $0x167] sm:$0x1] %vm279, 0.0
        %292 = vst.msk [vmem:[%s278 + $0x187] sm:$0x1] %vm279, 0.0
        %293 = vst.msk [vmem:[%s278 + $0x1a7] sm:$0x1] %vm279, 0.0
        %294 = vst.msk [vmem:[%s278 + $0x1c7] sm:$0x1] %vm279, 0.0
        %295 = vst.msk [vmem:[%s278 + $0x1e7] sm:$0x1] %vm279, 0.0
        %296 = vst.msk [vmem:[%s278 + $0x18] sm:$0x1] %vm279, 0.0
        %297 = vst.msk [vmem:[%s278 + $0x38] sm:$0x1] %vm279, 0.0
        %298 = vst.msk [vmem:[%s278 + $0x58] sm:$0x1] %vm279, 0.0
        %299 = vst.msk [vmem:[%s278 + $0x78] sm:$0x1] %vm279, 0.0
        %300 = vst.msk [vmem:[%s278 + $0x98] sm:$0x1] %vm279, 0.0
        %301 = vst.msk [vmem:[%s278 + $0xb8] sm:$0x1] %vm279, 0.0
        %302 = vst.msk [vmem:[%s278 + $0xd8] sm:$0x1] %vm279, 0.0
        %303 = vst.msk [vmem:[%s278 + $0xf8] sm:$0x1] %vm279, 0.0
        %304 = vst.msk [vmem:[%s278 + $0x118] sm:$0x1] %vm279, 0.0
        %305 = vst.msk [vmem:[%s278 + $0x138] sm:$0x1] %vm279, 0.0
        %306 = vst.msk [vmem:[%s278 + $0x158] sm:$0x1] %vm279, 0.0
        %307 = vst.msk [vmem:[%s278 + $0x178] sm:$0x1] %vm279, 0.0
        %308 = vst.msk [vmem:[%s278 + $0x198] sm:$0x1] %vm279, 0.0
        %309 = vst.msk [vmem:[%s278 + $0x1b8] sm:$0x1] %vm279, 0.0
        %310 = vst.msk [vmem:[%s278 + $0x1d8] sm:$0x1] %vm279, 0.0
        %311 = vst.msk [vmem:[%s278 + $0x1f8] sm:$0x1] %vm279, 0.0
        %312 = vst.msk [vmem:[#allocation4] sm:$0xff] %vm268, 0.0
        %313 = vst.msk [vmem:[#allocation4 + $0x8] sm:$0xff] %vm268, 0.0
        %314 = vst.msk [vmem:[#allocation4 + $0x10] sm:$0xff] %vm268, 0.0
        %315 = vst.msk [vmem:[#allocation4 + $0x18] sm:$0xff] %vm268, 0.0
        %s316 = scalar_lea.vmem [#allocation4], 544
        %317 = vst.msk [vmem:[%s316] sm:$0xff] %vm268, 0.0
        %318 = vst.msk [vmem:[%s316 + $0x8] sm:$0xff] %vm268, 0.0
        %319 = vst.msk [vmem:[%s316 + $0x10] sm:$0xff] %vm268, 0.0
        %320 = vst.msk [vmem:[%s316 + $0x18] sm:$0xff] %vm268, 0.0
        %s321 = scalar_lea.vmem [#allocation4], 32
        %322 = vst.msk [vmem:[%s321 + $0x7] sm:$0x1] %vm279, 0.0
        %323 = vst.msk [vmem:[%s321 + $0x27] sm:$0x1] %vm279, 0.0
        %324 = vst.msk [vmem:[%s321 + $0x47] sm:$0x1] %vm279, 0.0
        %325 = vst.msk [vmem:[%s321 + $0x67] sm:$0x1] %vm279, 0.0
        %326 = vst.msk [vmem:[%s321 + $0x87] sm:$0x1] %vm279, 0.0
        %327 = vst.msk [vmem:[%s321 + $0xa7] sm:$0x1] %vm279, 0.0
        %328 = vst.msk [vmem:[%s321 + $0xc7] sm:$0x1] %vm279, 0.0
        %329 = vst.msk [vmem:[%s321 + $0xe7] sm:$0x1] %vm279, 0.0
        %330 = vst.msk [vmem:[%s321 + $0x107] sm:$0x1] %vm279, 0.0
        %331 = vst.msk [vmem:[%s321 + $0x127] sm:$0x1] %vm279, 0.0
        %332 = vst.msk [vmem:[%s321 + $0x147] sm:$0x1] %vm279, 0.0
        %333 = vst.msk [vmem:[%s321 + $0x167] sm:$0x1] %vm279, 0.0
        %334 = vst.msk [vmem:[%s321 + $0x187] sm:$0x1] %vm279, 0.0
        %335 = vst.msk [vmem:[%s321 + $0x1a7] sm:$0x1] %vm279, 0.0
        %336 = vst.msk [vmem:[%s321 + $0x1c7] sm:$0x1] %vm279, 0.0
        %337 = vst.msk [vmem:[%s321 + $0x1e7] sm:$0x1] %vm279, 0.0
        %338 = vst.msk [vmem:[%s321 + $0x18] sm:$0x1] %vm279, 0.0
        %339 = vst.msk [vmem:[%s321 + $0x38] sm:$0x1] %vm279, 0.0
        %340 = vst.msk [vmem:[%s321 + $0x58] sm:$0x1] %vm279, 0.0
        %341 = vst.msk [vmem:[%s321 + $0x78] sm:$0x1] %vm279, 0.0
        %342 = vst.msk [vmem:[%s321 + $0x98] sm:$0x1] %vm279, 0.0
        %343 = vst.msk [vmem:[%s321 + $0xb8] sm:$0x1] %vm279, 0.0
        %344 = vst.msk [vmem:[%s321 + $0xd8] sm:$0x1] %vm279, 0.0
        %345 = vst.msk [vmem:[%s321 + $0xf8] sm:$0x1] %vm279, 0.0
        %346 = vst.msk [vmem:[%s321 + $0x118] sm:$0x1] %vm279, 0.0
        %347 = vst.msk [vmem:[%s321 + $0x138] sm:$0x1] %vm279, 0.0
        %348 = vst.msk [vmem:[%s321 + $0x158] sm:$0x1] %vm279, 0.0
        %349 = vst.msk [vmem:[%s321 + $0x178] sm:$0x1] %vm279, 0.0
        %350 = vst.msk [vmem:[%s321 + $0x198] sm:$0x1] %vm279, 0.0
        %351 = vst.msk [vmem:[%s321 + $0x1b8] sm:$0x1] %vm279, 0.0
        %352 = vst.msk [vmem:[%s321 + $0x1d8] sm:$0x1] %vm279, 0.0
        %353 = vst.msk [vmem:[%s321 + $0x1f8] sm:$0x1] %vm279, 0.0
        %v354 = vld [vmem:[%s222] sm:$0xff]
        %v355 = vld [vmem:[%s222 + $0x8] sm:$0xff]
        %v356 = vld [vmem:[%s222 + $0x10] sm:$0xff]
        %v357 = vld [vmem:[%s222 + $0x18] sm:$0xff]
        %v358 = vld [vmem:[%s222 + $0x20] sm:$0xff]
        %v359 = vld [vmem:[%s222 + $0x28] sm:$0xff]
        %v360 = vld [vmem:[%s222 + $0x30] sm:$0xff]
        %v361 = vld [vmem:[%s222 + $0x38] sm:$0xff]
        %v362 = vld [vmem:[%s222 + $0x40] sm:$0xff]
        %v363 = vld [vmem:[%s222 + $0x48] sm:$0xff]
        %v364 = vld [vmem:[%s222 + $0x50] sm:$0xff]
        %v365 = vld [vmem:[%s222 + $0x58] sm:$0xff]
        %v366 = vld [vmem:[%s222 + $0x60] sm:$0xff]
        %v367 = vld [vmem:[%s222 + $0x68] sm:$0xff]
        %v368 = vld [vmem:[%s222 + $0x70] sm:$0xff]
        %v369 = vld [vmem:[%s222 + $0x78] sm:$0xff]
        %v370 = vld [vmem:[%s222 + $0x80] sm:$0xff]
        %v371 = vld [vmem:[%s222 + $0x88] sm:$0xff]
        %v372 = vld [vmem:[%s222 + $0x90] sm:$0xff]
        %v373 = vld [vmem:[%s222 + $0x98] sm:$0xff]
        %v374 = vld [vmem:[%s222 + $0xa0] sm:$0xff]
        %v375 = vld [vmem:[%s222 + $0xa8] sm:$0xff]
        %v376 = vld [vmem:[%s222 + $0xb0] sm:$0xff]
        %v377 = vld [vmem:[%s222 + $0xb8] sm:$0xff]
        %v378 = vld [vmem:[%s222 + $0xc0] sm:$0xff]
        %v379 = vld [vmem:[%s222 + $0xc8] sm:$0xff]
        %v380 = vld [vmem:[%s222 + $0xd0] sm:$0xff]
        %v381 = vld [vmem:[%s222 + $0xd8] sm:$0xff]
        %v382 = vld [vmem:[%s222 + $0xe0] sm:$0xff]
        %v383 = vld [vmem:[%s222 + $0xe8] sm:$0xff]
        %v384 = vld [vmem:[%s222 + $0xf0] sm:$0xff]
        %v385 = vld [vmem:[%s222 + $0xf8] sm:$0xff]
        %386 = vst.msk [vmem:[%s234 + $0x8] sm:$0xff] %vm224, %v354
        %387 = vst.msk [vmem:[%s234 + $0x10] sm:$0xff] %vm224, %v355
        %388 = vst.msk [vmem:[%s234 + $0x28] sm:$0xff] %vm224, %v356
        %389 = vst.msk [vmem:[%s234 + $0x30] sm:$0xff] %vm224, %v357
        %390 = vst.msk [vmem:[%s234 + $0x48] sm:$0xff] %vm224, %v358
        %391 = vst.msk [vmem:[%s234 + $0x50] sm:$0xff] %vm224, %v359
        %392 = vst.msk [vmem:[%s234 + $0x68] sm:$0xff] %vm224, %v360
        %393 = vst.msk [vmem:[%s234 + $0x70] sm:$0xff] %vm224, %v361
        %394 = vst.msk [vmem:[%s234 + $0x88] sm:$0xff] %vm224, %v362
        %395 = vst.msk [vmem:[%s234 + $0x90] sm:$0xff] %vm224, %v363
        %396 = vst.msk [vmem:[%s234 + $0xa8] sm:$0xff] %vm224, %v364
        %397 = vst.msk [vmem:[%s234 + $0xb0] sm:$0xff] %vm224, %v365
        %398 = vst.msk [vmem:[%s234 + $0xc8] sm:$0xff] %vm224, %v366
        %399 = vst.msk [vmem:[%s234 + $0xd0] sm:$0xff] %vm224, %v367
        %400 = vst.msk [vmem:[%s234 + $0xe8] sm:$0xff] %vm224, %v368
        %401 = vst.msk [vmem:[%s234 + $0xf0] sm:$0xff] %vm224, %v369
        %402 = vst.msk [vmem:[%s234 + $0x108] sm:$0xff] %vm224, %v370
        %403 = vst.msk [vmem:[%s234 + $0x110] sm:$0xff] %vm224, %v371
        %404 = vst.msk [vmem:[%s234 + $0x128] sm:$0xff] %vm224, %v372
        %405 = vst.msk [vmem:[%s234 + $0x130] sm:$0xff] %vm224, %v373
        %406 = vst.msk [vmem:[%s234 + $0x148] sm:$0xff] %vm224, %v374
        %407 = vst.msk [vmem:[%s234 + $0x150] sm:$0xff] %vm224, %v375
        %408 = vst.msk [vmem:[%s234 + $0x168] sm:$0xff] %vm224, %v376
        %409 = vst.msk [vmem:[%s234 + $0x170] sm:$0xff] %vm224, %v377
        %410 = vst.msk [vmem:[%s234 + $0x188] sm:$0xff] %vm224, %v378
        %411 = vst.msk [vmem:[%s234 + $0x190] sm:$0xff] %vm224, %v379
        %412 = vst.msk [vmem:[%s234 + $0x1a8] sm:$0xff] %vm224, %v380
        %413 = vst.msk [vmem:[%s234 + $0x1b0] sm:$0xff] %vm224, %v381
        %414 = vst.msk [vmem:[%s234 + $0x1c8] sm:$0xff] %vm224, %v382
        %415 = vst.msk [vmem:[%s234 + $0x1d0] sm:$0xff] %vm224, %v383
        %416 = vst.msk [vmem:[%s234 + $0x1e8] sm:$0xff] %vm224, %v384
        %417 = vst.msk [vmem:[%s234 + $0x1f0] sm:$0xff] %vm224, %v385
        %v418 = vld [vmem:[%s1] sm:$0xf]
        %v419 = vld [vmem:[%s1 + $0x4] sm:$0xf]
        %v420 = vld [vmem:[%s1 + $0x8] sm:$0xf]
        %v421 = vld [vmem:[%s1 + $0xc] sm:$0xf]
        %v422 = vld [vmem:[%s1 + $0x10] sm:$0xf]
        %v423 = vld [vmem:[%s1 + $0x14] sm:$0xf]
        %v424 = vld [vmem:[%s1 + $0x18] sm:$0xf]
        %v425 = vld [vmem:[%s1 + $0x1c] sm:$0xf]
        %v426 = vld [vmem:[%s1 + $0x20] sm:$0xf]
        %v427 = vld [vmem:[%s1 + $0x24] sm:$0xf]
        %v428 = vld [vmem:[%s1 + $0x28] sm:$0xf]
        %v429 = vld [vmem:[%s1 + $0x2c] sm:$0xf]
        %v430 = vld [vmem:[%s1 + $0x30] sm:$0xf]
        %v431 = vld [vmem:[%s1 + $0x34] sm:$0xf]
        %v432 = vld [vmem:[%s1 + $0x38] sm:$0xf]
        %v433 = vld [vmem:[%s1 + $0x3c] sm:$0xf]
        %v434 = vld [vmem:[%s1 + $0x40] sm:$0xf]
        %v435 = vld [vmem:[%s1 + $0x44] sm:$0xf]
        %v436 = vld [vmem:[%s2] sm:$0x1]
        %v437 = vld [vmem:[#allocation2 + $0x7] sm:$0xff]
        %v438 = vld [vmem:[#allocation2 + $0xf] sm:$0xff]
        %v439 = vld [vmem:[#allocation2 + $0x27] sm:$0xff]
        %v440 = vld [vmem:[#allocation2 + $0x2f] sm:$0xff]
        %v441 = vld [vmem:[#allocation2 + $0x47] sm:$0xff]
        %v442 = vld [vmem:[#allocation2 + $0x4f] sm:$0xff]
        %v443 = vld [vmem:[#allocation2 + $0x67] sm:$0xff]
        %v444 = vld [vmem:[#allocation2 + $0x6f] sm:$0xff]
        %v445 = vld [vmem:[#allocation2 + $0x87] sm:$0xff]
        %v446 = vld [vmem:[#allocation2 + $0x8f] sm:$0xff]
        %v447 = vld [vmem:[#allocation2 + $0xa7] sm:$0xff]
        %v448 = vld [vmem:[#allocation2 + $0xaf] sm:$0xff]
        %v449 = vld [vmem:[#allocation2 + $0xc7] sm:$0xff]
        %v450 = vld [vmem:[#allocation2 + $0xcf] sm:$0xff]
        %v451 = vld [vmem:[#allocation2 + $0xe7] sm:$0xff]
        %v452 = vld [vmem:[#allocation2 + $0xef] sm:$0xff]
        %v453 = vld [vmem:[#allocation2 + $0x107] sm:$0xff]
        %v454 = vld [vmem:[#allocation2 + $0x10f] sm:$0xff]
        %v455 = vld [vmem:[#allocation2 + $0x127] sm:$0xff]
        %v456 = vld [vmem:[#allocation2 + $0x12f] sm:$0xff]
        %v457 = vld [vmem:[#allocation2 + $0x147] sm:$0xff]
        %v458 = vld [vmem:[#allocation2 + $0x14f] sm:$0xff]
        %v459 = vld [vmem:[#allocation2 + $0x167] sm:$0xff]
        %v460 = vld [vmem:[#allocation2 + $0x16f] sm:$0xff]
        %v461 = vld [vmem:[#allocation2 + $0x187] sm:$0xff]
        %v462 = vld [vmem:[#allocation2 + $0x18f] sm:$0xff]
        %v463 = vld [vmem:[#allocation2 + $0x1a7] sm:$0xff]
        %v464 = vld [vmem:[#allocation2 + $0x1af] sm:$0xff]
        %v465 = vld [vmem:[#allocation2 + $0x1c7] sm:$0xff]
        %v466 = vld [vmem:[#allocation2 + $0x1cf] sm:$0xff]
        %v467 = vld [vmem:[#allocation2 + $0x1e7] sm:$0xff]
        %v468 = vld [vmem:[#allocation2 + $0x1ef] sm:$0xff]
        %v469 = vpack.c.bf16 %v438, %v437
        %v470 = vpack.c.bf16 %v440, %v439
        %v471 = vpack.c.bf16 %v442, %v441
        %v472 = vpack.c.bf16 %v444, %v443
        %v473 = vpack.c.bf16 %v446, %v445
        %v474 = vpack.c.bf16 %v448, %v447
        %v475 = vpack.c.bf16 %v450, %v449
        %v476 = vpack.c.bf16 %v452, %v451
        %v477 = vpack.c.bf16 %v454, %v453
        %v478 = vpack.c.bf16 %v456, %v455
        %v479 = vpack.c.bf16 %v458, %v457
        %v480 = vpack.c.bf16 %v460, %v459
        %v481 = vpack.c.bf16 %v462, %v461
        %v482 = vpack.c.bf16 %v464, %v463
        %v483 = vpack.c.bf16 %v466, %v465
        %v484 = vpack.c.bf16 %v468, %v467
        %v485 = vld [vmem:[#allocation2 + $0x8] sm:$0xff]
        %v486 = vld [vmem:[#allocation2 + $0x10] sm:$0xff]
        %v487 = vld [vmem:[#allocation2 + $0x28] sm:$0xff]
        %v488 = vld [vmem:[#allocation2 + $0x30] sm:$0xff]
        %v489 = vld [vmem:[#allocation2 + $0x48] sm:$0xff]
        %v490 = vld [vmem:[#allocation2 + $0x50] sm:$0xff]
        %v491 = vld [vmem:[#allocation2 + $0x68] sm:$0xff]
        %v492 = vld [vmem:[#allocation2 + $0x70] sm:$0xff]
        %v493 = vld [vmem:[#allocation2 + $0x88] sm:$0xff]
        %v494 = vld [vmem:[#allocation2 + $0x90] sm:$0xff]
        %v495 = vld [vmem:[#allocation2 + $0xa8] sm:$0xff]
        %v496 = vld [vmem:[#allocation2 + $0xb0] sm:$0xff]
        %v497 = vld [vmem:[#allocation2 + $0xc8] sm:$0xff]
        %v498 = vld [vmem:[#allocation2 + $0xd0] sm:$0xff]
        %v499 = vld [vmem:[#allocation2 + $0xe8] sm:$0xff]
        %v500 = vld [vmem:[#allocation2 + $0xf0] sm:$0xff]
        %v501 = vld [vmem:[#allocation2 + $0x108] sm:$0xff]
        %v502 = vld [vmem:[#allocation2 + $0x110] sm:$0xff]
        %v503 = vld [vmem:[#allocation2 + $0x128] sm:$0xff]
        %v504 = vld [vmem:[#allocation2 + $0x130] sm:$0xff]
        %v505 = vld [vmem:[#allocation2 + $0x148] sm:$0xff]
        %v506 = vld [vmem:[#allocation2 + $0x150] sm:$0xff]
        %v507 = vld [vmem:[#allocation2 + $0x168] sm:$0xff]
        %v508 = vld [vmem:[#allocation2 + $0x170] sm:$0xff]
        %v509 = vld [vmem:[#allocation2 + $0x188] sm:$0xff]
        %v510 = vld [vmem:[#allocation2 + $0x190] sm:$0xff]
        %v511 = vld [vmem:[#allocation2 + $0x1a8] sm:$0xff]
        %v512 = vld [vmem:[#allocation2 + $0x1b0] sm:$0xff]
        %v513 = vld [vmem:[#allocation2 + $0x1c8] sm:$0xff]
        %v514 = vld [vmem:[#allocation2 + $0x1d0] sm:$0xff]
        %v515 = vld [vmem:[#allocation2 + $0x1e8] sm:$0xff]
        %v516 = vld [vmem:[#allocation2 + $0x1f0] sm:$0xff]
        %v517 = vpack.c.bf16 %v486, %v485
        %v518 = vpack.c.bf16 %v488, %v487
        %v519 = vpack.c.bf16 %v490, %v489
        %v520 = vpack.c.bf16 %v492, %v491
        %v521 = vpack.c.bf16 %v494, %v493
        %v522 = vpack.c.bf16 %v496, %v495
        %v523 = vpack.c.bf16 %v498, %v497
        %v524 = vpack.c.bf16 %v500, %v499
        %v525 = vpack.c.bf16 %v502, %v501
        %v526 = vpack.c.bf16 %v504, %v503
        %v527 = vpack.c.bf16 %v506, %v505
        %v528 = vpack.c.bf16 %v508, %v507
        %v529 = vpack.c.bf16 %v510, %v509
        %v530 = vpack.c.bf16 %v512, %v511
        %v531 = vpack.c.bf16 %v514, %v513
        %v532 = vpack.c.bf16 %v516, %v515
        %v533 = vld [vmem:[#allocation2 + $0x9] sm:$0xff]
        %v534 = vld [vmem:[#allocation2 + $0x11] sm:$0xff]
        %v535 = vld [vmem:[#allocation2 + $0x29] sm:$0xff]
        %v536 = vld [vmem:[#allocation2 + $0x31] sm:$0xff]
        %v537 = vld [vmem:[#allocation2 + $0x49] sm:$0xff]
        %v538 = vld [vmem:[#allocation2 + $0x51] sm:$0xff]
        %v539 = vld [vmem:[#allocation2 + $0x69] sm:$0xff]
        %v540 = vld [vmem:[#allocation2 + $0x71] sm:$0xff]
        %v541 = vld [vmem:[#allocation2 + $0x89] sm:$0xff]
        %v542 = vld [vmem:[#allocation2 + $0x91] sm:$0xff]
        %v543 = vld [vmem:[#allocation2 + $0xa9] sm:$0xff]
        %v544 = vld [vmem:[#allocation2 + $0xb1] sm:$0xff]
        %v545 = vld [vmem:[#allocation2 + $0xc9] sm:$0xff]
        %v546 = vld [vmem:[#allocation2 + $0xd1] sm:$0xff]
        %v547 = vld [vmem:[#allocation2 + $0xe9] sm:$0xff]
        %v548 = vld [vmem:[#allocation2 + $0xf1] sm:$0xff]
        %v549 = vld [vmem:[#allocation2 + $0x109] sm:$0xff]
        %v550 = vld [vmem:[#allocation2 + $0x111] sm:$0xff]
        %v551 = vld [vmem:[#allocation2 + $0x129] sm:$0xff]
        %v552 = vld [vmem:[#allocation2 + $0x131] sm:$0xff]
        %v553 = vld [vmem:[#allocation2 + $0x149] sm:$0xff]
        %v554 = vld [vmem:[#allocation2 + $0x151] sm:$0xff]
        %v555 = vld [vmem:[#allocation2 + $0x169] sm:$0xff]
        %v556 = vld [vmem:[#allocation2 + $0x171] sm:$0xff]
        %v557 = vld [vmem:[#allocation2 + $0x189] sm:$0xff]
        %v558 = vld [vmem:[#allocation2 + $0x191] sm:$0xff]
        %v559 = vld [vmem:[#allocation2 + $0x1a9] sm:$0xff]
        %v560 = vld [vmem:[#allocation2 + $0x1b1] sm:$0xff]
        %v561 = vld [vmem:[#allocation2 + $0x1c9] sm:$0xff]
        %v562 = vld [vmem:[#allocation2 + $0x1d1] sm:$0xff]
        %v563 = vld [vmem:[#allocation2 + $0x1e9] sm:$0xff]
        %v564 = vld [vmem:[#allocation2 + $0x1f1] sm:$0xff]
        %v565 = vpack.c.bf16 %v534, %v533
        %v566 = vpack.c.bf16 %v536, %v535
        %v567 = vpack.c.bf16 %v538, %v537
        %v568 = vpack.c.bf16 %v540, %v539
        %v569 = vpack.c.bf16 %v542, %v541
        %v570 = vpack.c.bf16 %v544, %v543
        %v571 = vpack.c.bf16 %v546, %v545
        %v572 = vpack.c.bf16 %v548, %v547
        %v573 = vpack.c.bf16 %v550, %v549
        %v574 = vpack.c.bf16 %v552, %v551
        %v575 = vpack.c.bf16 %v554, %v553
        %v576 = vpack.c.bf16 %v556, %v555
        %v577 = vpack.c.bf16 %v558, %v557
        %v578 = vpack.c.bf16 %v560, %v559
        %v579 = vpack.c.bf16 %v562, %v561
        %v580 = vpack.c.bf16 %v564, %v563
        %v581 = vld [vmem:[%s234 + $0x7] sm:$0xff]
        %v582 = vld [vmem:[%s234 + $0xf] sm:$0xff]
        %v583 = vld [vmem:[%s234 + $0x27] sm:$0xff]
        %v584 = vld [vmem:[%s234 + $0x2f] sm:$0xff]
        %v585 = vld [vmem:[%s234 + $0x47] sm:$0xff]
        %v586 = vld [vmem:[%s234 + $0x4f] sm:$0xff]
        %v587 = vld [vmem:[%s234 + $0x67] sm:$0xff]
        %v588 = vld [vmem:[%s234 + $0x6f] sm:$0xff]
        %v589 = vld [vmem:[%s234 + $0x87] sm:$0xff]
        %v590 = vld [vmem:[%s234 + $0x8f] sm:$0xff]
        %v591 = vld [vmem:[%s234 + $0xa7] sm:$0xff]
        %v592 = vld [vmem:[%s234 + $0xaf] sm:$0xff]
        %v593 = vld [vmem:[%s234 + $0xc7] sm:$0xff]
        %v594 = vld [vmem:[%s234 + $0xcf] sm:$0xff]
        %v595 = vld [vmem:[%s234 + $0xe7] sm:$0xff]
        %v596 = vld [vmem:[%s234 + $0xef] sm:$0xff]
        %v597 = vld [vmem:[%s234 + $0x107] sm:$0xff]
        %v598 = vld [vmem:[%s234 + $0x10f] sm:$0xff]
        %v599 = vld [vmem:[%s234 + $0x127] sm:$0xff]
        %v600 = vld [vmem:[%s234 + $0x12f] sm:$0xff]
        %v601 = vld [vmem:[%s234 + $0x147] sm:$0xff]
        %v602 = vld [vmem:[%s234 + $0x14f] sm:$0xff]
        %v603 = vld [vmem:[%s234 + $0x167] sm:$0xff]
        %v604 = vld [vmem:[%s234 + $0x16f] sm:$0xff]
        %v605 = vld [vmem:[%s234 + $0x187] sm:$0xff]
        %v606 = vld [vmem:[%s234 + $0x18f] sm:$0xff]
        %v607 = vld [vmem:[%s234 + $0x1a7] sm:$0xff]
        %v608 = vld [vmem:[%s234 + $0x1af] sm:$0xff]
        %v609 = vld [vmem:[%s234 + $0x1c7] sm:$0xff]
        %v610 = vld [vmem:[%s234 + $0x1cf] sm:$0xff]
        %v611 = vld [vmem:[%s234 + $0x1e7] sm:$0xff]
        %v612 = vld [vmem:[%s234 + $0x1ef] sm:$0xff]
        %v613 = vpack.c.bf16 %v582, %v581
        %v614 = vpack.c.bf16 %v584, %v583
        %v615 = vpack.c.bf16 %v586, %v585
        %v616 = vpack.c.bf16 %v588, %v587
        %v617 = vpack.c.bf16 %v590, %v589
        %v618 = vpack.c.bf16 %v592, %v591
        %v619 = vpack.c.bf16 %v594, %v593
        %v620 = vpack.c.bf16 %v596, %v595
        %v621 = vpack.c.bf16 %v598, %v597
        %v622 = vpack.c.bf16 %v600, %v599
        %v623 = vpack.c.bf16 %v602, %v601
        %v624 = vpack.c.bf16 %v604, %v603
        %v625 = vpack.c.bf16 %v606, %v605
        %v626 = vpack.c.bf16 %v608, %v607
        %v627 = vpack.c.bf16 %v610, %v609
        %v628 = vpack.c.bf16 %v612, %v611
        %v629 = vld [vmem:[%s234 + $0x8] sm:$0xff]
        %v630 = vld [vmem:[%s234 + $0x10] sm:$0xff]
        %v631 = vld [vmem:[%s234 + $0x28] sm:$0xff]
        %v632 = vld [vmem:[%s234 + $0x30] sm:$0xff]
        %v633 = vld [vmem:[%s234 + $0x48] sm:$0xff]
        %v634 = vld [vmem:[%s234 + $0x50] sm:$0xff]
        %v635 = vld [vmem:[%s234 + $0x68] sm:$0xff]
        %v636 = vld [vmem:[%s234 + $0x70] sm:$0xff]
        %v637 = vld [vmem:[%s234 + $0x88] sm:$0xff]
        %v638 = vld [vmem:[%s234 + $0x90] sm:$0xff]
        %v639 = vld [vmem:[%s234 + $0xa8] sm:$0xff]
        %v640 = vld [vmem:[%s234 + $0xb0] sm:$0xff]
        %v641 = vld [vmem:[%s234 + $0xc8] sm:$0xff]
        %v642 = vld [vmem:[%s234 + $0xd0] sm:$0xff]
        %v643 = vld [vmem:[%s234 + $0xe8] sm:$0xff]
        %v644 = vld [vmem:[%s234 + $0xf0] sm:$0xff]
        %v645 = vld [vmem:[%s234 + $0x108] sm:$0xff]
        %v646 = vld [vmem:[%s234 + $0x110] sm:$0xff]
        %v647 = vld [vmem:[%s234 + $0x128] sm:$0xff]
        %v648 = vld [vmem:[%s234 + $0x130] sm:$0xff]
        %v649 = vld [vmem:[%s234 + $0x148] sm:$0xff]
        %v650 = vld [vmem:[%s234 + $0x150] sm:$0xff]
        %v651 = vld [vmem:[%s234 + $0x168] sm:$0xff]
        %v652 = vld [vmem:[%s234 + $0x170] sm:$0xff]
        %v653 = vld [vmem:[%s234 + $0x188] sm:$0xff]
        %v654 = vld [vmem:[%s234 + $0x190] sm:$0xff]
        %v655 = vld [vmem:[%s234 + $0x1a8] sm:$0xff]
        %v656 = vld [vmem:[%s234 + $0x1b0] sm:$0xff]
        %v657 = vld [vmem:[%s234 + $0x1c8] sm:$0xff]
        %v658 = vld [vmem:[%s234 + $0x1d0] sm:$0xff]
        %v659 = vld [vmem:[%s234 + $0x1e8] sm:$0xff]
        %v660 = vld [vmem:[%s234 + $0x1f0] sm:$0xff]
        %v661 = vpack.c.bf16 %v630, %v629
        %v662 = vpack.c.bf16 %v632, %v631
        %v663 = vpack.c.bf16 %v634, %v633
        %v664 = vpack.c.bf16 %v636, %v635
        %v665 = vpack.c.bf16 %v638, %v637
        %v666 = vpack.c.bf16 %v640, %v639
        %v667 = vpack.c.bf16 %v642, %v641
        %v668 = vpack.c.bf16 %v644, %v643
        %v669 = vpack.c.bf16 %v646, %v645
        %v670 = vpack.c.bf16 %v648, %v647
        %v671 = vpack.c.bf16 %v650, %v649
        %v672 = vpack.c.bf16 %v652, %v651
        %v673 = vpack.c.bf16 %v654, %v653
        %v674 = vpack.c.bf16 %v656, %v655
        %v675 = vpack.c.bf16 %v658, %v657
        %v676 = vpack.c.bf16 %v660, %v659
        %v677 = vld [vmem:[%s234 + $0x9] sm:$0xff]
        %v678 = vld [vmem:[%s234 + $0x11] sm:$0xff]
        %v679 = vld [vmem:[%s234 + $0x29] sm:$0xff]
        %v680 = vld [vmem:[%s234 + $0x31] sm:$0xff]
        %v681 = vld [vmem:[%s234 + $0x49] sm:$0xff]
        %v682 = vld [vmem:[%s234 + $0x51] sm:$0xff]
        %v683 = vld [vmem:[%s234 + $0x69] sm:$0xff]
        %v684 = vld [vmem:[%s234 + $0x71] sm:$0xff]
        %v685 = vld [vmem:[%s234 + $0x89] sm:$0xff]
        %v686 = vld [vmem:[%s234 + $0x91] sm:$0xff]
        %v687 = vld [vmem:[%s234 + $0xa9] sm:$0xff]
        %v688 = vld [vmem:[%s234 + $0xb1] sm:$0xff]
        %v689 = vld [vmem:[%s234 + $0xc9] sm:$0xff]
        %v690 = vld [vmem:[%s234 + $0xd1] sm:$0xff]
        %v691 = vld [vmem:[%s234 + $0xe9] sm:$0xff]
        %v692 = vld [vmem:[%s234 + $0xf1] sm:$0xff]
        %v693 = vld [vmem:[%s234 + $0x109] sm:$0xff]
        %v694 = vld [vmem:[%s234 + $0x111] sm:$0xff]
        %v695 = vld [vmem:[%s234 + $0x129] sm:$0xff]
        %v696 = vld [vmem:[%s234 + $0x131] sm:$0xff]
        %v697 = vld [vmem:[%s234 + $0x149] sm:$0xff]
        %v698 = vld [vmem:[%s234 + $0x151] sm:$0xff]
        %v699 = vld [vmem:[%s234 + $0x169] sm:$0xff]
        %v700 = vld [vmem:[%s234 + $0x171] sm:$0xff]
        %v701 = vld [vmem:[%s234 + $0x189] sm:$0xff]
        %v702 = vld [vmem:[%s234 + $0x191] sm:$0xff]
        %v703 = vld [vmem:[%s234 + $0x1a9] sm:$0xff]
        %v704 = vld [vmem:[%s234 + $0x1b1] sm:$0xff]
        %v705 = vld [vmem:[%s234 + $0x1c9] sm:$0xff]
        %v706 = vld [vmem:[%s234 + $0x1d1] sm:$0xff]
        %v707 = vld [vmem:[%s234 + $0x1e9] sm:$0xff]
        %v708 = vld [vmem:[%s234 + $0x1f1] sm:$0xff]
        %v709 = vpack.c.bf16 %v678, %v677
        %v710 = vpack.c.bf16 %v680, %v679
        %v711 = vpack.c.bf16 %v682, %v681
        %v712 = vpack.c.bf16 %v684, %v683
        %v713 = vpack.c.bf16 %v686, %v685
        %v714 = vpack.c.bf16 %v688, %v687
        %v715 = vpack.c.bf16 %v690, %v689
        %v716 = vpack.c.bf16 %v692, %v691
        %v717 = vpack.c.bf16 %v694, %v693
        %v718 = vpack.c.bf16 %v696, %v695
        %v719 = vpack.c.bf16 %v698, %v697
        %v720 = vpack.c.bf16 %v700, %v699
        %v721 = vpack.c.bf16 %v702, %v701
        %v722 = vpack.c.bf16 %v704, %v703
        %v723 = vpack.c.bf16 %v706, %v705
        %v724 = vpack.c.bf16 %v708, %v707
        %s725 = scalar_lea.vmem [#allocation2], 64
        %v726 = vld [vmem:[%s725 + $0x7] sm:$0xff]
        %v727 = vld [vmem:[%s725 + $0xf] sm:$0xff]
        %v728 = vld [vmem:[%s725 + $0x27] sm:$0xff]
        %v729 = vld [vmem:[%s725 + $0x2f] sm:$0xff]
        %v730 = vld [vmem:[%s725 + $0x47] sm:$0xff]
        %v731 = vld [vmem:[%s725 + $0x4f] sm:$0xff]
        %v732 = vld [vmem:[%s725 + $0x67] sm:$0xff]
        %v733 = vld [vmem:[%s725 + $0x6f] sm:$0xff]
        %v734 = vld [vmem:[%s725 + $0x87] sm:$0xff]
        %v735 = vld [vmem:[%s725 + $0x8f] sm:$0xff]
        %v736 = vld [vmem:[%s725 + $0xa7] sm:$0xff]
        %v737 = vld [vmem:[%s725 + $0xaf] sm:$0xff]
        %v738 = vld [vmem:[%s725 + $0xc7] sm:$0xff]
        %v739 = vld [vmem:[%s725 + $0xcf] sm:$0xff]
        %v740 = vld [vmem:[%s725 + $0xe7] sm:$0xff]
        %v741 = vld [vmem:[%s725 + $0xef] sm:$0xff]
        %v742 = vld [vmem:[%s725 + $0x107] sm:$0xff]
        %v743 = vld [vmem:[%s725 + $0x10f] sm:$0xff]
        %v744 = vld [vmem:[%s725 + $0x127] sm:$0xff]
        %v745 = vld [vmem:[%s725 + $0x12f] sm:$0xff]
        %v746 = vld [vmem:[%s725 + $0x147] sm:$0xff]
        %v747 = vld [vmem:[%s725 + $0x14f] sm:$0xff]
        %v748 = vld [vmem:[%s725 + $0x167] sm:$0xff]
        %v749 = vld [vmem:[%s725 + $0x16f] sm:$0xff]
        %v750 = vld [vmem:[%s725 + $0x187] sm:$0xff]
        %v751 = vld [vmem:[%s725 + $0x18f] sm:$0xff]
        %v752 = vld [vmem:[%s725 + $0x1a7] sm:$0xff]
        %v753 = vld [vmem:[%s725 + $0x1af] sm:$0xff]
        %v754 = vld [vmem:[%s725 + $0x1c7] sm:$0xff]
        %v755 = vld [vmem:[%s725 + $0x1cf] sm:$0xff]
        %v756 = vld [vmem:[%s725 + $0x1e7] sm:$0xff]
        %v757 = vld [vmem:[%s725 + $0x1ef] sm:$0xff]
        %v758 = vpack.c.bf16 %v727, %v726
        %v759 = vpack.c.bf16 %v729, %v728
        %v760 = vpack.c.bf16 %v731, %v730
        %v761 = vpack.c.bf16 %v733, %v732
        %v762 = vpack.c.bf16 %v735, %v734
        %v763 = vpack.c.bf16 %v737, %v736
        %v764 = vpack.c.bf16 %v739, %v738
        %v765 = vpack.c.bf16 %v741, %v740
        %v766 = vpack.c.bf16 %v743, %v742
        %v767 = vpack.c.bf16 %v745, %v744
        %v768 = vpack.c.bf16 %v747, %v746
        %v769 = vpack.c.bf16 %v749, %v748
        %v770 = vpack.c.bf16 %v751, %v750
        %v771 = vpack.c.bf16 %v753, %v752
        %v772 = vpack.c.bf16 %v755, %v754
        %v773 = vpack.c.bf16 %v757, %v756
        %v774 = vld [vmem:[%s725 + $0x8] sm:$0xff]
        %v775 = vld [vmem:[%s725 + $0x10] sm:$0xff]
        %v776 = vld [vmem:[%s725 + $0x28] sm:$0xff]
        %v777 = vld [vmem:[%s725 + $0x30] sm:$0xff]
        %v778 = vld [vmem:[%s725 + $0x48] sm:$0xff]
        %v779 = vld [vmem:[%s725 + $0x50] sm:$0xff]
        %v780 = vld [vmem:[%s725 + $0x68] sm:$0xff]
        %v781 = vld [vmem:[%s725 + $0x70] sm:$0xff]
        %v782 = vld [vmem:[%s725 + $0x88] sm:$0xff]
        %v783 = vld [vmem:[%s725 + $0x90] sm:$0xff]
        %v784 = vld [vmem:[%s725 + $0xa8] sm:$0xff]
        %v785 = vld [vmem:[%s725 + $0xb0] sm:$0xff]
        %v786 = vld [vmem:[%s725 + $0xc8] sm:$0xff]
        %v787 = vld [vmem:[%s725 + $0xd0] sm:$0xff]
        %v788 = vld [vmem:[%s725 + $0xe8] sm:$0xff]
        %v789 = vld [vmem:[%s725 + $0xf0] sm:$0xff]
        %v790 = vld [vmem:[%s725 + $0x108] sm:$0xff]
        %v791 = vld [vmem:[%s725 + $0x110] sm:$0xff]
        %v792 = vld [vmem:[%s725 + $0x128] sm:$0xff]
        %v793 = vld [vmem:[%s725 + $0x130] sm:$0xff]
        %v794 = vld [vmem:[%s725 + $0x148] sm:$0xff]
        %v795 = vld [vmem:[%s725 + $0x150] sm:$0xff]
        %v796 = vld [vmem:[%s725 + $0x168] sm:$0xff]
        %v797 = vld [vmem:[%s725 + $0x170] sm:$0xff]
        %v798 = vld [vmem:[%s725 + $0x188] sm:$0xff]
        %v799 = vld [vmem:[%s725 + $0x190] sm:$0xff]
        %v800 = vld [vmem:[%s725 + $0x1a8] sm:$0xff]
        %v801 = vld [vmem:[%s725 + $0x1b0] sm:$0xff]
        %v802 = vld [vmem:[%s725 + $0x1c8] sm:$0xff]
        %v803 = vld [vmem:[%s725 + $0x1d0] sm:$0xff]
        %v804 = vld [vmem:[%s725 + $0x1e8] sm:$0xff]
        %v805 = vld [vmem:[%s725 + $0x1f0] sm:$0xff]
        %v806 = vpack.c.bf16 %v775, %v774
        %v807 = vpack.c.bf16 %v777, %v776
        %v808 = vpack.c.bf16 %v779, %v778
        %v809 = vpack.c.bf16 %v781, %v780
        %v810 = vpack.c.bf16 %v783, %v782
        %v811 = vpack.c.bf16 %v785, %v784
        %v812 = vpack.c.bf16 %v787, %v786
        %v813 = vpack.c.bf16 %v789, %v788
        %v814 = vpack.c.bf16 %v791, %v790
        %v815 = vpack.c.bf16 %v793, %v792
        %v816 = vpack.c.bf16 %v795, %v794
        %v817 = vpack.c.bf16 %v797, %v796
        %v818 = vpack.c.bf16 %v799, %v798
        %v819 = vpack.c.bf16 %v801, %v800
        %v820 = vpack.c.bf16 %v803, %v802
        %v821 = vpack.c.bf16 %v805, %v804
        %v822 = vld [vmem:[%s725 + $0x9] sm:$0xff]
        %v823 = vld [vmem:[%s725 + $0x11] sm:$0xff]
        %v824 = vld [vmem:[%s725 + $0x29] sm:$0xff]
        %v825 = vld [vmem:[%s725 + $0x31] sm:$0xff]
        %v826 = vld [vmem:[%s725 + $0x49] sm:$0xff]
        %v827 = vld [vmem:[%s725 + $0x51] sm:$0xff]
        %v828 = vld [vmem:[%s725 + $0x69] sm:$0xff]
        %v829 = vld [vmem:[%s725 + $0x71] sm:$0xff]
        %v830 = vld [vmem:[%s725 + $0x89] sm:$0xff]
        %v831 = vld [vmem:[%s725 + $0x91] sm:$0xff]
        %v832 = vld [vmem:[%s725 + $0xa9] sm:$0xff]
        %v833 = vld [vmem:[%s725 + $0xb1] sm:$0xff]
        %v834 = vld [vmem:[%s725 + $0xc9] sm:$0xff]
        %v835 = vld [vmem:[%s725 + $0xd1] sm:$0xff]
        %v836 = vld [vmem:[%s725 + $0xe9] sm:$0xff]
        %v837 = vld [vmem:[%s725 + $0xf1] sm:$0xff]
        %v838 = vld [vmem:[%s725 + $0x109] sm:$0xff]
        %v839 = vld [vmem:[%s725 + $0x111] sm:$0xff]
        %v840 = vld [vmem:[%s725 + $0x129] sm:$0xff]
        %v841 = vld [vmem:[%s725 + $0x131] sm:$0xff]
        %v842 = vld [vmem:[%s725 + $0x149] sm:$0xff]
        %v843 = vld [vmem:[%s725 + $0x151] sm:$0xff]
        %v844 = vld [vmem:[%s725 + $0x169] sm:$0xff]
        %v845 = vld [vmem:[%s725 + $0x171] sm:$0xff]
        %v846 = vld [vmem:[%s725 + $0x189] sm:$0xff]
        %v847 = vld [vmem:[%s725 + $0x191] sm:$0xff]
        %v848 = vld [vmem:[%s725 + $0x1a9] sm:$0xff]
        %v849 = vld [vmem:[%s725 + $0x1b1] sm:$0xff]
        %v850 = vld [vmem:[%s725 + $0x1c9] sm:$0xff]
        %v851 = vld [vmem:[%s725 + $0x1d1] sm:$0xff]
        %v852 = vld [vmem:[%s725 + $0x1e9] sm:$0xff]
        %v853 = vld [vmem:[%s725 + $0x1f1] sm:$0xff]
        %v854 = vpack.c.bf16 %v823, %v822
        %v855 = vpack.c.bf16 %v825, %v824
        %v856 = vpack.c.bf16 %v827, %v826
        %v857 = vpack.c.bf16 %v829, %v828
        %v858 = vpack.c.bf16 %v831, %v830
        %v859 = vpack.c.bf16 %v833, %v832
        %v860 = vpack.c.bf16 %v835, %v834
        %v861 = vpack.c.bf16 %v837, %v836
        %v862 = vpack.c.bf16 %v839, %v838
        %v863 = vpack.c.bf16 %v841, %v840
        %v864 = vpack.c.bf16 %v843, %v842
        %v865 = vpack.c.bf16 %v845, %v844
        %v866 = vpack.c.bf16 %v847, %v846
        %v867 = vpack.c.bf16 %v849, %v848
        %v868 = vpack.c.bf16 %v851, %v850
        %v869 = vpack.c.bf16 %v853, %v852
        %886 = vrot.lane.b32.xlu0 %v517, 16
        %v887 = vpop.permute.xlu0 %886
        %888 = vrot.lane.b32.xlu0 %v518, 16
        %v889 = vpop.permute.xlu0 %888
        %890 = vrot.lane.b32.xlu0 %v519, 16
        %v891 = vpop.permute.xlu0 %890
        %892 = vrot.lane.b32.xlu0 %v520, 16
        %v893 = vpop.permute.xlu0 %892
        %894 = vrot.lane.b32.xlu0 %v521, 16
        %v895 = vpop.permute.xlu0 %894
        %896 = vrot.lane.b32.xlu0 %v522, 16
        %v897 = vpop.permute.xlu0 %896
        %898 = vrot.lane.b32.xlu0 %v523, 16
        %v899 = vpop.permute.xlu0 %898
        %900 = vrot.lane.b32.xlu0 %v524, 16
        %v901 = vpop.permute.xlu0 %900
        %902 = vrot.lane.b32.xlu0 %v525, 16
        %v903 = vpop.permute.xlu0 %902
        %904 = vrot.lane.b32.xlu0 %v526, 16
        %v905 = vpop.permute.xlu0 %904
        %906 = vrot.lane.b32.xlu0 %v527, 16
        %v907 = vpop.permute.xlu0 %906
        %908 = vrot.lane.b32.xlu0 %v528, 16
        %v909 = vpop.permute.xlu0 %908
        %910 = vrot.lane.b32.xlu0 %v529, 16
        %v911 = vpop.permute.xlu0 %910
        %912 = vrot.lane.b32.xlu0 %v530, 16
        %v913 = vpop.permute.xlu0 %912
        %914 = vrot.lane.b32.xlu0 %v531, 16
        %v915 = vpop.permute.xlu0 %914
        %916 = vrot.lane.b32.xlu0 %v532, 16
        %v917 = vpop.permute.xlu0 %916
        %934 = vrot.lane.b32.xlu0 %v565, 32
        %v935 = vpop.permute.xlu0 %934
        %936 = vrot.lane.b32.xlu0 %v566, 32
        %v937 = vpop.permute.xlu0 %936
        %938 = vrot.lane.b32.xlu0 %v567, 32
        %v939 = vpop.permute.xlu0 %938
        %940 = vrot.lane.b32.xlu0 %v568, 32
        %v941 = vpop.permute.xlu0 %940
        %942 = vrot.lane.b32.xlu0 %v569, 32
        %v943 = vpop.permute.xlu0 %942
        %944 = vrot.lane.b32.xlu0 %v570, 32
        %v945 = vpop.permute.xlu0 %944
        %946 = vrot.lane.b32.xlu0 %v571, 32
        %v947 = vpop.permute.xlu0 %946
        %948 = vrot.lane.b32.xlu0 %v572, 32
        %v949 = vpop.permute.xlu0 %948
        %950 = vrot.lane.b32.xlu0 %v573, 32
        %v951 = vpop.permute.xlu0 %950
        %952 = vrot.lane.b32.xlu0 %v574, 32
        %v953 = vpop.permute.xlu0 %952
        %954 = vrot.lane.b32.xlu0 %v575, 32
        %v955 = vpop.permute.xlu0 %954
        %956 = vrot.lane.b32.xlu0 %v576, 32
        %v957 = vpop.permute.xlu0 %956
        %958 = vrot.lane.b32.xlu0 %v577, 32
        %v959 = vpop.permute.xlu0 %958
        %960 = vrot.lane.b32.xlu0 %v578, 32
        %v961 = vpop.permute.xlu0 %960
        %962 = vrot.lane.b32.xlu0 %v579, 32
        %v963 = vpop.permute.xlu0 %962
        %964 = vrot.lane.b32.xlu0 %v580, 32
        %v965 = vpop.permute.xlu0 %964
        %982 = vrot.lane.b32.xlu0 %v613, 48
        %v983 = vpop.permute.xlu0 %982
        %984 = vrot.lane.b32.xlu0 %v614, 48
        %v985 = vpop.permute.xlu0 %984
        %986 = vrot.lane.b32.xlu0 %v615, 48
        %v987 = vpop.permute.xlu0 %986
        %988 = vrot.lane.b32.xlu0 %v616, 48
        %v989 = vpop.permute.xlu0 %988
        %990 = vrot.lane.b32.xlu0 %v617, 48
        %v991 = vpop.permute.xlu0 %990
        %992 = vrot.lane.b32.xlu0 %v618, 48
        %v993 = vpop.permute.xlu0 %992
        %994 = vrot.lane.b32.xlu0 %v619, 48
        %v995 = vpop.permute.xlu0 %994
        %996 = vrot.lane.b32.xlu0 %v620, 48
        %v997 = vpop.permute.xlu0 %996
        %998 = vrot.lane.b32.xlu0 %v621, 48
        %v999 = vpop.permute.xlu0 %998
        %1000 = vrot.lane.b32.xlu0 %v622, 48
        %v1001 = vpop.permute.xlu0 %1000
        %1002 = vrot.lane.b32.xlu0 %v623, 48
        %v1003 = vpop.permute.xlu0 %1002
        %1004 = vrot.lane.b32.xlu0 %v624, 48
        %v1005 = vpop.permute.xlu0 %1004
        %1006 = vrot.lane.b32.xlu0 %v625, 48
        %v1007 = vpop.permute.xlu0 %1006
        %1008 = vrot.lane.b32.xlu0 %v626, 48
        %v1009 = vpop.permute.xlu0 %1008
        %1010 = vrot.lane.b32.xlu0 %v627, 48
        %v1011 = vpop.permute.xlu0 %1010
        %1012 = vrot.lane.b32.xlu0 %v628, 48
        %v1013 = vpop.permute.xlu0 %1012
        %1030 = vrot.lane.b32.xlu0 %v661, 64
        %v1031 = vpop.permute.xlu0 %1030
        %1032 = vrot.lane.b32.xlu0 %v662, 64
        %v1033 = vpop.permute.xlu0 %1032
        %1034 = vrot.lane.b32.xlu0 %v663, 64
        %v1035 = vpop.permute.xlu0 %1034
        %1036 = vrot.lane.b32.xlu0 %v664, 64
        %v1037 = vpop.permute.xlu0 %1036
        %1038 = vrot.lane.b32.xlu0 %v665, 64
        %v1039 = vpop.permute.xlu0 %1038
        %1040 = vrot.lane.b32.xlu0 %v666, 64
        %v1041 = vpop.permute.xlu0 %1040
        %1042 = vrot.lane.b32.xlu0 %v667, 64
        %v1043 = vpop.permute.xlu0 %1042
        %1044 = vrot.lane.b32.xlu0 %v668, 64
        %v1045 = vpop.permute.xlu0 %1044
        %1046 = vrot.lane.b32.xlu0 %v669, 64
        %v1047 = vpop.permute.xlu0 %1046
        %1048 = vrot.lane.b32.xlu0 %v670, 64
        %v1049 = vpop.permute.xlu0 %1048
        %1050 = vrot.lane.b32.xlu0 %v671, 64
        %v1051 = vpop.permute.xlu0 %1050
        %1052 = vrot.lane.b32.xlu0 %v672, 64
        %v1053 = vpop.permute.xlu0 %1052
        %1054 = vrot.lane.b32.xlu0 %v673, 64
        %v1055 = vpop.permute.xlu0 %1054
        %1056 = vrot.lane.b32.xlu0 %v674, 64
        %v1057 = vpop.permute.xlu0 %1056
        %1058 = vrot.lane.b32.xlu0 %v675, 64
        %v1059 = vpop.permute.xlu0 %1058
        %1060 = vrot.lane.b32.xlu0 %v676, 64
        %v1061 = vpop.permute.xlu0 %1060
        %1078 = vrot.lane.b32.xlu0 %v709, 80
        %v1079 = vpop.permute.xlu0 %1078
        %1080 = vrot.lane.b32.xlu0 %v710, 80
        %v1081 = vpop.permute.xlu0 %1080
        %1082 = vrot.lane.b32.xlu0 %v711, 80
        %v1083 = vpop.permute.xlu0 %1082
        %1084 = vrot.lane.b32.xlu0 %v712, 80
        %v1085 = vpop.permute.xlu0 %1084
        %1086 = vrot.lane.b32.xlu0 %v713, 80
        %v1087 = vpop.permute.xlu0 %1086
        %1088 = vrot.lane.b32.xlu0 %v714, 80
        %v1089 = vpop.permute.xlu0 %1088
        %1090 = vrot.lane.b32.xlu0 %v715, 80
        %v1091 = vpop.permute.xlu0 %1090
        %1092 = vrot.lane.b32.xlu0 %v716, 80
        %v1093 = vpop.permute.xlu0 %1092
        %1094 = vrot.lane.b32.xlu0 %v717, 80
        %v1095 = vpop.permute.xlu0 %1094
        %1096 = vrot.lane.b32.xlu0 %v718, 80
        %v1097 = vpop.permute.xlu0 %1096
        %1098 = vrot.lane.b32.xlu0 %v719, 80
        %v1099 = vpop.permute.xlu0 %1098
        %1100 = vrot.lane.b32.xlu0 %v720, 80
        %v1101 = vpop.permute.xlu0 %1100
        %1102 = vrot.lane.b32.xlu0 %v721, 80
        %v1103 = vpop.permute.xlu0 %1102
        %1104 = vrot.lane.b32.xlu0 %v722, 80
        %v1105 = vpop.permute.xlu0 %1104
        %1106 = vrot.lane.b32.xlu0 %v723, 80
        %v1107 = vpop.permute.xlu0 %1106
        %1108 = vrot.lane.b32.xlu0 %v724, 80
        %v1109 = vpop.permute.xlu0 %1108
        %1126 = vrot.lane.b32.xlu0 %v758, 96
        %v1127 = vpop.permute.xlu0 %1126
        %1128 = vrot.lane.b32.xlu0 %v759, 96
        %v1129 = vpop.permute.xlu0 %1128
        %1130 = vrot.lane.b32.xlu0 %v760, 96
        %v1131 = vpop.permute.xlu0 %1130
        %1132 = vrot.lane.b32.xlu0 %v761, 96
        %v1133 = vpop.permute.xlu0 %1132
        %1134 = vrot.lane.b32.xlu0 %v762, 96
        %v1135 = vpop.permute.xlu0 %1134
        %1136 = vrot.lane.b32.xlu0 %v763, 96
        %v1137 = vpop.permute.xlu0 %1136
        %1138 = vrot.lane.b32.xlu0 %v764, 96
        %v1139 = vpop.permute.xlu0 %1138
        %1140 = vrot.lane.b32.xlu0 %v765, 96
        %v1141 = vpop.permute.xlu0 %1140
        %1142 = vrot.lane.b32.xlu0 %v766, 96
        %v1143 = vpop.permute.xlu0 %1142
        %1144 = vrot.lane.b32.xlu0 %v767, 96
        %v1145 = vpop.permute.xlu0 %1144
        %1146 = vrot.lane.b32.xlu0 %v768, 96
        %v1147 = vpop.permute.xlu0 %1146
        %1148 = vrot.lane.b32.xlu0 %v769, 96
        %v1149 = vpop.permute.xlu0 %1148
        %1150 = vrot.lane.b32.xlu0 %v770, 96
        %v1151 = vpop.permute.xlu0 %1150
        %1152 = vrot.lane.b32.xlu0 %v771, 96
        %v1153 = vpop.permute.xlu0 %1152
        %1154 = vrot.lane.b32.xlu0 %v772, 96
        %v1155 = vpop.permute.xlu0 %1154
        %1156 = vrot.lane.b32.xlu0 %v773, 96
        %v1157 = vpop.permute.xlu0 %1156
        %1174 = vrot.lane.b32.xlu0 %v806, 112
        %v1175 = vpop.permute.xlu0 %1174
        %1176 = vrot.lane.b32.xlu0 %v807, 112
        %v1177 = vpop.permute.xlu0 %1176
        %1178 = vrot.lane.b32.xlu0 %v808, 112
        %v1179 = vpop.permute.xlu0 %1178
        %1180 = vrot.lane.b32.xlu0 %v809, 112
        %v1181 = vpop.permute.xlu0 %1180
        %1182 = vrot.lane.b32.xlu0 %v810, 112
        %v1183 = vpop.permute.xlu0 %1182
        %1184 = vrot.lane.b32.xlu0 %v811, 112
        %v1185 = vpop.permute.xlu0 %1184
        %1186 = vrot.lane.b32.xlu0 %v812, 112
        %v1187 = vpop.permute.xlu0 %1186
        %1188 = vrot.lane.b32.xlu0 %v813, 112
        %v1189 = vpop.permute.xlu0 %1188
        %1190 = vrot.lane.b32.xlu0 %v814, 112
        %v1191 = vpop.permute.xlu0 %1190
        %1192 = vrot.lane.b32.xlu0 %v815, 112
        %v1193 = vpop.permute.xlu0 %1192
        %1194 = vrot.lane.b32.xlu0 %v816, 112
        %v1195 = vpop.permute.xlu0 %1194
        %1196 = vrot.lane.b32.xlu0 %v817, 112
        %v1197 = vpop.permute.xlu0 %1196
        %1198 = vrot.lane.b32.xlu0 %v818, 112
        %v1199 = vpop.permute.xlu0 %1198
        %1200 = vrot.lane.b32.xlu0 %v819, 112
        %v1201 = vpop.permute.xlu0 %1200
        %1202 = vrot.lane.b32.xlu0 %v820, 112
        %v1203 = vpop.permute.xlu0 %1202
        %1204 = vrot.lane.b32.xlu0 %v821, 112
        %v1205 = vpop.permute.xlu0 %1204
        %v1208 = vsel %vm224, %v469, %v887
        %v1211 = vsel %vm224, %v470, %v889
        %v1214 = vsel %vm224, %v471, %v891
        %v1217 = vsel %vm224, %v472, %v893
        %v1220 = vsel %vm224, %v473, %v895
        %v1223 = vsel %vm224, %v474, %v897
        %v1226 = vsel %vm224, %v475, %v899
        %v1229 = vsel %vm224, %v476, %v901
        %v1232 = vsel %vm224, %v477, %v903
        %v1235 = vsel %vm224, %v478, %v905
        %v1238 = vsel %vm224, %v479, %v907
        %v1241 = vsel %vm224, %v480, %v909
        %v1244 = vsel %vm224, %v481, %v911
        %v1247 = vsel %vm224, %v482, %v913
        %v1250 = vsel %vm224, %v483, %v915
        %v1253 = vsel %vm224, %v484, %v917
        %v1255 = vsel %vm268, %v1208, %v935
        %v1257 = vsel %vm268, %v1211, %v937
        %v1259 = vsel %vm268, %v1214, %v939
        %v1261 = vsel %vm268, %v1217, %v941
        %v1263 = vsel %vm268, %v1220, %v943
        %v1265 = vsel %vm268, %v1223, %v945
        %v1267 = vsel %vm268, %v1226, %v947
        %v1269 = vsel %vm268, %v1229, %v949
        %v1271 = vsel %vm268, %v1232, %v951
        %v1273 = vsel %vm268, %v1235, %v953
        %v1275 = vsel %vm268, %v1238, %v955
        %v1277 = vsel %vm268, %v1241, %v957
        %v1279 = vsel %vm268, %v1244, %v959
        %v1281 = vsel %vm268, %v1247, %v961
        %v1283 = vsel %vm268, %v1250, %v963
        %v1285 = vsel %vm268, %v1253, %v965
        %vm1286 = vcmask 392192
        %v1288 = vsel %vm1286, %v1255, %v983
        %v1290 = vsel %vm1286, %v1257, %v985
        %v1292 = vsel %vm1286, %v1259, %v987
        %v1294 = vsel %vm1286, %v1261, %v989
        %v1296 = vsel %vm1286, %v1263, %v991
        %v1298 = vsel %vm1286, %v1265, %v993
        %v1300 = vsel %vm1286, %v1267, %v995
        %v1302 = vsel %vm1286, %v1269, %v997
        %v1304 = vsel %vm1286, %v1271, %v999
        %v1306 = vsel %vm1286, %v1273, %v1001
        %v1308 = vsel %vm1286, %v1275, %v1003
        %v1310 = vsel %vm1286, %v1277, %v1005
        %v1312 = vsel %vm1286, %v1279, %v1007
        %v1314 = vsel %vm1286, %v1281, %v1009
        %v1316 = vsel %vm1286, %v1283, %v1011
        %v1318 = vsel %vm1286, %v1285, %v1013
        %vm1319 = vcmask 523264
        %v1321 = vsel %vm1319, %v1288, %v1031
        %v1323 = vsel %vm1319, %v1290, %v1033
        %v1325 = vsel %vm1319, %v1292, %v1035
        %v1327 = vsel %vm1319, %v1294, %v1037
        %v1329 = vsel %vm1319, %v1296, %v1039
        %v1331 = vsel %vm1319, %v1298, %v1041
        %v1333 = vsel %vm1319, %v1300, %v1043
        %v1335 = vsel %vm1319, %v1302, %v1045
        %v1337 = vsel %vm1319, %v1304, %v1047
        %v1339 = vsel %vm1319, %v1306, %v1049
        %v1341 = vsel %vm1319, %v1308, %v1051
        %v1343 = vsel %vm1319, %v1310, %v1053
        %v1345 = vsel %vm1319, %v1312, %v1055
        %v1347 = vsel %vm1319, %v1314, %v1057
        %v1349 = vsel %vm1319, %v1316, %v1059
        %v1351 = vsel %vm1319, %v1318, %v1061
        %vm1352 = vcmask 654336
        %v1354 = vsel %vm1352, %v1321, %v1079
        %v1356 = vsel %vm1352, %v1323, %v1081
        %v1358 = vsel %vm1352, %v1325, %v1083
        %v1360 = vsel %vm1352, %v1327, %v1085
        %v1362 = vsel %vm1352, %v1329, %v1087
        %v1364 = vsel %vm1352, %v1331, %v1089
        %v1366 = vsel %vm1352, %v1333, %v1091
        %v1368 = vsel %vm1352, %v1335, %v1093
        %v1370 = vsel %vm1352, %v1337, %v1095
        %v1372 = vsel %vm1352, %v1339, %v1097
        %v1374 = vsel %vm1352, %v1341, %v1099
        %v1376 = vsel %vm1352, %v1343, %v1101
        %v1378 = vsel %vm1352, %v1345, %v1103
        %v1380 = vsel %vm1352, %v1347, %v1105
        %v1382 = vsel %vm1352, %v1349, %v1107
        %v1384 = vsel %vm1352, %v1351, %v1109
        %vm1385 = vcmask 785408
        %v1387 = vsel %vm1385, %v1354, %v1127
        %v1389 = vsel %vm1385, %v1356, %v1129
        %v1391 = vsel %vm1385, %v1358, %v1131
        %v1393 = vsel %vm1385, %v1360, %v1133
        %v1395 = vsel %vm1385, %v1362, %v1135
        %v1397 = vsel %vm1385, %v1364, %v1137
        %v1399 = vsel %vm1385, %v1366, %v1139
        %v1401 = vsel %vm1385, %v1368, %v1141
        %v1403 = vsel %vm1385, %v1370, %v1143
        %v1405 = vsel %vm1385, %v1372, %v1145
        %v1407 = vsel %vm1385, %v1374, %v1147
        %v1409 = vsel %vm1385, %v1376, %v1149
        %v1411 = vsel %vm1385, %v1378, %v1151
        %v1413 = vsel %vm1385, %v1380, %v1153
        %v1415 = vsel %vm1385, %v1382, %v1155
        %v1417 = vsel %vm1385, %v1384, %v1157
        %vm1418 = vcmask 916480
        %v1420 = vsel %vm1418, %v1387, %v1175
        %v1423 = vsel %vm1418, %v1389, %v1177
        %v1426 = vsel %vm1418, %v1391, %v1179
        %v1429 = vsel %vm1418, %v1393, %v1181
        %v1432 = vsel %vm1418, %v1395, %v1183
        %v1435 = vsel %vm1418, %v1397, %v1185
        %v1438 = vsel %vm1418, %v1399, %v1187
        %v1441 = vsel %vm1418, %v1401, %v1189
        %v1444 = vsel %vm1418, %v1403, %v1191
        %v1447 = vsel %vm1418, %v1405, %v1193
        %v1450 = vsel %vm1418, %v1407, %v1195
        %v1453 = vsel %vm1418, %v1409, %v1197
        %v1456 = vsel %vm1418, %v1411, %v1199
        %v1459 = vsel %vm1418, %v1413, %v1201
        %v1462 = vsel %vm1418, %v1415, %v1203
        %v1465 = vsel %vm1418, %v1417, %v1205
        %v1468 = vlaneseq
        %v1469 = vshrl.u32 %v1468, 7
        %v1470 = vsub.s32 0, %v1469
        %v1471 = vrot.slane %v436, %v1470
        %v1491 = vunpack.c.l.b16 %v418
        %v1492 = vunpack.c.l.b16 %v419
        %v1493 = vunpack.c.l.b16 %v420
        %v1494 = vunpack.c.l.b16 %v421
        %v1495 = vunpack.c.l.b16 %v422
        %v1496 = vunpack.c.l.b16 %v423
        %v1497 = vunpack.c.l.b16 %v424
        %v1498 = vunpack.c.l.b16 %v425
        %v1499 = vunpack.c.l.b16 %v426
        %v1500 = vunpack.c.l.b16 %v427
        %v1501 = vunpack.c.l.b16 %v428
        %v1502 = vunpack.c.l.b16 %v429
        %v1503 = vunpack.c.l.b16 %v430
        %v1504 = vunpack.c.l.b16 %v431
        %v1505 = vunpack.c.l.b16 %v432
        %v1506 = vunpack.c.l.b16 %v433
        %v1507 = vunpack.c.l.b16 %v434
        %v1508 = vunpack.c.l.b16 %v435
        %v1509 = vpack.c.b16 %v1492, %v1491
        %v1510 = vpack.c.b16 %v1494, %v1493
        %v1511 = vpack.c.b16 %v1496, %v1495
        %v1512 = vpack.c.b16 %v1498, %v1497
        %v1513 = vpack.c.b16 %v1500, %v1499
        %v1514 = vpack.c.b16 %v1502, %v1501
        %v1515 = vpack.c.b16 %v1504, %v1503
        %v1516 = vpack.c.b16 %v1506, %v1505
        %v1517 = vpack.c.b16 %v1508, %v1507
        %v1528 = vsel %vm224, %v854, 0
        %v1531 = vsel %vm224, %v855, 0
        %v1534 = vsel %vm224, %v856, 0
        %v1537 = vsel %vm224, %v857, 0
        %v1540 = vsel %vm224, %v858, 0
        %v1543 = vsel %vm224, %v859, 0
        %v1546 = vsel %vm224, %v860, 0
        %v1549 = vsel %vm224, %v861, 0
        %v1552 = vsel %vm224, %v862, 0
        %v1555 = vsel %vm224, %v863, 0
        %v1558 = vsel %vm224, %v864, 0
        %v1561 = vsel %vm224, %v865, 0
        %v1564 = vsel %vm224, %v866, 0
        %v1567 = vsel %vm224, %v867, 0
        %v1570 = vsel %vm224, %v868, 0
        %v1573 = vsel %vm224, %v869, 0
        %1575 = vmatprep.subr.bf16.mxu0 0
        %1576 = vmatpush1.bf16.msra.mxu0 %v1509
        %1577 = vmatprep.subr.bf16.mxu0 0
        %1578 = vmatpush1.bf16.msra.mxu0 %v1510
        %1579 = vmatprep.subr.bf16.mxu0 0
        %1580 = vmatpush1.bf16.msra.mxu0 %v1511
        %1581 = vmatprep.subr.bf16.mxu0 0
        %1582 = vmatpush1.bf16.msra.mxu0 %v1512
        %1583 = vmatprep.subr.bf16.mxu0 0
        %1584 = vmatpush1.bf16.msra.mxu0 %v1513
        %1585 = vmatprep.subr.bf16.mxu0 0
        %1586 = vmatpush1.bf16.msra.mxu0 %v1514
        %1587 = vmatprep.subr.bf16.mxu0 0
        %1588 = vmatpush1.bf16.msra.mxu0 %v1515
        %1589 = vmatprep.subr.bf16.mxu0 0
        %1590 = vmatpush1.bf16.msra.mxu0 %v1516
        %1591 = vmatprep.subr.bf16.mxu0 0
        %1592 = vmatpush1.bf16.msra.mxu0 %v1517
        %1593 = vmatprep.subr.bf16.mxu0 0
        %1594 = vmatpush1.bf16.msra.mxu0 0
        %1595 = vmatprep.subr.bf16.mxu0 0
        %1596 = vmatpush1.bf16.msra.mxu0 0
        %1597 = vmatprep.subr.bf16.mxu0 0
        %1598 = vmatpush1.bf16.msra.mxu0 0
        %1599 = vmatprep.subr.bf16.mxu0 0
        %1600 = vmatpush1.bf16.msra.mxu0 0
        %1601 = vmatprep.subr.bf16.mxu0 0
        %1602 = vmatpush1.bf16.msra.mxu0 0
        %1603 = vmatprep.subr.bf16.mxu0 0
        %1604 = vmatpush1.bf16.msra.mxu0 0
        %1605 = vmatprep.subr.bf16.mxu0 0
        %1606 = vmatpush1.bf16.msra.mxu0 0
        %1607 = vmatprep.mubr.bf16.mxu0 %v1528
        %1608 = vmatmul.mubr.bf16.gmra.mrb[0].mxu0 %v1420
        %v1609 = vpop.f32.mrb[0].mxu0
        %v1610 = vadd.f32 %v1471, %v1609
        %v1611 = vpop.f32.mrb[0].mxu0
        %v1612 = vpop.f32.mrb[0].mxu0
        %v1613 = vadd.f32 %v1471, %v1612
        %v1614 = vpop.f32.mrb[0].mxu0
        %1615 = vmatprep.mubr.bf16.mxu0 %v1531
        %1616 = vmatmul.mubr.bf16.gmra.mrb[0].mxu0 %v1423
        %v1617 = vpop.f32.mrb[0].mxu0
        %v1618 = vadd.f32 %v1471, %v1617
        %v1619 = vpop.f32.mrb[0].mxu0
        %v1620 = vpop.f32.mrb[0].mxu0
        %v1621 = vadd.f32 %v1471, %v1620
        %v1622 = vpop.f32.mrb[0].mxu0
        %1623 = vmatprep.mubr.bf16.mxu0 %v1534
        %1624 = vmatmul.mubr.bf16.gmra.mrb[0].mxu0 %v1426
        %v1625 = vpop.f32.mrb[0].mxu0
        %v1626 = vadd.f32 %v1471, %v1625
        %v1627 = vpop.f32.mrb[0].mxu0
        %v1628 = vpop.f32.mrb[0].mxu0
        %v1629 = vadd.f32 %v1471, %v1628
        %v1630 = vpop.f32.mrb[0].mxu0
        %1631 = vmatprep.mubr.bf16.mxu0 %v1537
        %1632 = vmatmul.mubr.bf16.gmra.mrb[0].mxu0 %v1429
        %v1633 = vpop.f32.mrb[0].mxu0
        %v1634 = vadd.f32 %v1471, %v1633
        %v1635 = vpop.f32.mrb[0].mxu0
        %v1636 = vpop.f32.mrb[0].mxu0
        %v1637 = vadd.f32 %v1471, %v1636
        %v1638 = vpop.f32.mrb[0].mxu0
        %1639 = vmatprep.mubr.bf16.mxu0 %v1540
        %1640 = vmatmul.mubr.bf16.gmra.mrb[0].mxu0 %v1432
        %v1641 = vpop.f32.mrb[0].mxu0
        %v1642 = vadd.f32 %v1471, %v1641
        %v1643 = vpop.f32.mrb[0].mxu0
        %v1644 = vpop.f32.mrb[0].mxu0
        %v1645 = vadd.f32 %v1471, %v1644
        %v1646 = vpop.f32.mrb[0].mxu0
        %1647 = vmatprep.mubr.bf16.mxu0 %v1543
        %1648 = vmatmul.mubr.bf16.gmra.mrb[0].mxu0 %v1435
        %v1649 = vpop.f32.mrb[0].mxu0
        %v1650 = vadd.f32 %v1471, %v1649
        %v1651 = vpop.f32.mrb[0].mxu0
        %v1652 = vpop.f32.mrb[0].mxu0
        %v1653 = vadd.f32 %v1471, %v1652
        %v1654 = vpop.f32.mrb[0].mxu0
        %1655 = vmatprep.mubr.bf16.mxu0 %v1546
        %1656 = vmatmul.mubr.bf16.gmra.mrb[0].mxu0 %v1438
        %v1657 = vpop.f32.mrb[0].mxu0
        %v1658 = vadd.f32 %v1471, %v1657
        %v1659 = vpop.f32.mrb[0].mxu0
        %v1660 = vpop.f32.mrb[0].mxu0
        %v1661 = vadd.f32 %v1471, %v1660
        %v1662 = vpop.f32.mrb[0].mxu0
        %1663 = vmatprep.mubr.bf16.mxu0 %v1549
        %1664 = vmatmul.mubr.bf16.gmra.mrb[0].mxu0 %v1441
        %v1665 = vpop.f32.mrb[0].mxu0
        %v1666 = vadd.f32 %v1471, %v1665
        %v1667 = vpop.f32.mrb[0].mxu0
        %v1668 = vpop.f32.mrb[0].mxu0
        %v1669 = vadd.f32 %v1471, %v1668
        %v1670 = vpop.f32.mrb[0].mxu0
        %1671 = vmatprep.mubr.bf16.mxu0 %v1552
        %1672 = vmatmul.mubr.bf16.gmra.mrb[0].mxu0 %v1444
        %v1673 = vpop.f32.mrb[0].mxu0
        %v1674 = vadd.f32 %v1471, %v1673
        %v1675 = vpop.f32.mrb[0].mxu0
        %v1676 = vpop.f32.mrb[0].mxu0
        %v1677 = vadd.f32 %v1471, %v1676
        %v1678 = vpop.f32.mrb[0].mxu0
        %1679 = vmatprep.mubr.bf16.mxu0 %v1555
        %1680 = vmatmul.mubr.bf16.gmra.mrb[0].mxu0 %v1447
        %v1681 = vpop.f32.mrb[0].mxu0
        %v1682 = vadd.f32 %v1471, %v1681
        %v1683 = vpop.f32.mrb[0].mxu0
        %v1684 = vpop.f32.mrb[0].mxu0
        %v1685 = vadd.f32 %v1471, %v1684
        %v1686 = vpop.f32.mrb[0].mxu0
        %1687 = vmatprep.mubr.bf16.mxu0 %v1558
        %1688 = vmatmul.mubr.bf16.gmra.mrb[0].mxu0 %v1450
        %v1689 = vpop.f32.mrb[0].mxu0
        %v1690 = vadd.f32 %v1471, %v1689
        %v1691 = vpop.f32.mrb[0].mxu0
        %v1692 = vpop.f32.mrb[0].mxu0
        %v1693 = vadd.f32 %v1471, %v1692
        %v1694 = vpop.f32.mrb[0].mxu0
        %1695 = vmatprep.mubr.bf16.mxu0 %v1561
        %1696 = vmatmul.mubr.bf16.gmra.mrb[0].mxu0 %v1453
        %v1697 = vpop.f32.mrb[0].mxu0
        %v1698 = vadd.f32 %v1471, %v1697
        %v1699 = vpop.f32.mrb[0].mxu0
        %v1700 = vpop.f32.mrb[0].mxu0
        %v1701 = vadd.f32 %v1471, %v1700
        %v1702 = vpop.f32.mrb[0].mxu0
        %1703 = vmatprep.mubr.bf16.mxu0 %v1564
        %1704 = vmatmul.mubr.bf16.gmra.mrb[0].mxu0 %v1456
        %v1705 = vpop.f32.mrb[0].mxu0
        %v1706 = vadd.f32 %v1471, %v1705
        %v1707 = vpop.f32.mrb[0].mxu0
        %v1708 = vpop.f32.mrb[0].mxu0
        %v1709 = vadd.f32 %v1471, %v1708
        %v1710 = vpop.f32.mrb[0].mxu0
        %1711 = vmatprep.mubr.bf16.mxu0 %v1567
        %1712 = vmatmul.mubr.bf16.gmra.mrb[0].mxu0 %v1459
        %v1713 = vpop.f32.mrb[0].mxu0
        %v1714 = vadd.f32 %v1471, %v1713
        %v1715 = vpop.f32.mrb[0].mxu0
        %v1716 = vpop.f32.mrb[0].mxu0
        %v1717 = vadd.f32 %v1471, %v1716
        %v1718 = vpop.f32.mrb[0].mxu0
        %1719 = vmatprep.mubr.bf16.mxu0 %v1570
        %1720 = vmatmul.mubr.bf16.gmra.mrb[0].mxu0 %v1462
        %v1721 = vpop.f32.mrb[0].mxu0
        %v1722 = vadd.f32 %v1471, %v1721
        %v1723 = vpop.f32.mrb[0].mxu0
        %v1724 = vpop.f32.mrb[0].mxu0
        %v1725 = vadd.f32 %v1471, %v1724
        %v1726 = vpop.f32.mrb[0].mxu0
        %1727 = vmatprep.mubr.bf16.mxu0 %v1573
        %1728 = vmatmul.mubr.bf16.gmra.mrb[0].mxu0 %v1465
        %v1729 = vpop.f32.mrb[0].mxu0
        %v1730 = vadd.f32 %v1471, %v1729
        %v1731 = vpop.f32.mrb[0].mxu0
        %v1732 = vpop.f32.mrb[0].mxu0
        %v1733 = vadd.f32 %v1471, %v1732
        %v1734 = vpop.f32.mrb[0].mxu0
        %1735 = vdwg.mxu0
        %v1736 = vmax.f32 %v1610, 0.0
        %v1737 = vmax.f32 %v1613, 0.0
        %v1738 = vmax.f32 %v1618, 0.0
        %v1739 = vmax.f32 %v1621, 0.0
        %v1740 = vmax.f32 %v1626, 0.0
        %v1741 = vmax.f32 %v1629, 0.0
        %v1742 = vmax.f32 %v1634, 0.0
        %v1743 = vmax.f32 %v1637, 0.0
        %v1744 = vmax.f32 %v1642, 0.0
        %v1745 = vmax.f32 %v1645, 0.0
        %v1746 = vmax.f32 %v1650, 0.0
        %v1747 = vmax.f32 %v1653, 0.0
        %v1748 = vmax.f32 %v1658, 0.0
        %v1749 = vmax.f32 %v1661, 0.0
        %v1750 = vmax.f32 %v1666, 0.0
        %v1751 = vmax.f32 %v1669, 0.0
        %v1752 = vmax.f32 %v1674, 0.0
        %v1753 = vmax.f32 %v1677, 0.0
        %v1754 = vmax.f32 %v1682, 0.0
        %v1755 = vmax.f32 %v1685, 0.0
        %v1756 = vmax.f32 %v1690, 0.0
        %v1757 = vmax.f32 %v1693, 0.0
        %v1758 = vmax.f32 %v1698, 0.0
        %v1759 = vmax.f32 %v1701, 0.0
        %v1760 = vmax.f32 %v1706, 0.0
        %v1761 = vmax.f32 %v1709, 0.0
        %v1762 = vmax.f32 %v1714, 0.0
        %v1763 = vmax.f32 %v1717, 0.0
        %v1764 = vmax.f32 %v1722, 0.0
        %v1765 = vmax.f32 %v1725, 0.0
        %v1766 = vmax.f32 %v1730, 0.0
        %v1767 = vmax.f32 %v1733, 0.0
        %1768 = vst.msk [vmem:[%s278 + $0x8] sm:$0xff] %vm268, %v1736
        %1769 = vst.msk [vmem:[%s278 + $0x10] sm:$0xff] %vm268, %v1737
        %1770 = vst.msk [vmem:[%s278 + $0x28] sm:$0xff] %vm268, %v1738
        %1771 = vst.msk [vmem:[%s278 + $0x30] sm:$0xff] %vm268, %v1739
        %1772 = vst.msk [vmem:[%s278 + $0x48] sm:$0xff] %vm268, %v1740
        %1773 = vst.msk [vmem:[%s278 + $0x50] sm:$0xff] %vm268, %v1741
        %1774 = vst.msk [vmem:[%s278 + $0x68] sm:$0xff] %vm268, %v1742
        %1775 = vst.msk [vmem:[%s278 + $0x70] sm:$0xff] %vm268, %v1743
        %1776 = vst.msk [vmem:[%s278 + $0x88] sm:$0xff] %vm268, %v1744
        %1777 = vst.msk [vmem:[%s278 + $0x90] sm:$0xff] %vm268, %v1745
        %1778 = vst.msk [vmem:[%s278 + $0xa8] sm:$0xff] %vm268, %v1746
        %1779 = vst.msk [vmem:[%s278 + $0xb0] sm:$0xff] %vm268, %v1747
        %1780 = vst.msk [vmem:[%s278 + $0xc8] sm:$0xff] %vm268, %v1748
        %1781 = vst.msk [vmem:[%s278 + $0xd0] sm:$0xff] %vm268, %v1749
        %1782 = vst.msk [vmem:[%s278 + $0xe8] sm:$0xff] %vm268, %v1750
        %1783 = vst.msk [vmem:[%s278 + $0xf0] sm:$0xff] %vm268, %v1751
        %1784 = vst.msk [vmem:[%s278 + $0x108] sm:$0xff] %vm268, %v1752
        %1785 = vst.msk [vmem:[%s278 + $0x110] sm:$0xff] %vm268, %v1753
        %1786 = vst.msk [vmem:[%s278 + $0x128] sm:$0xff] %vm268, %v1754
        %1787 = vst.msk [vmem:[%s278 + $0x130] sm:$0xff] %vm268, %v1755
        %1788 = vst.msk [vmem:[%s278 + $0x148] sm:$0xff] %vm268, %v1756
        %1789 = vst.msk [vmem:[%s278 + $0x150] sm:$0xff] %vm268, %v1757
        %1790 = vst.msk [vmem:[%s278 + $0x168] sm:$0xff] %vm268, %v1758
        %1791 = vst.msk [vmem:[%s278 + $0x170] sm:$0xff] %vm268, %v1759
        %1792 = vst.msk [vmem:[%s278 + $0x188] sm:$0xff] %vm268, %v1760
        %1793 = vst.msk [vmem:[%s278 + $0x190] sm:$0xff] %vm268, %v1761
        %1794 = vst.msk [vmem:[%s278 + $0x1a8] sm:$0xff] %vm268, %v1762
        %1795 = vst.msk [vmem:[%s278 + $0x1b0] sm:$0xff] %vm268, %v1763
        %1796 = vst.msk [vmem:[%s278 + $0x1c8] sm:$0xff] %vm268, %v1764
        %1797 = vst.msk [vmem:[%s278 + $0x1d0] sm:$0xff] %vm268, %v1765
        %1798 = vst.msk [vmem:[%s278 + $0x1e8] sm:$0xff] %vm268, %v1766
        %1799 = vst.msk [vmem:[%s278 + $0x1f0] sm:$0xff] %vm268, %v1767
        %v1800 = vld [vmem:[%s3] sm:$0xf]
        %v1801 = vld [vmem:[%s3 + $0x4] sm:$0xf]
        %v1802 = vld [vmem:[%s3 + $0x8] sm:$0xf]
        %v1803 = vld [vmem:[%s3 + $0xc] sm:$0xf]
        %v1804 = vld [vmem:[%s3 + $0x10] sm:$0xf]
        %v1805 = vld [vmem:[%s3 + $0x14] sm:$0xf]
        %v1806 = vld [vmem:[%s3 + $0x18] sm:$0xf]
        %v1807 = vld [vmem:[%s3 + $0x1c] sm:$0xf]
        %v1808 = vld [vmem:[%s3 + $0x20] sm:$0xf]
        %v1809 = vld [vmem:[%s3 + $0x24] sm:$0xf]
        %v1810 = vld [vmem:[%s3 + $0x28] sm:$0xf]
        %v1811 = vld [vmem:[%s3 + $0x2c] sm:$0xf]
        %v1812 = vld [vmem:[%s3 + $0x30] sm:$0xf]
        %v1813 = vld [vmem:[%s3 + $0x34] sm:$0xf]
        %v1814 = vld [vmem:[%s3 + $0x38] sm:$0xf]
        %v1815 = vld [vmem:[%s3 + $0x3c] sm:$0xf]
        %v1816 = vld [vmem:[%s3 + $0x40] sm:$0xf]
        %v1817 = vld [vmem:[%s3 + $0x44] sm:$0xf]
        %v1818 = vld [vmem:[%s3 + $0x48] sm:$0xf]
        %v1819 = vld [vmem:[%s3 + $0x4c] sm:$0xf]
        %v1820 = vld [vmem:[%s3 + $0x50] sm:$0xf]
        %v1821 = vld [vmem:[%s3 + $0x54] sm:$0xf]
        %v1822 = vld [vmem:[%s3 + $0x58] sm:$0xf]
        %v1823 = vld [vmem:[%s3 + $0x5c] sm:$0xf]
        %v1824 = vld [vmem:[%s3 + $0x60] sm:$0xf]
        %v1825 = vld [vmem:[%s3 + $0x64] sm:$0xf]
        %v1826 = vld [vmem:[%s3 + $0x68] sm:$0xf]
        %v1827 = vld [vmem:[%s3 + $0x6c] sm:$0xf]
        %v1828 = vld [vmem:[%s3 + $0x70] sm:$0xf]
        %v1829 = vld [vmem:[%s3 + $0x74] sm:$0xf]
        %v1830 = vld [vmem:[%s3 + $0x78] sm:$0xf]
        %v1831 = vld [vmem:[%s3 + $0x7c] sm:$0xf]
        %v1832 = vld [vmem:[%s3 + $0x80] sm:$0xf]
        %v1833 = vld [vmem:[%s3 + $0x84] sm:$0xf]
        %v1834 = vld [vmem:[%s3 + $0x88] sm:$0xf]
        %v1835 = vld [vmem:[%s3 + $0x8c] sm:$0xf]
        %v1836 = vld [vmem:[%s4] sm:$0x1]
        %v1837 = vld [vmem:[#allocation3 + $0x7] sm:$0xff]
        %v1838 = vld [vmem:[#allocation3 + $0xf] sm:$0xff]
        %v1839 = vld [vmem:[#allocation3 + $0x27] sm:$0xff]
        %v1840 = vld [vmem:[#allocation3 + $0x2f] sm:$0xff]
        %v1841 = vld [vmem:[#allocation3 + $0x47] sm:$0xff]
        %v1842 = vld [vmem:[#allocation3 + $0x4f] sm:$0xff]
        %v1843 = vld [vmem:[#allocation3 + $0x67] sm:$0xff]
        %v1844 = vld [vmem:[#allocation3 + $0x6f] sm:$0xff]
        %v1845 = vld [vmem:[#allocation3 + $0x87] sm:$0xff]
        %v1846 = vld [vmem:[#allocation3 + $0x8f] sm:$0xff]
        %v1847 = vld [vmem:[#allocation3 + $0xa7] sm:$0xff]
        %v1848 = vld [vmem:[#allocation3 + $0xaf] sm:$0xff]
        %v1849 = vld [vmem:[#allocation3 + $0xc7] sm:$0xff]
        %v1850 = vld [vmem:[#allocation3 + $0xcf] sm:$0xff]
        %v1851 = vld [vmem:[#allocation3 + $0xe7] sm:$0xff]
        %v1852 = vld [vmem:[#allocation3 + $0xef] sm:$0xff]
        %v1853 = vld [vmem:[#allocation3 + $0x107] sm:$0xff]
        %v1854 = vld [vmem:[#allocation3 + $0x10f] sm:$0xff]
        %v1855 = vld [vmem:[#allocation3 + $0x127] sm:$0xff]
        %v1856 = vld [vmem:[#allocation3 + $0x12f] sm:$0xff]
        %v1857 = vld [vmem:[#allocation3 + $0x147] sm:$0xff]
        %v1858 = vld [vmem:[#allocation3 + $0x14f] sm:$0xff]
        %v1859 = vld [vmem:[#allocation3 + $0x167] sm:$0xff]
        %v1860 = vld [vmem:[#allocation3 + $0x16f] sm:$0xff]
        %v1861 = vld [vmem:[#allocation3 + $0x187] sm:$0xff]
        %v1862 = vld [vmem:[#allocation3 + $0x18f] sm:$0xff]
        %v1863 = vld [vmem:[#allocation3 + $0x1a7] sm:$0xff]
        %v1864 = vld [vmem:[#allocation3 + $0x1af] sm:$0xff]
        %v1865 = vld [vmem:[#allocation3 + $0x1c7] sm:$0xff]
        %v1866 = vld [vmem:[#allocation3 + $0x1cf] sm:$0xff]
        %v1867 = vld [vmem:[#allocation3 + $0x1e7] sm:$0xff]
        %v1868 = vld [vmem:[#allocation3 + $0x1ef] sm:$0xff]
        %v1869 = vpack.c.bf16 %v1838, %v1837
        %v1870 = vpack.c.bf16 %v1840, %v1839
        %v1871 = vpack.c.bf16 %v1842, %v1841
        %v1872 = vpack.c.bf16 %v1844, %v1843
        %v1873 = vpack.c.bf16 %v1846, %v1845
        %v1874 = vpack.c.bf16 %v1848, %v1847
        %v1875 = vpack.c.bf16 %v1850, %v1849
        %v1876 = vpack.c.bf16 %v1852, %v1851
        %v1877 = vpack.c.bf16 %v1854, %v1853
        %v1878 = vpack.c.bf16 %v1856, %v1855
        %v1879 = vpack.c.bf16 %v1858, %v1857
        %v1880 = vpack.c.bf16 %v1860, %v1859
        %v1881 = vpack.c.bf16 %v1862, %v1861
        %v1882 = vpack.c.bf16 %v1864, %v1863
        %v1883 = vpack.c.bf16 %v1866, %v1865
        %v1884 = vpack.c.bf16 %v1868, %v1867
        %v1885 = vld [vmem:[#allocation3 + $0x8] sm:$0xff]
        %v1886 = vld [vmem:[#allocation3 + $0x10] sm:$0xff]
        %v1887 = vld [vmem:[#allocation3 + $0x28] sm:$0xff]
        %v1888 = vld [vmem:[#allocation3 + $0x30] sm:$0xff]
        %v1889 = vld [vmem:[#allocation3 + $0x48] sm:$0xff]
        %v1890 = vld [vmem:[#allocation3 + $0x50] sm:$0xff]
        %v1891 = vld [vmem:[#allocation3 + $0x68] sm:$0xff]
        %v1892 = vld [vmem:[#allocation3 + $0x70] sm:$0xff]
        %v1893 = vld [vmem:[#allocation3 + $0x88] sm:$0xff]
        %v1894 = vld [vmem:[#allocation3 + $0x90] sm:$0xff]
        %v1895 = vld [vmem:[#allocation3 + $0xa8] sm:$0xff]
        %v1896 = vld [vmem:[#allocation3 + $0xb0] sm:$0xff]
        %v1897 = vld [vmem:[#allocation3 + $0xc8] sm:$0xff]
        %v1898 = vld [vmem:[#allocation3 + $0xd0] sm:$0xff]
        %v1899 = vld [vmem:[#allocation3 + $0xe8] sm:$0xff]
        %v1900 = vld [vmem:[#allocation3 + $0xf0] sm:$0xff]
        %v1901 = vld [vmem:[#allocation3 + $0x108] sm:$0xff]
        %v1902 = vld [vmem:[#allocation3 + $0x110] sm:$0xff]
        %v1903 = vld [vmem:[#allocation3 + $0x128] sm:$0xff]
        %v1904 = vld [vmem:[#allocation3 + $0x130] sm:$0xff]
        %v1905 = vld [vmem:[#allocation3 + $0x148] sm:$0xff]
        %v1906 = vld [vmem:[#allocation3 + $0x150] sm:$0xff]
        %v1907 = vld [vmem:[#allocation3 + $0x168] sm:$0xff]
        %v1908 = vld [vmem:[#allocation3 + $0x170] sm:$0xff]
        %v1909 = vld [vmem:[#allocation3 + $0x188] sm:$0xff]
        %v1910 = vld [vmem:[#allocation3 + $0x190] sm:$0xff]
        %v1911 = vld [vmem:[#allocation3 + $0x1a8] sm:$0xff]
        %v1912 = vld [vmem:[#allocation3 + $0x1b0] sm:$0xff]
        %v1913 = vld [vmem:[#allocation3 + $0x1c8] sm:$0xff]
        %v1914 = vld [vmem:[#allocation3 + $0x1d0] sm:$0xff]
        %v1915 = vld [vmem:[#allocation3 + $0x1e8] sm:$0xff]
        %v1916 = vld [vmem:[#allocation3 + $0x1f0] sm:$0xff]
        %v1917 = vpack.c.bf16 %v1886, %v1885
        %v1918 = vpack.c.bf16 %v1888, %v1887
        %v1919 = vpack.c.bf16 %v1890, %v1889
        %v1920 = vpack.c.bf16 %v1892, %v1891
        %v1921 = vpack.c.bf16 %v1894, %v1893
        %v1922 = vpack.c.bf16 %v1896, %v1895
        %v1923 = vpack.c.bf16 %v1898, %v1897
        %v1924 = vpack.c.bf16 %v1900, %v1899
        %v1925 = vpack.c.bf16 %v1902, %v1901
        %v1926 = vpack.c.bf16 %v1904, %v1903
        %v1927 = vpack.c.bf16 %v1906, %v1905
        %v1928 = vpack.c.bf16 %v1908, %v1907
        %v1929 = vpack.c.bf16 %v1910, %v1909
        %v1930 = vpack.c.bf16 %v1912, %v1911
        %v1931 = vpack.c.bf16 %v1914, %v1913
        %v1932 = vpack.c.bf16 %v1916, %v1915
        %v1933 = vld [vmem:[#allocation3 + $0x9] sm:$0xff]
        %v1934 = vld [vmem:[#allocation3 + $0x11] sm:$0xff]
        %v1935 = vld [vmem:[#allocation3 + $0x29] sm:$0xff]
        %v1936 = vld [vmem:[#allocation3 + $0x31] sm:$0xff]
        %v1937 = vld [vmem:[#allocation3 + $0x49] sm:$0xff]
        %v1938 = vld [vmem:[#allocation3 + $0x51] sm:$0xff]
        %v1939 = vld [vmem:[#allocation3 + $0x69] sm:$0xff]
        %v1940 = vld [vmem:[#allocation3 + $0x71] sm:$0xff]
        %v1941 = vld [vmem:[#allocation3 + $0x89] sm:$0xff]
        %v1942 = vld [vmem:[#allocation3 + $0x91] sm:$0xff]
        %v1943 = vld [vmem:[#allocation3 + $0xa9] sm:$0xff]
        %v1944 = vld [vmem:[#allocation3 + $0xb1] sm:$0xff]
        %v1945 = vld [vmem:[#allocation3 + $0xc9] sm:$0xff]
        %v1946 = vld [vmem:[#allocation3 + $0xd1] sm:$0xff]
        %v1947 = vld [vmem:[#allocation3 + $0xe9] sm:$0xff]
        %v1948 = vld [vmem:[#allocation3 + $0xf1] sm:$0xff]
        %v1949 = vld [vmem:[#allocation3 + $0x109] sm:$0xff]
        %v1950 = vld [vmem:[#allocation3 + $0x111] sm:$0xff]
        %v1951 = vld [vmem:[#allocation3 + $0x129] sm:$0xff]
        %v1952 = vld [vmem:[#allocation3 + $0x131] sm:$0xff]
        %v1953 = vld [vmem:[#allocation3 + $0x149] sm:$0xff]
        %v1954 = vld [vmem:[#allocation3 + $0x151] sm:$0xff]
        %v1955 = vld [vmem:[#allocation3 + $0x169] sm:$0xff]
        %v1956 = vld [vmem:[#allocation3 + $0x171] sm:$0xff]
        %v1957 = vld [vmem:[#allocation3 + $0x189] sm:$0xff]
        %v1958 = vld [vmem:[#allocation3 + $0x191] sm:$0xff]
        %v1959 = vld [vmem:[#allocation3 + $0x1a9] sm:$0xff]
        %v1960 = vld [vmem:[#allocation3 + $0x1b1] sm:$0xff]
        %v1961 = vld [vmem:[#allocation3 + $0x1c9] sm:$0xff]
        %v1962 = vld [vmem:[#allocation3 + $0x1d1] sm:$0xff]
        %v1963 = vld [vmem:[#allocation3 + $0x1e9] sm:$0xff]
        %v1964 = vld [vmem:[#allocation3 + $0x1f1] sm:$0xff]
        %v1965 = vpack.c.bf16 %v1934, %v1933
        %v1966 = vpack.c.bf16 %v1936, %v1935
        %v1967 = vpack.c.bf16 %v1938, %v1937
        %v1968 = vpack.c.bf16 %v1940, %v1939
        %v1969 = vpack.c.bf16 %v1942, %v1941
        %v1970 = vpack.c.bf16 %v1944, %v1943
        %v1971 = vpack.c.bf16 %v1946, %v1945
        %v1972 = vpack.c.bf16 %v1948, %v1947
        %v1973 = vpack.c.bf16 %v1950, %v1949
        %v1974 = vpack.c.bf16 %v1952, %v1951
        %v1975 = vpack.c.bf16 %v1954, %v1953
        %v1976 = vpack.c.bf16 %v1956, %v1955
        %v1977 = vpack.c.bf16 %v1958, %v1957
        %v1978 = vpack.c.bf16 %v1960, %v1959
        %v1979 = vpack.c.bf16 %v1962, %v1961
        %v1980 = vpack.c.bf16 %v1964, %v1963
        %v1981 = vld [vmem:[%s278 + $0x7] sm:$0xff]
        %v1982 = vld [vmem:[%s278 + $0xf] sm:$0xff]
        %v1983 = vld [vmem:[%s278 + $0x27] sm:$0xff]
        %v1984 = vld [vmem:[%s278 + $0x2f] sm:$0xff]
        %v1985 = vld [vmem:[%s278 + $0x47] sm:$0xff]
        %v1986 = vld [vmem:[%s278 + $0x4f] sm:$0xff]
        %v1987 = vld [vmem:[%s278 + $0x67] sm:$0xff]
        %v1988 = vld [vmem:[%s278 + $0x6f] sm:$0xff]
        %v1989 = vld [vmem:[%s278 + $0x87] sm:$0xff]
        %v1990 = vld [vmem:[%s278 + $0x8f] sm:$0xff]
        %v1991 = vld [vmem:[%s278 + $0xa7] sm:$0xff]
        %v1992 = vld [vmem:[%s278 + $0xaf] sm:$0xff]
        %v1993 = vld [vmem:[%s278 + $0xc7] sm:$0xff]
        %v1994 = vld [vmem:[%s278 + $0xcf] sm:$0xff]
        %v1995 = vld [vmem:[%s278 + $0xe7] sm:$0xff]
        %v1996 = vld [vmem:[%s278 + $0xef] sm:$0xff]
        %v1997 = vld [vmem:[%s278 + $0x107] sm:$0xff]
        %v1998 = vld [vmem:[%s278 + $0x10f] sm:$0xff]
        %v1999 = vld [vmem:[%s278 + $0x127] sm:$0xff]
        %v2000 = vld [vmem:[%s278 + $0x12f] sm:$0xff]
        %v2001 = vld [vmem:[%s278 + $0x147] sm:$0xff]
        %v2002 = vld [vmem:[%s278 + $0x14f] sm:$0xff]
        %v2003 = vld [vmem:[%s278 + $0x167] sm:$0xff]
        %v2004 = vld [vmem:[%s278 + $0x16f] sm:$0xff]
        %v2005 = vld [vmem:[%s278 + $0x187] sm:$0xff]
        %v2006 = vld [vmem:[%s278 + $0x18f] sm:$0xff]
        %v2007 = vld [vmem:[%s278 + $0x1a7] sm:$0xff]
        %v2008 = vld [vmem:[%s278 + $0x1af] sm:$0xff]
        %v2009 = vld [vmem:[%s278 + $0x1c7] sm:$0xff]
        %v2010 = vld [vmem:[%s278 + $0x1cf] sm:$0xff]
        %v2011 = vld [vmem:[%s278 + $0x1e7] sm:$0xff]
        %v2012 = vld [vmem:[%s278 + $0x1ef] sm:$0xff]
        %v2013 = vpack.c.bf16 %v1982, %v1981
        %v2014 = vpack.c.bf16 %v1984, %v1983
        %v2015 = vpack.c.bf16 %v1986, %v1985
        %v2016 = vpack.c.bf16 %v1988, %v1987
        %v2017 = vpack.c.bf16 %v1990, %v1989
        %v2018 = vpack.c.bf16 %v1992, %v1991
        %v2019 = vpack.c.bf16 %v1994, %v1993
        %v2020 = vpack.c.bf16 %v1996, %v1995
        %v2021 = vpack.c.bf16 %v1998, %v1997
        %v2022 = vpack.c.bf16 %v2000, %v1999
        %v2023 = vpack.c.bf16 %v2002, %v2001
        %v2024 = vpack.c.bf16 %v2004, %v2003
        %v2025 = vpack.c.bf16 %v2006, %v2005
        %v2026 = vpack.c.bf16 %v2008, %v2007
        %v2027 = vpack.c.bf16 %v2010, %v2009
        %v2028 = vpack.c.bf16 %v2012, %v2011
        %v2029 = vld [vmem:[%s278 + $0x8] sm:$0xff]
        %v2030 = vld [vmem:[%s278 + $0x10] sm:$0xff]
        %v2031 = vld [vmem:[%s278 + $0x28] sm:$0xff]
        %v2032 = vld [vmem:[%s278 + $0x30] sm:$0xff]
        %v2033 = vld [vmem:[%s278 + $0x48] sm:$0xff]
        %v2034 = vld [vmem:[%s278 + $0x50] sm:$0xff]
        %v2035 = vld [vmem:[%s278 + $0x68] sm:$0xff]
        %v2036 = vld [vmem:[%s278 + $0x70] sm:$0xff]
        %v2037 = vld [vmem:[%s278 + $0x88] sm:$0xff]
        %v2038 = vld [vmem:[%s278 + $0x90] sm:$0xff]
        %v2039 = vld [vmem:[%s278 + $0xa8] sm:$0xff]
        %v2040 = vld [vmem:[%s278 + $0xb0] sm:$0xff]
        %v2041 = vld [vmem:[%s278 + $0xc8] sm:$0xff]
        %v2042 = vld [vmem:[%s278 + $0xd0] sm:$0xff]
        %v2043 = vld [vmem:[%s278 + $0xe8] sm:$0xff]
        %v2044 = vld [vmem:[%s278 + $0xf0] sm:$0xff]
        %v2045 = vld [vmem:[%s278 + $0x108] sm:$0xff]
        %v2046 = vld [vmem:[%s278 + $0x110] sm:$0xff]
        %v2047 = vld [vmem:[%s278 + $0x128] sm:$0xff]
        %v2048 = vld [vmem:[%s278 + $0x130] sm:$0xff]
        %v2049 = vld [vmem:[%s278 + $0x148] sm:$0xff]
        %v2050 = vld [vmem:[%s278 + $0x150] sm:$0xff]
        %v2051 = vld [vmem:[%s278 + $0x168] sm:$0xff]
        %v2052 = vld [vmem:[%s278 + $0x170] sm:$0xff]
        %v2053 = vld [vmem:[%s278 + $0x188] sm:$0xff]
        %v2054 = vld [vmem:[%s278 + $0x190] sm:$0xff]
        %v2055 = vld [vmem:[%s278 + $0x1a8] sm:$0xff]
        %v2056 = vld [vmem:[%s278 + $0x1b0] sm:$0xff]
        %v2057 = vld [vmem:[%s278 + $0x1c8] sm:$0xff]
        %v2058 = vld [vmem:[%s278 + $0x1d0] sm:$0xff]
        %v2059 = vld [vmem:[%s278 + $0x1e8] sm:$0xff]
        %v2060 = vld [vmem:[%s278 + $0x1f0] sm:$0xff]
        %v2061 = vpack.c.bf16 %v2030, %v2029
        %v2062 = vpack.c.bf16 %v2032, %v2031
        %v2063 = vpack.c.bf16 %v2034, %v2033
        %v2064 = vpack.c.bf16 %v2036, %v2035
        %v2065 = vpack.c.bf16 %v2038, %v2037
        %v2066 = vpack.c.bf16 %v2040, %v2039
        %v2067 = vpack.c.bf16 %v2042, %v2041
        %v2068 = vpack.c.bf16 %v2044, %v2043
        %v2069 = vpack.c.bf16 %v2046, %v2045
        %v2070 = vpack.c.bf16 %v2048, %v2047
        %v2071 = vpack.c.bf16 %v2050, %v2049
        %v2072 = vpack.c.bf16 %v2052, %v2051
        %v2073 = vpack.c.bf16 %v2054, %v2053
        %v2074 = vpack.c.bf16 %v2056, %v2055
        %v2075 = vpack.c.bf16 %v2058, %v2057
        %v2076 = vpack.c.bf16 %v2060, %v2059
        %v2077 = vld [vmem:[%s278 + $0x9] sm:$0xff]
        %v2078 = vld [vmem:[%s278 + $0x11] sm:$0xff]
        %v2079 = vld [vmem:[%s278 + $0x29] sm:$0xff]
        %v2080 = vld [vmem:[%s278 + $0x31] sm:$0xff]
        %v2081 = vld [vmem:[%s278 + $0x49] sm:$0xff]
        %v2082 = vld [vmem:[%s278 + $0x51] sm:$0xff]
        %v2083 = vld [vmem:[%s278 + $0x69] sm:$0xff]
        %v2084 = vld [vmem:[%s278 + $0x71] sm:$0xff]
        %v2085 = vld [vmem:[%s278 + $0x89] sm:$0xff]
        %v2086 = vld [vmem:[%s278 + $0x91] sm:$0xff]
        %v2087 = vld [vmem:[%s278 + $0xa9] sm:$0xff]
        %v2088 = vld [vmem:[%s278 + $0xb1] sm:$0xff]
        %v2089 = vld [vmem:[%s278 + $0xc9] sm:$0xff]
        %v2090 = vld [vmem:[%s278 + $0xd1] sm:$0xff]
        %v2091 = vld [vmem:[%s278 + $0xe9] sm:$0xff]
        %v2092 = vld [vmem:[%s278 + $0xf1] sm:$0xff]
        %v2093 = vld [vmem:[%s278 + $0x109] sm:$0xff]
        %v2094 = vld [vmem:[%s278 + $0x111] sm:$0xff]
        %v2095 = vld [vmem:[%s278 + $0x129] sm:$0xff]
        %v2096 = vld [vmem:[%s278 + $0x131] sm:$0xff]
        %v2097 = vld [vmem:[%s278 + $0x149] sm:$0xff]
        %v2098 = vld [vmem:[%s278 + $0x151] sm:$0xff]
        %v2099 = vld [vmem:[%s278 + $0x169] sm:$0xff]
        %v2100 = vld [vmem:[%s278 + $0x171] sm:$0xff]
        %v2101 = vld [vmem:[%s278 + $0x189] sm:$0xff]
        %v2102 = vld [vmem:[%s278 + $0x191] sm:$0xff]
        %v2103 = vld [vmem:[%s278 + $0x1a9] sm:$0xff]
        %v2104 = vld [vmem:[%s278 + $0x1b1] sm:$0xff]
        %v2105 = vld [vmem:[%s278 + $0x1c9] sm:$0xff]
        %v2106 = vld [vmem:[%s278 + $0x1d1] sm:$0xff]
        %v2107 = vld [vmem:[%s278 + $0x1e9] sm:$0xff]
        %v2108 = vld [vmem:[%s278 + $0x1f1] sm:$0xff]
        %v2109 = vpack.c.bf16 %v2078, %v2077
        %v2110 = vpack.c.bf16 %v2080, %v2079
        %v2111 = vpack.c.bf16 %v2082, %v2081
        %v2112 = vpack.c.bf16 %v2084, %v2083
        %v2113 = vpack.c.bf16 %v2086, %v2085
        %v2114 = vpack.c.bf16 %v2088, %v2087
        %v2115 = vpack.c.bf16 %v2090, %v2089
        %v2116 = vpack.c.bf16 %v2092, %v2091
        %v2117 = vpack.c.bf16 %v2094, %v2093
        %v2118 = vpack.c.bf16 %v2096, %v2095
        %v2119 = vpack.c.bf16 %v2098, %v2097
        %v2120 = vpack.c.bf16 %v2100, %v2099
        %v2121 = vpack.c.bf16 %v2102, %v2101
        %v2122 = vpack.c.bf16 %v2104, %v2103
        %v2123 = vpack.c.bf16 %v2106, %v2105
        %v2124 = vpack.c.bf16 %v2108, %v2107
        %s2125 = scalar_lea.vmem [#allocation3], 64
        %v2126 = vld [vmem:[%s2125 + $0x7] sm:$0xff]
        %v2127 = vld [vmem:[%s2125 + $0xf] sm:$0xff]
        %v2128 = vld [vmem:[%s2125 + $0x27] sm:$0xff]
        %v2129 = vld [vmem:[%s2125 + $0x2f] sm:$0xff]
        %v2130 = vld [vmem:[%s2125 + $0x47] sm:$0xff]
        %v2131 = vld [vmem:[%s2125 + $0x4f] sm:$0xff]
        %v2132 = vld [vmem:[%s2125 + $0x67] sm:$0xff]
        %v2133 = vld [vmem:[%s2125 + $0x6f] sm:$0xff]
        %v2134 = vld [vmem:[%s2125 + $0x87] sm:$0xff]
        %v2135 = vld [vmem:[%s2125 + $0x8f] sm:$0xff]
        %v2136 = vld [vmem:[%s2125 + $0xa7] sm:$0xff]
        %v2137 = vld [vmem:[%s2125 + $0xaf] sm:$0xff]
        %v2138 = vld [vmem:[%s2125 + $0xc7] sm:$0xff]
        %v2139 = vld [vmem:[%s2125 + $0xcf] sm:$0xff]
        %v2140 = vld [vmem:[%s2125 + $0xe7] sm:$0xff]
        %v2141 = vld [vmem:[%s2125 + $0xef] sm:$0xff]
        %v2142 = vld [vmem:[%s2125 + $0x107] sm:$0xff]
        %v2143 = vld [vmem:[%s2125 + $0x10f] sm:$0xff]
        %v2144 = vld [vmem:[%s2125 + $0x127] sm:$0xff]
        %v2145 = vld [vmem:[%s2125 + $0x12f] sm:$0xff]
        %v2146 = vld [vmem:[%s2125 + $0x147] sm:$0xff]
        %v2147 = vld [vmem:[%s2125 + $0x14f] sm:$0xff]
        %v2148 = vld [vmem:[%s2125 + $0x167] sm:$0xff]
        %v2149 = vld [vmem:[%s2125 + $0x16f] sm:$0xff]
        %v2150 = vld [vmem:[%s2125 + $0x187] sm:$0xff]
        %v2151 = vld [vmem:[%s2125 + $0x18f] sm:$0xff]
        %v2152 = vld [vmem:[%s2125 + $0x1a7] sm:$0xff]
        %v2153 = vld [vmem:[%s2125 + $0x1af] sm:$0xff]
        %v2154 = vld [vmem:[%s2125 + $0x1c7] sm:$0xff]
        %v2155 = vld [vmem:[%s2125 + $0x1cf] sm:$0xff]
        %v2156 = vld [vmem:[%s2125 + $0x1e7] sm:$0xff]
        %v2157 = vld [vmem:[%s2125 + $0x1ef] sm:$0xff]
        %v2158 = vpack.c.bf16 %v2127, %v2126
        %v2159 = vpack.c.bf16 %v2129, %v2128
        %v2160 = vpack.c.bf16 %v2131, %v2130
        %v2161 = vpack.c.bf16 %v2133, %v2132
        %v2162 = vpack.c.bf16 %v2135, %v2134
        %v2163 = vpack.c.bf16 %v2137, %v2136
        %v2164 = vpack.c.bf16 %v2139, %v2138
        %v2165 = vpack.c.bf16 %v2141, %v2140
        %v2166 = vpack.c.bf16 %v2143, %v2142
        %v2167 = vpack.c.bf16 %v2145, %v2144
        %v2168 = vpack.c.bf16 %v2147, %v2146
        %v2169 = vpack.c.bf16 %v2149, %v2148
        %v2170 = vpack.c.bf16 %v2151, %v2150
        %v2171 = vpack.c.bf16 %v2153, %v2152
        %v2172 = vpack.c.bf16 %v2155, %v2154
        %v2173 = vpack.c.bf16 %v2157, %v2156
        %v2174 = vld [vmem:[%s2125 + $0x8] sm:$0xff]
        %v2175 = vld [vmem:[%s2125 + $0x10] sm:$0xff]
        %v2176 = vld [vmem:[%s2125 + $0x28] sm:$0xff]
        %v2177 = vld [vmem:[%s2125 + $0x30] sm:$0xff]
        %v2178 = vld [vmem:[%s2125 + $0x48] sm:$0xff]
        %v2179 = vld [vmem:[%s2125 + $0x50] sm:$0xff]
        %v2180 = vld [vmem:[%s2125 + $0x68] sm:$0xff]
        %v2181 = vld [vmem:[%s2125 + $0x70] sm:$0xff]
        %v2182 = vld [vmem:[%s2125 + $0x88] sm:$0xff]
        %v2183 = vld [vmem:[%s2125 + $0x90] sm:$0xff]
        %v2184 = vld [vmem:[%s2125 + $0xa8] sm:$0xff]
        %v2185 = vld [vmem:[%s2125 + $0xb0] sm:$0xff]
        %v2186 = vld [vmem:[%s2125 + $0xc8] sm:$0xff]
        %v2187 = vld [vmem:[%s2125 + $0xd0] sm:$0xff]
        %v2188 = vld [vmem:[%s2125 + $0xe8] sm:$0xff]
        %v2189 = vld [vmem:[%s2125 + $0xf0] sm:$0xff]
        %v2190 = vld [vmem:[%s2125 + $0x108] sm:$0xff]
        %v2191 = vld [vmem:[%s2125 + $0x110] sm:$0xff]
        %v2192 = vld [vmem:[%s2125 + $0x128] sm:$0xff]
        %v2193 = vld [vmem:[%s2125 + $0x130] sm:$0xff]
        %v2194 = vld [vmem:[%s2125 + $0x148] sm:$0xff]
        %v2195 = vld [vmem:[%s2125 + $0x150] sm:$0xff]
        %v2196 = vld [vmem:[%s2125 + $0x168] sm:$0xff]
        %v2197 = vld [vmem:[%s2125 + $0x170] sm:$0xff]
        %v2198 = vld [vmem:[%s2125 + $0x188] sm:$0xff]
        %v2199 = vld [vmem:[%s2125 + $0x190] sm:$0xff]
        %v2200 = vld [vmem:[%s2125 + $0x1a8] sm:$0xff]
        %v2201 = vld [vmem:[%s2125 + $0x1b0] sm:$0xff]
        %v2202 = vld [vmem:[%s2125 + $0x1c8] sm:$0xff]
        %v2203 = vld [vmem:[%s2125 + $0x1d0] sm:$0xff]
        %v2204 = vld [vmem:[%s2125 + $0x1e8] sm:$0xff]
        %v2205 = vld [vmem:[%s2125 + $0x1f0] sm:$0xff]
        %v2206 = vpack.c.bf16 %v2175, %v2174
        %v2207 = vpack.c.bf16 %v2177, %v2176
        %v2208 = vpack.c.bf16 %v2179, %v2178
        %v2209 = vpack.c.bf16 %v2181, %v2180
        %v2210 = vpack.c.bf16 %v2183, %v2182
        %v2211 = vpack.c.bf16 %v2185, %v2184
        %v2212 = vpack.c.bf16 %v2187, %v2186
        %v2213 = vpack.c.bf16 %v2189, %v2188
        %v2214 = vpack.c.bf16 %v2191, %v2190
        %v2215 = vpack.c.bf16 %v2193, %v2192
        %v2216 = vpack.c.bf16 %v2195, %v2194
        %v2217 = vpack.c.bf16 %v2197, %v2196
        %v2218 = vpack.c.bf16 %v2199, %v2198
        %v2219 = vpack.c.bf16 %v2201, %v2200
        %v2220 = vpack.c.bf16 %v2203, %v2202
        %v2221 = vpack.c.bf16 %v2205, %v2204
        %v2222 = vld [vmem:[%s2125 + $0x9] sm:$0xff]
        %v2223 = vld [vmem:[%s2125 + $0x11] sm:$0xff]
        %v2224 = vld [vmem:[%s2125 + $0x29] sm:$0xff]
        %v2225 = vld [vmem:[%s2125 + $0x31] sm:$0xff]
        %v2226 = vld [vmem:[%s2125 + $0x49] sm:$0xff]
        %v2227 = vld [vmem:[%s2125 + $0x51] sm:$0xff]
        %v2228 = vld [vmem:[%s2125 + $0x69] sm:$0xff]
        %v2229 = vld [vmem:[%s2125 + $0x71] sm:$0xff]
        %v2230 = vld [vmem:[%s2125 + $0x89] sm:$0xff]
        %v2231 = vld [vmem:[%s2125 + $0x91] sm:$0xff]
        %v2232 = vld [vmem:[%s2125 + $0xa9] sm:$0xff]
        %v2233 = vld [vmem:[%s2125 + $0xb1] sm:$0xff]
        %v2234 = vld [vmem:[%s2125 + $0xc9] sm:$0xff]
        %v2235 = vld [vmem:[%s2125 + $0xd1] sm:$0xff]
        %v2236 = vld [vmem:[%s2125 + $0xe9] sm:$0xff]
        %v2237 = vld [vmem:[%s2125 + $0xf1] sm:$0xff]
        %v2238 = vld [vmem:[%s2125 + $0x109] sm:$0xff]
        %v2239 = vld [vmem:[%s2125 + $0x111] sm:$0xff]
        %v2240 = vld [vmem:[%s2125 + $0x129] sm:$0xff]
        %v2241 = vld [vmem:[%s2125 + $0x131] sm:$0xff]
        %v2242 = vld [vmem:[%s2125 + $0x149] sm:$0xff]
        %v2243 = vld [vmem:[%s2125 + $0x151] sm:$0xff]
        %v2244 = vld [vmem:[%s2125 + $0x169] sm:$0xff]
        %v2245 = vld [vmem:[%s2125 + $0x171] sm:$0xff]
        %v2246 = vld [vmem:[%s2125 + $0x189] sm:$0xff]
        %v2247 = vld [vmem:[%s2125 + $0x191] sm:$0xff]
        %v2248 = vld [vmem:[%s2125 + $0x1a9] sm:$0xff]
        %v2249 = vld [vmem:[%s2125 + $0x1b1] sm:$0xff]
        %v2250 = vld [vmem:[%s2125 + $0x1c9] sm:$0xff]
        %v2251 = vld [vmem:[%s2125 + $0x1d1] sm:$0xff]
        %v2252 = vld [vmem:[%s2125 + $0x1e9] sm:$0xff]
        %v2253 = vld [vmem:[%s2125 + $0x1f1] sm:$0xff]
        %v2254 = vpack.c.bf16 %v2223, %v2222
        %v2255 = vpack.c.bf16 %v2225, %v2224
        %v2256 = vpack.c.bf16 %v2227, %v2226
        %v2257 = vpack.c.bf16 %v2229, %v2228
        %v2258 = vpack.c.bf16 %v2231, %v2230
        %v2259 = vpack.c.bf16 %v2233, %v2232
        %v2260 = vpack.c.bf16 %v2235, %v2234
        %v2261 = vpack.c.bf16 %v2237, %v2236
        %v2262 = vpack.c.bf16 %v2239, %v2238
        %v2263 = vpack.c.bf16 %v2241, %v2240
        %v2264 = vpack.c.bf16 %v2243, %v2242
        %v2265 = vpack.c.bf16 %v2245, %v2244
        %v2266 = vpack.c.bf16 %v2247, %v2246
        %v2267 = vpack.c.bf16 %v2249, %v2248
        %v2268 = vpack.c.bf16 %v2251, %v2250
        %v2269 = vpack.c.bf16 %v2253, %v2252
        %2286 = vrot.lane.b32.xlu0 %v1917, 32
        %v2287 = vpop.permute.xlu0 %2286
        %2288 = vrot.lane.b32.xlu0 %v1918, 32
        %v2289 = vpop.permute.xlu0 %2288
        %2290 = vrot.lane.b32.xlu0 %v1919, 32
        %v2291 = vpop.permute.xlu0 %2290
        %2292 = vrot.lane.b32.xlu0 %v1920, 32
        %v2293 = vpop.permute.xlu0 %2292
        %2294 = vrot.lane.b32.xlu0 %v1921, 32
        %v2295 = vpop.permute.xlu0 %2294
        %2296 = vrot.lane.b32.xlu0 %v1922, 32
        %v2297 = vpop.permute.xlu0 %2296
        %2298 = vrot.lane.b32.xlu0 %v1923, 32
        %v2299 = vpop.permute.xlu0 %2298
        %2300 = vrot.lane.b32.xlu0 %v1924, 32
        %v2301 = vpop.permute.xlu0 %2300
        %2302 = vrot.lane.b32.xlu0 %v1925, 32
        %v2303 = vpop.permute.xlu0 %2302
        %2304 = vrot.lane.b32.xlu0 %v1926, 32
        %v2305 = vpop.permute.xlu0 %2304
        %2306 = vrot.lane.b32.xlu0 %v1927, 32
        %v2307 = vpop.permute.xlu0 %2306
        %2308 = vrot.lane.b32.xlu0 %v1928, 32
        %v2309 = vpop.permute.xlu0 %2308
        %2310 = vrot.lane.b32.xlu0 %v1929, 32
        %v2311 = vpop.permute.xlu0 %2310
        %2312 = vrot.lane.b32.xlu0 %v1930, 32
        %v2313 = vpop.permute.xlu0 %2312
        %2314 = vrot.lane.b32.xlu0 %v1931, 32
        %v2315 = vpop.permute.xlu0 %2314
        %2316 = vrot.lane.b32.xlu0 %v1932, 32
        %v2317 = vpop.permute.xlu0 %2316
        %2334 = vrot.lane.b32.xlu0 %v1965, 64
        %v2335 = vpop.permute.xlu0 %2334
        %2336 = vrot.lane.b32.xlu0 %v1966, 64
        %v2337 = vpop.permute.xlu0 %2336
        %2338 = vrot.lane.b32.xlu0 %v1967, 64
        %v2339 = vpop.permute.xlu0 %2338
        %2340 = vrot.lane.b32.xlu0 %v1968, 64
        %v2341 = vpop.permute.xlu0 %2340
        %2342 = vrot.lane.b32.xlu0 %v1969, 64
        %v2343 = vpop.permute.xlu0 %2342
        %2344 = vrot.lane.b32.xlu0 %v1970, 64
        %v2345 = vpop.permute.xlu0 %2344
        %2346 = vrot.lane.b32.xlu0 %v1971, 64
        %v2347 = vpop.permute.xlu0 %2346
        %2348 = vrot.lane.b32.xlu0 %v1972, 64
        %v2349 = vpop.permute.xlu0 %2348
        %2350 = vrot.lane.b32.xlu0 %v1973, 64
        %v2351 = vpop.permute.xlu0 %2350
        %2352 = vrot.lane.b32.xlu0 %v1974, 64
        %v2353 = vpop.permute.xlu0 %2352
        %2354 = vrot.lane.b32.xlu0 %v1975, 64
        %v2355 = vpop.permute.xlu0 %2354
        %2356 = vrot.lane.b32.xlu0 %v1976, 64
        %v2357 = vpop.permute.xlu0 %2356
        %2358 = vrot.lane.b32.xlu0 %v1977, 64
        %v2359 = vpop.permute.xlu0 %2358
        %2360 = vrot.lane.b32.xlu0 %v1978, 64
        %v2361 = vpop.permute.xlu0 %2360
        %2362 = vrot.lane.b32.xlu0 %v1979, 64
        %v2363 = vpop.permute.xlu0 %2362
        %2364 = vrot.lane.b32.xlu0 %v1980, 64
        %v2365 = vpop.permute.xlu0 %2364
        %2382 = vrot.lane.b32.xlu0 %v2013, 96
        %v2383 = vpop.permute.xlu0 %2382
        %2384 = vrot.lane.b32.xlu0 %v2014, 96
        %v2385 = vpop.permute.xlu0 %2384
        %2386 = vrot.lane.b32.xlu0 %v2015, 96
        %v2387 = vpop.permute.xlu0 %2386
        %2388 = vrot.lane.b32.xlu0 %v2016, 96
        %v2389 = vpop.permute.xlu0 %2388
        %2390 = vrot.lane.b32.xlu0 %v2017, 96
        %v2391 = vpop.permute.xlu0 %2390
        %2392 = vrot.lane.b32.xlu0 %v2018, 96
        %v2393 = vpop.permute.xlu0 %2392
        %2394 = vrot.lane.b32.xlu0 %v2019, 96
        %v2395 = vpop.permute.xlu0 %2394
        %2396 = vrot.lane.b32.xlu0 %v2020, 96
        %v2397 = vpop.permute.xlu0 %2396
        %2398 = vrot.lane.b32.xlu0 %v2021, 96
        %v2399 = vpop.permute.xlu0 %2398
        %2400 = vrot.lane.b32.xlu0 %v2022, 96
        %v2401 = vpop.permute.xlu0 %2400
        %2402 = vrot.lane.b32.xlu0 %v2023, 96
        %v2403 = vpop.permute.xlu0 %2402
        %2404 = vrot.lane.b32.xlu0 %v2024, 96
        %v2405 = vpop.permute.xlu0 %2404
        %2406 = vrot.lane.b32.xlu0 %v2025, 96
        %v2407 = vpop.permute.xlu0 %2406
        %2408 = vrot.lane.b32.xlu0 %v2026, 96
        %v2409 = vpop.permute.xlu0 %2408
        %2410 = vrot.lane.b32.xlu0 %v2027, 96
        %v2411 = vpop.permute.xlu0 %2410
        %2412 = vrot.lane.b32.xlu0 %v2028, 96
        %v2413 = vpop.permute.xlu0 %2412
        %2430 = vrot.lane.b32.xlu0 %v2109, 32
        %v2431 = vpop.permute.xlu0 %2430
        %2432 = vrot.lane.b32.xlu0 %v2110, 32
        %v2433 = vpop.permute.xlu0 %2432
        %2434 = vrot.lane.b32.xlu0 %v2111, 32
        %v2435 = vpop.permute.xlu0 %2434
        %2436 = vrot.lane.b32.xlu0 %v2112, 32
        %v2437 = vpop.permute.xlu0 %2436
        %2438 = vrot.lane.b32.xlu0 %v2113, 32
        %v2439 = vpop.permute.xlu0 %2438
        %2440 = vrot.lane.b32.xlu0 %v2114, 32
        %v2441 = vpop.permute.xlu0 %2440
        %2442 = vrot.lane.b32.xlu0 %v2115, 32
        %v2443 = vpop.permute.xlu0 %2442
        %2444 = vrot.lane.b32.xlu0 %v2116, 32
        %v2445 = vpop.permute.xlu0 %2444
        %2446 = vrot.lane.b32.xlu0 %v2117, 32
        %v2447 = vpop.permute.xlu0 %2446
        %2448 = vrot.lane.b32.xlu0 %v2118, 32
        %v2449 = vpop.permute.xlu0 %2448
        %2450 = vrot.lane.b32.xlu0 %v2119, 32
        %v2451 = vpop.permute.xlu0 %2450
        %2452 = vrot.lane.b32.xlu0 %v2120, 32
        %v2453 = vpop.permute.xlu0 %2452
        %2454 = vrot.lane.b32.xlu0 %v2121, 32
        %v2455 = vpop.permute.xlu0 %2454
        %2456 = vrot.lane.b32.xlu0 %v2122, 32
        %v2457 = vpop.permute.xlu0 %2456
        %2458 = vrot.lane.b32.xlu0 %v2123, 32
        %v2459 = vpop.permute.xlu0 %2458
        %2460 = vrot.lane.b32.xlu0 %v2124, 32
        %v2461 = vpop.permute.xlu0 %2460
        %2478 = vrot.lane.b32.xlu0 %v2158, 64
        %v2479 = vpop.permute.xlu0 %2478
        %2480 = vrot.lane.b32.xlu0 %v2159, 64
        %v2481 = vpop.permute.xlu0 %2480
        %2482 = vrot.lane.b32.xlu0 %v2160, 64
        %v2483 = vpop.permute.xlu0 %2482
        %2484 = vrot.lane.b32.xlu0 %v2161, 64
        %v2485 = vpop.permute.xlu0 %2484
        %2486 = vrot.lane.b32.xlu0 %v2162, 64
        %v2487 = vpop.permute.xlu0 %2486
        %2488 = vrot.lane.b32.xlu0 %v2163, 64
        %v2489 = vpop.permute.xlu0 %2488
        %2490 = vrot.lane.b32.xlu0 %v2164, 64
        %v2491 = vpop.permute.xlu0 %2490
        %2492 = vrot.lane.b32.xlu0 %v2165, 64
        %v2493 = vpop.permute.xlu0 %2492
        %2494 = vrot.lane.b32.xlu0 %v2166, 64
        %v2495 = vpop.permute.xlu0 %2494
        %2496 = vrot.lane.b32.xlu0 %v2167, 64
        %v2497 = vpop.permute.xlu0 %2496
        %2498 = vrot.lane.b32.xlu0 %v2168, 64
        %v2499 = vpop.permute.xlu0 %2498
        %2500 = vrot.lane.b32.xlu0 %v2169, 64
        %v2501 = vpop.permute.xlu0 %2500
        %2502 = vrot.lane.b32.xlu0 %v2170, 64
        %v2503 = vpop.permute.xlu0 %2502
        %2504 = vrot.lane.b32.xlu0 %v2171, 64
        %v2505 = vpop.permute.xlu0 %2504
        %2506 = vrot.lane.b32.xlu0 %v2172, 64
        %v2507 = vpop.permute.xlu0 %2506
        %2508 = vrot.lane.b32.xlu0 %v2173, 64
        %v2509 = vpop.permute.xlu0 %2508
        %2526 = vrot.lane.b32.xlu0 %v2206, 96
        %v2527 = vpop.permute.xlu0 %2526
        %2528 = vrot.lane.b32.xlu0 %v2207, 96
        %v2529 = vpop.permute.xlu0 %2528
        %2530 = vrot.lane.b32.xlu0 %v2208, 96
        %v2531 = vpop.permute.xlu0 %2530
        %2532 = vrot.lane.b32.xlu0 %v2209, 96
        %v2533 = vpop.permute.xlu0 %2532
        %2534 = vrot.lane.b32.xlu0 %v2210, 96
        %v2535 = vpop.permute.xlu0 %2534
        %2536 = vrot.lane.b32.xlu0 %v2211, 96
        %v2537 = vpop.permute.xlu0 %2536
        %2538 = vrot.lane.b32.xlu0 %v2212, 96
        %v2539 = vpop.permute.xlu0 %2538
        %2540 = vrot.lane.b32.xlu0 %v2213, 96
        %v2541 = vpop.permute.xlu0 %2540
        %2542 = vrot.lane.b32.xlu0 %v2214, 96
        %v2543 = vpop.permute.xlu0 %2542
        %2544 = vrot.lane.b32.xlu0 %v2215, 96
        %v2545 = vpop.permute.xlu0 %2544
        %2546 = vrot.lane.b32.xlu0 %v2216, 96
        %v2547 = vpop.permute.xlu0 %2546
        %2548 = vrot.lane.b32.xlu0 %v2217, 96
        %v2549 = vpop.permute.xlu0 %2548
        %2550 = vrot.lane.b32.xlu0 %v2218, 96
        %v2551 = vpop.permute.xlu0 %2550
        %2552 = vrot.lane.b32.xlu0 %v2219, 96
        %v2553 = vpop.permute.xlu0 %2552
        %2554 = vrot.lane.b32.xlu0 %v2220, 96
        %v2555 = vpop.permute.xlu0 %2554
        %2556 = vrot.lane.b32.xlu0 %v2221, 96
        %v2557 = vpop.permute.xlu0 %2556
        %v2560 = vsel %vm268, %v1869, %v2287
        %v2563 = vsel %vm268, %v1870, %v2289
        %v2566 = vsel %vm268, %v1871, %v2291
        %v2569 = vsel %vm268, %v1872, %v2293
        %v2572 = vsel %vm268, %v1873, %v2295
        %v2575 = vsel %vm268, %v1874, %v2297
        %v2578 = vsel %vm268, %v1875, %v2299
        %v2581 = vsel %vm268, %v1876, %v2301
        %v2584 = vsel %vm268, %v1877, %v2303
        %v2587 = vsel %vm268, %v1878, %v2305
        %v2590 = vsel %vm268, %v1879, %v2307
        %v2593 = vsel %vm268, %v1880, %v2309
        %v2596 = vsel %vm268, %v1881, %v2311
        %v2599 = vsel %vm268, %v1882, %v2313
        %v2602 = vsel %vm268, %v1883, %v2315
        %v2605 = vsel %vm268, %v1884, %v2317
        %v2607 = vsel %vm1319, %v2560, %v2335
        %v2609 = vsel %vm1319, %v2563, %v2337
        %v2611 = vsel %vm1319, %v2566, %v2339
        %v2613 = vsel %vm1319, %v2569, %v2341
        %v2615 = vsel %vm1319, %v2572, %v2343
        %v2617 = vsel %vm1319, %v2575, %v2345
        %v2619 = vsel %vm1319, %v2578, %v2347
        %v2621 = vsel %vm1319, %v2581, %v2349
        %v2623 = vsel %vm1319, %v2584, %v2351
        %v2625 = vsel %vm1319, %v2587, %v2353
        %v2627 = vsel %vm1319, %v2590, %v2355
        %v2629 = vsel %vm1319, %v2593, %v2357
        %v2631 = vsel %vm1319, %v2596, %v2359
        %v2633 = vsel %vm1319, %v2599, %v2361
        %v2635 = vsel %vm1319, %v2602, %v2363
        %v2637 = vsel %vm1319, %v2605, %v2365
        %v2639 = vsel %vm1385, %v2607, %v2383
        %v2642 = vsel %vm1385, %v2609, %v2385
        %v2645 = vsel %vm1385, %v2611, %v2387
        %v2648 = vsel %vm1385, %v2613, %v2389
        %v2651 = vsel %vm1385, %v2615, %v2391
        %v2654 = vsel %vm1385, %v2617, %v2393
        %v2657 = vsel %vm1385, %v2619, %v2395
        %v2660 = vsel %vm1385, %v2621, %v2397
        %v2663 = vsel %vm1385, %v2623, %v2399
        %v2666 = vsel %vm1385, %v2625, %v2401
        %v2669 = vsel %vm1385, %v2627, %v2403
        %v2672 = vsel %vm1385, %v2629, %v2405
        %v2675 = vsel %vm1385, %v2631, %v2407
        %v2678 = vsel %vm1385, %v2633, %v2409
        %v2681 = vsel %vm1385, %v2635, %v2411
        %v2684 = vsel %vm1385, %v2637, %v2413
        %v2688 = vsel %vm268, %v2061, %v2431
        %v2691 = vsel %vm268, %v2062, %v2433
        %v2694 = vsel %vm268, %v2063, %v2435
        %v2697 = vsel %vm268, %v2064, %v2437
        %v2700 = vsel %vm268, %v2065, %v2439
        %v2703 = vsel %vm268, %v2066, %v2441
        %v2706 = vsel %vm268, %v2067, %v2443
        %v2709 = vsel %vm268, %v2068, %v2445
        %v2712 = vsel %vm268, %v2069, %v2447
        %v2715 = vsel %vm268, %v2070, %v2449
        %v2718 = vsel %vm268, %v2071, %v2451
        %v2721 = vsel %vm268, %v2072, %v2453
        %v2724 = vsel %vm268, %v2073, %v2455
        %v2727 = vsel %vm268, %v2074, %v2457
        %v2730 = vsel %vm268, %v2075, %v2459
        %v2733 = vsel %vm268, %v2076, %v2461
        %v2735 = vsel %vm1319, %v2688, %v2479
        %v2737 = vsel %vm1319, %v2691, %v2481
        %v2739 = vsel %vm1319, %v2694, %v2483
        %v2741 = vsel %vm1319, %v2697, %v2485
        %v2743 = vsel %vm1319, %v2700, %v2487
        %v2745 = vsel %vm1319, %v2703, %v2489
        %v2747 = vsel %vm1319, %v2706, %v2491
        %v2749 = vsel %vm1319, %v2709, %v2493
        %v2751 = vsel %vm1319, %v2712, %v2495
        %v2753 = vsel %vm1319, %v2715, %v2497
        %v2755 = vsel %vm1319, %v2718, %v2499
        %v2757 = vsel %vm1319, %v2721, %v2501
        %v2759 = vsel %vm1319, %v2724, %v2503
        %v2761 = vsel %vm1319, %v2727, %v2505
        %v2763 = vsel %vm1319, %v2730, %v2507
        %v2765 = vsel %vm1319, %v2733, %v2509
        %v2767 = vsel %vm1385, %v2735, %v2527
        %v2770 = vsel %vm1385, %v2737, %v2529
        %v2773 = vsel %vm1385, %v2739, %v2531
        %v2776 = vsel %vm1385, %v2741, %v2533
        %v2779 = vsel %vm1385, %v2743, %v2535
        %v2782 = vsel %vm1385, %v2745, %v2537
        %v2785 = vsel %vm1385, %v2747, %v2539
        %v2788 = vsel %vm1385, %v2749, %v2541
        %v2791 = vsel %vm1385, %v2751, %v2543
        %v2794 = vsel %vm1385, %v2753, %v2545
        %v2797 = vsel %vm1385, %v2755, %v2547
        %v2800 = vsel %vm1385, %v2757, %v2549
        %v2803 = vsel %vm1385, %v2759, %v2551
        %v2806 = vsel %vm1385, %v2761, %v2553
        %v2809 = vsel %vm1385, %v2763, %v2555
        %v2812 = vsel %vm1385, %v2765, %v2557
        %v2815 = vlaneseq
        %v2816 = vshrl.u32 %v2815, 7
        %v2817 = vsub.s32 0, %v2816
        %v2818 = vrot.slane %v1836, %v2817
        %v2856 = vunpack.c.l.b16 %v1800
        %v2857 = vunpack.c.l.b16 %v1801
        %v2858 = vunpack.c.l.b16 %v1802
        %v2859 = vunpack.c.l.b16 %v1803
        %v2860 = vunpack.c.l.b16 %v1804
        %v2861 = vunpack.c.l.b16 %v1805
        %v2862 = vunpack.c.l.b16 %v1806
        %v2863 = vunpack.c.l.b16 %v1807
        %v2864 = vunpack.c.l.b16 %v1808
        %v2865 = vunpack.c.l.b16 %v1809
        %v2866 = vunpack.c.l.b16 %v1810
        %v2867 = vunpack.c.l.b16 %v1811
        %v2868 = vunpack.c.l.b16 %v1812
        %v2869 = vunpack.c.l.b16 %v1813
        %v2870 = vunpack.c.l.b16 %v1814
        %v2871 = vunpack.c.l.b16 %v1815
        %v2872 = vunpack.c.l.b16 %v1816
        %v2873 = vunpack.c.l.b16 %v1817
        %v2874 = vunpack.c.l.b16 %v1818
        %v2875 = vunpack.c.l.b16 %v1819
        %v2876 = vunpack.c.l.b16 %v1820
        %v2877 = vunpack.c.l.b16 %v1821
        %v2878 = vunpack.c.l.b16 %v1822
        %v2879 = vunpack.c.l.b16 %v1823
        %v2880 = vunpack.c.l.b16 %v1824
        %v2881 = vunpack.c.l.b16 %v1825
        %v2882 = vunpack.c.l.b16 %v1826
        %v2883 = vunpack.c.l.b16 %v1827
        %v2884 = vunpack.c.l.b16 %v1828
        %v2885 = vunpack.c.l.b16 %v1829
        %v2886 = vunpack.c.l.b16 %v1830
        %v2887 = vunpack.c.l.b16 %v1831
        %v2888 = vunpack.c.l.b16 %v1832
        %v2889 = vunpack.c.l.b16 %v1833
        %v2890 = vunpack.c.l.b16 %v1834
        %v2891 = vunpack.c.l.b16 %v1835
        %v2892 = vpack.c.b16 %v2857, %v2856
        %v2893 = vpack.c.b16 %v2859, %v2858
        %v2894 = vpack.c.b16 %v2861, %v2860
        %v2895 = vpack.c.b16 %v2863, %v2862
        %v2896 = vpack.c.b16 %v2865, %v2864
        %v2897 = vpack.c.b16 %v2867, %v2866
        %v2898 = vpack.c.b16 %v2869, %v2868
        %v2899 = vpack.c.b16 %v2871, %v2870
        %v2900 = vpack.c.b16 %v2873, %v2872
        %v2901 = vpack.c.b16 %v2875, %v2874
        %v2902 = vpack.c.b16 %v2877, %v2876
        %v2903 = vpack.c.b16 %v2879, %v2878
        %v2904 = vpack.c.b16 %v2881, %v2880
        %v2905 = vpack.c.b16 %v2883, %v2882
        %v2906 = vpack.c.b16 %v2885, %v2884
        %v2907 = vpack.c.b16 %v2887, %v2886
        %v2908 = vpack.c.b16 %v2889, %v2888
        %v2909 = vpack.c.b16 %v2891, %v2890
        %v2929 = vsel %vm268, %v2254, 0
        %v2932 = vsel %vm268, %v2255, 0
        %v2935 = vsel %vm268, %v2256, 0
        %v2938 = vsel %vm268, %v2257, 0
        %v2941 = vsel %vm268, %v2258, 0
        %v2944 = vsel %vm268, %v2259, 0
        %v2947 = vsel %vm268, %v2260, 0
        %v2950 = vsel %vm268, %v2261, 0
        %v2953 = vsel %vm268, %v2262, 0
        %v2956 = vsel %vm268, %v2263, 0
        %v2959 = vsel %vm268, %v2264, 0
        %v2962 = vsel %vm268, %v2265, 0
        %v2965 = vsel %vm268, %v2266, 0
        %v2968 = vsel %vm268, %v2267, 0
        %v2971 = vsel %vm268, %v2268, 0
        %v2974 = vsel %vm268, %v2269, 0
        %2976 = vmatprep.subr.bf16.mxu0 0
        %2977 = vmatpush1.bf16.msra.mxu0 %v2892
        %2978 = vmatprep.subr.bf16.mxu0 0
        %2979 = vmatpush1.bf16.msra.mxu0 %v2893
        %2980 = vmatprep.subr.bf16.mxu0 0
        %2981 = vmatpush1.bf16.msra.mxu0 %v2894
        %2982 = vmatprep.subr.bf16.mxu0 0
        %2983 = vmatpush1.bf16.msra.mxu0 %v2895
        %2984 = vmatprep.subr.bf16.mxu0 0
        %2985 = vmatpush1.bf16.msra.mxu0 %v2896
        %2986 = vmatprep.subr.bf16.mxu0 0
        %2987 = vmatpush1.bf16.msra.mxu0 %v2897
        %2988 = vmatprep.subr.bf16.mxu0 0
        %2989 = vmatpush1.bf16.msra.mxu0 %v2898
        %2990 = vmatprep.subr.bf16.mxu0 0
        %2991 = vmatpush1.bf16.msra.mxu0 %v2899
        %2992 = vmatprep.subr.bf16.mxu0 0
        %2993 = vmatpush1.bf16.msra.mxu0 %v2900
        %2994 = vmatprep.subr.bf16.mxu0 0
        %2995 = vmatpush1.bf16.msra.mxu0 %v2901
        %2996 = vmatprep.subr.bf16.mxu0 0
        %2997 = vmatpush1.bf16.msra.mxu0 %v2902
        %2998 = vmatprep.subr.bf16.mxu0 0
        %2999 = vmatpush1.bf16.msra.mxu0 %v2903
        %3000 = vmatprep.subr.bf16.mxu0 0
        %3001 = vmatpush1.bf16.msra.mxu0 %v2904
        %3002 = vmatprep.subr.bf16.mxu0 0
        %3003 = vmatpush1.bf16.msra.mxu0 %v2905
        %3004 = vmatprep.subr.bf16.mxu0 0
        %3005 = vmatpush1.bf16.msra.mxu0 %v2906
        %3006 = vmatprep.subr.bf16.mxu0 0
        %3007 = vmatpush1.bf16.msra.mxu0 %v2907
        %3008 = vmatprep.mubr.bf16.mxu0 %v2767
        %3009 = vmatmul.mubr.bf16.gmra.mrb[0].mxu0 %v2639
        %v3010 = vpop.f32.mrb[0].mxu0
        %v3011 = vadd.f32 %v2818, %v3010
        %v3012 = vpop.f32.mrb[0].mxu0
        %v3013 = vpop.f32.mrb[0].mxu0
        %v3014 = vadd.f32 %v2818, %v3013
        %v3015 = vpop.f32.mrb[0].mxu0
        %3016 = vmatprep.mubr.bf16.mxu0 %v2770
        %3017 = vmatmul.mubr.bf16.gmra.mrb[0].mxu0 %v2642
        %v3018 = vpop.f32.mrb[0].mxu0
        %v3019 = vadd.f32 %v2818, %v3018
        %v3020 = vpop.f32.mrb[0].mxu0
        %v3021 = vpop.f32.mrb[0].mxu0
        %v3022 = vadd.f32 %v2818, %v3021
        %v3023 = vpop.f32.mrb[0].mxu0
        %3024 = vmatprep.mubr.bf16.mxu0 %v2773
        %3025 = vmatmul.mubr.bf16.gmra.mrb[0].mxu0 %v2645
        %v3026 = vpop.f32.mrb[0].mxu0
        %v3027 = vadd.f32 %v2818, %v3026
        %v3028 = vpop.f32.mrb[0].mxu0
        %v3029 = vpop.f32.mrb[0].mxu0
        %v3030 = vadd.f32 %v2818, %v3029
        %v3031 = vpop.f32.mrb[0].mxu0
        %3032 = vmatprep.mubr.bf16.mxu0 %v2776
        %3033 = vmatmul.mubr.bf16.gmra.mrb[0].mxu0 %v2648
        %v3034 = vpop.f32.mrb[0].mxu0
        %v3035 = vadd.f32 %v2818, %v3034
        %v3036 = vpop.f32.mrb[0].mxu0
        %v3037 = vpop.f32.mrb[0].mxu0
        %v3038 = vadd.f32 %v2818, %v3037
        %v3039 = vpop.f32.mrb[0].mxu0
        %3040 = vmatprep.mubr.bf16.mxu0 %v2779
        %3041 = vmatmul.mubr.bf16.gmra.mrb[0].mxu0 %v2651
        %v3042 = vpop.f32.mrb[0].mxu0
        %v3043 = vadd.f32 %v2818, %v3042
        %v3044 = vpop.f32.mrb[0].mxu0
        %v3045 = vpop.f32.mrb[0].mxu0
        %v3046 = vadd.f32 %v2818, %v3045
        %v3047 = vpop.f32.mrb[0].mxu0
        %3048 = vmatprep.mubr.bf16.mxu0 %v2782
        %3049 = vmatmul.mubr.bf16.gmra.mrb[0].mxu0 %v2654
        %v3050 = vpop.f32.mrb[0].mxu0
        %v3051 = vadd.f32 %v2818, %v3050
        %v3052 = vpop.f32.mrb[0].mxu0
        %v3053 = vpop.f32.mrb[0].mxu0
        %v3054 = vadd.f32 %v2818, %v3053
        %v3055 = vpop.f32.mrb[0].mxu0
        %3056 = vmatprep.mubr.bf16.mxu0 %v2785
        %3057 = vmatmul.mubr.bf16.gmra.mrb[0].mxu0 %v2657
        %v3058 = vpop.f32.mrb[0].mxu0
        %v3059 = vadd.f32 %v2818, %v3058
        %v3060 = vpop.f32.mrb[0].mxu0
        %v3061 = vpop.f32.mrb[0].mxu0
        %v3062 = vadd.f32 %v2818, %v3061
        %v3063 = vpop.f32.mrb[0].mxu0
        %3064 = vmatprep.mubr.bf16.mxu0 %v2788
        %3065 = vmatmul.mubr.bf16.gmra.mrb[0].mxu0 %v2660
        %v3066 = vpop.f32.mrb[0].mxu0
        %v3067 = vadd.f32 %v2818, %v3066
        %v3068 = vpop.f32.mrb[0].mxu0
        %v3069 = vpop.f32.mrb[0].mxu0
        %v3070 = vadd.f32 %v2818, %v3069
        %v3071 = vpop.f32.mrb[0].mxu0
        %3072 = vmatprep.mubr.bf16.mxu0 %v2791
        %3073 = vmatmul.mubr.bf16.gmra.mrb[0].mxu0 %v2663
        %v3074 = vpop.f32.mrb[0].mxu0
        %v3075 = vadd.f32 %v2818, %v3074
        %v3076 = vpop.f32.mrb[0].mxu0
        %v3077 = vpop.f32.mrb[0].mxu0
        %v3078 = vadd.f32 %v2818, %v3077
        %v3079 = vpop.f32.mrb[0].mxu0
        %3080 = vmatprep.mubr.bf16.mxu0 %v2794
        %3081 = vmatmul.mubr.bf16.gmra.mrb[0].mxu0 %v2666
        %v3082 = vpop.f32.mrb[0].mxu0
        %v3083 = vadd.f32 %v2818, %v3082
        %v3084 = vpop.f32.mrb[0].mxu0
        %v3085 = vpop.f32.mrb[0].mxu0
        %v3086 = vadd.f32 %v2818, %v3085
        %v3087 = vpop.f32.mrb[0].mxu0
        %3088 = vmatprep.mubr.bf16.mxu0 %v2797
        %3089 = vmatmul.mubr.bf16.gmra.mrb[0].mxu0 %v2669
        %v3090 = vpop.f32.mrb[0].mxu0
        %v3091 = vadd.f32 %v2818, %v3090
        %v3092 = vpop.f32.mrb[0].mxu0
        %v3093 = vpop.f32.mrb[0].mxu0
        %v3094 = vadd.f32 %v2818, %v3093
        %v3095 = vpop.f32.mrb[0].mxu0
        %3096 = vmatprep.mubr.bf16.mxu0 %v2800
        %3097 = vmatmul.mubr.bf16.gmra.mrb[0].mxu0 %v2672
        %v3098 = vpop.f32.mrb[0].mxu0
        %v3099 = vadd.f32 %v2818, %v3098
        %v3100 = vpop.f32.mrb[0].mxu0
        %v3101 = vpop.f32.mrb[0].mxu0
        %v3102 = vadd.f32 %v2818, %v3101
        %v3103 = vpop.f32.mrb[0].mxu0
        %3104 = vmatprep.mubr.bf16.mxu0 %v2803
        %3105 = vmatmul.mubr.bf16.gmra.mrb[0].mxu0 %v2675
        %v3106 = vpop.f32.mrb[0].mxu0
        %v3107 = vadd.f32 %v2818, %v3106
        %v3108 = vpop.f32.mrb[0].mxu0
        %v3109 = vpop.f32.mrb[0].mxu0
        %v3110 = vadd.f32 %v2818, %v3109
        %v3111 = vpop.f32.mrb[0].mxu0
        %3112 = vmatprep.mubr.bf16.mxu0 %v2806
        %3113 = vmatmul.mubr.bf16.gmra.mrb[0].mxu0 %v2678
        %v3114 = vpop.f32.mrb[0].mxu0
        %v3115 = vadd.f32 %v2818, %v3114
        %v3116 = vpop.f32.mrb[0].mxu0
        %v3117 = vpop.f32.mrb[0].mxu0
        %v3118 = vadd.f32 %v2818, %v3117
        %v3119 = vpop.f32.mrb[0].mxu0
        %3120 = vmatprep.mubr.bf16.mxu0 %v2809
        %3121 = vmatmul.mubr.bf16.gmra.mrb[0].mxu0 %v2681
        %v3122 = vpop.f32.mrb[0].mxu0
        %v3123 = vadd.f32 %v2818, %v3122
        %v3124 = vpop.f32.mrb[0].mxu0
        %v3125 = vpop.f32.mrb[0].mxu0
        %v3126 = vadd.f32 %v2818, %v3125
        %v3127 = vpop.f32.mrb[0].mxu0
        %3128 = vmatprep.mubr.bf16.mxu0 %v2812
        %3129 = vmatmul.mubr.bf16.gmra.mrb[0].mxu0 %v2684
        %v3130 = vpop.f32.mrb[0].mxu0
        %v3131 = vadd.f32 %v2818, %v3130
        %v3132 = vpop.f32.mrb[0].mxu0
        %v3133 = vpop.f32.mrb[0].mxu0
        %v3134 = vadd.f32 %v2818, %v3133
        %v3135 = vpop.f32.mrb[0].mxu0
        %3136 = vdwg.mxu0
        %3137 = vmatprep.subr.bf16.mxu0 0
        %3138 = vmatpush1.bf16.msra.mxu0 %v2908
        %3139 = vmatprep.subr.bf16.mxu0 0
        %3140 = vmatpush1.bf16.msra.mxu0 %v2909
        %3141 = vmatprep.subr.bf16.mxu0 0
        %3142 = vmatpush1.bf16.msra.mxu0 0
        %3143 = vmatprep.subr.bf16.mxu0 0
        %3144 = vmatpush1.bf16.msra.mxu0 0
        %3145 = vmatprep.subr.bf16.mxu0 0
        %3146 = vmatpush1.bf16.msra.mxu0 0
        %3147 = vmatprep.subr.bf16.mxu0 0
        %3148 = vmatpush1.bf16.msra.mxu0 0
        %3149 = vmatprep.subr.bf16.mxu0 0
        %3150 = vmatpush1.bf16.msra.mxu0 0
        %3151 = vmatprep.subr.bf16.mxu0 0
        %3152 = vmatpush1.bf16.msra.mxu0 0
        %3153 = vmatprep.subr.bf16.mxu0 0
        %3154 = vmatpush1.bf16.msra.mxu0 0
        %3155 = vmatprep.subr.bf16.mxu0 0
        %3156 = vmatpush1.bf16.msra.mxu0 0
        %3157 = vmatprep.subr.bf16.mxu0 0
        %3158 = vmatpush1.bf16.msra.mxu0 0
        %3159 = vmatprep.subr.bf16.mxu0 0
        %3160 = vmatpush1.bf16.msra.mxu0 0
        %3161 = vmatprep.subr.bf16.mxu0 0
        %3162 = vmatpush1.bf16.msra.mxu0 0
        %3163 = vmatprep.subr.bf16.mxu0 0
        %3164 = vmatpush1.bf16.msra.mxu0 0
        %3165 = vmatprep.subr.bf16.mxu0 0
        %3166 = vmatpush1.bf16.msra.mxu0 0
        %3167 = vmatprep.subr.bf16.mxu0 0
        %3168 = vmatpush1.bf16.msra.mxu0 0
        %3169 = vmatprep.mubr.bf16.mxu0 0
        %3170 = vmatmul.mubr.bf16.gmra.mrb[0].mxu0 %v2929
        %v3171 = vpop.f32.mrb[0].mxu0
        %v3172 = vadd.f32 %v3011, %v3171
        %v3173 = vpop.f32.mrb[0].mxu0
        %v3174 = vpop.f32.mrb[0].mxu0
        %v3175 = vadd.f32 %v3014, %v3174
        %v3176 = vpop.f32.mrb[0].mxu0
        %3177 = vmatprep.mubr.bf16.mxu0 0
        %3178 = vmatmul.mubr.bf16.gmra.mrb[0].mxu0 %v2932
        %v3179 = vpop.f32.mrb[0].mxu0
        %v3180 = vadd.f32 %v3019, %v3179
        %v3181 = vpop.f32.mrb[0].mxu0
        %v3182 = vpop.f32.mrb[0].mxu0
        %v3183 = vadd.f32 %v3022, %v3182
        %v3184 = vpop.f32.mrb[0].mxu0
        %3185 = vmatprep.mubr.bf16.mxu0 0
        %3186 = vmatmul.mubr.bf16.gmra.mrb[0].mxu0 %v2935
        %v3187 = vpop.f32.mrb[0].mxu0
        %v3188 = vadd.f32 %v3027, %v3187
        %v3189 = vpop.f32.mrb[0].mxu0
        %v3190 = vpop.f32.mrb[0].mxu0
        %v3191 = vadd.f32 %v3030, %v3190
        %v3192 = vpop.f32.mrb[0].mxu0
        %3193 = vmatprep.mubr.bf16.mxu0 0
        %3194 = vmatmul.mubr.bf16.gmra.mrb[0].mxu0 %v2938
        %v3195 = vpop.f32.mrb[0].mxu0
        %v3196 = vadd.f32 %v3035, %v3195
        %v3197 = vpop.f32.mrb[0].mxu0
        %v3198 = vpop.f32.mrb[0].mxu0
        %v3199 = vadd.f32 %v3038, %v3198
        %v3200 = vpop.f32.mrb[0].mxu0
        %3201 = vmatprep.mubr.bf16.mxu0 0
        %3202 = vmatmul.mubr.bf16.gmra.mrb[0].mxu0 %v2941
        %v3203 = vpop.f32.mrb[0].mxu0
        %v3204 = vadd.f32 %v3043, %v3203
        %v3205 = vpop.f32.mrb[0].mxu0
        %v3206 = vpop.f32.mrb[0].mxu0
        %v3207 = vadd.f32 %v3046, %v3206
        %v3208 = vpop.f32.mrb[0].mxu0
        %3209 = vmatprep.mubr.bf16.mxu0 0
        %3210 = vmatmul.mubr.bf16.gmra.mrb[0].mxu0 %v2944
        %v3211 = vpop.f32.mrb[0].mxu0
        %v3212 = vadd.f32 %v3051, %v3211
        %v3213 = vpop.f32.mrb[0].mxu0
        %v3214 = vpop.f32.mrb[0].mxu0
        %v3215 = vadd.f32 %v3054, %v3214
        %v3216 = vpop.f32.mrb[0].mxu0
        %3217 = vmatprep.mubr.bf16.mxu0 0
        %3218 = vmatmul.mubr.bf16.gmra.mrb[0].mxu0 %v2947
        %v3219 = vpop.f32.mrb[0].mxu0
        %v3220 = vadd.f32 %v3059, %v3219
        %v3221 = vpop.f32.mrb[0].mxu0
        %v3222 = vpop.f32.mrb[0].mxu0
        %v3223 = vadd.f32 %v3062, %v3222
        %v3224 = vpop.f32.mrb[0].mxu0
        %3225 = vmatprep.mubr.bf16.mxu0 0
        %3226 = vmatmul.mubr.bf16.gmra.mrb[0].mxu0 %v2950
        %v3227 = vpop.f32.mrb[0].mxu0
        %v3228 = vadd.f32 %v3067, %v3227
        %v3229 = vpop.f32.mrb[0].mxu0
        %v3230 = vpop.f32.mrb[0].mxu0
        %v3231 = vadd.f32 %v3070, %v3230
        %v3232 = vpop.f32.mrb[0].mxu0
        %3233 = vmatprep.mubr.bf16.mxu0 0
        %3234 = vmatmul.mubr.bf16.gmra.mrb[0].mxu0 %v2953
        %v3235 = vpop.f32.mrb[0].mxu0
        %v3236 = vadd.f32 %v3075, %v3235
        %v3237 = vpop.f32.mrb[0].mxu0
        %v3238 = vpop.f32.mrb[0].mxu0
        %v3239 = vadd.f32 %v3078, %v3238
        %v3240 = vpop.f32.mrb[0].mxu0
        %3241 = vmatprep.mubr.bf16.mxu0 0
        %3242 = vmatmul.mubr.bf16.gmra.mrb[0].mxu0 %v2956
        %v3243 = vpop.f32.mrb[0].mxu0
        %v3244 = vadd.f32 %v3083, %v3243
        %v3245 = vpop.f32.mrb[0].mxu0
        %v3246 = vpop.f32.mrb[0].mxu0
        %v3247 = vadd.f32 %v3086, %v3246
        %v3248 = vpop.f32.mrb[0].mxu0
        %3249 = vmatprep.mubr.bf16.mxu0 0
        %3250 = vmatmul.mubr.bf16.gmra.mrb[0].mxu0 %v2959
        %v3251 = vpop.f32.mrb[0].mxu0
        %v3252 = vadd.f32 %v3091, %v3251
        %v3253 = vpop.f32.mrb[0].mxu0
        %v3254 = vpop.f32.mrb[0].mxu0
        %v3255 = vadd.f32 %v3094, %v3254
        %v3256 = vpop.f32.mrb[0].mxu0
        %3257 = vmatprep.mubr.bf16.mxu0 0
        %3258 = vmatmul.mubr.bf16.gmra.mrb[0].mxu0 %v2962
        %v3259 = vpop.f32.mrb[0].mxu0
        %v3260 = vadd.f32 %v3099, %v3259
        %v3261 = vpop.f32.mrb[0].mxu0
        %v3262 = vpop.f32.mrb[0].mxu0
        %v3263 = vadd.f32 %v3102, %v3262
        %v3264 = vpop.f32.mrb[0].mxu0
        %3265 = vmatprep.mubr.bf16.mxu0 0
        %3266 = vmatmul.mubr.bf16.gmra.mrb[0].mxu0 %v2965
        %v3267 = vpop.f32.mrb[0].mxu0
        %v3268 = vadd.f32 %v3107, %v3267
        %v3269 = vpop.f32.mrb[0].mxu0
        %v3270 = vpop.f32.mrb[0].mxu0
        %v3271 = vadd.f32 %v3110, %v3270
        %v3272 = vpop.f32.mrb[0].mxu0
        %3273 = vmatprep.mubr.bf16.mxu0 0
        %3274 = vmatmul.mubr.bf16.gmra.mrb[0].mxu0 %v2968
        %v3275 = vpop.f32.mrb[0].mxu0
        %v3276 = vadd.f32 %v3115, %v3275
        %v3277 = vpop.f32.mrb[0].mxu0
        %v3278 = vpop.f32.mrb[0].mxu0
        %v3279 = vadd.f32 %v3118, %v3278
        %v3280 = vpop.f32.mrb[0].mxu0
        %3281 = vmatprep.mubr.bf16.mxu0 0
        %3282 = vmatmul.mubr.bf16.gmra.mrb[0].mxu0 %v2971
        %v3283 = vpop.f32.mrb[0].mxu0
        %v3284 = vadd.f32 %v3123, %v3283
        %v3285 = vpop.f32.mrb[0].mxu0
        %v3286 = vpop.f32.mrb[0].mxu0
        %v3287 = vadd.f32 %v3126, %v3286
        %v3288 = vpop.f32.mrb[0].mxu0
        %3289 = vmatprep.mubr.bf16.mxu0 0
        %3290 = vmatmul.mubr.bf16.gmra.mrb[0].mxu0 %v2974
        %v3291 = vpop.f32.mrb[0].mxu0
        %v3292 = vadd.f32 %v3131, %v3291
        %v3293 = vpop.f32.mrb[0].mxu0
        %v3294 = vpop.f32.mrb[0].mxu0
        %v3295 = vadd.f32 %v3134, %v3294
        %v3296 = vpop.f32.mrb[0].mxu0
        %3297 = vdwg.mxu0
        %v3298 = vmax.f32 %v3172, 0.0
        %v3299 = vmax.f32 %v3175, 0.0
        %v3300 = vmax.f32 %v3180, 0.0
        %v3301 = vmax.f32 %v3183, 0.0
        %v3302 = vmax.f32 %v3188, 0.0
        %v3303 = vmax.f32 %v3191, 0.0
        %v3304 = vmax.f32 %v3196, 0.0
        %v3305 = vmax.f32 %v3199, 0.0
        %v3306 = vmax.f32 %v3204, 0.0
        %v3307 = vmax.f32 %v3207, 0.0
        %v3308 = vmax.f32 %v3212, 0.0
        %v3309 = vmax.f32 %v3215, 0.0
        %v3310 = vmax.f32 %v3220, 0.0
        %v3311 = vmax.f32 %v3223, 0.0
        %v3312 = vmax.f32 %v3228, 0.0
        %v3313 = vmax.f32 %v3231, 0.0
        %v3314 = vmax.f32 %v3236, 0.0
        %v3315 = vmax.f32 %v3239, 0.0
        %v3316 = vmax.f32 %v3244, 0.0
        %v3317 = vmax.f32 %v3247, 0.0
        %v3318 = vmax.f32 %v3252, 0.0
        %v3319 = vmax.f32 %v3255, 0.0
        %v3320 = vmax.f32 %v3260, 0.0
        %v3321 = vmax.f32 %v3263, 0.0
        %v3322 = vmax.f32 %v3268, 0.0
        %v3323 = vmax.f32 %v3271, 0.0
        %v3324 = vmax.f32 %v3276, 0.0
        %v3325 = vmax.f32 %v3279, 0.0
        %v3326 = vmax.f32 %v3284, 0.0
        %v3327 = vmax.f32 %v3287, 0.0
        %v3328 = vmax.f32 %v3292, 0.0
        %v3329 = vmax.f32 %v3295, 0.0
        %3330 = vst.msk [vmem:[%s321 + $0x8] sm:$0xff] %vm268, %v3298
        %3331 = vst.msk [vmem:[%s321 + $0x10] sm:$0xff] %vm268, %v3299
        %3332 = vst.msk [vmem:[%s321 + $0x28] sm:$0xff] %vm268, %v3300
        %3333 = vst.msk [vmem:[%s321 + $0x30] sm:$0xff] %vm268, %v3301
        %3334 = vst.msk [vmem:[%s321 + $0x48] sm:$0xff] %vm268, %v3302
        %3335 = vst.msk [vmem:[%s321 + $0x50] sm:$0xff] %vm268, %v3303
        %3336 = vst.msk [vmem:[%s321 + $0x68] sm:$0xff] %vm268, %v3304
        %3337 = vst.msk [vmem:[%s321 + $0x70] sm:$0xff] %vm268, %v3305
        %3338 = vst.msk [vmem:[%s321 + $0x88] sm:$0xff] %vm268, %v3306
        %3339 = vst.msk [vmem:[%s321 + $0x90] sm:$0xff] %vm268, %v3307
        %3340 = vst.msk [vmem:[%s321 + $0xa8] sm:$0xff] %vm268, %v3308
        %3341 = vst.msk [vmem:[%s321 + $0xb0] sm:$0xff] %vm268, %v3309
        %3342 = vst.msk [vmem:[%s321 + $0xc8] sm:$0xff] %vm268, %v3310
        %3343 = vst.msk [vmem:[%s321 + $0xd0] sm:$0xff] %vm268, %v3311
        %3344 = vst.msk [vmem:[%s321 + $0xe8] sm:$0xff] %vm268, %v3312
        %3345 = vst.msk [vmem:[%s321 + $0xf0] sm:$0xff] %vm268, %v3313
        %3346 = vst.msk [vmem:[%s321 + $0x108] sm:$0xff] %vm268, %v3314
        %3347 = vst.msk [vmem:[%s321 + $0x110] sm:$0xff] %vm268, %v3315
        %3348 = vst.msk [vmem:[%s321 + $0x128] sm:$0xff] %vm268, %v3316
        %3349 = vst.msk [vmem:[%s321 + $0x130] sm:$0xff] %vm268, %v3317
        %3350 = vst.msk [vmem:[%s321 + $0x148] sm:$0xff] %vm268, %v3318
        %3351 = vst.msk [vmem:[%s321 + $0x150] sm:$0xff] %vm268, %v3319
        %3352 = vst.msk [vmem:[%s321 + $0x168] sm:$0xff] %vm268, %v3320
        %3353 = vst.msk [vmem:[%s321 + $0x170] sm:$0xff] %vm268, %v3321
        %3354 = vst.msk [vmem:[%s321 + $0x188] sm:$0xff] %vm268, %v3322
        %3355 = vst.msk [vmem:[%s321 + $0x190] sm:$0xff] %vm268, %v3323
        %3356 = vst.msk [vmem:[%s321 + $0x1a8] sm:$0xff] %vm268, %v3324
        %3357 = vst.msk [vmem:[%s321 + $0x1b0] sm:$0xff] %vm268, %v3325
        %3358 = vst.msk [vmem:[%s321 + $0x1c8] sm:$0xff] %vm268, %v3326
        %3359 = vst.msk [vmem:[%s321 + $0x1d0] sm:$0xff] %vm268, %v3327
        %3360 = vst.msk [vmem:[%s321 + $0x1e8] sm:$0xff] %vm268, %v3328
        %3361 = vst.msk [vmem:[%s321 + $0x1f0] sm:$0xff] %vm268, %v3329
        %v3362 = vld [vmem:[%s278 + $0x8] sm:$0xff]
        %v3363 = vld [vmem:[%s278 + $0x10] sm:$0xff]
        %v3364 = vld [vmem:[%s278 + $0x28] sm:$0xff]
        %v3365 = vld [vmem:[%s278 + $0x30] sm:$0xff]
        %v3366 = vld [vmem:[%s278 + $0x48] sm:$0xff]
        %v3367 = vld [vmem:[%s278 + $0x50] sm:$0xff]
        %v3368 = vld [vmem:[%s278 + $0x68] sm:$0xff]
        %v3369 = vld [vmem:[%s278 + $0x70] sm:$0xff]
        %v3370 = vld [vmem:[%s278 + $0x88] sm:$0xff]
        %v3371 = vld [vmem:[%s278 + $0x90] sm:$0xff]
        %v3372 = vld [vmem:[%s278 + $0xa8] sm:$0xff]
        %v3373 = vld [vmem:[%s278 + $0xb0] sm:$0xff]
        %v3374 = vld [vmem:[%s278 + $0xc8] sm:$0xff]
        %v3375 = vld [vmem:[%s278 + $0xd0] sm:$0xff]
        %v3376 = vld [vmem:[%s278 + $0xe8] sm:$0xff]
        %v3377 = vld [vmem:[%s278 + $0xf0] sm:$0xff]
        %v3378 = vld [vmem:[%s278 + $0x108] sm:$0xff]
        %v3379 = vld [vmem:[%s278 + $0x110] sm:$0xff]
        %v3380 = vld [vmem:[%s278 + $0x128] sm:$0xff]
        %v3381 = vld [vmem:[%s278 + $0x130] sm:$0xff]
        %v3382 = vld [vmem:[%s278 + $0x148] sm:$0xff]
        %v3383 = vld [vmem:[%s278 + $0x150] sm:$0xff]
        %v3384 = vld [vmem:[%s278 + $0x168] sm:$0xff]
        %v3385 = vld [vmem:[%s278 + $0x170] sm:$0xff]
        %v3386 = vld [vmem:[%s278 + $0x188] sm:$0xff]
        %v3387 = vld [vmem:[%s278 + $0x190] sm:$0xff]
        %v3388 = vld [vmem:[%s278 + $0x1a8] sm:$0xff]
        %v3389 = vld [vmem:[%s278 + $0x1b0] sm:$0xff]
        %v3390 = vld [vmem:[%s278 + $0x1c8] sm:$0xff]
        %v3391 = vld [vmem:[%s278 + $0x1d0] sm:$0xff]
        %v3392 = vld [vmem:[%s278 + $0x1e8] sm:$0xff]
        %v3393 = vld [vmem:[%s278 + $0x1f0] sm:$0xff]
        %s3394 = scalar_lea.vmem %s3, 144
        %v3395 = vld [vmem:[%s3394] sm:$0xf]
        %v3396 = vld [vmem:[%s3394 + $0x4] sm:$0xf]
        %v3397 = vld [vmem:[%s3394 + $0x8] sm:$0xf]
        %v3398 = vld [vmem:[%s3394 + $0xc] sm:$0xf]
        %v3399 = vld [vmem:[%s3394 + $0x10] sm:$0xf]
        %v3400 = vld [vmem:[%s3394 + $0x14] sm:$0xf]
        %v3401 = vld [vmem:[%s3394 + $0x18] sm:$0xf]
        %v3402 = vld [vmem:[%s3394 + $0x1c] sm:$0xf]
        %v3403 = vld [vmem:[%s3394 + $0x20] sm:$0xf]
        %v3404 = vld [vmem:[%s3394 + $0x24] sm:$0xf]
        %v3405 = vld [vmem:[%s3394 + $0x28] sm:$0xf]
        %v3406 = vld [vmem:[%s3394 + $0x2c] sm:$0xf]
        %v3407 = vld [vmem:[%s3394 + $0x30] sm:$0xf]
        %v3408 = vld [vmem:[%s3394 + $0x34] sm:$0xf]
        %v3409 = vld [vmem:[%s3394 + $0x38] sm:$0xf]
        %v3410 = vld [vmem:[%s3394 + $0x3c] sm:$0xf]
        %v3411 = vld [vmem:[%s3394 + $0x40] sm:$0xf]
        %v3412 = vld [vmem:[%s3394 + $0x44] sm:$0xf]
        %v3413 = vld [vmem:[%s3394 + $0x48] sm:$0xf]
        %v3414 = vld [vmem:[%s3394 + $0x4c] sm:$0xf]
        %v3415 = vld [vmem:[%s3394 + $0x50] sm:$0xf]
        %v3416 = vld [vmem:[%s3394 + $0x54] sm:$0xf]
        %v3417 = vld [vmem:[%s3394 + $0x58] sm:$0xf]
        %v3418 = vld [vmem:[%s3394 + $0x5c] sm:$0xf]
        %v3419 = vld [vmem:[%s3394 + $0x60] sm:$0xf]
        %v3420 = vld [vmem:[%s3394 + $0x64] sm:$0xf]
        %v3421 = vld [vmem:[%s3394 + $0x68] sm:$0xf]
        %v3422 = vld [vmem:[%s3394 + $0x6c] sm:$0xf]
        %v3423 = vld [vmem:[%s3394 + $0x70] sm:$0xf]
        %v3424 = vld [vmem:[%s3394 + $0x74] sm:$0xf]
        %v3425 = vld [vmem:[%s3394 + $0x78] sm:$0xf]
        %v3426 = vld [vmem:[%s3394 + $0x7c] sm:$0xf]
        %v3427 = vld [vmem:[%s3394 + $0x80] sm:$0xf]
        %v3428 = vld [vmem:[%s3394 + $0x84] sm:$0xf]
        %v3429 = vld [vmem:[%s3394 + $0x88] sm:$0xf]
        %v3430 = vld [vmem:[%s3394 + $0x8c] sm:$0xf]
        %s3431 = scalar_lea.vmem %s4, 1
        %v3432 = vld [vmem:[%s3431] sm:$0x1]
        %v3433 = vld [vmem:[#allocation4 + $0x7] sm:$0xff]
        %v3434 = vld [vmem:[#allocation4 + $0xf] sm:$0xff]
        %v3435 = vld [vmem:[#allocation4 + $0x27] sm:$0xff]
        %v3436 = vld [vmem:[#allocation4 + $0x2f] sm:$0xff]
        %v3437 = vld [vmem:[#allocation4 + $0x47] sm:$0xff]
        %v3438 = vld [vmem:[#allocation4 + $0x4f] sm:$0xff]
        %v3439 = vld [vmem:[#allocation4 + $0x67] sm:$0xff]
        %v3440 = vld [vmem:[#allocation4 + $0x6f] sm:$0xff]
        %v3441 = vld [vmem:[#allocation4 + $0x87] sm:$0xff]
        %v3442 = vld [vmem:[#allocation4 + $0x8f] sm:$0xff]
        %v3443 = vld [vmem:[#allocation4 + $0xa7] sm:$0xff]
        %v3444 = vld [vmem:[#allocation4 + $0xaf] sm:$0xff]
        %v3445 = vld [vmem:[#allocation4 + $0xc7] sm:$0xff]
        %v3446 = vld [vmem:[#allocation4 + $0xcf] sm:$0xff]
        %v3447 = vld [vmem:[#allocation4 + $0xe7] sm:$0xff]
        %v3448 = vld [vmem:[#allocation4 + $0xef] sm:$0xff]
        %v3449 = vld [vmem:[#allocation4 + $0x107] sm:$0xff]
        %v3450 = vld [vmem:[#allocation4 + $0x10f] sm:$0xff]
        %v3451 = vld [vmem:[#allocation4 + $0x127] sm:$0xff]
        %v3452 = vld [vmem:[#allocation4 + $0x12f] sm:$0xff]
        %v3453 = vld [vmem:[#allocation4 + $0x147] sm:$0xff]
        %v3454 = vld [vmem:[#allocation4 + $0x14f] sm:$0xff]
        %v3455 = vld [vmem:[#allocation4 + $0x167] sm:$0xff]
        %v3456 = vld [vmem:[#allocation4 + $0x16f] sm:$0xff]
        %v3457 = vld [vmem:[#allocation4 + $0x187] sm:$0xff]
        %v3458 = vld [vmem:[#allocation4 + $0x18f] sm:$0xff]
        %v3459 = vld [vmem:[#allocation4 + $0x1a7] sm:$0xff]
        %v3460 = vld [vmem:[#allocation4 + $0x1af] sm:$0xff]
        %v3461 = vld [vmem:[#allocation4 + $0x1c7] sm:$0xff]
        %v3462 = vld [vmem:[#allocation4 + $0x1cf] sm:$0xff]
        %v3463 = vld [vmem:[#allocation4 + $0x1e7] sm:$0xff]
        %v3464 = vld [vmem:[#allocation4 + $0x1ef] sm:$0xff]
        %v3465 = vpack.c.bf16 %v3434, %v3433
        %v3466 = vpack.c.bf16 %v3436, %v3435
        %v3467 = vpack.c.bf16 %v3438, %v3437
        %v3468 = vpack.c.bf16 %v3440, %v3439
        %v3469 = vpack.c.bf16 %v3442, %v3441
        %v3470 = vpack.c.bf16 %v3444, %v3443
        %v3471 = vpack.c.bf16 %v3446, %v3445
        %v3472 = vpack.c.bf16 %v3448, %v3447
        %v3473 = vpack.c.bf16 %v3450, %v3449
        %v3474 = vpack.c.bf16 %v3452, %v3451
        %v3475 = vpack.c.bf16 %v3454, %v3453
        %v3476 = vpack.c.bf16 %v3456, %v3455
        %v3477 = vpack.c.bf16 %v3458, %v3457
        %v3478 = vpack.c.bf16 %v3460, %v3459
        %v3479 = vpack.c.bf16 %v3462, %v3461
        %v3480 = vpack.c.bf16 %v3464, %v3463
        %v3481 = vld [vmem:[#allocation4 + $0x8] sm:$0xff]
        %v3482 = vld [vmem:[#allocation4 + $0x10] sm:$0xff]
        %v3483 = vld [vmem:[#allocation4 + $0x28] sm:$0xff]
        %v3484 = vld [vmem:[#allocation4 + $0x30] sm:$0xff]
        %v3485 = vld [vmem:[#allocation4 + $0x48] sm:$0xff]
        %v3486 = vld [vmem:[#allocation4 + $0x50] sm:$0xff]
        %v3487 = vld [vmem:[#allocation4 + $0x68] sm:$0xff]
        %v3488 = vld [vmem:[#allocation4 + $0x70] sm:$0xff]
        %v3489 = vld [vmem:[#allocation4 + $0x88] sm:$0xff]
        %v3490 = vld [vmem:[#allocation4 + $0x90] sm:$0xff]
        %v3491 = vld [vmem:[#allocation4 + $0xa8] sm:$0xff]
        %v3492 = vld [vmem:[#allocation4 + $0xb0] sm:$0xff]
        %v3493 = vld [vmem:[#allocation4 + $0xc8] sm:$0xff]
        %v3494 = vld [vmem:[#allocation4 + $0xd0] sm:$0xff]
        %v3495 = vld [vmem:[#allocation4 + $0xe8] sm:$0xff]
        %v3496 = vld [vmem:[#allocation4 + $0xf0] sm:$0xff]
        %v3497 = vld [vmem:[#allocation4 + $0x108] sm:$0xff]
        %v3498 = vld [vmem:[#allocation4 + $0x110] sm:$0xff]
        %v3499 = vld [vmem:[#allocation4 + $0x128] sm:$0xff]
        %v3500 = vld [vmem:[#allocation4 + $0x130] sm:$0xff]
        %v3501 = vld [vmem:[#allocation4 + $0x148] sm:$0xff]
        %v3502 = vld [vmem:[#allocation4 + $0x150] sm:$0xff]
        %v3503 = vld [vmem:[#allocation4 + $0x168] sm:$0xff]
        %v3504 = vld [vmem:[#allocation4 + $0x170] sm:$0xff]
        %v3505 = vld [vmem:[#allocation4 + $0x188] sm:$0xff]
        %v3506 = vld [vmem:[#allocation4 + $0x190] sm:$0xff]
        %v3507 = vld [vmem:[#allocation4 + $0x1a8] sm:$0xff]
        %v3508 = vld [vmem:[#allocation4 + $0x1b0] sm:$0xff]
        %v3509 = vld [vmem:[#allocation4 + $0x1c8] sm:$0xff]
        %v3510 = vld [vmem:[#allocation4 + $0x1d0] sm:$0xff]
        %v3511 = vld [vmem:[#allocation4 + $0x1e8] sm:$0xff]
        %v3512 = vld [vmem:[#allocation4 + $0x1f0] sm:$0xff]
        %v3513 = vpack.c.bf16 %v3482, %v3481
        %v3514 = vpack.c.bf16 %v3484, %v3483
        %v3515 = vpack.c.bf16 %v3486, %v3485
        %v3516 = vpack.c.bf16 %v3488, %v3487
        %v3517 = vpack.c.bf16 %v3490, %v3489
        %v3518 = vpack.c.bf16 %v3492, %v3491
        %v3519 = vpack.c.bf16 %v3494, %v3493
        %v3520 = vpack.c.bf16 %v3496, %v3495
        %v3521 = vpack.c.bf16 %v3498, %v3497
        %v3522 = vpack.c.bf16 %v3500, %v3499
        %v3523 = vpack.c.bf16 %v3502, %v3501
        %v3524 = vpack.c.bf16 %v3504, %v3503
        %v3525 = vpack.c.bf16 %v3506, %v3505
        %v3526 = vpack.c.bf16 %v3508, %v3507
        %v3527 = vpack.c.bf16 %v3510, %v3509
        %v3528 = vpack.c.bf16 %v3512, %v3511
        %v3529 = vld [vmem:[#allocation4 + $0x9] sm:$0xff]
        %v3530 = vld [vmem:[#allocation4 + $0x11] sm:$0xff]
        %v3531 = vld [vmem:[#allocation4 + $0x29] sm:$0xff]
        %v3532 = vld [vmem:[#allocation4 + $0x31] sm:$0xff]
        %v3533 = vld [vmem:[#allocation4 + $0x49] sm:$0xff]
        %v3534 = vld [vmem:[#allocation4 + $0x51] sm:$0xff]
        %v3535 = vld [vmem:[#allocation4 + $0x69] sm:$0xff]
        %v3536 = vld [vmem:[#allocation4 + $0x71] sm:$0xff]
        %v3537 = vld [vmem:[#allocation4 + $0x89] sm:$0xff]
        %v3538 = vld [vmem:[#allocation4 + $0x91] sm:$0xff]
        %v3539 = vld [vmem:[#allocation4 + $0xa9] sm:$0xff]
        %v3540 = vld [vmem:[#allocation4 + $0xb1] sm:$0xff]
        %v3541 = vld [vmem:[#allocation4 + $0xc9] sm:$0xff]
        %v3542 = vld [vmem:[#allocation4 + $0xd1] sm:$0xff]
        %v3543 = vld [vmem:[#allocation4 + $0xe9] sm:$0xff]
        %v3544 = vld [vmem:[#allocation4 + $0xf1] sm:$0xff]
        %v3545 = vld [vmem:[#allocation4 + $0x109] sm:$0xff]
        %v3546 = vld [vmem:[#allocation4 + $0x111] sm:$0xff]
        %v3547 = vld [vmem:[#allocation4 + $0x129] sm:$0xff]
        %v3548 = vld [vmem:[#allocation4 + $0x131] sm:$0xff]
        %v3549 = vld [vmem:[#allocation4 + $0x149] sm:$0xff]
        %v3550 = vld [vmem:[#allocation4 + $0x151] sm:$0xff]
        %v3551 = vld [vmem:[#allocation4 + $0x169] sm:$0xff]
        %v3552 = vld [vmem:[#allocation4 + $0x171] sm:$0xff]
        %v3553 = vld [vmem:[#allocation4 + $0x189] sm:$0xff]
        %v3554 = vld [vmem:[#allocation4 + $0x191] sm:$0xff]
        %v3555 = vld [vmem:[#allocation4 + $0x1a9] sm:$0xff]
        %v3556 = vld [vmem:[#allocation4 + $0x1b1] sm:$0xff]
        %v3557 = vld [vmem:[#allocation4 + $0x1c9] sm:$0xff]
        %v3558 = vld [vmem:[#allocation4 + $0x1d1] sm:$0xff]
        %v3559 = vld [vmem:[#allocation4 + $0x1e9] sm:$0xff]
        %v3560 = vld [vmem:[#allocation4 + $0x1f1] sm:$0xff]
        %v3561 = vpack.c.bf16 %v3530, %v3529
        %v3562 = vpack.c.bf16 %v3532, %v3531
        %v3563 = vpack.c.bf16 %v3534, %v3533
        %v3564 = vpack.c.bf16 %v3536, %v3535
        %v3565 = vpack.c.bf16 %v3538, %v3537
        %v3566 = vpack.c.bf16 %v3540, %v3539
        %v3567 = vpack.c.bf16 %v3542, %v3541
        %v3568 = vpack.c.bf16 %v3544, %v3543
        %v3569 = vpack.c.bf16 %v3546, %v3545
        %v3570 = vpack.c.bf16 %v3548, %v3547
        %v3571 = vpack.c.bf16 %v3550, %v3549
        %v3572 = vpack.c.bf16 %v3552, %v3551
        %v3573 = vpack.c.bf16 %v3554, %v3553
        %v3574 = vpack.c.bf16 %v3556, %v3555
        %v3575 = vpack.c.bf16 %v3558, %v3557
        %v3576 = vpack.c.bf16 %v3560, %v3559
        %v3577 = vld [vmem:[%s321 + $0x7] sm:$0xff]
        %v3578 = vld [vmem:[%s321 + $0xf] sm:$0xff]
        %v3579 = vld [vmem:[%s321 + $0x27] sm:$0xff]
        %v3580 = vld [vmem:[%s321 + $0x2f] sm:$0xff]
        %v3581 = vld [vmem:[%s321 + $0x47] sm:$0xff]
        %v3582 = vld [vmem:[%s321 + $0x4f] sm:$0xff]
        %v3583 = vld [vmem:[%s321 + $0x67] sm:$0xff]
        %v3584 = vld [vmem:[%s321 + $0x6f] sm:$0xff]
        %v3585 = vld [vmem:[%s321 + $0x87] sm:$0xff]
        %v3586 = vld [vmem:[%s321 + $0x8f] sm:$0xff]
        %v3587 = vld [vmem:[%s321 + $0xa7] sm:$0xff]
        %v3588 = vld [vmem:[%s321 + $0xaf] sm:$0xff]
        %v3589 = vld [vmem:[%s321 + $0xc7] sm:$0xff]
        %v3590 = vld [vmem:[%s321 + $0xcf] sm:$0xff]
        %v3591 = vld [vmem:[%s321 + $0xe7] sm:$0xff]
        %v3592 = vld [vmem:[%s321 + $0xef] sm:$0xff]
        %v3593 = vld [vmem:[%s321 + $0x107] sm:$0xff]
        %v3594 = vld [vmem:[%s321 + $0x10f] sm:$0xff]
        %v3595 = vld [vmem:[%s321 + $0x127] sm:$0xff]
        %v3596 = vld [vmem:[%s321 + $0x12f] sm:$0xff]
        %v3597 = vld [vmem:[%s321 + $0x147] sm:$0xff]
        %v3598 = vld [vmem:[%s321 + $0x14f] sm:$0xff]
        %v3599 = vld [vmem:[%s321 + $0x167] sm:$0xff]
        %v3600 = vld [vmem:[%s321 + $0x16f] sm:$0xff]
        %v3601 = vld [vmem:[%s321 + $0x187] sm:$0xff]
        %v3602 = vld [vmem:[%s321 + $0x18f] sm:$0xff]
        %v3603 = vld [vmem:[%s321 + $0x1a7] sm:$0xff]
        %v3604 = vld [vmem:[%s321 + $0x1af] sm:$0xff]
        %v3605 = vld [vmem:[%s321 + $0x1c7] sm:$0xff]
        %v3606 = vld [vmem:[%s321 + $0x1cf] sm:$0xff]
        %v3607 = vld [vmem:[%s321 + $0x1e7] sm:$0xff]
        %v3608 = vld [vmem:[%s321 + $0x1ef] sm:$0xff]
        %v3609 = vpack.c.bf16 %v3578, %v3577
        %v3610 = vpack.c.bf16 %v3580, %v3579
        %v3611 = vpack.c.bf16 %v3582, %v3581
        %v3612 = vpack.c.bf16 %v3584, %v3583
        %v3613 = vpack.c.bf16 %v3586, %v3585
        %v3614 = vpack.c.bf16 %v3588, %v3587
        %v3615 = vpack.c.bf16 %v3590, %v3589
        %v3616 = vpack.c.bf16 %v3592, %v3591
        %v3617 = vpack.c.bf16 %v3594, %v3593
        %v3618 = vpack.c.bf16 %v3596, %v3595
        %v3619 = vpack.c.bf16 %v3598, %v3597
        %v3620 = vpack.c.bf16 %v3600, %v3599
        %v3621 = vpack.c.bf16 %v3602, %v3601
        %v3622 = vpack.c.bf16 %v3604, %v3603
        %v3623 = vpack.c.bf16 %v3606, %v3605
        %v3624 = vpack.c.bf16 %v3608, %v3607
        %v3625 = vld [vmem:[%s321 + $0x8] sm:$0xff]
        %v3626 = vld [vmem:[%s321 + $0x10] sm:$0xff]
        %v3627 = vld [vmem:[%s321 + $0x28] sm:$0xff]
        %v3628 = vld [vmem:[%s321 + $0x30] sm:$0xff]
        %v3629 = vld [vmem:[%s321 + $0x48] sm:$0xff]
        %v3630 = vld [vmem:[%s321 + $0x50] sm:$0xff]
        %v3631 = vld [vmem:[%s321 + $0x68] sm:$0xff]
        %v3632 = vld [vmem:[%s321 + $0x70] sm:$0xff]
        %v3633 = vld [vmem:[%s321 + $0x88] sm:$0xff]
        %v3634 = vld [vmem:[%s321 + $0x90] sm:$0xff]
        %v3635 = vld [vmem:[%s321 + $0xa8] sm:$0xff]
        %v3636 = vld [vmem:[%s321 + $0xb0] sm:$0xff]
        %v3637 = vld [vmem:[%s321 + $0xc8] sm:$0xff]
        %v3638 = vld [vmem:[%s321 + $0xd0] sm:$0xff]
        %v3639 = vld [vmem:[%s321 + $0xe8] sm:$0xff]
        %v3640 = vld [vmem:[%s321 + $0xf0] sm:$0xff]
        %v3641 = vld [vmem:[%s321 + $0x108] sm:$0xff]
        %v3642 = vld [vmem:[%s321 + $0x110] sm:$0xff]
        %v3643 = vld [vmem:[%s321 + $0x128] sm:$0xff]
        %v3644 = vld [vmem:[%s321 + $0x130] sm:$0xff]
        %v3645 = vld [vmem:[%s321 + $0x148] sm:$0xff]
        %v3646 = vld [vmem:[%s321 + $0x150] sm:$0xff]
        %v3647 = vld [vmem:[%s321 + $0x168] sm:$0xff]
        %v3648 = vld [vmem:[%s321 + $0x170] sm:$0xff]
        %v3649 = vld [vmem:[%s321 + $0x188] sm:$0xff]
        %v3650 = vld [vmem:[%s321 + $0x190] sm:$0xff]
        %v3651 = vld [vmem:[%s321 + $0x1a8] sm:$0xff]
        %v3652 = vld [vmem:[%s321 + $0x1b0] sm:$0xff]
        %v3653 = vld [vmem:[%s321 + $0x1c8] sm:$0xff]
        %v3654 = vld [vmem:[%s321 + $0x1d0] sm:$0xff]
        %v3655 = vld [vmem:[%s321 + $0x1e8] sm:$0xff]
        %v3656 = vld [vmem:[%s321 + $0x1f0] sm:$0xff]
        %v3657 = vpack.c.bf16 %v3626, %v3625
        %v3658 = vpack.c.bf16 %v3628, %v3627
        %v3659 = vpack.c.bf16 %v3630, %v3629
        %v3660 = vpack.c.bf16 %v3632, %v3631
        %v3661 = vpack.c.bf16 %v3634, %v3633
        %v3662 = vpack.c.bf16 %v3636, %v3635
        %v3663 = vpack.c.bf16 %v3638, %v3637
        %v3664 = vpack.c.bf16 %v3640, %v3639
        %v3665 = vpack.c.bf16 %v3642, %v3641
        %v3666 = vpack.c.bf16 %v3644, %v3643
        %v3667 = vpack.c.bf16 %v3646, %v3645
        %v3668 = vpack.c.bf16 %v3648, %v3647
        %v3669 = vpack.c.bf16 %v3650, %v3649
        %v3670 = vpack.c.bf16 %v3652, %v3651
        %v3671 = vpack.c.bf16 %v3654, %v3653
        %v3672 = vpack.c.bf16 %v3656, %v3655
        %v3673 = vld [vmem:[%s321 + $0x9] sm:$0xff]
        %v3674 = vld [vmem:[%s321 + $0x11] sm:$0xff]
        %v3675 = vld [vmem:[%s321 + $0x29] sm:$0xff]
        %v3676 = vld [vmem:[%s321 + $0x31] sm:$0xff]
        %v3677 = vld [vmem:[%s321 + $0x49] sm:$0xff]
        %v3678 = vld [vmem:[%s321 + $0x51] sm:$0xff]
        %v3679 = vld [vmem:[%s321 + $0x69] sm:$0xff]
        %v3680 = vld [vmem:[%s321 + $0x71] sm:$0xff]
        %v3681 = vld [vmem:[%s321 + $0x89] sm:$0xff]
        %v3682 = vld [vmem:[%s321 + $0x91] sm:$0xff]
        %v3683 = vld [vmem:[%s321 + $0xa9] sm:$0xff]
        %v3684 = vld [vmem:[%s321 + $0xb1] sm:$0xff]
        %v3685 = vld [vmem:[%s321 + $0xc9] sm:$0xff]
        %v3686 = vld [vmem:[%s321 + $0xd1] sm:$0xff]
        %v3687 = vld [vmem:[%s321 + $0xe9] sm:$0xff]
        %v3688 = vld [vmem:[%s321 + $0xf1] sm:$0xff]
        %v3689 = vld [vmem:[%s321 + $0x109] sm:$0xff]
        %v3690 = vld [vmem:[%s321 + $0x111] sm:$0xff]
        %v3691 = vld [vmem:[%s321 + $0x129] sm:$0xff]
        %v3692 = vld [vmem:[%s321 + $0x131] sm:$0xff]
        %v3693 = vld [vmem:[%s321 + $0x149] sm:$0xff]
        %v3694 = vld [vmem:[%s321 + $0x151] sm:$0xff]
        %v3695 = vld [vmem:[%s321 + $0x169] sm:$0xff]
        %v3696 = vld [vmem:[%s321 + $0x171] sm:$0xff]
        %v3697 = vld [vmem:[%s321 + $0x189] sm:$0xff]
        %v3698 = vld [vmem:[%s321 + $0x191] sm:$0xff]
        %v3699 = vld [vmem:[%s321 + $0x1a9] sm:$0xff]
        %v3700 = vld [vmem:[%s321 + $0x1b1] sm:$0xff]
        %v3701 = vld [vmem:[%s321 + $0x1c9] sm:$0xff]
        %v3702 = vld [vmem:[%s321 + $0x1d1] sm:$0xff]
        %v3703 = vld [vmem:[%s321 + $0x1e9] sm:$0xff]
        %v3704 = vld [vmem:[%s321 + $0x1f1] sm:$0xff]
        %v3705 = vpack.c.bf16 %v3674, %v3673
        %v3706 = vpack.c.bf16 %v3676, %v3675
        %v3707 = vpack.c.bf16 %v3678, %v3677
        %v3708 = vpack.c.bf16 %v3680, %v3679
        %v3709 = vpack.c.bf16 %v3682, %v3681
        %v3710 = vpack.c.bf16 %v3684, %v3683
        %v3711 = vpack.c.bf16 %v3686, %v3685
        %v3712 = vpack.c.bf16 %v3688, %v3687
        %v3713 = vpack.c.bf16 %v3690, %v3689
        %v3714 = vpack.c.bf16 %v3692, %v3691
        %v3715 = vpack.c.bf16 %v3694, %v3693
        %v3716 = vpack.c.bf16 %v3696, %v3695
        %v3717 = vpack.c.bf16 %v3698, %v3697
        %v3718 = vpack.c.bf16 %v3700, %v3699
        %v3719 = vpack.c.bf16 %v3702, %v3701
        %v3720 = vpack.c.bf16 %v3704, %v3703
        %s3721 = scalar_lea.vmem [#allocation4], 64
        %v3722 = vld [vmem:[%s3721 + $0x7] sm:$0xff]
        %v3723 = vld [vmem:[%s3721 + $0xf] sm:$0xff]
        %v3724 = vld [vmem:[%s3721 + $0x27] sm:$0xff]
        %v3725 = vld [vmem:[%s3721 + $0x2f] sm:$0xff]
        %v3726 = vld [vmem:[%s3721 + $0x47] sm:$0xff]
        %v3727 = vld [vmem:[%s3721 + $0x4f] sm:$0xff]
        %v3728 = vld [vmem:[%s3721 + $0x67] sm:$0xff]
        %v3729 = vld [vmem:[%s3721 + $0x6f] sm:$0xff]
        %v3730 = vld [vmem:[%s3721 + $0x87] sm:$0xff]
        %v3731 = vld [vmem:[%s3721 + $0x8f] sm:$0xff]
        %v3732 = vld [vmem:[%s3721 + $0xa7] sm:$0xff]
        %v3733 = vld [vmem:[%s3721 + $0xaf] sm:$0xff]
        %v3734 = vld [vmem:[%s3721 + $0xc7] sm:$0xff]
        %v3735 = vld [vmem:[%s3721 + $0xcf] sm:$0xff]
        %v3736 = vld [vmem:[%s3721 + $0xe7] sm:$0xff]
        %v3737 = vld [vmem:[%s3721 + $0xef] sm:$0xff]
        %v3738 = vld [vmem:[%s3721 + $0x107] sm:$0xff]
        %v3739 = vld [vmem:[%s3721 + $0x10f] sm:$0xff]
        %v3740 = vld [vmem:[%s3721 + $0x127] sm:$0xff]
        %v3741 = vld [vmem:[%s3721 + $0x12f] sm:$0xff]
        %v3742 = vld [vmem:[%s3721 + $0x147] sm:$0xff]
        %v3743 = vld [vmem:[%s3721 + $0x14f] sm:$0xff]
        %v3744 = vld [vmem:[%s3721 + $0x167] sm:$0xff]
        %v3745 = vld [vmem:[%s3721 + $0x16f] sm:$0xff]
        %v3746 = vld [vmem:[%s3721 + $0x187] sm:$0xff]
        %v3747 = vld [vmem:[%s3721 + $0x18f] sm:$0xff]
        %v3748 = vld [vmem:[%s3721 + $0x1a7] sm:$0xff]
        %v3749 = vld [vmem:[%s3721 + $0x1af] sm:$0xff]
        %v3750 = vld [vmem:[%s3721 + $0x1c7] sm:$0xff]
        %v3751 = vld [vmem:[%s3721 + $0x1cf] sm:$0xff]
        %v3752 = vld [vmem:[%s3721 + $0x1e7] sm:$0xff]
        %v3753 = vld [vmem:[%s3721 + $0x1ef] sm:$0xff]
        %v3754 = vpack.c.bf16 %v3723, %v3722
        %v3755 = vpack.c.bf16 %v3725, %v3724
        %v3756 = vpack.c.bf16 %v3727, %v3726
        %v3757 = vpack.c.bf16 %v3729, %v3728
        %v3758 = vpack.c.bf16 %v3731, %v3730
        %v3759 = vpack.c.bf16 %v3733, %v3732
        %v3760 = vpack.c.bf16 %v3735, %v3734
        %v3761 = vpack.c.bf16 %v3737, %v3736
        %v3762 = vpack.c.bf16 %v3739, %v3738
        %v3763 = vpack.c.bf16 %v3741, %v3740
        %v3764 = vpack.c.bf16 %v3743, %v3742
        %v3765 = vpack.c.bf16 %v3745, %v3744
        %v3766 = vpack.c.bf16 %v3747, %v3746
        %v3767 = vpack.c.bf16 %v3749, %v3748
        %v3768 = vpack.c.bf16 %v3751, %v3750
        %v3769 = vpack.c.bf16 %v3753, %v3752
        %v3770 = vld [vmem:[%s3721 + $0x8] sm:$0xff]
        %v3771 = vld [vmem:[%s3721 + $0x10] sm:$0xff]
        %v3772 = vld [vmem:[%s3721 + $0x28] sm:$0xff]
        %v3773 = vld [vmem:[%s3721 + $0x30] sm:$0xff]
        %v3774 = vld [vmem:[%s3721 + $0x48] sm:$0xff]
        %v3775 = vld [vmem:[%s3721 + $0x50] sm:$0xff]
        %v3776 = vld [vmem:[%s3721 + $0x68] sm:$0xff]
        %v3777 = vld [vmem:[%s3721 + $0x70] sm:$0xff]
        %v3778 = vld [vmem:[%s3721 + $0x88] sm:$0xff]
        %v3779 = vld [vmem:[%s3721 + $0x90] sm:$0xff]
        %v3780 = vld [vmem:[%s3721 + $0xa8] sm:$0xff]
        %v3781 = vld [vmem:[%s3721 + $0xb0] sm:$0xff]
        %v3782 = vld [vmem:[%s3721 + $0xc8] sm:$0xff]
        %v3783 = vld [vmem:[%s3721 + $0xd0] sm:$0xff]
        %v3784 = vld [vmem:[%s3721 + $0xe8] sm:$0xff]
        %v3785 = vld [vmem:[%s3721 + $0xf0] sm:$0xff]
        %v3786 = vld [vmem:[%s3721 + $0x108] sm:$0xff]
        %v3787 = vld [vmem:[%s3721 + $0x110] sm:$0xff]
        %v3788 = vld [vmem:[%s3721 + $0x128] sm:$0xff]
        %v3789 = vld [vmem:[%s3721 + $0x130] sm:$0xff]
        %v3790 = vld [vmem:[%s3721 + $0x148] sm:$0xff]
        %v3791 = vld [vmem:[%s3721 + $0x150] sm:$0xff]
        %v3792 = vld [vmem:[%s3721 + $0x168] sm:$0xff]
        %v3793 = vld [vmem:[%s3721 + $0x170] sm:$0xff]
        %v3794 = vld [vmem:[%s3721 + $0x188] sm:$0xff]
        %v3795 = vld [vmem:[%s3721 + $0x190] sm:$0xff]
        %v3796 = vld [vmem:[%s3721 + $0x1a8] sm:$0xff]
        %v3797 = vld [vmem:[%s3721 + $0x1b0] sm:$0xff]
        %v3798 = vld [vmem:[%s3721 + $0x1c8] sm:$0xff]
        %v3799 = vld [vmem:[%s3721 + $0x1d0] sm:$0xff]
        %v3800 = vld [vmem:[%s3721 + $0x1e8] sm:$0xff]
        %v3801 = vld [vmem:[%s3721 + $0x1f0] sm:$0xff]
        %v3802 = vpack.c.bf16 %v3771, %v3770
        %v3803 = vpack.c.bf16 %v3773, %v3772
        %v3804 = vpack.c.bf16 %v3775, %v3774
        %v3805 = vpack.c.bf16 %v3777, %v3776
        %v3806 = vpack.c.bf16 %v3779, %v3778
        %v3807 = vpack.c.bf16 %v3781, %v3780
        %v3808 = vpack.c.bf16 %v3783, %v3782
        %v3809 = vpack.c.bf16 %v3785, %v3784
        %v3810 = vpack.c.bf16 %v3787, %v3786
        %v3811 = vpack.c.bf16 %v3789, %v3788
        %v3812 = vpack.c.bf16 %v3791, %v3790
        %v3813 = vpack.c.bf16 %v3793, %v3792
        %v3814 = vpack.c.bf16 %v3795, %v3794
        %v3815 = vpack.c.bf16 %v3797, %v3796
        %v3816 = vpack.c.bf16 %v3799, %v3798
        %v3817 = vpack.c.bf16 %v3801, %v3800
        %v3818 = vld [vmem:[%s3721 + $0x9] sm:$0xff]
        %v3819 = vld [vmem:[%s3721 + $0x11] sm:$0xff]
        %v3820 = vld [vmem:[%s3721 + $0x29] sm:$0xff]
        %v3821 = vld [vmem:[%s3721 + $0x31] sm:$0xff]
        %v3822 = vld [vmem:[%s3721 + $0x49] sm:$0xff]
        %v3823 = vld [vmem:[%s3721 + $0x51] sm:$0xff]
        %v3824 = vld [vmem:[%s3721 + $0x69] sm:$0xff]
        %v3825 = vld [vmem:[%s3721 + $0x71] sm:$0xff]
        %v3826 = vld [vmem:[%s3721 + $0x89] sm:$0xff]
        %v3827 = vld [vmem:[%s3721 + $0x91] sm:$0xff]
        %v3828 = vld [vmem:[%s3721 + $0xa9] sm:$0xff]
        %v3829 = vld [vmem:[%s3721 + $0xb1] sm:$0xff]
        %v3830 = vld [vmem:[%s3721 + $0xc9] sm:$0xff]
        %v3831 = vld [vmem:[%s3721 + $0xd1] sm:$0xff]
        %v3832 = vld [vmem:[%s3721 + $0xe9] sm:$0xff]
        %v3833 = vld [vmem:[%s3721 + $0xf1] sm:$0xff]
        %v3834 = vld [vmem:[%s3721 + $0x109] sm:$0xff]
        %v3835 = vld [vmem:[%s3721 + $0x111] sm:$0xff]
        %v3836 = vld [vmem:[%s3721 + $0x129] sm:$0xff]
        %v3837 = vld [vmem:[%s3721 + $0x131] sm:$0xff]
        %v3838 = vld [vmem:[%s3721 + $0x149] sm:$0xff]
        %v3839 = vld [vmem:[%s3721 + $0x151] sm:$0xff]
        %v3840 = vld [vmem:[%s3721 + $0x169] sm:$0xff]
        %v3841 = vld [vmem:[%s3721 + $0x171] sm:$0xff]
        %v3842 = vld [vmem:[%s3721 + $0x189] sm:$0xff]
        %v3843 = vld [vmem:[%s3721 + $0x191] sm:$0xff]
        %v3844 = vld [vmem:[%s3721 + $0x1a9] sm:$0xff]
        %v3845 = vld [vmem:[%s3721 + $0x1b1] sm:$0xff]
        %v3846 = vld [vmem:[%s3721 + $0x1c9] sm:$0xff]
        %v3847 = vld [vmem:[%s3721 + $0x1d1] sm:$0xff]
        %v3848 = vld [vmem:[%s3721 + $0x1e9] sm:$0xff]
        %v3849 = vld [vmem:[%s3721 + $0x1f1] sm:$0xff]
        %v3850 = vpack.c.bf16 %v3819, %v3818
        %v3851 = vpack.c.bf16 %v3821, %v3820
        %v3852 = vpack.c.bf16 %v3823, %v3822
        %v3853 = vpack.c.bf16 %v3825, %v3824
        %v3854 = vpack.c.bf16 %v3827, %v3826
        %v3855 = vpack.c.bf16 %v3829, %v3828
        %v3856 = vpack.c.bf16 %v3831, %v3830
        %v3857 = vpack.c.bf16 %v3833, %v3832
        %v3858 = vpack.c.bf16 %v3835, %v3834
        %v3859 = vpack.c.bf16 %v3837, %v3836
        %v3860 = vpack.c.bf16 %v3839, %v3838
        %v3861 = vpack.c.bf16 %v3841, %v3840
        %v3862 = vpack.c.bf16 %v3843, %v3842
        %v3863 = vpack.c.bf16 %v3845, %v3844
        %v3864 = vpack.c.bf16 %v3847, %v3846
        %v3865 = vpack.c.bf16 %v3849, %v3848
        %3882 = vrot.lane.b32.xlu0 %v3513, 32
        %v3883 = vpop.permute.xlu0 %3882
        %3884 = vrot.lane.b32.xlu0 %v3514, 32
        %v3885 = vpop.permute.xlu0 %3884
        %3886 = vrot.lane.b32.xlu0 %v3515, 32
        %v3887 = vpop.permute.xlu0 %3886
        %3888 = vrot.lane.b32.xlu0 %v3516, 32
        %v3889 = vpop.permute.xlu0 %3888
        %3890 = vrot.lane.b32.xlu0 %v3517, 32
        %v3891 = vpop.permute.xlu0 %3890
        %3892 = vrot.lane.b32.xlu0 %v3518, 32
        %v3893 = vpop.permute.xlu0 %3892
        %3894 = vrot.lane.b32.xlu0 %v3519, 32
        %v3895 = vpop.permute.xlu0 %3894
        %3896 = vrot.lane.b32.xlu0 %v3520, 32
        %v3897 = vpop.permute.xlu0 %3896
        %3898 = vrot.lane.b32.xlu0 %v3521, 32
        %v3899 = vpop.permute.xlu0 %3898
        %3900 = vrot.lane.b32.xlu0 %v3522, 32
        %v3901 = vpop.permute.xlu0 %3900
        %3902 = vrot.lane.b32.xlu0 %v3523, 32
        %v3903 = vpop.permute.xlu0 %3902
        %3904 = vrot.lane.b32.xlu0 %v3524, 32
        %v3905 = vpop.permute.xlu0 %3904
        %3906 = vrot.lane.b32.xlu0 %v3525, 32
        %v3907 = vpop.permute.xlu0 %3906
        %3908 = vrot.lane.b32.xlu0 %v3526, 32
        %v3909 = vpop.permute.xlu0 %3908
        %3910 = vrot.lane.b32.xlu0 %v3527, 32
        %v3911 = vpop.permute.xlu0 %3910
        %3912 = vrot.lane.b32.xlu0 %v3528, 32
        %v3913 = vpop.permute.xlu0 %3912
        %3930 = vrot.lane.b32.xlu0 %v3561, 64
        %v3931 = vpop.permute.xlu0 %3930
        %3932 = vrot.lane.b32.xlu0 %v3562, 64
        %v3933 = vpop.permute.xlu0 %3932
        %3934 = vrot.lane.b32.xlu0 %v3563, 64
        %v3935 = vpop.permute.xlu0 %3934
        %3936 = vrot.lane.b32.xlu0 %v3564, 64
        %v3937 = vpop.permute.xlu0 %3936
        %3938 = vrot.lane.b32.xlu0 %v3565, 64
        %v3939 = vpop.permute.xlu0 %3938
        %3940 = vrot.lane.b32.xlu0 %v3566, 64
        %v3941 = vpop.permute.xlu0 %3940
        %3942 = vrot.lane.b32.xlu0 %v3567, 64
        %v3943 = vpop.permute.xlu0 %3942
        %3944 = vrot.lane.b32.xlu0 %v3568, 64
        %v3945 = vpop.permute.xlu0 %3944
        %3946 = vrot.lane.b32.xlu0 %v3569, 64
        %v3947 = vpop.permute.xlu0 %3946
        %3948 = vrot.lane.b32.xlu0 %v3570, 64
        %v3949 = vpop.permute.xlu0 %3948
        %3950 = vrot.lane.b32.xlu0 %v3571, 64
        %v3951 = vpop.permute.xlu0 %3950
        %3952 = vrot.lane.b32.xlu0 %v3572, 64
        %v3953 = vpop.permute.xlu0 %3952
        %3954 = vrot.lane.b32.xlu0 %v3573, 64
        %v3955 = vpop.permute.xlu0 %3954
        %3956 = vrot.lane.b32.xlu0 %v3574, 64
        %v3957 = vpop.permute.xlu0 %3956
        %3958 = vrot.lane.b32.xlu0 %v3575, 64
        %v3959 = vpop.permute.xlu0 %3958
        %3960 = vrot.lane.b32.xlu0 %v3576, 64
        %v3961 = vpop.permute.xlu0 %3960
        %3978 = vrot.lane.b32.xlu0 %v3609, 96
        %v3979 = vpop.permute.xlu0 %3978
        %3980 = vrot.lane.b32.xlu0 %v3610, 96
        %v3981 = vpop.permute.xlu0 %3980
        %3982 = vrot.lane.b32.xlu0 %v3611, 96
        %v3983 = vpop.permute.xlu0 %3982
        %3984 = vrot.lane.b32.xlu0 %v3612, 96
        %v3985 = vpop.permute.xlu0 %3984
        %3986 = vrot.lane.b32.xlu0 %v3613, 96
        %v3987 = vpop.permute.xlu0 %3986
        %3988 = vrot.lane.b32.xlu0 %v3614, 96
        %v3989 = vpop.permute.xlu0 %3988
        %3990 = vrot.lane.b32.xlu0 %v3615, 96
        %v3991 = vpop.permute.xlu0 %3990
        %3992 = vrot.lane.b32.xlu0 %v3616, 96
        %v3993 = vpop.permute.xlu0 %3992
        %3994 = vrot.lane.b32.xlu0 %v3617, 96
        %v3995 = vpop.permute.xlu0 %3994
        %3996 = vrot.lane.b32.xlu0 %v3618, 96
        %v3997 = vpop.permute.xlu0 %3996
        %3998 = vrot.lane.b32.xlu0 %v3619, 96
        %v3999 = vpop.permute.xlu0 %3998
        %4000 = vrot.lane.b32.xlu0 %v3620, 96
        %v4001 = vpop.permute.xlu0 %4000
        %4002 = vrot.lane.b32.xlu0 %v3621, 96
        %v4003 = vpop.permute.xlu0 %4002
        %4004 = vrot.lane.b32.xlu0 %v3622, 96
        %v4005 = vpop.permute.xlu0 %4004
        %4006 = vrot.lane.b32.xlu0 %v3623, 96
        %v4007 = vpop.permute.xlu0 %4006
        %4008 = vrot.lane.b32.xlu0 %v3624, 96
        %v4009 = vpop.permute.xlu0 %4008
        %4026 = vrot.lane.b32.xlu0 %v3705, 32
        %v4027 = vpop.permute.xlu0 %4026
        %4028 = vrot.lane.b32.xlu0 %v3706, 32
        %v4029 = vpop.permute.xlu0 %4028
        %4030 = vrot.lane.b32.xlu0 %v3707, 32
        %v4031 = vpop.permute.xlu0 %4030
        %4032 = vrot.lane.b32.xlu0 %v3708, 32
        %v4033 = vpop.permute.xlu0 %4032
        %4034 = vrot.lane.b32.xlu0 %v3709, 32
        %v4035 = vpop.permute.xlu0 %4034
        %4036 = vrot.lane.b32.xlu0 %v3710, 32
        %v4037 = vpop.permute.xlu0 %4036
        %4038 = vrot.lane.b32.xlu0 %v3711, 32
        %v4039 = vpop.permute.xlu0 %4038
        %4040 = vrot.lane.b32.xlu0 %v3712, 32
        %v4041 = vpop.permute.xlu0 %4040
        %4042 = vrot.lane.b32.xlu0 %v3713, 32
        %v4043 = vpop.permute.xlu0 %4042
        %4044 = vrot.lane.b32.xlu0 %v3714, 32
        %v4045 = vpop.permute.xlu0 %4044
        %4046 = vrot.lane.b32.xlu0 %v3715, 32
        %v4047 = vpop.permute.xlu0 %4046
        %4048 = vrot.lane.b32.xlu0 %v3716, 32
        %v4049 = vpop.permute.xlu0 %4048
        %4050 = vrot.lane.b32.xlu0 %v3717, 32
        %v4051 = vpop.permute.xlu0 %4050
        %4052 = vrot.lane.b32.xlu0 %v3718, 32
        %v4053 = vpop.permute.xlu0 %4052
        %4054 = vrot.lane.b32.xlu0 %v3719, 32
        %v4055 = vpop.permute.xlu0 %4054
        %4056 = vrot.lane.b32.xlu0 %v3720, 32
        %v4057 = vpop.permute.xlu0 %4056
        %4074 = vrot.lane.b32.xlu0 %v3754, 64
        %v4075 = vpop.permute.xlu0 %4074
        %4076 = vrot.lane.b32.xlu0 %v3755, 64
        %v4077 = vpop.permute.xlu0 %4076
        %4078 = vrot.lane.b32.xlu0 %v3756, 64
        %v4079 = vpop.permute.xlu0 %4078
        %4080 = vrot.lane.b32.xlu0 %v3757, 64
        %v4081 = vpop.permute.xlu0 %4080
        %4082 = vrot.lane.b32.xlu0 %v3758, 64
        %v4083 = vpop.permute.xlu0 %4082
        %4084 = vrot.lane.b32.xlu0 %v3759, 64
        %v4085 = vpop.permute.xlu0 %4084
        %4086 = vrot.lane.b32.xlu0 %v3760, 64
        %v4087 = vpop.permute.xlu0 %4086
        %4088 = vrot.lane.b32.xlu0 %v3761, 64
        %v4089 = vpop.permute.xlu0 %4088
        %4090 = vrot.lane.b32.xlu0 %v3762, 64
        %v4091 = vpop.permute.xlu0 %4090
        %4092 = vrot.lane.b32.xlu0 %v3763, 64
        %v4093 = vpop.permute.xlu0 %4092
        %4094 = vrot.lane.b32.xlu0 %v3764, 64
        %v4095 = vpop.permute.xlu0 %4094
        %4096 = vrot.lane.b32.xlu0 %v3765, 64
        %v4097 = vpop.permute.xlu0 %4096
        %4098 = vrot.lane.b32.xlu0 %v3766, 64
        %v4099 = vpop.permute.xlu0 %4098
        %4100 = vrot.lane.b32.xlu0 %v3767, 64
        %v4101 = vpop.permute.xlu0 %4100
        %4102 = vrot.lane.b32.xlu0 %v3768, 64
        %v4103 = vpop.permute.xlu0 %4102
        %4104 = vrot.lane.b32.xlu0 %v3769, 64
        %v4105 = vpop.permute.xlu0 %4104
        %4122 = vrot.lane.b32.xlu0 %v3802, 96
        %v4123 = vpop.permute.xlu0 %4122
        %4124 = vrot.lane.b32.xlu0 %v3803, 96
        %v4125 = vpop.permute.xlu0 %4124
        %4126 = vrot.lane.b32.xlu0 %v3804, 96
        %v4127 = vpop.permute.xlu0 %4126
        %4128 = vrot.lane.b32.xlu0 %v3805, 96
        %v4129 = vpop.permute.xlu0 %4128
        %4130 = vrot.lane.b32.xlu0 %v3806, 96
        %v4131 = vpop.permute.xlu0 %4130
        %4132 = vrot.lane.b32.xlu0 %v3807, 96
        %v4133 = vpop.permute.xlu0 %4132
        %4134 = vrot.lane.b32.xlu0 %v3808, 96
        %v4135 = vpop.permute.xlu0 %4134
        %4136 = vrot.lane.b32.xlu0 %v3809, 96
        %v4137 = vpop.permute.xlu0 %4136
        %4138 = vrot.lane.b32.xlu0 %v3810, 96
        %v4139 = vpop.permute.xlu0 %4138
        %4140 = vrot.lane.b32.xlu0 %v3811, 96
        %v4141 = vpop.permute.xlu0 %4140
        %4142 = vrot.lane.b32.xlu0 %v3812, 96
        %v4143 = vpop.permute.xlu0 %4142
        %4144 = vrot.lane.b32.xlu0 %v3813, 96
        %v4145 = vpop.permute.xlu0 %4144
        %4146 = vrot.lane.b32.xlu0 %v3814, 96
        %v4147 = vpop.permute.xlu0 %4146
        %4148 = vrot.lane.b32.xlu0 %v3815, 96
        %v4149 = vpop.permute.xlu0 %4148
        %4150 = vrot.lane.b32.xlu0 %v3816, 96
        %v4151 = vpop.permute.xlu0 %4150
        %4152 = vrot.lane.b32.xlu0 %v3817, 96
        %v4153 = vpop.permute.xlu0 %4152
        %v4156 = vsel %vm268, %v3465, %v3883
        %v4159 = vsel %vm268, %v3466, %v3885
        %v4162 = vsel %vm268, %v3467, %v3887
        %v4165 = vsel %vm268, %v3468, %v3889
        %v4168 = vsel %vm268, %v3469, %v3891
        %v4171 = vsel %vm268, %v3470, %v3893
        %v4174 = vsel %vm268, %v3471, %v3895
        %v4177 = vsel %vm268, %v3472, %v3897
        %v4180 = vsel %vm268, %v3473, %v3899
        %v4183 = vsel %vm268, %v3474, %v3901
        %v4186 = vsel %vm268, %v3475, %v3903
        %v4189 = vsel %vm268, %v3476, %v3905
        %v4192 = vsel %vm268, %v3477, %v3907
        %v4195 = vsel %vm268, %v3478, %v3909
        %v4198 = vsel %vm268, %v3479, %v3911
        %v4201 = vsel %vm268, %v3480, %v3913
        %v4203 = vsel %vm1319, %v4156, %v3931
        %v4205 = vsel %vm1319, %v4159, %v3933
        %v4207 = vsel %vm1319, %v4162, %v3935
        %v4209 = vsel %vm1319, %v4165, %v3937
        %v4211 = vsel %vm1319, %v4168, %v3939
        %v4213 = vsel %vm1319, %v4171, %v3941
        %v4215 = vsel %vm1319, %v4174, %v3943
        %v4217 = vsel %vm1319, %v4177, %v3945
        %v4219 = vsel %vm1319, %v4180, %v3947
        %v4221 = vsel %vm1319, %v4183, %v3949
        %v4223 = vsel %vm1319, %v4186, %v3951
        %v4225 = vsel %vm1319, %v4189, %v3953
        %v4227 = vsel %vm1319, %v4192, %v3955
        %v4229 = vsel %vm1319, %v4195, %v3957
        %v4231 = vsel %vm1319, %v4198, %v3959
        %v4233 = vsel %vm1319, %v4201, %v3961
        %v4235 = vsel %vm1385, %v4203, %v3979
        %v4238 = vsel %vm1385, %v4205, %v3981
        %v4241 = vsel %vm1385, %v4207, %v3983
        %v4244 = vsel %vm1385, %v4209, %v3985
        %v4247 = vsel %vm1385, %v4211, %v3987
        %v4250 = vsel %vm1385, %v4213, %v3989
        %v4253 = vsel %vm1385, %v4215, %v3991
        %v4256 = vsel %vm1385, %v4217, %v3993
        %v4259 = vsel %vm1385, %v4219, %v3995
        %v4262 = vsel %vm1385, %v4221, %v3997
        %v4265 = vsel %vm1385, %v4223, %v3999
        %v4268 = vsel %vm1385, %v4225, %v4001
        %v4271 = vsel %vm1385, %v4227, %v4003
        %v4274 = vsel %vm1385, %v4229, %v4005
        %v4277 = vsel %vm1385, %v4231, %v4007
        %v4280 = vsel %vm1385, %v4233, %v4009
        %v4284 = vsel %vm268, %v3657, %v4027
        %v4287 = vsel %vm268, %v3658, %v4029
        %v4290 = vsel %vm268, %v3659, %v4031
        %v4293 = vsel %vm268, %v3660, %v4033
        %v4296 = vsel %vm268, %v3661, %v4035
        %v4299 = vsel %vm268, %v3662, %v4037
        %v4302 = vsel %vm268, %v3663, %v4039
        %v4305 = vsel %vm268, %v3664, %v4041
        %v4308 = vsel %vm268, %v3665, %v4043
        %v4311 = vsel %vm268, %v3666, %v4045
        %v4314 = vsel %vm268, %v3667, %v4047
        %v4317 = vsel %vm268, %v3668, %v4049
        %v4320 = vsel %vm268, %v3669, %v4051
        %v4323 = vsel %vm268, %v3670, %v4053
        %v4326 = vsel %vm268, %v3671, %v4055
        %v4329 = vsel %vm268, %v3672, %v4057
        %v4331 = vsel %vm1319, %v4284, %v4075
        %v4333 = vsel %vm1319, %v4287, %v4077
        %v4335 = vsel %vm1319, %v4290, %v4079
        %v4337 = vsel %vm1319, %v4293, %v4081
        %v4339 = vsel %vm1319, %v4296, %v4083
        %v4341 = vsel %vm1319, %v4299, %v4085
        %v4343 = vsel %vm1319, %v4302, %v4087
        %v4345 = vsel %vm1319, %v4305, %v4089
        %v4347 = vsel %vm1319, %v4308, %v4091
        %v4349 = vsel %vm1319, %v4311, %v4093
        %v4351 = vsel %vm1319, %v4314, %v4095
        %v4353 = vsel %vm1319, %v4317, %v4097
        %v4355 = vsel %vm1319, %v4320, %v4099
        %v4357 = vsel %vm1319, %v4323, %v4101
        %v4359 = vsel %vm1319, %v4326, %v4103
        %v4361 = vsel %vm1319, %v4329, %v4105
        %v4363 = vsel %vm1385, %v4331, %v4123
        %v4366 = vsel %vm1385, %v4333, %v4125
        %v4369 = vsel %vm1385, %v4335, %v4127
        %v4372 = vsel %vm1385, %v4337, %v4129
        %v4375 = vsel %vm1385, %v4339, %v4131
        %v4378 = vsel %vm1385, %v4341, %v4133
        %v4381 = vsel %vm1385, %v4343, %v4135
        %v4384 = vsel %vm1385, %v4345, %v4137
        %v4387 = vsel %vm1385, %v4347, %v4139
        %v4390 = vsel %vm1385, %v4349, %v4141
        %v4393 = vsel %vm1385, %v4351, %v4143
        %v4396 = vsel %vm1385, %v4353, %v4145
        %v4399 = vsel %vm1385, %v4355, %v4147
        %v4402 = vsel %vm1385, %v4357, %v4149
        %v4405 = vsel %vm1385, %v4359, %v4151
        %v4408 = vsel %vm1385, %v4361, %v4153
        %v4411 = vlaneseq
        %v4412 = vshrl.u32 %v4411, 7
        %v4413 = vsub.s32 0, %v4412
        %v4414 = vrot.slane %v3432, %v4413
        %v4452 = vunpack.c.l.b16 %v3395
        %v4453 = vunpack.c.l.b16 %v3396
        %v4454 = vunpack.c.l.b16 %v3397
        %v4455 = vunpack.c.l.b16 %v3398
        %v4456 = vunpack.c.l.b16 %v3399
        %v4457 = vunpack.c.l.b16 %v3400
        %v4458 = vunpack.c.l.b16 %v3401
        %v4459 = vunpack.c.l.b16 %v3402
        %v4460 = vunpack.c.l.b16 %v3403
        %v4461 = vunpack.c.l.b16 %v3404
        %v4462 = vunpack.c.l.b16 %v3405
        %v4463 = vunpack.c.l.b16 %v3406
        %v4464 = vunpack.c.l.b16 %v3407
        %v4465 = vunpack.c.l.b16 %v3408
        %v4466 = vunpack.c.l.b16 %v3409
        %v4467 = vunpack.c.l.b16 %v3410
        %v4468 = vunpack.c.l.b16 %v3411
        %v4469 = vunpack.c.l.b16 %v3412
        %v4470 = vunpack.c.l.b16 %v3413
        %v4471 = vunpack.c.l.b16 %v3414
        %v4472 = vunpack.c.l.b16 %v3415
        %v4473 = vunpack.c.l.b16 %v3416
        %v4474 = vunpack.c.l.b16 %v3417
        %v4475 = vunpack.c.l.b16 %v3418
        %v4476 = vunpack.c.l.b16 %v3419
        %v4477 = vunpack.c.l.b16 %v3420
        %v4478 = vunpack.c.l.b16 %v3421
        %v4479 = vunpack.c.l.b16 %v3422
        %v4480 = vunpack.c.l.b16 %v3423
        %v4481 = vunpack.c.l.b16 %v3424
        %v4482 = vunpack.c.l.b16 %v3425
        %v4483 = vunpack.c.l.b16 %v3426
        %v4484 = vunpack.c.l.b16 %v3427
        %v4485 = vunpack.c.l.b16 %v3428
        %v4486 = vunpack.c.l.b16 %v3429
        %v4487 = vunpack.c.l.b16 %v3430
        %v4488 = vpack.c.b16 %v4453, %v4452
        %v4489 = vpack.c.b16 %v4455, %v4454
        %v4490 = vpack.c.b16 %v4457, %v4456
        %v4491 = vpack.c.b16 %v4459, %v4458
        %v4492 = vpack.c.b16 %v4461, %v4460
        %v4493 = vpack.c.b16 %v4463, %v4462
        %v4494 = vpack.c.b16 %v4465, %v4464
        %v4495 = vpack.c.b16 %v4467, %v4466
        %v4496 = vpack.c.b16 %v4469, %v4468
        %v4497 = vpack.c.b16 %v4471, %v4470
        %v4498 = vpack.c.b16 %v4473, %v4472
        %v4499 = vpack.c.b16 %v4475, %v4474
        %v4500 = vpack.c.b16 %v4477, %v4476
        %v4501 = vpack.c.b16 %v4479, %v4478
        %v4502 = vpack.c.b16 %v4481, %v4480
        %v4503 = vpack.c.b16 %v4483, %v4482
        %v4504 = vpack.c.b16 %v4485, %v4484
        %v4505 = vpack.c.b16 %v4487, %v4486
        %v4525 = vsel %vm268, %v3850, 0
        %v4528 = vsel %vm268, %v3851, 0
        %v4531 = vsel %vm268, %v3852, 0
        %v4534 = vsel %vm268, %v3853, 0
        %v4537 = vsel %vm268, %v3854, 0
        %v4540 = vsel %vm268, %v3855, 0
        %v4543 = vsel %vm268, %v3856, 0
        %v4546 = vsel %vm268, %v3857, 0
        %v4549 = vsel %vm268, %v3858, 0
        %v4552 = vsel %vm268, %v3859, 0
        %v4555 = vsel %vm268, %v3860, 0
        %v4558 = vsel %vm268, %v3861, 0
        %v4561 = vsel %vm268, %v3862, 0
        %v4564 = vsel %vm268, %v3863, 0
        %v4567 = vsel %vm268, %v3864, 0
        %v4570 = vsel %vm268, %v3865, 0
        %4572 = vmatprep.subr.bf16.mxu0 0
        %4573 = vmatpush1.bf16.msra.mxu0 %v4488
        %4574 = vmatprep.subr.bf16.mxu0 0
        %4575 = vmatpush1.bf16.msra.mxu0 %v4489
        %4576 = vmatprep.subr.bf16.mxu0 0
        %4577 = vmatpush1.bf16.msra.mxu0 %v4490
        %4578 = vmatprep.subr.bf16.mxu0 0
        %4579 = vmatpush1.bf16.msra.mxu0 %v4491
        %4580 = vmatprep.subr.bf16.mxu0 0
        %4581 = vmatpush1.bf16.msra.mxu0 %v4492
        %4582 = vmatprep.subr.bf16.mxu0 0
        %4583 = vmatpush1.bf16.msra.mxu0 %v4493
        %4584 = vmatprep.subr.bf16.mxu0 0
        %4585 = vmatpush1.bf16.msra.mxu0 %v4494
        %4586 = vmatprep.subr.bf16.mxu0 0
        %4587 = vmatpush1.bf16.msra.mxu0 %v4495
        %4588 = vmatprep.subr.bf16.mxu0 0
        %4589 = vmatpush1.bf16.msra.mxu0 %v4496
        %4590 = vmatprep.subr.bf16.mxu0 0
        %4591 = vmatpush1.bf16.msra.mxu0 %v4497
        %4592 = vmatprep.subr.bf16.mxu0 0
        %4593 = vmatpush1.bf16.msra.mxu0 %v4498
        %4594 = vmatprep.subr.bf16.mxu0 0
        %4595 = vmatpush1.bf16.msra.mxu0 %v4499
        %4596 = vmatprep.subr.bf16.mxu0 0
        %4597 = vmatpush1.bf16.msra.mxu0 %v4500
        %4598 = vmatprep.subr.bf16.mxu0 0
        %4599 = vmatpush1.bf16.msra.mxu0 %v4501
        %4600 = vmatprep.subr.bf16.mxu0 0
        %4601 = vmatpush1.bf16.msra.mxu0 %v4502
        %4602 = vmatprep.subr.bf16.mxu0 0
        %4603 = vmatpush1.bf16.msra.mxu0 %v4503
        %4604 = vmatprep.mubr.bf16.mxu0 %v4363
        %4605 = vmatmul.mubr.bf16.gmra.mrb[0].mxu0 %v4235
        %v4606 = vpop.f32.mrb[0].mxu0
        %v4607 = vadd.f32 %v4414, %v4606
        %v4608 = vpop.f32.mrb[0].mxu0
        %v4609 = vpop.f32.mrb[0].mxu0
        %v4610 = vadd.f32 %v4414, %v4609
        %v4611 = vpop.f32.mrb[0].mxu0
        %4612 = vmatprep.mubr.bf16.mxu0 %v4366
        %4613 = vmatmul.mubr.bf16.gmra.mrb[0].mxu0 %v4238
        %v4614 = vpop.f32.mrb[0].mxu0
        %v4615 = vadd.f32 %v4414, %v4614
        %v4616 = vpop.f32.mrb[0].mxu0
        %v4617 = vpop.f32.mrb[0].mxu0
        %v4618 = vadd.f32 %v4414, %v4617
        %v4619 = vpop.f32.mrb[0].mxu0
        %4620 = vmatprep.mubr.bf16.mxu0 %v4369
        %4621 = vmatmul.mubr.bf16.gmra.mrb[0].mxu0 %v4241
        %v4622 = vpop.f32.mrb[0].mxu0
        %v4623 = vadd.f32 %v4414, %v4622
        %v4624 = vpop.f32.mrb[0].mxu0
        %v4625 = vpop.f32.mrb[0].mxu0
        %v4626 = vadd.f32 %v4414, %v4625
        %v4627 = vpop.f32.mrb[0].mxu0
        %4628 = vmatprep.mubr.bf16.mxu0 %v4372
        %4629 = vmatmul.mubr.bf16.gmra.mrb[0].mxu0 %v4244
        %v4630 = vpop.f32.mrb[0].mxu0
        %v4631 = vadd.f32 %v4414, %v4630
        %v4632 = vpop.f32.mrb[0].mxu0
        %v4633 = vpop.f32.mrb[0].mxu0
        %v4634 = vadd.f32 %v4414, %v4633
        %v4635 = vpop.f32.mrb[0].mxu0
        %4636 = vmatprep.mubr.bf16.mxu0 %v4375
        %4637 = vmatmul.mubr.bf16.gmra.mrb[0].mxu0 %v4247
        %v4638 = vpop.f32.mrb[0].mxu0
        %v4639 = vadd.f32 %v4414, %v4638
        %v4640 = vpop.f32.mrb[0].mxu0
        %v4641 = vpop.f32.mrb[0].mxu0
        %v4642 = vadd.f32 %v4414, %v4641
        %v4643 = vpop.f32.mrb[0].mxu0
        %4644 = vmatprep.mubr.bf16.mxu0 %v4378
        %4645 = vmatmul.mubr.bf16.gmra.mrb[0].mxu0 %v4250
        %v4646 = vpop.f32.mrb[0].mxu0
        %v4647 = vadd.f32 %v4414, %v4646
        %v4648 = vpop.f32.mrb[0].mxu0
        %v4649 = vpop.f32.mrb[0].mxu0
        %v4650 = vadd.f32 %v4414, %v4649
        %v4651 = vpop.f32.mrb[0].mxu0
        %4652 = vmatprep.mubr.bf16.mxu0 %v4381
        %4653 = vmatmul.mubr.bf16.gmra.mrb[0].mxu0 %v4253
        %v4654 = vpop.f32.mrb[0].mxu0
        %v4655 = vadd.f32 %v4414, %v4654
        %v4656 = vpop.f32.mrb[0].mxu0
        %v4657 = vpop.f32.mrb[0].mxu0
        %v4658 = vadd.f32 %v4414, %v4657
        %v4659 = vpop.f32.mrb[0].mxu0
        %4660 = vmatprep.mubr.bf16.mxu0 %v4384
        %4661 = vmatmul.mubr.bf16.gmra.mrb[0].mxu0 %v4256
        %v4662 = vpop.f32.mrb[0].mxu0
        %v4663 = vadd.f32 %v4414, %v4662
        %v4664 = vpop.f32.mrb[0].mxu0
        %v4665 = vpop.f32.mrb[0].mxu0
        %v4666 = vadd.f32 %v4414, %v4665
        %v4667 = vpop.f32.mrb[0].mxu0
        %4668 = vmatprep.mubr.bf16.mxu0 %v4387
        %4669 = vmatmul.mubr.bf16.gmra.mrb[0].mxu0 %v4259
        %v4670 = vpop.f32.mrb[0].mxu0
        %v4671 = vadd.f32 %v4414, %v4670
        %v4672 = vpop.f32.mrb[0].mxu0
        %v4673 = vpop.f32.mrb[0].mxu0
        %v4674 = vadd.f32 %v4414, %v4673
        %v4675 = vpop.f32.mrb[0].mxu0
        %4676 = vmatprep.mubr.bf16.mxu0 %v4390
        %4677 = vmatmul.mubr.bf16.gmra.mrb[0].mxu0 %v4262
        %v4678 = vpop.f32.mrb[0].mxu0
        %v4679 = vadd.f32 %v4414, %v4678
        %v4680 = vpop.f32.mrb[0].mxu0
        %v4681 = vpop.f32.mrb[0].mxu0
        %v4682 = vadd.f32 %v4414, %v4681
        %v4683 = vpop.f32.mrb[0].mxu0
        %4684 = vmatprep.mubr.bf16.mxu0 %v4393
        %4685 = vmatmul.mubr.bf16.gmra.mrb[0].mxu0 %v4265
        %v4686 = vpop.f32.mrb[0].mxu0
        %v4687 = vadd.f32 %v4414, %v4686
        %v4688 = vpop.f32.mrb[0].mxu0
        %v4689 = vpop.f32.mrb[0].mxu0
        %v4690 = vadd.f32 %v4414, %v4689
        %v4691 = vpop.f32.mrb[0].mxu0
        %4692 = vmatprep.mubr.bf16.mxu0 %v4396
        %4693 = vmatmul.mubr.bf16.gmra.mrb[0].mxu0 %v4268
        %v4694 = vpop.f32.mrb[0].mxu0
        %v4695 = vadd.f32 %v4414, %v4694
        %v4696 = vpop.f32.mrb[0].mxu0
        %v4697 = vpop.f32.mrb[0].mxu0
        %v4698 = vadd.f32 %v4414, %v4697
        %v4699 = vpop.f32.mrb[0].mxu0
        %4700 = vmatprep.mubr.bf16.mxu0 %v4399
        %4701 = vmatmul.mubr.bf16.gmra.mrb[0].mxu0 %v4271
        %v4702 = vpop.f32.mrb[0].mxu0
        %v4703 = vadd.f32 %v4414, %v4702
        %v4704 = vpop.f32.mrb[0].mxu0
        %v4705 = vpop.f32.mrb[0].mxu0
        %v4706 = vadd.f32 %v4414, %v4705
        %v4707 = vpop.f32.mrb[0].mxu0
        %4708 = vmatprep.mubr.bf16.mxu0 %v4402
        %4709 = vmatmul.mubr.bf16.gmra.mrb[0].mxu0 %v4274
        %v4710 = vpop.f32.mrb[0].mxu0
        %v4711 = vadd.f32 %v4414, %v4710
        %v4712 = vpop.f32.mrb[0].mxu0
        %v4713 = vpop.f32.mrb[0].mxu0
        %v4714 = vadd.f32 %v4414, %v4713
        %v4715 = vpop.f32.mrb[0].mxu0
        %4716 = vmatprep.mubr.bf16.mxu0 %v4405
        %4717 = vmatmul.mubr.bf16.gmra.mrb[0].mxu0 %v4277
        %v4718 = vpop.f32.mrb[0].mxu0
        %v4719 = vadd.f32 %v4414, %v4718
        %v4720 = vpop.f32.mrb[0].mxu0
        %v4721 = vpop.f32.mrb[0].mxu0
        %v4722 = vadd.f32 %v4414, %v4721
        %v4723 = vpop.f32.mrb[0].mxu0
        %4724 = vmatprep.mubr.bf16.mxu0 %v4408
        %4725 = vmatmul.mubr.bf16.gmra.mrb[0].mxu0 %v4280
        %v4726 = vpop.f32.mrb[0].mxu0
        %v4727 = vadd.f32 %v4414, %v4726
        %v4728 = vpop.f32.mrb[0].mxu0
        %v4729 = vpop.f32.mrb[0].mxu0
        %v4730 = vadd.f32 %v4414, %v4729
        %v4731 = vpop.f32.mrb[0].mxu0
        %4732 = vdwg.mxu0
        %4733 = vmatprep.subr.bf16.mxu0 0
        %4734 = vmatpush1.bf16.msra.mxu0 %v4504
        %4735 = vmatprep.subr.bf16.mxu0 0
        %4736 = vmatpush1.bf16.msra.mxu0 %v4505
        %4737 = vmatprep.subr.bf16.mxu0 0
        %4738 = vmatpush1.bf16.msra.mxu0 0
        %4739 = vmatprep.subr.bf16.mxu0 0
        %4740 = vmatpush1.bf16.msra.mxu0 0
        %4741 = vmatprep.subr.bf16.mxu0 0
        %4742 = vmatpush1.bf16.msra.mxu0 0
        %4743 = vmatprep.subr.bf16.mxu0 0
        %4744 = vmatpush1.bf16.msra.mxu0 0
        %4745 = vmatprep.subr.bf16.mxu0 0
        %4746 = vmatpush1.bf16.msra.mxu0 0
        %4747 = vmatprep.subr.bf16.mxu0 0
        %4748 = vmatpush1.bf16.msra.mxu0 0
        %4749 = vmatprep.subr.bf16.mxu0 0
        %4750 = vmatpush1.bf16.msra.mxu0 0
        %4751 = vmatprep.subr.bf16.mxu0 0
        %4752 = vmatpush1.bf16.msra.mxu0 0
        %4753 = vmatprep.subr.bf16.mxu0 0
        %4754 = vmatpush1.bf16.msra.mxu0 0
        %4755 = vmatprep.subr.bf16.mxu0 0
        %4756 = vmatpush1.bf16.msra.mxu0 0
        %4757 = vmatprep.subr.bf16.mxu0 0
        %4758 = vmatpush1.bf16.msra.mxu0 0
        %4759 = vmatprep.subr.bf16.mxu0 0
        %4760 = vmatpush1.bf16.msra.mxu0 0
        %4761 = vmatprep.subr.bf16.mxu0 0
        %4762 = vmatpush1.bf16.msra.mxu0 0
        %4763 = vmatprep.subr.bf16.mxu0 0
        %4764 = vmatpush1.bf16.msra.mxu0 0
        %4765 = vmatprep.mubr.bf16.mxu0 0
        %4766 = vmatmul.mubr.bf16.gmra.mrb[0].mxu0 %v4525
        %v4767 = vpop.f32.mrb[0].mxu0
        %v4768 = vadd.f32 %v4607, %v4767
        %v4769 = vpop.f32.mrb[0].mxu0
        %v4770 = vpop.f32.mrb[0].mxu0
        %v4771 = vadd.f32 %v4610, %v4770
        %v4772 = vpop.f32.mrb[0].mxu0
        %4773 = vmatprep.mubr.bf16.mxu0 0
        %4774 = vmatmul.mubr.bf16.gmra.mrb[0].mxu0 %v4528
        %v4775 = vpop.f32.mrb[0].mxu0
        %v4776 = vadd.f32 %v4615, %v4775
        %v4777 = vpop.f32.mrb[0].mxu0
        %v4778 = vpop.f32.mrb[0].mxu0
        %v4779 = vadd.f32 %v4618, %v4778
        %v4780 = vpop.f32.mrb[0].mxu0
        %4781 = vmatprep.mubr.bf16.mxu0 0
        %4782 = vmatmul.mubr.bf16.gmra.mrb[0].mxu0 %v4531
        %v4783 = vpop.f32.mrb[0].mxu0
        %v4784 = vadd.f32 %v4623, %v4783
        %v4785 = vpop.f32.mrb[0].mxu0
        %v4786 = vpop.f32.mrb[0].mxu0
        %v4787 = vadd.f32 %v4626, %v4786
        %v4788 = vpop.f32.mrb[0].mxu0
        %4789 = vmatprep.mubr.bf16.mxu0 0
        %4790 = vmatmul.mubr.bf16.gmra.mrb[0].mxu0 %v4534
        %v4791 = vpop.f32.mrb[0].mxu0
        %v4792 = vadd.f32 %v4631, %v4791
        %v4793 = vpop.f32.mrb[0].mxu0
        %v4794 = vpop.f32.mrb[0].mxu0
        %v4795 = vadd.f32 %v4634, %v4794
        %v4796 = vpop.f32.mrb[0].mxu0
        %4797 = vmatprep.mubr.bf16.mxu0 0
        %4798 = vmatmul.mubr.bf16.gmra.mrb[0].mxu0 %v4537
        %v4799 = vpop.f32.mrb[0].mxu0
        %v4800 = vadd.f32 %v4639, %v4799
        %v4801 = vpop.f32.mrb[0].mxu0
        %v4802 = vpop.f32.mrb[0].mxu0
        %v4803 = vadd.f32 %v4642, %v4802
        %v4804 = vpop.f32.mrb[0].mxu0
        %4805 = vmatprep.mubr.bf16.mxu0 0
        %4806 = vmatmul.mubr.bf16.gmra.mrb[0].mxu0 %v4540
        %v4807 = vpop.f32.mrb[0].mxu0
        %v4808 = vadd.f32 %v4647, %v4807
        %v4809 = vpop.f32.mrb[0].mxu0
        %v4810 = vpop.f32.mrb[0].mxu0
        %v4811 = vadd.f32 %v4650, %v4810
        %v4812 = vpop.f32.mrb[0].mxu0
        %4813 = vmatprep.mubr.bf16.mxu0 0
        %4814 = vmatmul.mubr.bf16.gmra.mrb[0].mxu0 %v4543
        %v4815 = vpop.f32.mrb[0].mxu0
        %v4816 = vadd.f32 %v4655, %v4815
        %v4817 = vpop.f32.mrb[0].mxu0
        %v4818 = vpop.f32.mrb[0].mxu0
        %v4819 = vadd.f32 %v4658, %v4818
        %v4820 = vpop.f32.mrb[0].mxu0
        %4821 = vmatprep.mubr.bf16.mxu0 0
        %4822 = vmatmul.mubr.bf16.gmra.mrb[0].mxu0 %v4546
        %v4823 = vpop.f32.mrb[0].mxu0
        %v4824 = vadd.f32 %v4663, %v4823
        %v4825 = vpop.f32.mrb[0].mxu0
        %v4826 = vpop.f32.mrb[0].mxu0
        %v4827 = vadd.f32 %v4666, %v4826
        %v4828 = vpop.f32.mrb[0].mxu0
        %4829 = vmatprep.mubr.bf16.mxu0 0
        %4830 = vmatmul.mubr.bf16.gmra.mrb[0].mxu0 %v4549
        %v4831 = vpop.f32.mrb[0].mxu0
        %v4832 = vadd.f32 %v4671, %v4831
        %v4833 = vpop.f32.mrb[0].mxu0
        %v4834 = vpop.f32.mrb[0].mxu0
        %v4835 = vadd.f32 %v4674, %v4834
        %v4836 = vpop.f32.mrb[0].mxu0
        %4837 = vmatprep.mubr.bf16.mxu0 0
        %4838 = vmatmul.mubr.bf16.gmra.mrb[0].mxu0 %v4552
        %v4839 = vpop.f32.mrb[0].mxu0
        %v4840 = vadd.f32 %v4679, %v4839
        %v4841 = vpop.f32.mrb[0].mxu0
        %v4842 = vpop.f32.mrb[0].mxu0
        %v4843 = vadd.f32 %v4682, %v4842
        %v4844 = vpop.f32.mrb[0].mxu0
        %4845 = vmatprep.mubr.bf16.mxu0 0
        %4846 = vmatmul.mubr.bf16.gmra.mrb[0].mxu0 %v4555
        %v4847 = vpop.f32.mrb[0].mxu0
        %v4848 = vadd.f32 %v4687, %v4847
        %v4849 = vpop.f32.mrb[0].mxu0
        %v4850 = vpop.f32.mrb[0].mxu0
        %v4851 = vadd.f32 %v4690, %v4850
        %v4852 = vpop.f32.mrb[0].mxu0
        %4853 = vmatprep.mubr.bf16.mxu0 0
        %4854 = vmatmul.mubr.bf16.gmra.mrb[0].mxu0 %v4558
        %v4855 = vpop.f32.mrb[0].mxu0
        %v4856 = vadd.f32 %v4695, %v4855
        %v4857 = vpop.f32.mrb[0].mxu0
        %v4858 = vpop.f32.mrb[0].mxu0
        %v4859 = vadd.f32 %v4698, %v4858
        %v4860 = vpop.f32.mrb[0].mxu0
        %4861 = vmatprep.mubr.bf16.mxu0 0
        %4862 = vmatmul.mubr.bf16.gmra.mrb[0].mxu0 %v4561
        %v4863 = vpop.f32.mrb[0].mxu0
        %v4864 = vadd.f32 %v4703, %v4863
        %v4865 = vpop.f32.mrb[0].mxu0
        %v4866 = vpop.f32.mrb[0].mxu0
        %v4867 = vadd.f32 %v4706, %v4866
        %v4868 = vpop.f32.mrb[0].mxu0
        %4869 = vmatprep.mubr.bf16.mxu0 0
        %4870 = vmatmul.mubr.bf16.gmra.mrb[0].mxu0 %v4564
        %v4871 = vpop.f32.mrb[0].mxu0
        %v4872 = vadd.f32 %v4711, %v4871
        %v4873 = vpop.f32.mrb[0].mxu0
        %v4874 = vpop.f32.mrb[0].mxu0
        %v4875 = vadd.f32 %v4714, %v4874
        %v4876 = vpop.f32.mrb[0].mxu0
        %4877 = vmatprep.mubr.bf16.mxu0 0
        %4878 = vmatmul.mubr.bf16.gmra.mrb[0].mxu0 %v4567
        %v4879 = vpop.f32.mrb[0].mxu0
        %v4880 = vadd.f32 %v4719, %v4879
        %v4881 = vpop.f32.mrb[0].mxu0
        %v4882 = vpop.f32.mrb[0].mxu0
        %v4883 = vadd.f32 %v4722, %v4882
        %v4884 = vpop.f32.mrb[0].mxu0
        %4885 = vmatprep.mubr.bf16.mxu0 0
        %4886 = vmatmul.mubr.bf16.gmra.mrb[0].mxu0 %v4570
        %v4887 = vpop.f32.mrb[0].mxu0
        %v4888 = vadd.f32 %v4727, %v4887
        %v4889 = vpop.f32.mrb[0].mxu0
        %v4890 = vpop.f32.mrb[0].mxu0
        %v4891 = vadd.f32 %v4730, %v4890
        %v4892 = vpop.f32.mrb[0].mxu0
        %4893 = vdwg.mxu0
        %v4894 = vadd.f32 %v4768, %v3362
        %v4895 = vadd.f32 %v4771, %v3363
        %v4896 = vadd.f32 %v4776, %v3364
        %v4897 = vadd.f32 %v4779, %v3365
        %v4898 = vadd.f32 %v4784, %v3366
        %v4899 = vadd.f32 %v4787, %v3367
        %v4900 = vadd.f32 %v4792, %v3368
        %v4901 = vadd.f32 %v4795, %v3369
        %v4902 = vadd.f32 %v4800, %v3370
        %v4903 = vadd.f32 %v4803, %v3371
        %v4904 = vadd.f32 %v4808, %v3372
        %v4905 = vadd.f32 %v4811, %v3373
        %v4906 = vadd.f32 %v4816, %v3374
        %v4907 = vadd.f32 %v4819, %v3375
        %v4908 = vadd.f32 %v4824, %v3376
        %v4909 = vadd.f32 %v4827, %v3377
        %v4910 = vadd.f32 %v4832, %v3378
        %v4911 = vadd.f32 %v4835, %v3379
        %v4912 = vadd.f32 %v4840, %v3380
        %v4913 = vadd.f32 %v4843, %v3381
        %v4914 = vadd.f32 %v4848, %v3382
        %v4915 = vadd.f32 %v4851, %v3383
        %v4916 = vadd.f32 %v4856, %v3384
        %v4917 = vadd.f32 %v4859, %v3385
        %v4918 = vadd.f32 %v4864, %v3386
        %v4919 = vadd.f32 %v4867, %v3387
        %v4920 = vadd.f32 %v4872, %v3388
        %v4921 = vadd.f32 %v4875, %v3389
        %v4922 = vadd.f32 %v4880, %v3390
        %v4923 = vadd.f32 %v4883, %v3391
        %v4924 = vadd.f32 %v4888, %v3392
        %v4925 = vadd.f32 %v4891, %v3393
        %v4926 = vmax.f32 %v4894, 0.0
        %v4927 = vmax.f32 %v4895, 0.0
        %v4928 = vmax.f32 %v4896, 0.0
        %v4929 = vmax.f32 %v4897, 0.0
        %v4930 = vmax.f32 %v4898, 0.0
        %v4931 = vmax.f32 %v4899, 0.0
        %v4932 = vmax.f32 %v4900, 0.0
        %v4933 = vmax.f32 %v4901, 0.0
        %v4934 = vmax.f32 %v4902, 0.0
        %v4935 = vmax.f32 %v4903, 0.0
        %v4936 = vmax.f32 %v4904, 0.0
        %v4937 = vmax.f32 %v4905, 0.0
        %v4938 = vmax.f32 %v4906, 0.0
        %v4939 = vmax.f32 %v4907, 0.0
        %v4940 = vmax.f32 %v4908, 0.0
        %v4941 = vmax.f32 %v4909, 0.0
        %v4942 = vmax.f32 %v4910, 0.0
        %v4943 = vmax.f32 %v4911, 0.0
        %v4944 = vmax.f32 %v4912, 0.0
        %v4945 = vmax.f32 %v4913, 0.0
        %v4946 = vmax.f32 %v4914, 0.0
        %v4947 = vmax.f32 %v4915, 0.0
        %v4948 = vmax.f32 %v4916, 0.0
        %v4949 = vmax.f32 %v4917, 0.0
        %v4950 = vmax.f32 %v4918, 0.0
        %v4951 = vmax.f32 %v4919, 0.0
        %v4952 = vmax.f32 %v4920, 0.0
        %v4953 = vmax.f32 %v4921, 0.0
        %v4954 = vmax.f32 %v4922, 0.0
        %v4955 = vmax.f32 %v4923, 0.0
        %v4956 = vmax.f32 %v4924, 0.0
        %v4957 = vmax.f32 %v4925, 0.0
        %4958 = vst.msk [vmem:[%s278 + $0x8] sm:$0xff] %vm268, %v4926
        %4959 = vst.msk [vmem:[%s278 + $0x10] sm:$0xff] %vm268, %v4927
        %4960 = vst.msk [vmem:[%s278 + $0x28] sm:$0xff] %vm268, %v4928
        %4961 = vst.msk [vmem:[%s278 + $0x30] sm:$0xff] %vm268, %v4929
        %4962 = vst.msk [vmem:[%s278 + $0x48] sm:$0xff] %vm268, %v4930
        %4963 = vst.msk [vmem:[%s278 + $0x50] sm:$0xff] %vm268, %v4931
        %4964 = vst.msk [vmem:[%s278 + $0x68] sm:$0xff] %vm268, %v4932
        %4965 = vst.msk [vmem:[%s278 + $0x70] sm:$0xff] %vm268, %v4933
        %4966 = vst.msk [vmem:[%s278 + $0x88] sm:$0xff] %vm268, %v4934
        %4967 = vst.msk [vmem:[%s278 + $0x90] sm:$0xff] %vm268, %v4935
        %4968 = vst.msk [vmem:[%s278 + $0xa8] sm:$0xff] %vm268, %v4936
        %4969 = vst.msk [vmem:[%s278 + $0xb0] sm:$0xff] %vm268, %v4937
        %4970 = vst.msk [vmem:[%s278 + $0xc8] sm:$0xff] %vm268, %v4938
        %4971 = vst.msk [vmem:[%s278 + $0xd0] sm:$0xff] %vm268, %v4939
        %4972 = vst.msk [vmem:[%s278 + $0xe8] sm:$0xff] %vm268, %v4940
        %4973 = vst.msk [vmem:[%s278 + $0xf0] sm:$0xff] %vm268, %v4941
        %4974 = vst.msk [vmem:[%s278 + $0x108] sm:$0xff] %vm268, %v4942
        %4975 = vst.msk [vmem:[%s278 + $0x110] sm:$0xff] %vm268, %v4943
        %4976 = vst.msk [vmem:[%s278 + $0x128] sm:$0xff] %vm268, %v4944
        %4977 = vst.msk [vmem:[%s278 + $0x130] sm:$0xff] %vm268, %v4945
        %4978 = vst.msk [vmem:[%s278 + $0x148] sm:$0xff] %vm268, %v4946
        %4979 = vst.msk [vmem:[%s278 + $0x150] sm:$0xff] %vm268, %v4947
        %4980 = vst.msk [vmem:[%s278 + $0x168] sm:$0xff] %vm268, %v4948
        %4981 = vst.msk [vmem:[%s278 + $0x170] sm:$0xff] %vm268, %v4949
        %4982 = vst.msk [vmem:[%s278 + $0x188] sm:$0xff] %vm268, %v4950
        %4983 = vst.msk [vmem:[%s278 + $0x190] sm:$0xff] %vm268, %v4951
        %4984 = vst.msk [vmem:[%s278 + $0x1a8] sm:$0xff] %vm268, %v4952
        %4985 = vst.msk [vmem:[%s278 + $0x1b0] sm:$0xff] %vm268, %v4953
        %4986 = vst.msk [vmem:[%s278 + $0x1c8] sm:$0xff] %vm268, %v4954
        %4987 = vst.msk [vmem:[%s278 + $0x1d0] sm:$0xff] %vm268, %v4955
        %4988 = vst.msk [vmem:[%s278 + $0x1e8] sm:$0xff] %vm268, %v4956
        %4989 = vst.msk [vmem:[%s278 + $0x1f0] sm:$0xff] %vm268, %v4957
        %s4990 = scalar_lea.vmem %s3, 288
        %v4991 = vld [vmem:[%s4990] sm:$0xf]
        %v4992 = vld [vmem:[%s4990 + $0x4] sm:$0xf]
        %v4993 = vld [vmem:[%s4990 + $0x8] sm:$0xf]
        %v4994 = vld [vmem:[%s4990 + $0xc] sm:$0xf]
        %v4995 = vld [vmem:[%s4990 + $0x10] sm:$0xf]
        %v4996 = vld [vmem:[%s4990 + $0x14] sm:$0xf]
        %v4997 = vld [vmem:[%s4990 + $0x18] sm:$0xf]
        %v4998 = vld [vmem:[%s4990 + $0x1c] sm:$0xf]
        %v4999 = vld [vmem:[%s4990 + $0x20] sm:$0xf]
        %v5000 = vld [vmem:[%s4990 + $0x24] sm:$0xf]
        %v5001 = vld [vmem:[%s4990 + $0x28] sm:$0xf]
        %v5002 = vld [vmem:[%s4990 + $0x2c] sm:$0xf]
        %v5003 = vld [vmem:[%s4990 + $0x30] sm:$0xf]
        %v5004 = vld [vmem:[%s4990 + $0x34] sm:$0xf]
        %v5005 = vld [vmem:[%s4990 + $0x38] sm:$0xf]
        %v5006 = vld [vmem:[%s4990 + $0x3c] sm:$0xf]
        %v5007 = vld [vmem:[%s4990 + $0x40] sm:$0xf]
        %v5008 = vld [vmem:[%s4990 + $0x44] sm:$0xf]
        %v5009 = vld [vmem:[%s4990 + $0x48] sm:$0xf]
        %v5010 = vld [vmem:[%s4990 + $0x4c] sm:$0xf]
        %v5011 = vld [vmem:[%s4990 + $0x50] sm:$0xf]
        %v5012 = vld [vmem:[%s4990 + $0x54] sm:$0xf]
        %v5013 = vld [vmem:[%s4990 + $0x58] sm:$0xf]
        %v5014 = vld [vmem:[%s4990 + $0x5c] sm:$0xf]
        %v5015 = vld [vmem:[%s4990 + $0x60] sm:$0xf]
        %v5016 = vld [vmem:[%s4990 + $0x64] sm:$0xf]
        %v5017 = vld [vmem:[%s4990 + $0x68] sm:$0xf]
        %v5018 = vld [vmem:[%s4990 + $0x6c] sm:$0xf]
        %v5019 = vld [vmem:[%s4990 + $0x70] sm:$0xf]
        %v5020 = vld [vmem:[%s4990 + $0x74] sm:$0xf]
        %v5021 = vld [vmem:[%s4990 + $0x78] sm:$0xf]
        %v5022 = vld [vmem:[%s4990 + $0x7c] sm:$0xf]
        %v5023 = vld [vmem:[%s4990 + $0x80] sm:$0xf]
        %v5024 = vld [vmem:[%s4990 + $0x84] sm:$0xf]
        %v5025 = vld [vmem:[%s4990 + $0x88] sm:$0xf]
        %v5026 = vld [vmem:[%s4990 + $0x8c] sm:$0xf]
        %s5027 = scalar_lea.vmem %s4, 2
        %v5028 = vld [vmem:[%s5027] sm:$0x1]
        %v5029 = vld [vmem:[#allocation3 + $0x7] sm:$0xff]
        %v5030 = vld [vmem:[#allocation3 + $0xf] sm:$0xff]
        %v5031 = vld [vmem:[#allocation3 + $0x27] sm:$0xff]
        %v5032 = vld [vmem:[#allocation3 + $0x2f] sm:$0xff]
        %v5033 = vld [vmem:[#allocation3 + $0x47] sm:$0xff]
        %v5034 = vld [vmem:[#allocation3 + $0x4f] sm:$0xff]
        %v5035 = vld [vmem:[#allocation3 + $0x67] sm:$0xff]
        %v5036 = vld [vmem:[#allocation3 + $0x6f] sm:$0xff]
        %v5037 = vld [vmem:[#allocation3 + $0x87] sm:$0xff]
        %v5038 = vld [vmem:[#allocation3 + $0x8f] sm:$0xff]
        %v5039 = vld [vmem:[#allocation3 + $0xa7] sm:$0xff]
        %v5040 = vld [vmem:[#allocation3 + $0xaf] sm:$0xff]
        %v5041 = vld [vmem:[#allocation3 + $0xc7] sm:$0xff]
        %v5042 = vld [vmem:[#allocation3 + $0xcf] sm:$0xff]
        %v5043 = vld [vmem:[#allocation3 + $0xe7] sm:$0xff]
        %v5044 = vld [vmem:[#allocation3 + $0xef] sm:$0xff]
        %v5045 = vld [vmem:[#allocation3 + $0x107] sm:$0xff]
        %v5046 = vld [vmem:[#allocation3 + $0x10f] sm:$0xff]
        %v5047 = vld [vmem:[#allocation3 + $0x127] sm:$0xff]
        %v5048 = vld [vmem:[#allocation3 + $0x12f] sm:$0xff]
        %v5049 = vld [vmem:[#allocation3 + $0x147] sm:$0xff]
        %v5050 = vld [vmem:[#allocation3 + $0x14f] sm:$0xff]
        %v5051 = vld [vmem:[#allocation3 + $0x167] sm:$0xff]
        %v5052 = vld [vmem:[#allocation3 + $0x16f] sm:$0xff]
        %v5053 = vld [vmem:[#allocation3 + $0x187] sm:$0xff]
        %v5054 = vld [vmem:[#allocation3 + $0x18f] sm:$0xff]
        %v5055 = vld [vmem:[#allocation3 + $0x1a7] sm:$0xff]
        %v5056 = vld [vmem:[#allocation3 + $0x1af] sm:$0xff]
        %v5057 = vld [vmem:[#allocation3 + $0x1c7] sm:$0xff]
        %v5058 = vld [vmem:[#allocation3 + $0x1cf] sm:$0xff]
        %v5059 = vld [vmem:[#allocation3 + $0x1e7] sm:$0xff]
        %v5060 = vld [vmem:[#allocation3 + $0x1ef] sm:$0xff]
        %v5061 = vpack.c.bf16 %v5030, %v5029
        %v5062 = vpack.c.bf16 %v5032, %v5031
        %v5063 = vpack.c.bf16 %v5034, %v5033
        %v5064 = vpack.c.bf16 %v5036, %v5035
        %v5065 = vpack.c.bf16 %v5038, %v5037
        %v5066 = vpack.c.bf16 %v5040, %v5039
        %v5067 = vpack.c.bf16 %v5042, %v5041
        %v5068 = vpack.c.bf16 %v5044, %v5043
        %v5069 = vpack.c.bf16 %v5046, %v5045
        %v5070 = vpack.c.bf16 %v5048, %v5047
        %v5071 = vpack.c.bf16 %v5050, %v5049
        %v5072 = vpack.c.bf16 %v5052, %v5051
        %v5073 = vpack.c.bf16 %v5054, %v5053
        %v5074 = vpack.c.bf16 %v5056, %v5055
        %v5075 = vpack.c.bf16 %v5058, %v5057
        %v5076 = vpack.c.bf16 %v5060, %v5059
        %v5077 = vld [vmem:[#allocation3 + $0x8] sm:$0xff]
        %v5078 = vld [vmem:[#allocation3 + $0x10] sm:$0xff]
        %v5079 = vld [vmem:[#allocation3 + $0x28] sm:$0xff]
        %v5080 = vld [vmem:[#allocation3 + $0x30] sm:$0xff]
        %v5081 = vld [vmem:[#allocation3 + $0x48] sm:$0xff]
        %v5082 = vld [vmem:[#allocation3 + $0x50] sm:$0xff]
        %v5083 = vld [vmem:[#allocation3 + $0x68] sm:$0xff]
        %v5084 = vld [vmem:[#allocation3 + $0x70] sm:$0xff]
        %v5085 = vld [vmem:[#allocation3 + $0x88] sm:$0xff]
        %v5086 = vld [vmem:[#allocation3 + $0x90] sm:$0xff]
        %v5087 = vld [vmem:[#allocation3 + $0xa8] sm:$0xff]
        %v5088 = vld [vmem:[#allocation3 + $0xb0] sm:$0xff]
        %v5089 = vld [vmem:[#allocation3 + $0xc8] sm:$0xff]
        %v5090 = vld [vmem:[#allocation3 + $0xd0] sm:$0xff]
        %v5091 = vld [vmem:[#allocation3 + $0xe8] sm:$0xff]
        %v5092 = vld [vmem:[#allocation3 + $0xf0] sm:$0xff]
        %v5093 = vld [vmem:[#allocation3 + $0x108] sm:$0xff]
        %v5094 = vld [vmem:[#allocation3 + $0x110] sm:$0xff]
        %v5095 = vld [vmem:[#allocation3 + $0x128] sm:$0xff]
        %v5096 = vld [vmem:[#allocation3 + $0x130] sm:$0xff]
        %v5097 = vld [vmem:[#allocation3 + $0x148] sm:$0xff]
        %v5098 = vld [vmem:[#allocation3 + $0x150] sm:$0xff]
        %v5099 = vld [vmem:[#allocation3 + $0x168] sm:$0xff]
        %v5100 = vld [vmem:[#allocation3 + $0x170] sm:$0xff]
        %v5101 = vld [vmem:[#allocation3 + $0x188] sm:$0xff]
        %v5102 = vld [vmem:[#allocation3 + $0x190] sm:$0xff]
        %v5103 = vld [vmem:[#allocation3 + $0x1a8] sm:$0xff]
        %v5104 = vld [vmem:[#allocation3 + $0x1b0] sm:$0xff]
        %v5105 = vld [vmem:[#allocation3 + $0x1c8] sm:$0xff]
        %v5106 = vld [vmem:[#allocation3 + $0x1d0] sm:$0xff]
        %v5107 = vld [vmem:[#allocation3 + $0x1e8] sm:$0xff]
        %v5108 = vld [vmem:[#allocation3 + $0x1f0] sm:$0xff]
        %v5109 = vpack.c.bf16 %v5078, %v5077
        %v5110 = vpack.c.bf16 %v5080, %v5079
        %v5111 = vpack.c.bf16 %v5082, %v5081
        %v5112 = vpack.c.bf16 %v5084, %v5083
        %v5113 = vpack.c.bf16 %v5086, %v5085
        %v5114 = vpack.c.bf16 %v5088, %v5087
        %v5115 = vpack.c.bf16 %v5090, %v5089
        %v5116 = vpack.c.bf16 %v5092, %v5091
        %v5117 = vpack.c.bf16 %v5094, %v5093
        %v5118 = vpack.c.bf16 %v5096, %v5095
        %v5119 = vpack.c.bf16 %v5098, %v5097
        %v5120 = vpack.c.bf16 %v5100, %v5099
        %v5121 = vpack.c.bf16 %v5102, %v5101
        %v5122 = vpack.c.bf16 %v5104, %v5103
        %v5123 = vpack.c.bf16 %v5106, %v5105
        %v5124 = vpack.c.bf16 %v5108, %v5107
        %v5125 = vld [vmem:[#allocation3 + $0x9] sm:$0xff]
        %v5126 = vld [vmem:[#allocation3 + $0x11] sm:$0xff]
        %v5127 = vld [vmem:[#allocation3 + $0x29] sm:$0xff]
        %v5128 = vld [vmem:[#allocation3 + $0x31] sm:$0xff]
        %v5129 = vld [vmem:[#allocation3 + $0x49] sm:$0xff]
        %v5130 = vld [vmem:[#allocation3 + $0x51] sm:$0xff]
        %v5131 = vld [vmem:[#allocation3 + $0x69] sm:$0xff]
        %v5132 = vld [vmem:[#allocation3 + $0x71] sm:$0xff]
        %v5133 = vld [vmem:[#allocation3 + $0x89] sm:$0xff]
        %v5134 = vld [vmem:[#allocation3 + $0x91] sm:$0xff]
        %v5135 = vld [vmem:[#allocation3 + $0xa9] sm:$0xff]
        %v5136 = vld [vmem:[#allocation3 + $0xb1] sm:$0xff]
        %v5137 = vld [vmem:[#allocation3 + $0xc9] sm:$0xff]
        %v5138 = vld [vmem:[#allocation3 + $0xd1] sm:$0xff]
        %v5139 = vld [vmem:[#allocation3 + $0xe9] sm:$0xff]
        %v5140 = vld [vmem:[#allocation3 + $0xf1] sm:$0xff]
        %v5141 = vld [vmem:[#allocation3 + $0x109] sm:$0xff]
        %v5142 = vld [vmem:[#allocation3 + $0x111] sm:$0xff]
        %v5143 = vld [vmem:[#allocation3 + $0x129] sm:$0xff]
        %v5144 = vld [vmem:[#allocation3 + $0x131] sm:$0xff]
        %v5145 = vld [vmem:[#allocation3 + $0x149] sm:$0xff]
        %v5146 = vld [vmem:[#allocation3 + $0x151] sm:$0xff]
        %v5147 = vld [vmem:[#allocation3 + $0x169] sm:$0xff]
        %v5148 = vld [vmem:[#allocation3 + $0x171] sm:$0xff]
        %v5149 = vld [vmem:[#allocation3 + $0x189] sm:$0xff]
        %v5150 = vld [vmem:[#allocation3 + $0x191] sm:$0xff]
        %v5151 = vld [vmem:[#allocation3 + $0x1a9] sm:$0xff]
        %v5152 = vld [vmem:[#allocation3 + $0x1b1] sm:$0xff]
        %v5153 = vld [vmem:[#allocation3 + $0x1c9] sm:$0xff]
        %v5154 = vld [vmem:[#allocation3 + $0x1d1] sm:$0xff]
        %v5155 = vld [vmem:[#allocation3 + $0x1e9] sm:$0xff]
        %v5156 = vld [vmem:[#allocation3 + $0x1f1] sm:$0xff]
        %v5157 = vpack.c.bf16 %v5126, %v5125
        %v5158 = vpack.c.bf16 %v5128, %v5127
        %v5159 = vpack.c.bf16 %v5130, %v5129
        %v5160 = vpack.c.bf16 %v5132, %v5131
        %v5161 = vpack.c.bf16 %v5134, %v5133
        %v5162 = vpack.c.bf16 %v5136, %v5135
        %v5163 = vpack.c.bf16 %v5138, %v5137
        %v5164 = vpack.c.bf16 %v5140, %v5139
        %v5165 = vpack.c.bf16 %v5142, %v5141
        %v5166 = vpack.c.bf16 %v5144, %v5143
        %v5167 = vpack.c.bf16 %v5146, %v5145
        %v5168 = vpack.c.bf16 %v5148, %v5147
        %v5169 = vpack.c.bf16 %v5150, %v5149
        %v5170 = vpack.c.bf16 %v5152, %v5151
        %v5171 = vpack.c.bf16 %v5154, %v5153
        %v5172 = vpack.c.bf16 %v5156, %v5155
        %v5173 = vld [vmem:[%s278 + $0x7] sm:$0xff]
        %v5174 = vld [vmem:[%s278 + $0xf] sm:$0xff]
        %v5175 = vld [vmem:[%s278 + $0x27] sm:$0xff]
        %v5176 = vld [vmem:[%s278 + $0x2f] sm:$0xff]
        %v5177 = vld [vmem:[%s278 + $0x47] sm:$0xff]
        %v5178 = vld [vmem:[%s278 + $0x4f] sm:$0xff]
        %v5179 = vld [vmem:[%s278 + $0x67] sm:$0xff]
        %v5180 = vld [vmem:[%s278 + $0x6f] sm:$0xff]
        %v5181 = vld [vmem:[%s278 + $0x87] sm:$0xff]
        %v5182 = vld [vmem:[%s278 + $0x8f] sm:$0xff]
        %v5183 = vld [vmem:[%s278 + $0xa7] sm:$0xff]
        %v5184 = vld [vmem:[%s278 + $0xaf] sm:$0xff]
        %v5185 = vld [vmem:[%s278 + $0xc7] sm:$0xff]
        %v5186 = vld [vmem:[%s278 + $0xcf] sm:$0xff]
        %v5187 = vld [vmem:[%s278 + $0xe7] sm:$0xff]
        %v5188 = vld [vmem:[%s278 + $0xef] sm:$0xff]
        %v5189 = vld [vmem:[%s278 + $0x107] sm:$0xff]
        %v5190 = vld [vmem:[%s278 + $0x10f] sm:$0xff]
        %v5191 = vld [vmem:[%s278 + $0x127] sm:$0xff]
        %v5192 = vld [vmem:[%s278 + $0x12f] sm:$0xff]
        %v5193 = vld [vmem:[%s278 + $0x147] sm:$0xff]
        %v5194 = vld [vmem:[%s278 + $0x14f] sm:$0xff]
        %v5195 = vld [vmem:[%s278 + $0x167] sm:$0xff]
        %v5196 = vld [vmem:[%s278 + $0x16f] sm:$0xff]
        %v5197 = vld [vmem:[%s278 + $0x187] sm:$0xff]
        %v5198 = vld [vmem:[%s278 + $0x18f] sm:$0xff]
        %v5199 = vld [vmem:[%s278 + $0x1a7] sm:$0xff]
        %v5200 = vld [vmem:[%s278 + $0x1af] sm:$0xff]
        %v5201 = vld [vmem:[%s278 + $0x1c7] sm:$0xff]
        %v5202 = vld [vmem:[%s278 + $0x1cf] sm:$0xff]
        %v5203 = vld [vmem:[%s278 + $0x1e7] sm:$0xff]
        %v5204 = vld [vmem:[%s278 + $0x1ef] sm:$0xff]
        %v5205 = vpack.c.bf16 %v5174, %v5173
        %v5206 = vpack.c.bf16 %v5176, %v5175
        %v5207 = vpack.c.bf16 %v5178, %v5177
        %v5208 = vpack.c.bf16 %v5180, %v5179
        %v5209 = vpack.c.bf16 %v5182, %v5181
        %v5210 = vpack.c.bf16 %v5184, %v5183
        %v5211 = vpack.c.bf16 %v5186, %v5185
        %v5212 = vpack.c.bf16 %v5188, %v5187
        %v5213 = vpack.c.bf16 %v5190, %v5189
        %v5214 = vpack.c.bf16 %v5192, %v5191
        %v5215 = vpack.c.bf16 %v5194, %v5193
        %v5216 = vpack.c.bf16 %v5196, %v5195
        %v5217 = vpack.c.bf16 %v5198, %v5197
        %v5218 = vpack.c.bf16 %v5200, %v5199
        %v5219 = vpack.c.bf16 %v5202, %v5201
        %v5220 = vpack.c.bf16 %v5204, %v5203
        %v5221 = vld [vmem:[%s278 + $0x8] sm:$0xff]
        %v5222 = vld [vmem:[%s278 + $0x10] sm:$0xff]
        %v5223 = vld [vmem:[%s278 + $0x28] sm:$0xff]
        %v5224 = vld [vmem:[%s278 + $0x30] sm:$0xff]
        %v5225 = vld [vmem:[%s278 + $0x48] sm:$0xff]
        %v5226 = vld [vmem:[%s278 + $0x50] sm:$0xff]
        %v5227 = vld [vmem:[%s278 + $0x68] sm:$0xff]
        %v5228 = vld [vmem:[%s278 + $0x70] sm:$0xff]
        %v5229 = vld [vmem:[%s278 + $0x88] sm:$0xff]
        %v5230 = vld [vmem:[%s278 + $0x90] sm:$0xff]
        %v5231 = vld [vmem:[%s278 + $0xa8] sm:$0xff]
        %v5232 = vld [vmem:[%s278 + $0xb0] sm:$0xff]
        %v5233 = vld [vmem:[%s278 + $0xc8] sm:$0xff]
        %v5234 = vld [vmem:[%s278 + $0xd0] sm:$0xff]
        %v5235 = vld [vmem:[%s278 + $0xe8] sm:$0xff]
        %v5236 = vld [vmem:[%s278 + $0xf0] sm:$0xff]
        %v5237 = vld [vmem:[%s278 + $0x108] sm:$0xff]
        %v5238 = vld [vmem:[%s278 + $0x110] sm:$0xff]
        %v5239 = vld [vmem:[%s278 + $0x128] sm:$0xff]
        %v5240 = vld [vmem:[%s278 + $0x130] sm:$0xff]
        %v5241 = vld [vmem:[%s278 + $0x148] sm:$0xff]
        %v5242 = vld [vmem:[%s278 + $0x150] sm:$0xff]
        %v5243 = vld [vmem:[%s278 + $0x168] sm:$0xff]
        %v5244 = vld [vmem:[%s278 + $0x170] sm:$0xff]
        %v5245 = vld [vmem:[%s278 + $0x188] sm:$0xff]
        %v5246 = vld [vmem:[%s278 + $0x190] sm:$0xff]
        %v5247 = vld [vmem:[%s278 + $0x1a8] sm:$0xff]
        %v5248 = vld [vmem:[%s278 + $0x1b0] sm:$0xff]
        %v5249 = vld [vmem:[%s278 + $0x1c8] sm:$0xff]
        %v5250 = vld [vmem:[%s278 + $0x1d0] sm:$0xff]
        %v5251 = vld [vmem:[%s278 + $0x1e8] sm:$0xff]
        %v5252 = vld [vmem:[%s278 + $0x1f0] sm:$0xff]
        %v5253 = vpack.c.bf16 %v5222, %v5221
        %v5254 = vpack.c.bf16 %v5224, %v5223
        %v5255 = vpack.c.bf16 %v5226, %v5225
        %v5256 = vpack.c.bf16 %v5228, %v5227
        %v5257 = vpack.c.bf16 %v5230, %v5229
        %v5258 = vpack.c.bf16 %v5232, %v5231
        %v5259 = vpack.c.bf16 %v5234, %v5233
        %v5260 = vpack.c.bf16 %v5236, %v5235
        %v5261 = vpack.c.bf16 %v5238, %v5237
        %v5262 = vpack.c.bf16 %v5240, %v5239
        %v5263 = vpack.c.bf16 %v5242, %v5241
        %v5264 = vpack.c.bf16 %v5244, %v5243
        %v5265 = vpack.c.bf16 %v5246, %v5245
        %v5266 = vpack.c.bf16 %v5248, %v5247
        %v5267 = vpack.c.bf16 %v5250, %v5249
        %v5268 = vpack.c.bf16 %v5252, %v5251
        %v5269 = vld [vmem:[%s278 + $0x9] sm:$0xff]
        %v5270 = vld [vmem:[%s278 + $0x11] sm:$0xff]
        %v5271 = vld [vmem:[%s278 + $0x29] sm:$0xff]
        %v5272 = vld [vmem:[%s278 + $0x31] sm:$0xff]
        %v5273 = vld [vmem:[%s278 + $0x49] sm:$0xff]
        %v5274 = vld [vmem:[%s278 + $0x51] sm:$0xff]
        %v5275 = vld [vmem:[%s278 + $0x69] sm:$0xff]
        %v5276 = vld [vmem:[%s278 + $0x71] sm:$0xff]
        %v5277 = vld [vmem:[%s278 + $0x89] sm:$0xff]
        %v5278 = vld [vmem:[%s278 + $0x91] sm:$0xff]
        %v5279 = vld [vmem:[%s278 + $0xa9] sm:$0xff]
        %v5280 = vld [vmem:[%s278 + $0xb1] sm:$0xff]
        %v5281 = vld [vmem:[%s278 + $0xc9] sm:$0xff]
        %v5282 = vld [vmem:[%s278 + $0xd1] sm:$0xff]
        %v5283 = vld [vmem:[%s278 + $0xe9] sm:$0xff]
        %v5284 = vld [vmem:[%s278 + $0xf1] sm:$0xff]
        %v5285 = vld [vmem:[%s278 + $0x109] sm:$0xff]
        %v5286 = vld [vmem:[%s278 + $0x111] sm:$0xff]
        %v5287 = vld [vmem:[%s278 + $0x129] sm:$0xff]
        %v5288 = vld [vmem:[%s278 + $0x131] sm:$0xff]
        %v5289 = vld [vmem:[%s278 + $0x149] sm:$0xff]
        %v5290 = vld [vmem:[%s278 + $0x151] sm:$0xff]
        %v5291 = vld [vmem:[%s278 + $0x169] sm:$0xff]
        %v5292 = vld [vmem:[%s278 + $0x171] sm:$0xff]
        %v5293 = vld [vmem:[%s278 + $0x189] sm:$0xff]
        %v5294 = vld [vmem:[%s278 + $0x191] sm:$0xff]
        %v5295 = vld [vmem:[%s278 + $0x1a9] sm:$0xff]
        %v5296 = vld [vmem:[%s278 + $0x1b1] sm:$0xff]
        %v5297 = vld [vmem:[%s278 + $0x1c9] sm:$0xff]
        %v5298 = vld [vmem:[%s278 + $0x1d1] sm:$0xff]
        %v5299 = vld [vmem:[%s278 + $0x1e9] sm:$0xff]
        %v5300 = vld [vmem:[%s278 + $0x1f1] sm:$0xff]
        %v5301 = vpack.c.bf16 %v5270, %v5269
        %v5302 = vpack.c.bf16 %v5272, %v5271
        %v5303 = vpack.c.bf16 %v5274, %v5273
        %v5304 = vpack.c.bf16 %v5276, %v5275
        %v5305 = vpack.c.bf16 %v5278, %v5277
        %v5306 = vpack.c.bf16 %v5280, %v5279
        %v5307 = vpack.c.bf16 %v5282, %v5281
        %v5308 = vpack.c.bf16 %v5284, %v5283
        %v5309 = vpack.c.bf16 %v5286, %v5285
        %v5310 = vpack.c.bf16 %v5288, %v5287
        %v5311 = vpack.c.bf16 %v5290, %v5289
        %v5312 = vpack.c.bf16 %v5292, %v5291
        %v5313 = vpack.c.bf16 %v5294, %v5293
        %v5314 = vpack.c.bf16 %v5296, %v5295
        %v5315 = vpack.c.bf16 %v5298, %v5297
        %v5316 = vpack.c.bf16 %v5300, %v5299
        %v5317 = vld [vmem:[%s2125 + $0x7] sm:$0xff]
        %v5318 = vld [vmem:[%s2125 + $0xf] sm:$0xff]
        %v5319 = vld [vmem:[%s2125 + $0x27] sm:$0xff]
        %v5320 = vld [vmem:[%s2125 + $0x2f] sm:$0xff]
        %v5321 = vld [vmem:[%s2125 + $0x47] sm:$0xff]
        %v5322 = vld [vmem:[%s2125 + $0x4f] sm:$0xff]
        %v5323 = vld [vmem:[%s2125 + $0x67] sm:$0xff]
        %v5324 = vld [vmem:[%s2125 + $0x6f] sm:$0xff]
        %v5325 = vld [vmem:[%s2125 + $0x87] sm:$0xff]
        %v5326 = vld [vmem:[%s2125 + $0x8f] sm:$0xff]
        %v5327 = vld [vmem:[%s2125 + $0xa7] sm:$0xff]
        %v5328 = vld [vmem:[%s2125 + $0xaf] sm:$0xff]
        %v5329 = vld [vmem:[%s2125 + $0xc7] sm:$0xff]
        %v5330 = vld [vmem:[%s2125 + $0xcf] sm:$0xff]
        %v5331 = vld [vmem:[%s2125 + $0xe7] sm:$0xff]
        %v5332 = vld [vmem:[%s2125 + $0xef] sm:$0xff]
        %v5333 = vld [vmem:[%s2125 + $0x107] sm:$0xff]
        %v5334 = vld [vmem:[%s2125 + $0x10f] sm:$0xff]
        %v5335 = vld [vmem:[%s2125 + $0x127] sm:$0xff]
        %v5336 = vld [vmem:[%s2125 + $0x12f] sm:$0xff]
        %v5337 = vld [vmem:[%s2125 + $0x147] sm:$0xff]
        %v5338 = vld [vmem:[%s2125 + $0x14f] sm:$0xff]
        %v5339 = vld [vmem:[%s2125 + $0x167] sm:$0xff]
        %v5340 = vld [vmem:[%s2125 + $0x16f] sm:$0xff]
        %v5341 = vld [vmem:[%s2125 + $0x187] sm:$0xff]
        %v5342 = vld [vmem:[%s2125 + $0x18f] sm:$0xff]
        %v5343 = vld [vmem:[%s2125 + $0x1a7] sm:$0xff]
        %v5344 = vld [vmem:[%s2125 + $0x1af] sm:$0xff]
        %v5345 = vld [vmem:[%s2125 + $0x1c7] sm:$0xff]
        %v5346 = vld [vmem:[%s2125 + $0x1cf] sm:$0xff]
        %v5347 = vld [vmem:[%s2125 + $0x1e7] sm:$0xff]
        %v5348 = vld [vmem:[%s2125 + $0x1ef] sm:$0xff]
        %v5349 = vpack.c.bf16 %v5318, %v5317
        %v5350 = vpack.c.bf16 %v5320, %v5319
        %v5351 = vpack.c.bf16 %v5322, %v5321
        %v5352 = vpack.c.bf16 %v5324, %v5323
        %v5353 = vpack.c.bf16 %v5326, %v5325
        %v5354 = vpack.c.bf16 %v5328, %v5327
        %v5355 = vpack.c.bf16 %v5330, %v5329
        %v5356 = vpack.c.bf16 %v5332, %v5331
        %v5357 = vpack.c.bf16 %v5334, %v5333
        %v5358 = vpack.c.bf16 %v5336, %v5335
        %v5359 = vpack.c.bf16 %v5338, %v5337
        %v5360 = vpack.c.bf16 %v5340, %v5339
        %v5361 = vpack.c.bf16 %v5342, %v5341
        %v5362 = vpack.c.bf16 %v5344, %v5343
        %v5363 = vpack.c.bf16 %v5346, %v5345
        %v5364 = vpack.c.bf16 %v5348, %v5347
        %v5365 = vld [vmem:[%s2125 + $0x8] sm:$0xff]
        %v5366 = vld [vmem:[%s2125 + $0x10] sm:$0xff]
        %v5367 = vld [vmem:[%s2125 + $0x28] sm:$0xff]
        %v5368 = vld [vmem:[%s2125 + $0x30] sm:$0xff]
        %v5369 = vld [vmem:[%s2125 + $0x48] sm:$0xff]
        %v5370 = vld [vmem:[%s2125 + $0x50] sm:$0xff]
        %v5371 = vld [vmem:[%s2125 + $0x68] sm:$0xff]
        %v5372 = vld [vmem:[%s2125 + $0x70] sm:$0xff]
        %v5373 = vld [vmem:[%s2125 + $0x88] sm:$0xff]
        %v5374 = vld [vmem:[%s2125 + $0x90] sm:$0xff]
        %v5375 = vld [vmem:[%s2125 + $0xa8] sm:$0xff]
        %v5376 = vld [vmem:[%s2125 + $0xb0] sm:$0xff]
        %v5377 = vld [vmem:[%s2125 + $0xc8] sm:$0xff]
        %v5378 = vld [vmem:[%s2125 + $0xd0] sm:$0xff]
        %v5379 = vld [vmem:[%s2125 + $0xe8] sm:$0xff]
        %v5380 = vld [vmem:[%s2125 + $0xf0] sm:$0xff]
        %v5381 = vld [vmem:[%s2125 + $0x108] sm:$0xff]
        %v5382 = vld [vmem:[%s2125 + $0x110] sm:$0xff]
        %v5383 = vld [vmem:[%s2125 + $0x128] sm:$0xff]
        %v5384 = vld [vmem:[%s2125 + $0x130] sm:$0xff]
        %v5385 = vld [vmem:[%s2125 + $0x148] sm:$0xff]
        %v5386 = vld [vmem:[%s2125 + $0x150] sm:$0xff]
        %v5387 = vld [vmem:[%s2125 + $0x168] sm:$0xff]
        %v5388 = vld [vmem:[%s2125 + $0x170] sm:$0xff]
        %v5389 = vld [vmem:[%s2125 + $0x188] sm:$0xff]
        %v5390 = vld [vmem:[%s2125 + $0x190] sm:$0xff]
        %v5391 = vld [vmem:[%s2125 + $0x1a8] sm:$0xff]
        %v5392 = vld [vmem:[%s2125 + $0x1b0] sm:$0xff]
        %v5393 = vld [vmem:[%s2125 + $0x1c8] sm:$0xff]
        %v5394 = vld [vmem:[%s2125 + $0x1d0] sm:$0xff]
        %v5395 = vld [vmem:[%s2125 + $0x1e8] sm:$0xff]
        %v5396 = vld [vmem:[%s2125 + $0x1f0] sm:$0xff]
        %v5397 = vpack.c.bf16 %v5366, %v5365
        %v5398 = vpack.c.bf16 %v5368, %v5367
        %v5399 = vpack.c.bf16 %v5370, %v5369
        %v5400 = vpack.c.bf16 %v5372, %v5371
        %v5401 = vpack.c.bf16 %v5374, %v5373
        %v5402 = vpack.c.bf16 %v5376, %v5375
        %v5403 = vpack.c.bf16 %v5378, %v5377
        %v5404 = vpack.c.bf16 %v5380, %v5379
        %v5405 = vpack.c.bf16 %v5382, %v5381
        %v5406 = vpack.c.bf16 %v5384, %v5383
        %v5407 = vpack.c.bf16 %v5386, %v5385
        %v5408 = vpack.c.bf16 %v5388, %v5387
        %v5409 = vpack.c.bf16 %v5390, %v5389
        %v5410 = vpack.c.bf16 %v5392, %v5391
        %v5411 = vpack.c.bf16 %v5394, %v5393
        %v5412 = vpack.c.bf16 %v5396, %v5395
        %v5413 = vld [vmem:[%s2125 + $0x9] sm:$0xff]
        %v5414 = vld [vmem:[%s2125 + $0x11] sm:$0xff]
        %v5415 = vld [vmem:[%s2125 + $0x29] sm:$0xff]
        %v5416 = vld [vmem:[%s2125 + $0x31] sm:$0xff]
        %v5417 = vld [vmem:[%s2125 + $0x49] sm:$0xff]
        %v5418 = vld [vmem:[%s2125 + $0x51] sm:$0xff]
        %v5419 = vld [vmem:[%s2125 + $0x69] sm:$0xff]
        %v5420 = vld [vmem:[%s2125 + $0x71] sm:$0xff]
        %v5421 = vld [vmem:[%s2125 + $0x89] sm:$0xff]
        %v5422 = vld [vmem:[%s2125 + $0x91] sm:$0xff]
        %v5423 = vld [vmem:[%s2125 + $0xa9] sm:$0xff]
        %v5424 = vld [vmem:[%s2125 + $0xb1] sm:$0xff]
        %v5425 = vld [vmem:[%s2125 + $0xc9] sm:$0xff]
        %v5426 = vld [vmem:[%s2125 + $0xd1] sm:$0xff]
        %v5427 = vld [vmem:[%s2125 + $0xe9] sm:$0xff]
        %v5428 = vld [vmem:[%s2125 + $0xf1] sm:$0xff]
        %v5429 = vld [vmem:[%s2125 + $0x109] sm:$0xff]
        %v5430 = vld [vmem:[%s2125 + $0x111] sm:$0xff]
        %v5431 = vld [vmem:[%s2125 + $0x129] sm:$0xff]
        %v5432 = vld [vmem:[%s2125 + $0x131] sm:$0xff]
        %v5433 = vld [vmem:[%s2125 + $0x149] sm:$0xff]
        %v5434 = vld [vmem:[%s2125 + $0x151] sm:$0xff]
        %v5435 = vld [vmem:[%s2125 + $0x169] sm:$0xff]
        %v5436 = vld [vmem:[%s2125 + $0x171] sm:$0xff]
        %v5437 = vld [vmem:[%s2125 + $0x189] sm:$0xff]
        %v5438 = vld [vmem:[%s2125 + $0x191] sm:$0xff]
        %v5439 = vld [vmem:[%s2125 + $0x1a9] sm:$0xff]
        %v5440 = vld [vmem:[%s2125 + $0x1b1] sm:$0xff]
        %v5441 = vld [vmem:[%s2125 + $0x1c9] sm:$0xff]
        %v5442 = vld [vmem:[%s2125 + $0x1d1] sm:$0xff]
        %v5443 = vld [vmem:[%s2125 + $0x1e9] sm:$0xff]
        %v5444 = vld [vmem:[%s2125 + $0x1f1] sm:$0xff]
        %v5445 = vpack.c.bf16 %v5414, %v5413
        %v5446 = vpack.c.bf16 %v5416, %v5415
        %v5447 = vpack.c.bf16 %v5418, %v5417
        %v5448 = vpack.c.bf16 %v5420, %v5419
        %v5449 = vpack.c.bf16 %v5422, %v5421
        %v5450 = vpack.c.bf16 %v5424, %v5423
        %v5451 = vpack.c.bf16 %v5426, %v5425
        %v5452 = vpack.c.bf16 %v5428, %v5427
        %v5453 = vpack.c.bf16 %v5430, %v5429
        %v5454 = vpack.c.bf16 %v5432, %v5431
        %v5455 = vpack.c.bf16 %v5434, %v5433
        %v5456 = vpack.c.bf16 %v5436, %v5435
        %v5457 = vpack.c.bf16 %v5438, %v5437
        %v5458 = vpack.c.bf16 %v5440, %v5439
        %v5459 = vpack.c.bf16 %v5442, %v5441
        %v5460 = vpack.c.bf16 %v5444, %v5443
        %5477 = vrot.lane.b32.xlu0 %v5109, 32
        %v5478 = vpop.permute.xlu0 %5477
        %5479 = vrot.lane.b32.xlu0 %v5110, 32
        %v5480 = vpop.permute.xlu0 %5479
        %5481 = vrot.lane.b32.xlu0 %v5111, 32
        %v5482 = vpop.permute.xlu0 %5481
        %5483 = vrot.lane.b32.xlu0 %v5112, 32
        %v5484 = vpop.permute.xlu0 %5483
        %5485 = vrot.lane.b32.xlu0 %v5113, 32
        %v5486 = vpop.permute.xlu0 %5485
        %5487 = vrot.lane.b32.xlu0 %v5114, 32
        %v5488 = vpop.permute.xlu0 %5487
        %5489 = vrot.lane.b32.xlu0 %v5115, 32
        %v5490 = vpop.permute.xlu0 %5489
        %5491 = vrot.lane.b32.xlu0 %v5116, 32
        %v5492 = vpop.permute.xlu0 %5491
        %5493 = vrot.lane.b32.xlu0 %v5117, 32
        %v5494 = vpop.permute.xlu0 %5493
        %5495 = vrot.lane.b32.xlu0 %v5118, 32
        %v5496 = vpop.permute.xlu0 %5495
        %5497 = vrot.lane.b32.xlu0 %v5119, 32
        %v5498 = vpop.permute.xlu0 %5497
        %5499 = vrot.lane.b32.xlu0 %v5120, 32
        %v5500 = vpop.permute.xlu0 %5499
        %5501 = vrot.lane.b32.xlu0 %v5121, 32
        %v5502 = vpop.permute.xlu0 %5501
        %5503 = vrot.lane.b32.xlu0 %v5122, 32
        %v5504 = vpop.permute.xlu0 %5503
        %5505 = vrot.lane.b32.xlu0 %v5123, 32
        %v5506 = vpop.permute.xlu0 %5505
        %5507 = vrot.lane.b32.xlu0 %v5124, 32
        %v5508 = vpop.permute.xlu0 %5507
        %5525 = vrot.lane.b32.xlu0 %v5157, 64
        %v5526 = vpop.permute.xlu0 %5525
        %5527 = vrot.lane.b32.xlu0 %v5158, 64
        %v5528 = vpop.permute.xlu0 %5527
        %5529 = vrot.lane.b32.xlu0 %v5159, 64
        %v5530 = vpop.permute.xlu0 %5529
        %5531 = vrot.lane.b32.xlu0 %v5160, 64
        %v5532 = vpop.permute.xlu0 %5531
        %5533 = vrot.lane.b32.xlu0 %v5161, 64
        %v5534 = vpop.permute.xlu0 %5533
        %5535 = vrot.lane.b32.xlu0 %v5162, 64
        %v5536 = vpop.permute.xlu0 %5535
        %5537 = vrot.lane.b32.xlu0 %v5163, 64
        %v5538 = vpop.permute.xlu0 %5537
        %5539 = vrot.lane.b32.xlu0 %v5164, 64
        %v5540 = vpop.permute.xlu0 %5539
        %5541 = vrot.lane.b32.xlu0 %v5165, 64
        %v5542 = vpop.permute.xlu0 %5541
        %5543 = vrot.lane.b32.xlu0 %v5166, 64
        %v5544 = vpop.permute.xlu0 %5543
        %5545 = vrot.lane.b32.xlu0 %v5167, 64
        %v5546 = vpop.permute.xlu0 %5545
        %5547 = vrot.lane.b32.xlu0 %v5168, 64
        %v5548 = vpop.permute.xlu0 %5547
        %5549 = vrot.lane.b32.xlu0 %v5169, 64
        %v5550 = vpop.permute.xlu0 %5549
        %5551 = vrot.lane.b32.xlu0 %v5170, 64
        %v5552 = vpop.permute.xlu0 %5551
        %5553 = vrot.lane.b32.xlu0 %v5171, 64
        %v5554 = vpop.permute.xlu0 %5553
        %5555 = vrot.lane.b32.xlu0 %v5172, 64
        %v5556 = vpop.permute.xlu0 %5555
        %5573 = vrot.lane.b32.xlu0 %v5205, 96
        %v5574 = vpop.permute.xlu0 %5573
        %5575 = vrot.lane.b32.xlu0 %v5206, 96
        %v5576 = vpop.permute.xlu0 %5575
        %5577 = vrot.lane.b32.xlu0 %v5207, 96
        %v5578 = vpop.permute.xlu0 %5577
        %5579 = vrot.lane.b32.xlu0 %v5208, 96
        %v5580 = vpop.permute.xlu0 %5579
        %5581 = vrot.lane.b32.xlu0 %v5209, 96
        %v5582 = vpop.permute.xlu0 %5581
        %5583 = vrot.lane.b32.xlu0 %v5210, 96
        %v5584 = vpop.permute.xlu0 %5583
        %5585 = vrot.lane.b32.xlu0 %v5211, 96
        %v5586 = vpop.permute.xlu0 %5585
        %5587 = vrot.lane.b32.xlu0 %v5212, 96
        %v5588 = vpop.permute.xlu0 %5587
        %5589 = vrot.lane.b32.xlu0 %v5213, 96
        %v5590 = vpop.permute.xlu0 %5589
        %5591 = vrot.lane.b32.xlu0 %v5214, 96
        %v5592 = vpop.permute.xlu0 %5591
        %5593 = vrot.lane.b32.xlu0 %v5215, 96
        %v5594 = vpop.permute.xlu0 %5593
        %5595 = vrot.lane.b32.xlu0 %v5216, 96
        %v5596 = vpop.permute.xlu0 %5595
        %5597 = vrot.lane.b32.xlu0 %v5217, 96
        %v5598 = vpop.permute.xlu0 %5597
        %5599 = vrot.lane.b32.xlu0 %v5218, 96
        %v5600 = vpop.permute.xlu0 %5599
        %5601 = vrot.lane.b32.xlu0 %v5219, 96
        %v5602 = vpop.permute.xlu0 %5601
        %5603 = vrot.lane.b32.xlu0 %v5220, 96
        %v5604 = vpop.permute.xlu0 %5603
        %5621 = vrot.lane.b32.xlu0 %v5301, 32
        %v5622 = vpop.permute.xlu0 %5621
        %5623 = vrot.lane.b32.xlu0 %v5302, 32
        %v5624 = vpop.permute.xlu0 %5623
        %5625 = vrot.lane.b32.xlu0 %v5303, 32
        %v5626 = vpop.permute.xlu0 %5625
        %5627 = vrot.lane.b32.xlu0 %v5304, 32
        %v5628 = vpop.permute.xlu0 %5627
        %5629 = vrot.lane.b32.xlu0 %v5305, 32
        %v5630 = vpop.permute.xlu0 %5629
        %5631 = vrot.lane.b32.xlu0 %v5306, 32
        %v5632 = vpop.permute.xlu0 %5631
        %5633 = vrot.lane.b32.xlu0 %v5307, 32
        %v5634 = vpop.permute.xlu0 %5633
        %5635 = vrot.lane.b32.xlu0 %v5308, 32
        %v5636 = vpop.permute.xlu0 %5635
        %5637 = vrot.lane.b32.xlu0 %v5309, 32
        %v5638 = vpop.permute.xlu0 %5637
        %5639 = vrot.lane.b32.xlu0 %v5310, 32
        %v5640 = vpop.permute.xlu0 %5639
        %5641 = vrot.lane.b32.xlu0 %v5311, 32
        %v5642 = vpop.permute.xlu0 %5641
        %5643 = vrot.lane.b32.xlu0 %v5312, 32
        %v5644 = vpop.permute.xlu0 %5643
        %5645 = vrot.lane.b32.xlu0 %v5313, 32
        %v5646 = vpop.permute.xlu0 %5645
        %5647 = vrot.lane.b32.xlu0 %v5314, 32
        %v5648 = vpop.permute.xlu0 %5647
        %5649 = vrot.lane.b32.xlu0 %v5315, 32
        %v5650 = vpop.permute.xlu0 %5649
        %5651 = vrot.lane.b32.xlu0 %v5316, 32
        %v5652 = vpop.permute.xlu0 %5651
        %5669 = vrot.lane.b32.xlu0 %v5349, 64
        %v5670 = vpop.permute.xlu0 %5669
        %5671 = vrot.lane.b32.xlu0 %v5350, 64
        %v5672 = vpop.permute.xlu0 %5671
        %5673 = vrot.lane.b32.xlu0 %v5351, 64
        %v5674 = vpop.permute.xlu0 %5673
        %5675 = vrot.lane.b32.xlu0 %v5352, 64
        %v5676 = vpop.permute.xlu0 %5675
        %5677 = vrot.lane.b32.xlu0 %v5353, 64
        %v5678 = vpop.permute.xlu0 %5677
        %5679 = vrot.lane.b32.xlu0 %v5354, 64
        %v5680 = vpop.permute.xlu0 %5679
        %5681 = vrot.lane.b32.xlu0 %v5355, 64
        %v5682 = vpop.permute.xlu0 %5681
        %5683 = vrot.lane.b32.xlu0 %v5356, 64
        %v5684 = vpop.permute.xlu0 %5683
        %5685 = vrot.lane.b32.xlu0 %v5357, 64
        %v5686 = vpop.permute.xlu0 %5685
        %5687 = vrot.lane.b32.xlu0 %v5358, 64
        %v5688 = vpop.permute.xlu0 %5687
        %5689 = vrot.lane.b32.xlu0 %v5359, 64
        %v5690 = vpop.permute.xlu0 %5689
        %5691 = vrot.lane.b32.xlu0 %v5360, 64
        %v5692 = vpop.permute.xlu0 %5691
        %5693 = vrot.lane.b32.xlu0 %v5361, 64
        %v5694 = vpop.permute.xlu0 %5693
        %5695 = vrot.lane.b32.xlu0 %v5362, 64
        %v5696 = vpop.permute.xlu0 %5695
        %5697 = vrot.lane.b32.xlu0 %v5363, 64
        %v5698 = vpop.permute.xlu0 %5697
        %5699 = vrot.lane.b32.xlu0 %v5364, 64
        %v5700 = vpop.permute.xlu0 %5699
        %5717 = vrot.lane.b32.xlu0 %v5397, 96
        %v5718 = vpop.permute.xlu0 %5717
        %5719 = vrot.lane.b32.xlu0 %v5398, 96
        %v5720 = vpop.permute.xlu0 %5719
        %5721 = vrot.lane.b32.xlu0 %v5399, 96
        %v5722 = vpop.permute.xlu0 %5721
        %5723 = vrot.lane.b32.xlu0 %v5400, 96
        %v5724 = vpop.permute.xlu0 %5723
        %5725 = vrot.lane.b32.xlu0 %v5401, 96
        %v5726 = vpop.permute.xlu0 %5725
        %5727 = vrot.lane.b32.xlu0 %v5402, 96
        %v5728 = vpop.permute.xlu0 %5727
        %5729 = vrot.lane.b32.xlu0 %v5403, 96
        %v5730 = vpop.permute.xlu0 %5729
        %5731 = vrot.lane.b32.xlu0 %v5404, 96
        %v5732 = vpop.permute.xlu0 %5731
        %5733 = vrot.lane.b32.xlu0 %v5405, 96
        %v5734 = vpop.permute.xlu0 %5733
        %5735 = vrot.lane.b32.xlu0 %v5406, 96
        %v5736 = vpop.permute.xlu0 %5735
        %5737 = vrot.lane.b32.xlu0 %v5407, 96
        %v5738 = vpop.permute.xlu0 %5737
        %5739 = vrot.lane.b32.xlu0 %v5408, 96
        %v5740 = vpop.permute.xlu0 %5739
        %5741 = vrot.lane.b32.xlu0 %v5409, 96
        %v5742 = vpop.permute.xlu0 %5741
        %5743 = vrot.lane.b32.xlu0 %v5410, 96
        %v5744 = vpop.permute.xlu0 %5743
        %5745 = vrot.lane.b32.xlu0 %v5411, 96
        %v5746 = vpop.permute.xlu0 %5745
        %5747 = vrot.lane.b32.xlu0 %v5412, 96
        %v5748 = vpop.permute.xlu0 %5747
        %v5751 = vsel %vm268, %v5061, %v5478
        %v5754 = vsel %vm268, %v5062, %v5480
        %v5757 = vsel %vm268, %v5063, %v5482
        %v5760 = vsel %vm268, %v5064, %v5484
        %v5763 = vsel %vm268, %v5065, %v5486
        %v5766 = vsel %vm268, %v5066, %v5488
        %v5769 = vsel %vm268, %v5067, %v5490
        %v5772 = vsel %vm268, %v5068, %v5492
        %v5775 = vsel %vm268, %v5069, %v5494
        %v5778 = vsel %vm268, %v5070, %v5496
        %v5781 = vsel %vm268, %v5071, %v5498
        %v5784 = vsel %vm268, %v5072, %v5500
        %v5787 = vsel %vm268, %v5073, %v5502
        %v5790 = vsel %vm268, %v5074, %v5504
        %v5793 = vsel %vm268, %v5075, %v5506
        %v5796 = vsel %vm268, %v5076, %v5508
        %v5798 = vsel %vm1319, %v5751, %v5526
        %v5800 = vsel %vm1319, %v5754, %v5528
        %v5802 = vsel %vm1319, %v5757, %v5530
        %v5804 = vsel %vm1319, %v5760, %v5532
        %v5806 = vsel %vm1319, %v5763, %v5534
        %v5808 = vsel %vm1319, %v5766, %v5536
        %v5810 = vsel %vm1319, %v5769, %v5538
        %v5812 = vsel %vm1319, %v5772, %v5540
        %v5814 = vsel %vm1319, %v5775, %v5542
        %v5816 = vsel %vm1319, %v5778, %v5544
        %v5818 = vsel %vm1319, %v5781, %v5546
        %v5820 = vsel %vm1319, %v5784, %v5548
        %v5822 = vsel %vm1319, %v5787, %v5550
        %v5824 = vsel %vm1319, %v5790, %v5552
        %v5826 = vsel %vm1319, %v5793, %v5554
        %v5828 = vsel %vm1319, %v5796, %v5556
        %v5830 = vsel %vm1385, %v5798, %v5574
        %v5833 = vsel %vm1385, %v5800, %v5576
        %v5836 = vsel %vm1385, %v5802, %v5578
        %v5839 = vsel %vm1385, %v5804, %v5580
        %v5842 = vsel %vm1385, %v5806, %v5582
        %v5845 = vsel %vm1385, %v5808, %v5584
        %v5848 = vsel %vm1385, %v5810, %v5586
        %v5851 = vsel %vm1385, %v5812, %v5588
        %v5854 = vsel %vm1385, %v5814, %v5590
        %v5857 = vsel %vm1385, %v5816, %v5592
        %v5860 = vsel %vm1385, %v5818, %v5594
        %v5863 = vsel %vm1385, %v5820, %v5596
        %v5866 = vsel %vm1385, %v5822, %v5598
        %v5869 = vsel %vm1385, %v5824, %v5600
        %v5872 = vsel %vm1385, %v5826, %v5602
        %v5875 = vsel %vm1385, %v5828, %v5604
        %v5879 = vsel %vm268, %v5253, %v5622
        %v5882 = vsel %vm268, %v5254, %v5624
        %v5885 = vsel %vm268, %v5255, %v5626
        %v5888 = vsel %vm268, %v5256, %v5628
        %v5891 = vsel %vm268, %v5257, %v5630
        %v5894 = vsel %vm268, %v5258, %v5632
        %v5897 = vsel %vm268, %v5259, %v5634
        %v5900 = vsel %vm268, %v5260, %v5636
        %v5903 = vsel %vm268, %v5261, %v5638
        %v5906 = vsel %vm268, %v5262, %v5640
        %v5909 = vsel %vm268, %v5263, %v5642
        %v5912 = vsel %vm268, %v5264, %v5644
        %v5915 = vsel %vm268, %v5265, %v5646
        %v5918 = vsel %vm268, %v5266, %v5648
        %v5921 = vsel %vm268, %v5267, %v5650
        %v5924 = vsel %vm268, %v5268, %v5652
        %v5926 = vsel %vm1319, %v5879, %v5670
        %v5928 = vsel %vm1319, %v5882, %v5672
        %v5930 = vsel %vm1319, %v5885, %v5674
        %v5932 = vsel %vm1319, %v5888, %v5676
        %v5934 = vsel %vm1319, %v5891, %v5678
        %v5936 = vsel %vm1319, %v5894, %v5680
        %v5938 = vsel %vm1319, %v5897, %v5682
        %v5940 = vsel %vm1319, %v5900, %v5684
        %v5942 = vsel %vm1319, %v5903, %v5686
        %v5944 = vsel %vm1319, %v5906, %v5688
        %v5946 = vsel %vm1319, %v5909, %v5690
        %v5948 = vsel %vm1319, %v5912, %v5692
        %v5950 = vsel %vm1319, %v5915, %v5694
        %v5952 = vsel %vm1319, %v5918, %v5696
        %v5954 = vsel %vm1319, %v5921, %v5698
        %v5956 = vsel %vm1319, %v5924, %v5700
        %v5958 = vsel %vm1385, %v5926, %v5718
        %v5961 = vsel %vm1385, %v5928, %v5720
        %v5964 = vsel %vm1385, %v5930, %v5722
        %v5967 = vsel %vm1385, %v5932, %v5724
        %v5970 = vsel %vm1385, %v5934, %v5726
        %v5973 = vsel %vm1385, %v5936, %v5728
        %v5976 = vsel %vm1385, %v5938, %v5730
        %v5979 = vsel %vm1385, %v5940, %v5732
        %v5982 = vsel %vm1385, %v5942, %v5734
        %v5985 = vsel %vm1385, %v5944, %v5736
        %v5988 = vsel %vm1385, %v5946, %v5738
        %v5991 = vsel %vm1385, %v5948, %v5740
        %v5994 = vsel %vm1385, %v5950, %v5742
        %v5997 = vsel %vm1385, %v5952, %v5744
        %v6000 = vsel %vm1385, %v5954, %v5746
        %v6003 = vsel %vm1385, %v5956, %v5748
        %v6006 = vlaneseq
        %v6007 = vshrl.u32 %v6006, 7
        %v6008 = vsub.s32 0, %v6007
        %v6009 = vrot.slane %v5028, %v6008
        %v6047 = vunpack.c.l.b16 %v4991
        %v6048 = vunpack.c.l.b16 %v4992
        %v6049 = vunpack.c.l.b16 %v4993
        %v6050 = vunpack.c.l.b16 %v4994
        %v6051 = vunpack.c.l.b16 %v4995
        %v6052 = vunpack.c.l.b16 %v4996
        %v6053 = vunpack.c.l.b16 %v4997
        %v6054 = vunpack.c.l.b16 %v4998
        %v6055 = vunpack.c.l.b16 %v4999
        %v6056 = vunpack.c.l.b16 %v5000
        %v6057 = vunpack.c.l.b16 %v5001
        %v6058 = vunpack.c.l.b16 %v5002
        %v6059 = vunpack.c.l.b16 %v5003
        %v6060 = vunpack.c.l.b16 %v5004
        %v6061 = vunpack.c.l.b16 %v5005
        %v6062 = vunpack.c.l.b16 %v5006
        %v6063 = vunpack.c.l.b16 %v5007
        %v6064 = vunpack.c.l.b16 %v5008
        %v6065 = vunpack.c.l.b16 %v5009
        %v6066 = vunpack.c.l.b16 %v5010
        %v6067 = vunpack.c.l.b16 %v5011
        %v6068 = vunpack.c.l.b16 %v5012
        %v6069 = vunpack.c.l.b16 %v5013
        %v6070 = vunpack.c.l.b16 %v5014
        %v6071 = vunpack.c.l.b16 %v5015
        %v6072 = vunpack.c.l.b16 %v5016
        %v6073 = vunpack.c.l.b16 %v5017
        %v6074 = vunpack.c.l.b16 %v5018
        %v6075 = vunpack.c.l.b16 %v5019
        %v6076 = vunpack.c.l.b16 %v5020
        %v6077 = vunpack.c.l.b16 %v5021
        %v6078 = vunpack.c.l.b16 %v5022
        %v6079 = vunpack.c.l.b16 %v5023
        %v6080 = vunpack.c.l.b16 %v5024
        %v6081 = vunpack.c.l.b16 %v5025
        %v6082 = vunpack.c.l.b16 %v5026
        %v6083 = vpack.c.b16 %v6048, %v6047
        %v6084 = vpack.c.b16 %v6050, %v6049
        %v6085 = vpack.c.b16 %v6052, %v6051
        %v6086 = vpack.c.b16 %v6054, %v6053
        %v6087 = vpack.c.b16 %v6056, %v6055
        %v6088 = vpack.c.b16 %v6058, %v6057
        %v6089 = vpack.c.b16 %v6060, %v6059
        %v6090 = vpack.c.b16 %v6062, %v6061
        %v6091 = vpack.c.b16 %v6064, %v6063
        %v6092 = vpack.c.b16 %v6066, %v6065
        %v6093 = vpack.c.b16 %v6068, %v6067
        %v6094 = vpack.c.b16 %v6070, %v6069
        %v6095 = vpack.c.b16 %v6072, %v6071
        %v6096 = vpack.c.b16 %v6074, %v6073
        %v6097 = vpack.c.b16 %v6076, %v6075
        %v6098 = vpack.c.b16 %v6078, %v6077
        %v6099 = vpack.c.b16 %v6080, %v6079
        %v6100 = vpack.c.b16 %v6082, %v6081
        %v6120 = vsel %vm268, %v5445, 0
        %v6123 = vsel %vm268, %v5446, 0
        %v6126 = vsel %vm268, %v5447, 0
        %v6129 = vsel %vm268, %v5448, 0
        %v6132 = vsel %vm268, %v5449, 0
        %v6135 = vsel %vm268, %v5450, 0
        %v6138 = vsel %vm268, %v5451, 0
        %v6141 = vsel %vm268, %v5452, 0
        %v6144 = vsel %vm268, %v5453, 0
        %v6147 = vsel %vm268, %v5454, 0
        %v6150 = vsel %vm268, %v5455, 0
        %v6153 = vsel %vm268, %v5456, 0
        %v6156 = vsel %vm268, %v5457, 0
        %v6159 = vsel %vm268, %v5458, 0
        %v6162 = vsel %vm268, %v5459, 0
        %v6165 = vsel %vm268, %v5460, 0
        %6167 = vmatprep.subr.bf16.mxu0 0
        %6168 = vmatpush1.bf16.msra.mxu0 %v6083
        %6169 = vmatprep.subr.bf16.mxu0 0
        %6170 = vmatpush1.bf16.msra.mxu0 %v6084
        %6171 = vmatprep.subr.bf16.mxu0 0
        %6172 = vmatpush1.bf16.msra.mxu0 %v6085
        %6173 = vmatprep.subr.bf16.mxu0 0
        %6174 = vmatpush1.bf16.msra.mxu0 %v6086
        %6175 = vmatprep.subr.bf16.mxu0 0
        %6176 = vmatpush1.bf16.msra.mxu0 %v6087
        %6177 = vmatprep.subr.bf16.mxu0 0
        %6178 = vmatpush1.bf16.msra.mxu0 %v6088
        %6179 = vmatprep.subr.bf16.mxu0 0
        %6180 = vmatpush1.bf16.msra.mxu0 %v6089
        %6181 = vmatprep.subr.bf16.mxu0 0
        %6182 = vmatpush1.bf16.msra.mxu0 %v6090
        %6183 = vmatprep.subr.bf16.mxu0 0
        %6184 = vmatpush1.bf16.msra.mxu0 %v6091
        %6185 = vmatprep.subr.bf16.mxu0 0
        %6186 = vmatpush1.bf16.msra.mxu0 %v6092
        %6187 = vmatprep.subr.bf16.mxu0 0
        %6188 = vmatpush1.bf16.msra.mxu0 %v6093
        %6189 = vmatprep.subr.bf16.mxu0 0
        %6190 = vmatpush1.bf16.msra.mxu0 %v6094
        %6191 = vmatprep.subr.bf16.mxu0 0
        %6192 = vmatpush1.bf16.msra.mxu0 %v6095
        %6193 = vmatprep.subr.bf16.mxu0 0
        %6194 = vmatpush1.bf16.msra.mxu0 %v6096
        %6195 = vmatprep.subr.bf16.mxu0 0
        %6196 = vmatpush1.bf16.msra.mxu0 %v6097
        %6197 = vmatprep.subr.bf16.mxu0 0
        %6198 = vmatpush1.bf16.msra.mxu0 %v6098
        %6199 = vmatprep.mubr.bf16.mxu0 %v5958
        %6200 = vmatmul.mubr.bf16.gmra.mrb[0].mxu0 %v5830
        %v6201 = vpop.f32.mrb[0].mxu0
        %v6202 = vadd.f32 %v6009, %v6201
        %v6203 = vpop.f32.mrb[0].mxu0
        %v6204 = vpop.f32.mrb[0].mxu0
        %v6205 = vadd.f32 %v6009, %v6204
        %v6206 = vpop.f32.mrb[0].mxu0
        %6207 = vmatprep.mubr.bf16.mxu0 %v5961
        %6208 = vmatmul.mubr.bf16.gmra.mrb[0].mxu0 %v5833
        %v6209 = vpop.f32.mrb[0].mxu0
        %v6210 = vadd.f32 %v6009, %v6209
        %v6211 = vpop.f32.mrb[0].mxu0
        %v6212 = vpop.f32.mrb[0].mxu0
        %v6213 = vadd.f32 %v6009, %v6212
        %v6214 = vpop.f32.mrb[0].mxu0
        %6215 = vmatprep.mubr.bf16.mxu0 %v5964
        %6216 = vmatmul.mubr.bf16.gmra.mrb[0].mxu0 %v5836
        %v6217 = vpop.f32.mrb[0].mxu0
        %v6218 = vadd.f32 %v6009, %v6217
        %v6219 = vpop.f32.mrb[0].mxu0
        %v6220 = vpop.f32.mrb[0].mxu0
        %v6221 = vadd.f32 %v6009, %v6220
        %v6222 = vpop.f32.mrb[0].mxu0
        %6223 = vmatprep.mubr.bf16.mxu0 %v5967
        %6224 = vmatmul.mubr.bf16.gmra.mrb[0].mxu0 %v5839
        %v6225 = vpop.f32.mrb[0].mxu0
        %v6226 = vadd.f32 %v6009, %v6225
        %v6227 = vpop.f32.mrb[0].mxu0
        %v6228 = vpop.f32.mrb[0].mxu0
        %v6229 = vadd.f32 %v6009, %v6228
        %v6230 = vpop.f32.mrb[0].mxu0
        %6231 = vmatprep.mubr.bf16.mxu0 %v5970
        %6232 = vmatmul.mubr.bf16.gmra.mrb[0].mxu0 %v5842
        %v6233 = vpop.f32.mrb[0].mxu0
        %v6234 = vadd.f32 %v6009, %v6233
        %v6235 = vpop.f32.mrb[0].mxu0
        %v6236 = vpop.f32.mrb[0].mxu0
        %v6237 = vadd.f32 %v6009, %v6236
        %v6238 = vpop.f32.mrb[0].mxu0
        %6239 = vmatprep.mubr.bf16.mxu0 %v5973
        %6240 = vmatmul.mubr.bf16.gmra.mrb[0].mxu0 %v5845
        %v6241 = vpop.f32.mrb[0].mxu0
        %v6242 = vadd.f32 %v6009, %v6241
        %v6243 = vpop.f32.mrb[0].mxu0
        %v6244 = vpop.f32.mrb[0].mxu0
        %v6245 = vadd.f32 %v6009, %v6244
        %v6246 = vpop.f32.mrb[0].mxu0
        %6247 = vmatprep.mubr.bf16.mxu0 %v5976
        %6248 = vmatmul.mubr.bf16.gmra.mrb[0].mxu0 %v5848
        %v6249 = vpop.f32.mrb[0].mxu0
        %v6250 = vadd.f32 %v6009, %v6249
        %v6251 = vpop.f32.mrb[0].mxu0
        %v6252 = vpop.f32.mrb[0].mxu0
        %v6253 = vadd.f32 %v6009, %v6252
        %v6254 = vpop.f32.mrb[0].mxu0
        %6255 = vmatprep.mubr.bf16.mxu0 %v5979
        %6256 = vmatmul.mubr.bf16.gmra.mrb[0].mxu0 %v5851
        %v6257 = vpop.f32.mrb[0].mxu0
        %v6258 = vadd.f32 %v6009, %v6257
        %v6259 = vpop.f32.mrb[0].mxu0
        %v6260 = vpop.f32.mrb[0].mxu0
        %v6261 = vadd.f32 %v6009, %v6260
        %v6262 = vpop.f32.mrb[0].mxu0
        %6263 = vmatprep.mubr.bf16.mxu0 %v5982
        %6264 = vmatmul.mubr.bf16.gmra.mrb[0].mxu0 %v5854
        %v6265 = vpop.f32.mrb[0].mxu0
        %v6266 = vadd.f32 %v6009, %v6265
        %v6267 = vpop.f32.mrb[0].mxu0
        %v6268 = vpop.f32.mrb[0].mxu0
        %v6269 = vadd.f32 %v6009, %v6268
        %v6270 = vpop.f32.mrb[0].mxu0
        %6271 = vmatprep.mubr.bf16.mxu0 %v5985
        %6272 = vmatmul.mubr.bf16.gmra.mrb[0].mxu0 %v5857
        %v6273 = vpop.f32.mrb[0].mxu0
        %v6274 = vadd.f32 %v6009, %v6273
        %v6275 = vpop.f32.mrb[0].mxu0
        %v6276 = vpop.f32.mrb[0].mxu0
        %v6277 = vadd.f32 %v6009, %v6276
        %v6278 = vpop.f32.mrb[0].mxu0
        %6279 = vmatprep.mubr.bf16.mxu0 %v5988
        %6280 = vmatmul.mubr.bf16.gmra.mrb[0].mxu0 %v5860
        %v6281 = vpop.f32.mrb[0].mxu0
        %v6282 = vadd.f32 %v6009, %v6281
        %v6283 = vpop.f32.mrb[0].mxu0
        %v6284 = vpop.f32.mrb[0].mxu0
        %v6285 = vadd.f32 %v6009, %v6284
        %v6286 = vpop.f32.mrb[0].mxu0
        %6287 = vmatprep.mubr.bf16.mxu0 %v5991
        %6288 = vmatmul.mubr.bf16.gmra.mrb[0].mxu0 %v5863
        %v6289 = vpop.f32.mrb[0].mxu0
        %v6290 = vadd.f32 %v6009, %v6289
        %v6291 = vpop.f32.mrb[0].mxu0
        %v6292 = vpop.f32.mrb[0].mxu0
        %v6293 = vadd.f32 %v6009, %v6292
        %v6294 = vpop.f32.mrb[0].mxu0
        %6295 = vmatprep.mubr.bf16.mxu0 %v5994
        %6296 = vmatmul.mubr.bf16.gmra.mrb[0].mxu0 %v5866
        %v6297 = vpop.f32.mrb[0].mxu0
        %v6298 = vadd.f32 %v6009, %v6297
        %v6299 = vpop.f32.mrb[0].mxu0
        %v6300 = vpop.f32.mrb[0].mxu0
        %v6301 = vadd.f32 %v6009, %v6300
        %v6302 = vpop.f32.mrb[0].mxu0
        %6303 = vmatprep.mubr.bf16.mxu0 %v5997
        %6304 = vmatmul.mubr.bf16.gmra.mrb[0].mxu0 %v5869
        %v6305 = vpop.f32.mrb[0].mxu0
        %v6306 = vadd.f32 %v6009, %v6305
        %v6307 = vpop.f32.mrb[0].mxu0
        %v6308 = vpop.f32.mrb[0].mxu0
        %v6309 = vadd.f32 %v6009, %v6308
        %v6310 = vpop.f32.mrb[0].mxu0
        %6311 = vmatprep.mubr.bf16.mxu0 %v6000
        %6312 = vmatmul.mubr.bf16.gmra.mrb[0].mxu0 %v5872
        %v6313 = vpop.f32.mrb[0].mxu0
        %v6314 = vadd.f32 %v6009, %v6313
        %v6315 = vpop.f32.mrb[0].mxu0
        %v6316 = vpop.f32.mrb[0].mxu0
        %v6317 = vadd.f32 %v6009, %v6316
        %v6318 = vpop.f32.mrb[0].mxu0
        %6319 = vmatprep.mubr.bf16.mxu0 %v6003
        %6320 = vmatmul.mubr.bf16.gmra.mrb[0].mxu0 %v5875
        %v6321 = vpop.f32.mrb[0].mxu0
        %v6322 = vadd.f32 %v6009, %v6321
        %v6323 = vpop.f32.mrb[0].mxu0
        %v6324 = vpop.f32.mrb[0].mxu0
        %v6325 = vadd.f32 %v6009, %v6324
        %v6326 = vpop.f32.mrb[0].mxu0
        %6327 = vdwg.mxu0
        %6328 = vmatprep.subr.bf16.mxu0 0
        %6329 = vmatpush1.bf16.msra.mxu0 %v6099
        %6330 = vmatprep.subr.bf16.mxu0 0
        %6331 = vmatpush1.bf16.msra.mxu0 %v6100
        %6332 = vmatprep.subr.bf16.mxu0 0
        %6333 = vmatpush1.bf16.msra.mxu0 0
        %6334 = vmatprep.subr.bf16.mxu0 0
        %6335 = vmatpush1.bf16.msra.mxu0 0
        %6336 = vmatprep.subr.bf16.mxu0 0
        %6337 = vmatpush1.bf16.msra.mxu0 0
        %6338 = vmatprep.subr.bf16.mxu0 0
        %6339 = vmatpush1.bf16.msra.mxu0 0
        %6340 = vmatprep.subr.bf16.mxu0 0
        %6341 = vmatpush1.bf16.msra.mxu0 0
        %6342 = vmatprep.subr.bf16.mxu0 0
        %6343 = vmatpush1.bf16.msra.mxu0 0
        %6344 = vmatprep.subr.bf16.mxu0 0
        %6345 = vmatpush1.bf16.msra.mxu0 0
        %6346 = vmatprep.subr.bf16.mxu0 0
        %6347 = vmatpush1.bf16.msra.mxu0 0
        %6348 = vmatprep.subr.bf16.mxu0 0
        %6349 = vmatpush1.bf16.msra.mxu0 0
        %6350 = vmatprep.subr.bf16.mxu0 0
        %6351 = vmatpush1.bf16.msra.mxu0 0
        %6352 = vmatprep.subr.bf16.mxu0 0
        %6353 = vmatpush1.bf16.msra.mxu0 0
        %6354 = vmatprep.subr.bf16.mxu0 0
        %6355 = vmatpush1.bf16.msra.mxu0 0
        %6356 = vmatprep.subr.bf16.mxu0 0
        %6357 = vmatpush1.bf16.msra.mxu0 0
        %6358 = vmatprep.subr.bf16.mxu0 0
        %6359 = vmatpush1.bf16.msra.mxu0 0
        %6360 = vmatprep.mubr.bf16.mxu0 0
        %6361 = vmatmul.mubr.bf16.gmra.mrb[0].mxu0 %v6120
        %v6362 = vpop.f32.mrb[0].mxu0
        %v6363 = vadd.f32 %v6202, %v6362
        %v6364 = vpop.f32.mrb[0].mxu0
        %v6365 = vpop.f32.mrb[0].mxu0
        %v6366 = vadd.f32 %v6205, %v6365
        %v6367 = vpop.f32.mrb[0].mxu0
        %6368 = vmatprep.mubr.bf16.mxu0 0
        %6369 = vmatmul.mubr.bf16.gmra.mrb[0].mxu0 %v6123
        %v6370 = vpop.f32.mrb[0].mxu0
        %v6371 = vadd.f32 %v6210, %v6370
        %v6372 = vpop.f32.mrb[0].mxu0
        %v6373 = vpop.f32.mrb[0].mxu0
        %v6374 = vadd.f32 %v6213, %v6373
        %v6375 = vpop.f32.mrb[0].mxu0
        %6376 = vmatprep.mubr.bf16.mxu0 0
        %6377 = vmatmul.mubr.bf16.gmra.mrb[0].mxu0 %v6126
        %v6378 = vpop.f32.mrb[0].mxu0
        %v6379 = vadd.f32 %v6218, %v6378
        %v6380 = vpop.f32.mrb[0].mxu0
        %v6381 = vpop.f32.mrb[0].mxu0
        %v6382 = vadd.f32 %v6221, %v6381
        %v6383 = vpop.f32.mrb[0].mxu0
        %6384 = vmatprep.mubr.bf16.mxu0 0
        %6385 = vmatmul.mubr.bf16.gmra.mrb[0].mxu0 %v6129
        %v6386 = vpop.f32.mrb[0].mxu0
        %v6387 = vadd.f32 %v6226, %v6386
        %v6388 = vpop.f32.mrb[0].mxu0
        %v6389 = vpop.f32.mrb[0].mxu0
        %v6390 = vadd.f32 %v6229, %v6389
        %v6391 = vpop.f32.mrb[0].mxu0
        %6392 = vmatprep.mubr.bf16.mxu0 0
        %6393 = vmatmul.mubr.bf16.gmra.mrb[0].mxu0 %v6132
        %v6394 = vpop.f32.mrb[0].mxu0
        %v6395 = vadd.f32 %v6234, %v6394
        %v6396 = vpop.f32.mrb[0].mxu0
        %v6397 = vpop.f32.mrb[0].mxu0
        %v6398 = vadd.f32 %v6237, %v6397
        %v6399 = vpop.f32.mrb[0].mxu0
        %6400 = vmatprep.mubr.bf16.mxu0 0
        %6401 = vmatmul.mubr.bf16.gmra.mrb[0].mxu0 %v6135
        %v6402 = vpop.f32.mrb[0].mxu0
        %v6403 = vadd.f32 %v6242, %v6402
        %v6404 = vpop.f32.mrb[0].mxu0
        %v6405 = vpop.f32.mrb[0].mxu0
        %v6406 = vadd.f32 %v6245, %v6405
        %v6407 = vpop.f32.mrb[0].mxu0
        %6408 = vmatprep.mubr.bf16.mxu0 0
        %6409 = vmatmul.mubr.bf16.gmra.mrb[0].mxu0 %v6138
        %v6410 = vpop.f32.mrb[0].mxu0
        %v6411 = vadd.f32 %v6250, %v6410
        %v6412 = vpop.f32.mrb[0].mxu0
        %v6413 = vpop.f32.mrb[0].mxu0
        %v6414 = vadd.f32 %v6253, %v6413
        %v6415 = vpop.f32.mrb[0].mxu0
        %6416 = vmatprep.mubr.bf16.mxu0 0
        %6417 = vmatmul.mubr.bf16.gmra.mrb[0].mxu0 %v6141
        %v6418 = vpop.f32.mrb[0].mxu0
        %v6419 = vadd.f32 %v6258, %v6418
        %v6420 = vpop.f32.mrb[0].mxu0
        %v6421 = vpop.f32.mrb[0].mxu0
        %v6422 = vadd.f32 %v6261, %v6421
        %v6423 = vpop.f32.mrb[0].mxu0
        %6424 = vmatprep.mubr.bf16.mxu0 0
        %6425 = vmatmul.mubr.bf16.gmra.mrb[0].mxu0 %v6144
        %v6426 = vpop.f32.mrb[0].mxu0
        %v6427 = vadd.f32 %v6266, %v6426
        %v6428 = vpop.f32.mrb[0].mxu0
        %v6429 = vpop.f32.mrb[0].mxu0
        %v6430 = vadd.f32 %v6269, %v6429
        %v6431 = vpop.f32.mrb[0].mxu0
        %6432 = vmatprep.mubr.bf16.mxu0 0
        %6433 = vmatmul.mubr.bf16.gmra.mrb[0].mxu0 %v6147
        %v6434 = vpop.f32.mrb[0].mxu0
        %v6435 = vadd.f32 %v6274, %v6434
        %v6436 = vpop.f32.mrb[0].mxu0
        %v6437 = vpop.f32.mrb[0].mxu0
        %v6438 = vadd.f32 %v6277, %v6437
        %v6439 = vpop.f32.mrb[0].mxu0
        %6440 = vmatprep.mubr.bf16.mxu0 0
        %6441 = vmatmul.mubr.bf16.gmra.mrb[0].mxu0 %v6150
        %v6442 = vpop.f32.mrb[0].mxu0
        %v6443 = vadd.f32 %v6282, %v6442
        %v6444 = vpop.f32.mrb[0].mxu0
        %v6445 = vpop.f32.mrb[0].mxu0
        %v6446 = vadd.f32 %v6285, %v6445
        %v6447 = vpop.f32.mrb[0].mxu0
        %6448 = vmatprep.mubr.bf16.mxu0 0
        %6449 = vmatmul.mubr.bf16.gmra.mrb[0].mxu0 %v6153
        %v6450 = vpop.f32.mrb[0].mxu0
        %v6451 = vadd.f32 %v6290, %v6450
        %v6452 = vpop.f32.mrb[0].mxu0
        %v6453 = vpop.f32.mrb[0].mxu0
        %v6454 = vadd.f32 %v6293, %v6453
        %v6455 = vpop.f32.mrb[0].mxu0
        %6456 = vmatprep.mubr.bf16.mxu0 0
        %6457 = vmatmul.mubr.bf16.gmra.mrb[0].mxu0 %v6156
        %v6458 = vpop.f32.mrb[0].mxu0
        %v6459 = vadd.f32 %v6298, %v6458
        %v6460 = vpop.f32.mrb[0].mxu0
        %v6461 = vpop.f32.mrb[0].mxu0
        %v6462 = vadd.f32 %v6301, %v6461
        %v6463 = vpop.f32.mrb[0].mxu0
        %6464 = vmatprep.mubr.bf16.mxu0 0
        %6465 = vmatmul.mubr.bf16.gmra.mrb[0].mxu0 %v6159
        %v6466 = vpop.f32.mrb[0].mxu0
        %v6467 = vadd.f32 %v6306, %v6466
        %v6468 = vpop.f32.mrb[0].mxu0
        %v6469 = vpop.f32.mrb[0].mxu0
        %v6470 = vadd.f32 %v6309, %v6469
        %v6471 = vpop.f32.mrb[0].mxu0
        %6472 = vmatprep.mubr.bf16.mxu0 0
        %6473 = vmatmul.mubr.bf16.gmra.mrb[0].mxu0 %v6162
        %v6474 = vpop.f32.mrb[0].mxu0
        %v6475 = vadd.f32 %v6314, %v6474
        %v6476 = vpop.f32.mrb[0].mxu0
        %v6477 = vpop.f32.mrb[0].mxu0
        %v6478 = vadd.f32 %v6317, %v6477
        %v6479 = vpop.f32.mrb[0].mxu0
        %6480 = vmatprep.mubr.bf16.mxu0 0
        %6481 = vmatmul.mubr.bf16.gmra.mrb[0].mxu0 %v6165
        %v6482 = vpop.f32.mrb[0].mxu0
        %v6483 = vadd.f32 %v6322, %v6482
        %v6484 = vpop.f32.mrb[0].mxu0
        %v6485 = vpop.f32.mrb[0].mxu0
        %v6486 = vadd.f32 %v6325, %v6485
        %v6487 = vpop.f32.mrb[0].mxu0
        %6488 = vdwg.mxu0
        %v6489 = vmax.f32 %v6363, 0.0
        %v6490 = vmax.f32 %v6366, 0.0
        %v6491 = vmax.f32 %v6371, 0.0
        %v6492 = vmax.f32 %v6374, 0.0
        %v6493 = vmax.f32 %v6379, 0.0
        %v6494 = vmax.f32 %v6382, 0.0
        %v6495 = vmax.f32 %v6387, 0.0
        %v6496 = vmax.f32 %v6390, 0.0
        %v6497 = vmax.f32 %v6395, 0.0
        %v6498 = vmax.f32 %v6398, 0.0
        %v6499 = vmax.f32 %v6403, 0.0
        %v6500 = vmax.f32 %v6406, 0.0
        %v6501 = vmax.f32 %v6411, 0.0
        %v6502 = vmax.f32 %v6414, 0.0
        %v6503 = vmax.f32 %v6419, 0.0
        %v6504 = vmax.f32 %v6422, 0.0
        %v6505 = vmax.f32 %v6427, 0.0
        %v6506 = vmax.f32 %v6430, 0.0
        %v6507 = vmax.f32 %v6435, 0.0
        %v6508 = vmax.f32 %v6438, 0.0
        %v6509 = vmax.f32 %v6443, 0.0
        %v6510 = vmax.f32 %v6446, 0.0
        %v6511 = vmax.f32 %v6451, 0.0
        %v6512 = vmax.f32 %v6454, 0.0
        %v6513 = vmax.f32 %v6459, 0.0
        %v6514 = vmax.f32 %v6462, 0.0
        %v6515 = vmax.f32 %v6467, 0.0
        %v6516 = vmax.f32 %v6470, 0.0
        %v6517 = vmax.f32 %v6475, 0.0
        %v6518 = vmax.f32 %v6478, 0.0
        %v6519 = vmax.f32 %v6483, 0.0
        %v6520 = vmax.f32 %v6486, 0.0
        %6521 = vst.msk [vmem:[%s321 + $0x8] sm:$0xff] %vm268, %v6489
        %6522 = vst.msk [vmem:[%s321 + $0x10] sm:$0xff] %vm268, %v6490
        %6523 = vst.msk [vmem:[%s321 + $0x28] sm:$0xff] %vm268, %v6491
        %6524 = vst.msk [vmem:[%s321 + $0x30] sm:$0xff] %vm268, %v6492
        %6525 = vst.msk [vmem:[%s321 + $0x48] sm:$0xff] %vm268, %v6493
        %6526 = vst.msk [vmem:[%s321 + $0x50] sm:$0xff] %vm268, %v6494
        %6527 = vst.msk [vmem:[%s321 + $0x68] sm:$0xff] %vm268, %v6495
        %6528 = vst.msk [vmem:[%s321 + $0x70] sm:$0xff] %vm268, %v6496
        %6529 = vst.msk [vmem:[%s321 + $0x88] sm:$0xff] %vm268, %v6497
        %6530 = vst.msk [vmem:[%s321 + $0x90] sm:$0xff] %vm268, %v6498
        %6531 = vst.msk [vmem:[%s321 + $0xa8] sm:$0xff] %vm268, %v6499
        %6532 = vst.msk [vmem:[%s321 + $0xb0] sm:$0xff] %vm268, %v6500
        %6533 = vst.msk [vmem:[%s321 + $0xc8] sm:$0xff] %vm268, %v6501
        %6534 = vst.msk [vmem:[%s321 + $0xd0] sm:$0xff] %vm268, %v6502
        %6535 = vst.msk [vmem:[%s321 + $0xe8] sm:$0xff] %vm268, %v6503
        %6536 = vst.msk [vmem:[%s321 + $0xf0] sm:$0xff] %vm268, %v6504
        %6537 = vst.msk [vmem:[%s321 + $0x108] sm:$0xff] %vm268, %v6505
        %6538 = vst.msk [vmem:[%s321 + $0x110] sm:$0xff] %vm268, %v6506
        %6539 = vst.msk [vmem:[%s321 + $0x128] sm:$0xff] %vm268, %v6507
        %6540 = vst.msk [vmem:[%s321 + $0x130] sm:$0xff] %vm268, %v6508
        %6541 = vst.msk [vmem:[%s321 + $0x148] sm:$0xff] %vm268, %v6509
        %6542 = vst.msk [vmem:[%s321 + $0x150] sm:$0xff] %vm268, %v6510
        %6543 = vst.msk [vmem:[%s321 + $0x168] sm:$0xff] %vm268, %v6511
        %6544 = vst.msk [vmem:[%s321 + $0x170] sm:$0xff] %vm268, %v6512
        %6545 = vst.msk [vmem:[%s321 + $0x188] sm:$0xff] %vm268, %v6513
        %6546 = vst.msk [vmem:[%s321 + $0x190] sm:$0xff] %vm268, %v6514
        %6547 = vst.msk [vmem:[%s321 + $0x1a8] sm:$0xff] %vm268, %v6515
        %6548 = vst.msk [vmem:[%s321 + $0x1b0] sm:$0xff] %vm268, %v6516
        %6549 = vst.msk [vmem:[%s321 + $0x1c8] sm:$0xff] %vm268, %v6517
        %6550 = vst.msk [vmem:[%s321 + $0x1d0] sm:$0xff] %vm268, %v6518
        %6551 = vst.msk [vmem:[%s321 + $0x1e8] sm:$0xff] %vm268, %v6519
        %6552 = vst.msk [vmem:[%s321 + $0x1f0] sm:$0xff] %vm268, %v6520
        %v6553 = vld [vmem:[%s278 + $0x8] sm:$0xff]
        %v6554 = vld [vmem:[%s278 + $0x10] sm:$0xff]
        %v6555 = vld [vmem:[%s278 + $0x28] sm:$0xff]
        %v6556 = vld [vmem:[%s278 + $0x30] sm:$0xff]
        %v6557 = vld [vmem:[%s278 + $0x48] sm:$0xff]
        %v6558 = vld [vmem:[%s278 + $0x50] sm:$0xff]
        %v6559 = vld [vmem:[%s278 + $0x68] sm:$0xff]
        %v6560 = vld [vmem:[%s278 + $0x70] sm:$0xff]
        %v6561 = vld [vmem:[%s278 + $0x88] sm:$0xff]
        %v6562 = vld [vmem:[%s278 + $0x90] sm:$0xff]
        %v6563 = vld [vmem:[%s278 + $0xa8] sm:$0xff]
        %v6564 = vld [vmem:[%s278 + $0xb0] sm:$0xff]
        %v6565 = vld [vmem:[%s278 + $0xc8] sm:$0xff]
        %v6566 = vld [vmem:[%s278 + $0xd0] sm:$0xff]
        %v6567 = vld [vmem:[%s278 + $0xe8] sm:$0xff]
        %v6568 = vld [vmem:[%s278 + $0xf0] sm:$0xff]
        %v6569 = vld [vmem:[%s278 + $0x108] sm:$0xff]
        %v6570 = vld [vmem:[%s278 + $0x110] sm:$0xff]
        %v6571 = vld [vmem:[%s278 + $0x128] sm:$0xff]
        %v6572 = vld [vmem:[%s278 + $0x130] sm:$0xff]
        %v6573 = vld [vmem:[%s278 + $0x148] sm:$0xff]
        %v6574 = vld [vmem:[%s278 + $0x150] sm:$0xff]
        %v6575 = vld [vmem:[%s278 + $0x168] sm:$0xff]
        %v6576 = vld [vmem:[%s278 + $0x170] sm:$0xff]
        %v6577 = vld [vmem:[%s278 + $0x188] sm:$0xff]
        %v6578 = vld [vmem:[%s278 + $0x190] sm:$0xff]
        %v6579 = vld [vmem:[%s278 + $0x1a8] sm:$0xff]
        %v6580 = vld [vmem:[%s278 + $0x1b0] sm:$0xff]
        %v6581 = vld [vmem:[%s278 + $0x1c8] sm:$0xff]
        %v6582 = vld [vmem:[%s278 + $0x1d0] sm:$0xff]
        %v6583 = vld [vmem:[%s278 + $0x1e8] sm:$0xff]
        %v6584 = vld [vmem:[%s278 + $0x1f0] sm:$0xff]
        %s6585 = scalar_lea.vmem %s3, 432
        %v6586 = vld [vmem:[%s6585] sm:$0xf]
        %v6587 = vld [vmem:[%s6585 + $0x4] sm:$0xf]
        %v6588 = vld [vmem:[%s6585 + $0x8] sm:$0xf]
        %v6589 = vld [vmem:[%s6585 + $0xc] sm:$0xf]
        %v6590 = vld [vmem:[%s6585 + $0x10] sm:$0xf]
        %v6591 = vld [vmem:[%s6585 + $0x14] sm:$0xf]
        %v6592 = vld [vmem:[%s6585 + $0x18] sm:$0xf]
        %v6593 = vld [vmem:[%s6585 + $0x1c] sm:$0xf]
        %v6594 = vld [vmem:[%s6585 + $0x20] sm:$0xf]
        %v6595 = vld [vmem:[%s6585 + $0x24] sm:$0xf]
        %v6596 = vld [vmem:[%s6585 + $0x28] sm:$0xf]
        %v6597 = vld [vmem:[%s6585 + $0x2c] sm:$0xf]
        %v6598 = vld [vmem:[%s6585 + $0x30] sm:$0xf]
        %v6599 = vld [vmem:[%s6585 + $0x34] sm:$0xf]
        %v6600 = vld [vmem:[%s6585 + $0x38] sm:$0xf]
        %v6601 = vld [vmem:[%s6585 + $0x3c] sm:$0xf]
        %v6602 = vld [vmem:[%s6585 + $0x40] sm:$0xf]
        %v6603 = vld [vmem:[%s6585 + $0x44] sm:$0xf]
        %v6604 = vld [vmem:[%s6585 + $0x48] sm:$0xf]
        %v6605 = vld [vmem:[%s6585 + $0x4c] sm:$0xf]
        %v6606 = vld [vmem:[%s6585 + $0x50] sm:$0xf]
        %v6607 = vld [vmem:[%s6585 + $0x54] sm:$0xf]
        %v6608 = vld [vmem:[%s6585 + $0x58] sm:$0xf]
        %v6609 = vld [vmem:[%s6585 + $0x5c] sm:$0xf]
        %v6610 = vld [vmem:[%s6585 + $0x60] sm:$0xf]
        %v6611 = vld [vmem:[%s6585 + $0x64] sm:$0xf]
        %v6612 = vld [vmem:[%s6585 + $0x68] sm:$0xf]
        %v6613 = vld [vmem:[%s6585 + $0x6c] sm:$0xf]
        %v6614 = vld [vmem:[%s6585 + $0x70] sm:$0xf]
        %v6615 = vld [vmem:[%s6585 + $0x74] sm:$0xf]
        %v6616 = vld [vmem:[%s6585 + $0x78] sm:$0xf]
        %v6617 = vld [vmem:[%s6585 + $0x7c] sm:$0xf]
        %v6618 = vld [vmem:[%s6585 + $0x80] sm:$0xf]
        %v6619 = vld [vmem:[%s6585 + $0x84] sm:$0xf]
        %v6620 = vld [vmem:[%s6585 + $0x88] sm:$0xf]
        %v6621 = vld [vmem:[%s6585 + $0x8c] sm:$0xf]
        %s6622 = scalar_lea.vmem %s4, 3
        %v6623 = vld [vmem:[%s6622] sm:$0x1]
        %v6624 = vld [vmem:[#allocation4 + $0x7] sm:$0xff]
        %v6625 = vld [vmem:[#allocation4 + $0xf] sm:$0xff]
        %v6626 = vld [vmem:[#allocation4 + $0x27] sm:$0xff]
        %v6627 = vld [vmem:[#allocation4 + $0x2f] sm:$0xff]
        %v6628 = vld [vmem:[#allocation4 + $0x47] sm:$0xff]
        %v6629 = vld [vmem:[#allocation4 + $0x4f] sm:$0xff]
        %v6630 = vld [vmem:[#allocation4 + $0x67] sm:$0xff]
        %v6631 = vld [vmem:[#allocation4 + $0x6f] sm:$0xff]
        %v6632 = vld [vmem:[#allocation4 + $0x87] sm:$0xff]
        %v6633 = vld [vmem:[#allocation4 + $0x8f] sm:$0xff]
        %v6634 = vld [vmem:[#allocation4 + $0xa7] sm:$0xff]
        %v6635 = vld [vmem:[#allocation4 + $0xaf] sm:$0xff]
        %v6636 = vld [vmem:[#allocation4 + $0xc7] sm:$0xff]
        %v6637 = vld [vmem:[#allocation4 + $0xcf] sm:$0xff]
        %v6638 = vld [vmem:[#allocation4 + $0xe7] sm:$0xff]
        %v6639 = vld [vmem:[#allocation4 + $0xef] sm:$0xff]
        %v6640 = vld [vmem:[#allocation4 + $0x107] sm:$0xff]
        %v6641 = vld [vmem:[#allocation4 + $0x10f] sm:$0xff]
        %v6642 = vld [vmem:[#allocation4 + $0x127] sm:$0xff]
        %v6643 = vld [vmem:[#allocation4 + $0x12f] sm:$0xff]
        %v6644 = vld [vmem:[#allocation4 + $0x147] sm:$0xff]
        %v6645 = vld [vmem:[#allocation4 + $0x14f] sm:$0xff]
        %v6646 = vld [vmem:[#allocation4 + $0x167] sm:$0xff]
        %v6647 = vld [vmem:[#allocation4 + $0x16f] sm:$0xff]
        %v6648 = vld [vmem:[#allocation4 + $0x187] sm:$0xff]
        %v6649 = vld [vmem:[#allocation4 + $0x18f] sm:$0xff]
        %v6650 = vld [vmem:[#allocation4 + $0x1a7] sm:$0xff]
        %v6651 = vld [vmem:[#allocation4 + $0x1af] sm:$0xff]
        %v6652 = vld [vmem:[#allocation4 + $0x1c7] sm:$0xff]
        %v6653 = vld [vmem:[#allocation4 + $0x1cf] sm:$0xff]
        %v6654 = vld [vmem:[#allocation4 + $0x1e7] sm:$0xff]
        %v6655 = vld [vmem:[#allocation4 + $0x1ef] sm:$0xff]
        %v6656 = vpack.c.bf16 %v6625, %v6624
        %v6657 = vpack.c.bf16 %v6627, %v6626
        %v6658 = vpack.c.bf16 %v6629, %v6628
        %v6659 = vpack.c.bf16 %v6631, %v6630
        %v6660 = vpack.c.bf16 %v6633, %v6632
        %v6661 = vpack.c.bf16 %v6635, %v6634
        %v6662 = vpack.c.bf16 %v6637, %v6636
        %v6663 = vpack.c.bf16 %v6639, %v6638
        %v6664 = vpack.c.bf16 %v6641, %v6640
        %v6665 = vpack.c.bf16 %v6643, %v6642
        %v6666 = vpack.c.bf16 %v6645, %v6644
        %v6667 = vpack.c.bf16 %v6647, %v6646
        %v6668 = vpack.c.bf16 %v6649, %v6648
        %v6669 = vpack.c.bf16 %v6651, %v6650
        %v6670 = vpack.c.bf16 %v6653, %v6652
        %v6671 = vpack.c.bf16 %v6655, %v6654
        %v6672 = vld [vmem:[#allocation4 + $0x8] sm:$0xff]
        %v6673 = vld [vmem:[#allocation4 + $0x10] sm:$0xff]
        %v6674 = vld [vmem:[#allocation4 + $0x28] sm:$0xff]
        %v6675 = vld [vmem:[#allocation4 + $0x30] sm:$0xff]
        %v6676 = vld [vmem:[#allocation4 + $0x48] sm:$0xff]
        %v6677 = vld [vmem:[#allocation4 + $0x50] sm:$0xff]
        %v6678 = vld [vmem:[#allocation4 + $0x68] sm:$0xff]
        %v6679 = vld [vmem:[#allocation4 + $0x70] sm:$0xff]
        %v6680 = vld [vmem:[#allocation4 + $0x88] sm:$0xff]
        %v6681 = vld [vmem:[#allocation4 + $0x90] sm:$0xff]
        %v6682 = vld [vmem:[#allocation4 + $0xa8] sm:$0xff]
        %v6683 = vld [vmem:[#allocation4 + $0xb0] sm:$0xff]
        %v6684 = vld [vmem:[#allocation4 + $0xc8] sm:$0xff]
        %v6685 = vld [vmem:[#allocation4 + $0xd0] sm:$0xff]
        %v6686 = vld [vmem:[#allocation4 + $0xe8] sm:$0xff]
        %v6687 = vld [vmem:[#allocation4 + $0xf0] sm:$0xff]
        %v6688 = vld [vmem:[#allocation4 + $0x108] sm:$0xff]
        %v6689 = vld [vmem:[#allocation4 + $0x110] sm:$0xff]
        %v6690 = vld [vmem:[#allocation4 + $0x128] sm:$0xff]
        %v6691 = vld [vmem:[#allocation4 + $0x130] sm:$0xff]
        %v6692 = vld [vmem:[#allocation4 + $0x148] sm:$0xff]
        %v6693 = vld [vmem:[#allocation4 + $0x150] sm:$0xff]
        %v6694 = vld [vmem:[#allocation4 + $0x168] sm:$0xff]
        %v6695 = vld [vmem:[#allocation4 + $0x170] sm:$0xff]
        %v6696 = vld [vmem:[#allocation4 + $0x188] sm:$0xff]
        %v6697 = vld [vmem:[#allocation4 + $0x190] sm:$0xff]
        %v6698 = vld [vmem:[#allocation4 + $0x1a8] sm:$0xff]
        %v6699 = vld [vmem:[#allocation4 + $0x1b0] sm:$0xff]
        %v6700 = vld [vmem:[#allocation4 + $0x1c8] sm:$0xff]
        %v6701 = vld [vmem:[#allocation4 + $0x1d0] sm:$0xff]
        %v6702 = vld [vmem:[#allocation4 + $0x1e8] sm:$0xff]
        %v6703 = vld [vmem:[#allocation4 + $0x1f0] sm:$0xff]
        %v6704 = vpack.c.bf16 %v6673, %v6672
        %v6705 = vpack.c.bf16 %v6675, %v6674
        %v6706 = vpack.c.bf16 %v6677, %v6676
        %v6707 = vpack.c.bf16 %v6679, %v6678
        %v6708 = vpack.c.bf16 %v6681, %v6680
        %v6709 = vpack.c.bf16 %v6683, %v6682
        %v6710 = vpack.c.bf16 %v6685, %v6684
        %v6711 = vpack.c.bf16 %v6687, %v6686
        %v6712 = vpack.c.bf16 %v6689, %v6688
        %v6713 = vpack.c.bf16 %v6691, %v6690
        %v6714 = vpack.c.bf16 %v6693, %v6692
        %v6715 = vpack.c.bf16 %v6695, %v6694
        %v6716 = vpack.c.bf16 %v6697, %v6696
        %v6717 = vpack.c.bf16 %v6699, %v6698
        %v6718 = vpack.c.bf16 %v6701, %v6700
        %v6719 = vpack.c.bf16 %v6703, %v6702
        %v6720 = vld [vmem:[#allocation4 + $0x9] sm:$0xff]
        %v6721 = vld [vmem:[#allocation4 + $0x11] sm:$0xff]
        %v6722 = vld [vmem:[#allocation4 + $0x29] sm:$0xff]
        %v6723 = vld [vmem:[#allocation4 + $0x31] sm:$0xff]
        %v6724 = vld [vmem:[#allocation4 + $0x49] sm:$0xff]
        %v6725 = vld [vmem:[#allocation4 + $0x51] sm:$0xff]
        %v6726 = vld [vmem:[#allocation4 + $0x69] sm:$0xff]
        %v6727 = vld [vmem:[#allocation4 + $0x71] sm:$0xff]
        %v6728 = vld [vmem:[#allocation4 + $0x89] sm:$0xff]
        %v6729 = vld [vmem:[#allocation4 + $0x91] sm:$0xff]
        %v6730 = vld [vmem:[#allocation4 + $0xa9] sm:$0xff]
        %v6731 = vld [vmem:[#allocation4 + $0xb1] sm:$0xff]
        %v6732 = vld [vmem:[#allocation4 + $0xc9] sm:$0xff]
        %v6733 = vld [vmem:[#allocation4 + $0xd1] sm:$0xff]
        %v6734 = vld [vmem:[#allocation4 + $0xe9] sm:$0xff]
        %v6735 = vld [vmem:[#allocation4 + $0xf1] sm:$0xff]
        %v6736 = vld [vmem:[#allocation4 + $0x109] sm:$0xff]
        %v6737 = vld [vmem:[#allocation4 + $0x111] sm:$0xff]
        %v6738 = vld [vmem:[#allocation4 + $0x129] sm:$0xff]
        %v6739 = vld [vmem:[#allocation4 + $0x131] sm:$0xff]
        %v6740 = vld [vmem:[#allocation4 + $0x149] sm:$0xff]
        %v6741 = vld [vmem:[#allocation4 + $0x151] sm:$0xff]
        %v6742 = vld [vmem:[#allocation4 + $0x169] sm:$0xff]
        %v6743 = vld [vmem:[#allocation4 + $0x171] sm:$0xff]
        %v6744 = vld [vmem:[#allocation4 + $0x189] sm:$0xff]
        %v6745 = vld [vmem:[#allocation4 + $0x191] sm:$0xff]
        %v6746 = vld [vmem:[#allocation4 + $0x1a9] sm:$0xff]
        %v6747 = vld [vmem:[#allocation4 + $0x1b1] sm:$0xff]
        %v6748 = vld [vmem:[#allocation4 + $0x1c9] sm:$0xff]
        %v6749 = vld [vmem:[#allocation4 + $0x1d1] sm:$0xff]
        %v6750 = vld [vmem:[#allocation4 + $0x1e9] sm:$0xff]
        %v6751 = vld [vmem:[#allocation4 + $0x1f1] sm:$0xff]
        %v6752 = vpack.c.bf16 %v6721, %v6720
        %v6753 = vpack.c.bf16 %v6723, %v6722
        %v6754 = vpack.c.bf16 %v6725, %v6724
        %v6755 = vpack.c.bf16 %v6727, %v6726
        %v6756 = vpack.c.bf16 %v6729, %v6728
        %v6757 = vpack.c.bf16 %v6731, %v6730
        %v6758 = vpack.c.bf16 %v6733, %v6732
        %v6759 = vpack.c.bf16 %v6735, %v6734
        %v6760 = vpack.c.bf16 %v6737, %v6736
        %v6761 = vpack.c.bf16 %v6739, %v6738
        %v6762 = vpack.c.bf16 %v6741, %v6740
        %v6763 = vpack.c.bf16 %v6743, %v6742
        %v6764 = vpack.c.bf16 %v6745, %v6744
        %v6765 = vpack.c.bf16 %v6747, %v6746
        %v6766 = vpack.c.bf16 %v6749, %v6748
        %v6767 = vpack.c.bf16 %v6751, %v6750
        %v6768 = vld [vmem:[%s321 + $0x7] sm:$0xff]
        %v6769 = vld [vmem:[%s321 + $0xf] sm:$0xff]
        %v6770 = vld [vmem:[%s321 + $0x27] sm:$0xff]
        %v6771 = vld [vmem:[%s321 + $0x2f] sm:$0xff]
        %v6772 = vld [vmem:[%s321 + $0x47] sm:$0xff]
        %v6773 = vld [vmem:[%s321 + $0x4f] sm:$0xff]
        %v6774 = vld [vmem:[%s321 + $0x67] sm:$0xff]
        %v6775 = vld [vmem:[%s321 + $0x6f] sm:$0xff]
        %v6776 = vld [vmem:[%s321 + $0x87] sm:$0xff]
        %v6777 = vld [vmem:[%s321 + $0x8f] sm:$0xff]
        %v6778 = vld [vmem:[%s321 + $0xa7] sm:$0xff]
        %v6779 = vld [vmem:[%s321 + $0xaf] sm:$0xff]
        %v6780 = vld [vmem:[%s321 + $0xc7] sm:$0xff]
        %v6781 = vld [vmem:[%s321 + $0xcf] sm:$0xff]
        %v6782 = vld [vmem:[%s321 + $0xe7] sm:$0xff]
        %v6783 = vld [vmem:[%s321 + $0xef] sm:$0xff]
        %v6784 = vld [vmem:[%s321 + $0x107] sm:$0xff]
        %v6785 = vld [vmem:[%s321 + $0x10f] sm:$0xff]
        %v6786 = vld [vmem:[%s321 + $0x127] sm:$0xff]
        %v6787 = vld [vmem:[%s321 + $0x12f] sm:$0xff]
        %v6788 = vld [vmem:[%s321 + $0x147] sm:$0xff]
        %v6789 = vld [vmem:[%s321 + $0x14f] sm:$0xff]
        %v6790 = vld [vmem:[%s321 + $0x167] sm:$0xff]
        %v6791 = vld [vmem:[%s321 + $0x16f] sm:$0xff]
        %v6792 = vld [vmem:[%s321 + $0x187] sm:$0xff]
        %v6793 = vld [vmem:[%s321 + $0x18f] sm:$0xff]
        %v6794 = vld [vmem:[%s321 + $0x1a7] sm:$0xff]
        %v6795 = vld [vmem:[%s321 + $0x1af] sm:$0xff]
        %v6796 = vld [vmem:[%s321 + $0x1c7] sm:$0xff]
        %v6797 = vld [vmem:[%s321 + $0x1cf] sm:$0xff]
        %v6798 = vld [vmem:[%s321 + $0x1e7] sm:$0xff]
        %v6799 = vld [vmem:[%s321 + $0x1ef] sm:$0xff]
        %v6800 = vpack.c.bf16 %v6769, %v6768
        %v6801 = vpack.c.bf16 %v6771, %v6770
        %v6802 = vpack.c.bf16 %v6773, %v6772
        %v6803 = vpack.c.bf16 %v6775, %v6774
        %v6804 = vpack.c.bf16 %v6777, %v6776
        %v6805 = vpack.c.bf16 %v6779, %v6778
        %v6806 = vpack.c.bf16 %v6781, %v6780
        %v6807 = vpack.c.bf16 %v6783, %v6782
        %v6808 = vpack.c.bf16 %v6785, %v6784
        %v6809 = vpack.c.bf16 %v6787, %v6786
        %v6810 = vpack.c.bf16 %v6789, %v6788
        %v6811 = vpack.c.bf16 %v6791, %v6790
        %v6812 = vpack.c.bf16 %v6793, %v6792
        %v6813 = vpack.c.bf16 %v6795, %v6794
        %v6814 = vpack.c.bf16 %v6797, %v6796
        %v6815 = vpack.c.bf16 %v6799, %v6798
        %v6816 = vld [vmem:[%s321 + $0x8] sm:$0xff]
        %v6817 = vld [vmem:[%s321 + $0x10] sm:$0xff]
        %v6818 = vld [vmem:[%s321 + $0x28] sm:$0xff]
        %v6819 = vld [vmem:[%s321 + $0x30] sm:$0xff]
        %v6820 = vld [vmem:[%s321 + $0x48] sm:$0xff]
        %v6821 = vld [vmem:[%s321 + $0x50] sm:$0xff]
        %v6822 = vld [vmem:[%s321 + $0x68] sm:$0xff]
        %v6823 = vld [vmem:[%s321 + $0x70] sm:$0xff]
        %v6824 = vld [vmem:[%s321 + $0x88] sm:$0xff]
        %v6825 = vld [vmem:[%s321 + $0x90] sm:$0xff]
        %v6826 = vld [vmem:[%s321 + $0xa8] sm:$0xff]
        %v6827 = vld [vmem:[%s321 + $0xb0] sm:$0xff]
        %v6828 = vld [vmem:[%s321 + $0xc8] sm:$0xff]
        %v6829 = vld [vmem:[%s321 + $0xd0] sm:$0xff]
        %v6830 = vld [vmem:[%s321 + $0xe8] sm:$0xff]
        %v6831 = vld [vmem:[%s321 + $0xf0] sm:$0xff]
        %v6832 = vld [vmem:[%s321 + $0x108] sm:$0xff]
        %v6833 = vld [vmem:[%s321 + $0x110] sm:$0xff]
        %v6834 = vld [vmem:[%s321 + $0x128] sm:$0xff]
        %v6835 = vld [vmem:[%s321 + $0x130] sm:$0xff]
        %v6836 = vld [vmem:[%s321 + $0x148] sm:$0xff]
        %v6837 = vld [vmem:[%s321 + $0x150] sm:$0xff]
        %v6838 = vld [vmem:[%s321 + $0x168] sm:$0xff]
        %v6839 = vld [vmem:[%s321 + $0x170] sm:$0xff]
        %v6840 = vld [vmem:[%s321 + $0x188] sm:$0xff]
        %v6841 = vld [vmem:[%s321 + $0x190] sm:$0xff]
        %v6842 = vld [vmem:[%s321 + $0x1a8] sm:$0xff]
        %v6843 = vld [vmem:[%s321 + $0x1b0] sm:$0xff]
        %v6844 = vld [vmem:[%s321 + $0x1c8] sm:$0xff]
        %v6845 = vld [vmem:[%s321 + $0x1d0] sm:$0xff]
        %v6846 = vld [vmem:[%s321 + $0x1e8] sm:$0xff]
        %v6847 = vld [vmem:[%s321 + $0x1f0] sm:$0xff]
        %v6848 = vpack.c.bf16 %v6817, %v6816
        %v6849 = vpack.c.bf16 %v6819, %v6818
        %v6850 = vpack.c.bf16 %v6821, %v6820
        %v6851 = vpack.c.bf16 %v6823, %v6822
        %v6852 = vpack.c.bf16 %v6825, %v6824
        %v6853 = vpack.c.bf16 %v6827, %v6826
        %v6854 = vpack.c.bf16 %v6829, %v6828
        %v6855 = vpack.c.bf16 %v6831, %v6830
        %v6856 = vpack.c.bf16 %v6833, %v6832
        %v6857 = vpack.c.bf16 %v6835, %v6834
        %v6858 = vpack.c.bf16 %v6837, %v6836
        %v6859 = vpack.c.bf16 %v6839, %v6838
        %v6860 = vpack.c.bf16 %v6841, %v6840
        %v6861 = vpack.c.bf16 %v6843, %v6842
        %v6862 = vpack.c.bf16 %v6845, %v6844
        %v6863 = vpack.c.bf16 %v6847, %v6846
        %v6864 = vld [vmem:[%s321 + $0x9] sm:$0xff]
        %v6865 = vld [vmem:[%s321 + $0x11] sm:$0xff]
        %v6866 = vld [vmem:[%s321 + $0x29] sm:$0xff]
        %v6867 = vld [vmem:[%s321 + $0x31] sm:$0xff]
        %v6868 = vld [vmem:[%s321 + $0x49] sm:$0xff]
        %v6869 = vld [vmem:[%s321 + $0x51] sm:$0xff]
        %v6870 = vld [vmem:[%s321 + $0x69] sm:$0xff]
        %v6871 = vld [vmem:[%s321 + $0x71] sm:$0xff]
        %v6872 = vld [vmem:[%s321 + $0x89] sm:$0xff]
        %v6873 = vld [vmem:[%s321 + $0x91] sm:$0xff]
        %v6874 = vld [vmem:[%s321 + $0xa9] sm:$0xff]
        %v6875 = vld [vmem:[%s321 + $0xb1] sm:$0xff]
        %v6876 = vld [vmem:[%s321 + $0xc9] sm:$0xff]
        %v6877 = vld [vmem:[%s321 + $0xd1] sm:$0xff]
        %v6878 = vld [vmem:[%s321 + $0xe9] sm:$0xff]
        %v6879 = vld [vmem:[%s321 + $0xf1] sm:$0xff]
        %v6880 = vld [vmem:[%s321 + $0x109] sm:$0xff]
        %v6881 = vld [vmem:[%s321 + $0x111] sm:$0xff]
        %v6882 = vld [vmem:[%s321 + $0x129] sm:$0xff]
        %v6883 = vld [vmem:[%s321 + $0x131] sm:$0xff]
        %v6884 = vld [vmem:[%s321 + $0x149] sm:$0xff]
        %v6885 = vld [vmem:[%s321 + $0x151] sm:$0xff]
        %v6886 = vld [vmem:[%s321 + $0x169] sm:$0xff]
        %v6887 = vld [vmem:[%s321 + $0x171] sm:$0xff]
        %v6888 = vld [vmem:[%s321 + $0x189] sm:$0xff]
        %v6889 = vld [vmem:[%s321 + $0x191] sm:$0xff]
        %v6890 = vld [vmem:[%s321 + $0x1a9] sm:$0xff]
        %v6891 = vld [vmem:[%s321 + $0x1b1] sm:$0xff]
        %v6892 = vld [vmem:[%s321 + $0x1c9] sm:$0xff]
        %v6893 = vld [vmem:[%s321 + $0x1d1] sm:$0xff]
        %v6894 = vld [vmem:[%s321 + $0x1e9] sm:$0xff]
        %v6895 = vld [vmem:[%s321 + $0x1f1] sm:$0xff]
        %v6896 = vpack.c.bf16 %v6865, %v6864
        %v6897 = vpack.c.bf16 %v6867, %v6866
        %v6898 = vpack.c.bf16 %v6869, %v6868
        %v6899 = vpack.c.bf16 %v6871, %v6870
        %v6900 = vpack.c.bf16 %v6873, %v6872
        %v6901 = vpack.c.bf16 %v6875, %v6874
        %v6902 = vpack.c.bf16 %v6877, %v6876
        %v6903 = vpack.c.bf16 %v6879, %v6878
        %v6904 = vpack.c.bf16 %v6881, %v6880
        %v6905 = vpack.c.bf16 %v6883, %v6882
        %v6906 = vpack.c.bf16 %v6885, %v6884
        %v6907 = vpack.c.bf16 %v6887, %v6886
        %v6908 = vpack.c.bf16 %v6889, %v6888
        %v6909 = vpack.c.bf16 %v6891, %v6890
        %v6910 = vpack.c.bf16 %v6893, %v6892
        %v6911 = vpack.c.bf16 %v6895, %v6894
        %v6912 = vld [vmem:[%s3721 + $0x7] sm:$0xff]
        %v6913 = vld [vmem:[%s3721 + $0xf] sm:$0xff]
        %v6914 = vld [vmem:[%s3721 + $0x27] sm:$0xff]
        %v6915 = vld [vmem:[%s3721 + $0x2f] sm:$0xff]
        %v6916 = vld [vmem:[%s3721 + $0x47] sm:$0xff]
        %v6917 = vld [vmem:[%s3721 + $0x4f] sm:$0xff]
        %v6918 = vld [vmem:[%s3721 + $0x67] sm:$0xff]
        %v6919 = vld [vmem:[%s3721 + $0x6f] sm:$0xff]
        %v6920 = vld [vmem:[%s3721 + $0x87] sm:$0xff]
        %v6921 = vld [vmem:[%s3721 + $0x8f] sm:$0xff]
        %v6922 = vld [vmem:[%s3721 + $0xa7] sm:$0xff]
        %v6923 = vld [vmem:[%s3721 + $0xaf] sm:$0xff]
        %v6924 = vld [vmem:[%s3721 + $0xc7] sm:$0xff]
        %v6925 = vld [vmem:[%s3721 + $0xcf] sm:$0xff]
        %v6926 = vld [vmem:[%s3721 + $0xe7] sm:$0xff]
        %v6927 = vld [vmem:[%s3721 + $0xef] sm:$0xff]
        %v6928 = vld [vmem:[%s3721 + $0x107] sm:$0xff]
        %v6929 = vld [vmem:[%s3721 + $0x10f] sm:$0xff]
        %v6930 = vld [vmem:[%s3721 + $0x127] sm:$0xff]
        %v6931 = vld [vmem:[%s3721 + $0x12f] sm:$0xff]
        %v6932 = vld [vmem:[%s3721 + $0x147] sm:$0xff]
        %v6933 = vld [vmem:[%s3721 + $0x14f] sm:$0xff]
        %v6934 = vld [vmem:[%s3721 + $0x167] sm:$0xff]
        %v6935 = vld [vmem:[%s3721 + $0x16f] sm:$0xff]
        %v6936 = vld [vmem:[%s3721 + $0x187] sm:$0xff]
        %v6937 = vld [vmem:[%s3721 + $0x18f] sm:$0xff]
        %v6938 = vld [vmem:[%s3721 + $0x1a7] sm:$0xff]
        %v6939 = vld [vmem:[%s3721 + $0x1af] sm:$0xff]
        %v6940 = vld [vmem:[%s3721 + $0x1c7] sm:$0xff]
        %v6941 = vld [vmem:[%s3721 + $0x1cf] sm:$0xff]
        %v6942 = vld [vmem:[%s3721 + $0x1e7] sm:$0xff]
        %v6943 = vld [vmem:[%s3721 + $0x1ef] sm:$0xff]
        %v6944 = vpack.c.bf16 %v6913, %v6912
        %v6945 = vpack.c.bf16 %v6915, %v6914
        %v6946 = vpack.c.bf16 %v6917, %v6916
        %v6947 = vpack.c.bf16 %v6919, %v6918
        %v6948 = vpack.c.bf16 %v6921, %v6920
        %v6949 = vpack.c.bf16 %v6923, %v6922
        %v6950 = vpack.c.bf16 %v6925, %v6924
        %v6951 = vpack.c.bf16 %v6927, %v6926
        %v6952 = vpack.c.bf16 %v6929, %v6928
        %v6953 = vpack.c.bf16 %v6931, %v6930
        %v6954 = vpack.c.bf16 %v6933, %v6932
        %v6955 = vpack.c.bf16 %v6935, %v6934
        %v6956 = vpack.c.bf16 %v6937, %v6936
        %v6957 = vpack.c.bf16 %v6939, %v6938
        %v6958 = vpack.c.bf16 %v6941, %v6940
        %v6959 = vpack.c.bf16 %v6943, %v6942
        %v6960 = vld [vmem:[%s3721 + $0x8] sm:$0xff]
        %v6961 = vld [vmem:[%s3721 + $0x10] sm:$0xff]
        %v6962 = vld [vmem:[%s3721 + $0x28] sm:$0xff]
        %v6963 = vld [vmem:[%s3721 + $0x30] sm:$0xff]
        %v6964 = vld [vmem:[%s3721 + $0x48] sm:$0xff]
        %v6965 = vld [vmem:[%s3721 + $0x50] sm:$0xff]
        %v6966 = vld [vmem:[%s3721 + $0x68] sm:$0xff]
        %v6967 = vld [vmem:[%s3721 + $0x70] sm:$0xff]
        %v6968 = vld [vmem:[%s3721 + $0x88] sm:$0xff]
        %v6969 = vld [vmem:[%s3721 + $0x90] sm:$0xff]
        %v6970 = vld [vmem:[%s3721 + $0xa8] sm:$0xff]
        %v6971 = vld [vmem:[%s3721 + $0xb0] sm:$0xff]
        %v6972 = vld [vmem:[%s3721 + $0xc8] sm:$0xff]
        %v6973 = vld [vmem:[%s3721 + $0xd0] sm:$0xff]
        %v6974 = vld [vmem:[%s3721 + $0xe8] sm:$0xff]
        %v6975 = vld [vmem:[%s3721 + $0xf0] sm:$0xff]
        %v6976 = vld [vmem:[%s3721 + $0x108] sm:$0xff]
        %v6977 = vld [vmem:[%s3721 + $0x110] sm:$0xff]
        %v6978 = vld [vmem:[%s3721 + $0x128] sm:$0xff]
        %v6979 = vld [vmem:[%s3721 + $0x130] sm:$0xff]
        %v6980 = vld [vmem:[%s3721 + $0x148] sm:$0xff]
        %v6981 = vld [vmem:[%s3721 + $0x150] sm:$0xff]
        %v6982 = vld [vmem:[%s3721 + $0x168] sm:$0xff]
        %v6983 = vld [vmem:[%s3721 + $0x170] sm:$0xff]
        %v6984 = vld [vmem:[%s3721 + $0x188] sm:$0xff]
        %v6985 = vld [vmem:[%s3721 + $0x190] sm:$0xff]
        %v6986 = vld [vmem:[%s3721 + $0x1a8] sm:$0xff]
        %v6987 = vld [vmem:[%s3721 + $0x1b0] sm:$0xff]
        %v6988 = vld [vmem:[%s3721 + $0x1c8] sm:$0xff]
        %v6989 = vld [vmem:[%s3721 + $0x1d0] sm:$0xff]
        %v6990 = vld [vmem:[%s3721 + $0x1e8] sm:$0xff]
        %v6991 = vld [vmem:[%s3721 + $0x1f0] sm:$0xff]
        %v6992 = vpack.c.bf16 %v6961, %v6960
        %v6993 = vpack.c.bf16 %v6963, %v6962
        %v6994 = vpack.c.bf16 %v6965, %v6964
        %v6995 = vpack.c.bf16 %v6967, %v6966
        %v6996 = vpack.c.bf16 %v6969, %v6968
        %v6997 = vpack.c.bf16 %v6971, %v6970
        %v6998 = vpack.c.bf16 %v6973, %v6972
        %v6999 = vpack.c.bf16 %v6975, %v6974
        %v7000 = vpack.c.bf16 %v6977, %v6976
        %v7001 = vpack.c.bf16 %v6979, %v6978
        %v7002 = vpack.c.bf16 %v6981, %v6980
        %v7003 = vpack.c.bf16 %v6983, %v6982
        %v7004 = vpack.c.bf16 %v6985, %v6984
        %v7005 = vpack.c.bf16 %v6987, %v6986
        %v7006 = vpack.c.bf16 %v6989, %v6988
        %v7007 = vpack.c.bf16 %v6991, %v6990
        %v7008 = vld [vmem:[%s3721 + $0x9] sm:$0xff]
        %v7009 = vld [vmem:[%s3721 + $0x11] sm:$0xff]
        %v7010 = vld [vmem:[%s3721 + $0x29] sm:$0xff]
        %v7011 = vld [vmem:[%s3721 + $0x31] sm:$0xff]
        %v7012 = vld [vmem:[%s3721 + $0x49] sm:$0xff]
        %v7013 = vld [vmem:[%s3721 + $0x51] sm:$0xff]
        %v7014 = vld [vmem:[%s3721 + $0x69] sm:$0xff]
        %v7015 = vld [vmem:[%s3721 + $0x71] sm:$0xff]
        %v7016 = vld [vmem:[%s3721 + $0x89] sm:$0xff]
        %v7017 = vld [vmem:[%s3721 + $0x91] sm:$0xff]
        %v7018 = vld [vmem:[%s3721 + $0xa9] sm:$0xff]
        %v7019 = vld [vmem:[%s3721 + $0xb1] sm:$0xff]
        %v7020 = vld [vmem:[%s3721 + $0xc9] sm:$0xff]
        %v7021 = vld [vmem:[%s3721 + $0xd1] sm:$0xff]
        %v7022 = vld [vmem:[%s3721 + $0xe9] sm:$0xff]
        %v7023 = vld [vmem:[%s3721 + $0xf1] sm:$0xff]
        %v7024 = vld [vmem:[%s3721 + $0x109] sm:$0xff]
        %v7025 = vld [vmem:[%s3721 + $0x111] sm:$0xff]
        %v7026 = vld [vmem:[%s3721 + $0x129] sm:$0xff]
        %v7027 = vld [vmem:[%s3721 + $0x131] sm:$0xff]
        %v7028 = vld [vmem:[%s3721 + $0x149] sm:$0xff]
        %v7029 = vld [vmem:[%s3721 + $0x151] sm:$0xff]
        %v7030 = vld [vmem:[%s3721 + $0x169] sm:$0xff]
        %v7031 = vld [vmem:[%s3721 + $0x171] sm:$0xff]
        %v7032 = vld [vmem:[%s3721 + $0x189] sm:$0xff]
        %v7033 = vld [vmem:[%s3721 + $0x191] sm:$0xff]
        %v7034 = vld [vmem:[%s3721 + $0x1a9] sm:$0xff]
        %v7035 = vld [vmem:[%s3721 + $0x1b1] sm:$0xff]
        %v7036 = vld [vmem:[%s3721 + $0x1c9] sm:$0xff]
        %v7037 = vld [vmem:[%s3721 + $0x1d1] sm:$0xff]
        %v7038 = vld [vmem:[%s3721 + $0x1e9] sm:$0xff]
        %v7039 = vld [vmem:[%s3721 + $0x1f1] sm:$0xff]
        %v7040 = vpack.c.bf16 %v7009, %v7008
        %v7041 = vpack.c.bf16 %v7011, %v7010
        %v7042 = vpack.c.bf16 %v7013, %v7012
        %v7043 = vpack.c.bf16 %v7015, %v7014
        %v7044 = vpack.c.bf16 %v7017, %v7016
        %v7045 = vpack.c.bf16 %v7019, %v7018
        %v7046 = vpack.c.bf16 %v7021, %v7020
        %v7047 = vpack.c.bf16 %v7023, %v7022
        %v7048 = vpack.c.bf16 %v7025, %v7024
        %v7049 = vpack.c.bf16 %v7027, %v7026
        %v7050 = vpack.c.bf16 %v7029, %v7028
        %v7051 = vpack.c.bf16 %v7031, %v7030
        %v7052 = vpack.c.bf16 %v7033, %v7032
        %v7053 = vpack.c.bf16 %v7035, %v7034
        %v7054 = vpack.c.bf16 %v7037, %v7036
        %v7055 = vpack.c.bf16 %v7039, %v7038
        %7072 = vrot.lane.b32.xlu0 %v6704, 32
        %v7073 = vpop.permute.xlu0 %7072
        %7074 = vrot.lane.b32.xlu0 %v6705, 32
        %v7075 = vpop.permute.xlu0 %7074
        %7076 = vrot.lane.b32.xlu0 %v6706, 32
        %v7077 = vpop.permute.xlu0 %7076
        %7078 = vrot.lane.b32.xlu0 %v6707, 32
        %v7079 = vpop.permute.xlu0 %7078
        %7080 = vrot.lane.b32.xlu0 %v6708, 32
        %v7081 = vpop.permute.xlu0 %7080
        %7082 = vrot.lane.b32.xlu0 %v6709, 32
        %v7083 = vpop.permute.xlu0 %7082
        %7084 = vrot.lane.b32.xlu0 %v6710, 32
        %v7085 = vpop.permute.xlu0 %7084
        %7086 = vrot.lane.b32.xlu0 %v6711, 32
        %v7087 = vpop.permute.xlu0 %7086
        %7088 = vrot.lane.b32.xlu0 %v6712, 32
        %v7089 = vpop.permute.xlu0 %7088
        %7090 = vrot.lane.b32.xlu0 %v6713, 32
        %v7091 = vpop.permute.xlu0 %7090
        %7092 = vrot.lane.b32.xlu0 %v6714, 32
        %v7093 = vpop.permute.xlu0 %7092
        %7094 = vrot.lane.b32.xlu0 %v6715, 32
        %v7095 = vpop.permute.xlu0 %7094
        %7096 = vrot.lane.b32.xlu0 %v6716, 32
        %v7097 = vpop.permute.xlu0 %7096
        %7098 = vrot.lane.b32.xlu0 %v6717, 32
        %v7099 = vpop.permute.xlu0 %7098
        %7100 = vrot.lane.b32.xlu0 %v6718, 32
        %v7101 = vpop.permute.xlu0 %7100
        %7102 = vrot.lane.b32.xlu0 %v6719, 32
        %v7103 = vpop.permute.xlu0 %7102
        %7120 = vrot.lane.b32.xlu0 %v6752, 64
        %v7121 = vpop.permute.xlu0 %7120
        %7122 = vrot.lane.b32.xlu0 %v6753, 64
        %v7123 = vpop.permute.xlu0 %7122
        %7124 = vrot.lane.b32.xlu0 %v6754, 64
        %v7125 = vpop.permute.xlu0 %7124
        %7126 = vrot.lane.b32.xlu0 %v6755, 64
        %v7127 = vpop.permute.xlu0 %7126
        %7128 = vrot.lane.b32.xlu0 %v6756, 64
        %v7129 = vpop.permute.xlu0 %7128
        %7130 = vrot.lane.b32.xlu0 %v6757, 64
        %v7131 = vpop.permute.xlu0 %7130
        %7132 = vrot.lane.b32.xlu0 %v6758, 64
        %v7133 = vpop.permute.xlu0 %7132
        %7134 = vrot.lane.b32.xlu0 %v6759, 64
        %v7135 = vpop.permute.xlu0 %7134
        %7136 = vrot.lane.b32.xlu0 %v6760, 64
        %v7137 = vpop.permute.xlu0 %7136
        %7138 = vrot.lane.b32.xlu0 %v6761, 64
        %v7139 = vpop.permute.xlu0 %7138
        %7140 = vrot.lane.b32.xlu0 %v6762, 64
        %v7141 = vpop.permute.xlu0 %7140
        %7142 = vrot.lane.b32.xlu0 %v6763, 64
        %v7143 = vpop.permute.xlu0 %7142
        %7144 = vrot.lane.b32.xlu0 %v6764, 64
        %v7145 = vpop.permute.xlu0 %7144
        %7146 = vrot.lane.b32.xlu0 %v6765, 64
        %v7147 = vpop.permute.xlu0 %7146
        %7148 = vrot.lane.b32.xlu0 %v6766, 64
        %v7149 = vpop.permute.xlu0 %7148
        %7150 = vrot.lane.b32.xlu0 %v6767, 64
        %v7151 = vpop.permute.xlu0 %7150
        %7168 = vrot.lane.b32.xlu0 %v6800, 96
        %v7169 = vpop.permute.xlu0 %7168
        %7170 = vrot.lane.b32.xlu0 %v6801, 96
        %v7171 = vpop.permute.xlu0 %7170
        %7172 = vrot.lane.b32.xlu0 %v6802, 96
        %v7173 = vpop.permute.xlu0 %7172
        %7174 = vrot.lane.b32.xlu0 %v6803, 96
        %v7175 = vpop.permute.xlu0 %7174
        %7176 = vrot.lane.b32.xlu0 %v6804, 96
        %v7177 = vpop.permute.xlu0 %7176
        %7178 = vrot.lane.b32.xlu0 %v6805, 96
        %v7179 = vpop.permute.xlu0 %7178
        %7180 = vrot.lane.b32.xlu0 %v6806, 96
        %v7181 = vpop.permute.xlu0 %7180
        %7182 = vrot.lane.b32.xlu0 %v6807, 96
        %v7183 = vpop.permute.xlu0 %7182
        %7184 = vrot.lane.b32.xlu0 %v6808, 96
        %v7185 = vpop.permute.xlu0 %7184
        %7186 = vrot.lane.b32.xlu0 %v6809, 96
        %v7187 = vpop.permute.xlu0 %7186
        %7188 = vrot.lane.b32.xlu0 %v6810, 96
        %v7189 = vpop.permute.xlu0 %7188
        %7190 = vrot.lane.b32.xlu0 %v6811, 96
        %v7191 = vpop.permute.xlu0 %7190
        %7192 = vrot.lane.b32.xlu0 %v6812, 96
        %v7193 = vpop.permute.xlu0 %7192
        %7194 = vrot.lane.b32.xlu0 %v6813, 96
        %v7195 = vpop.permute.xlu0 %7194
        %7196 = vrot.lane.b32.xlu0 %v6814, 96
        %v7197 = vpop.permute.xlu0 %7196
        %7198 = vrot.lane.b32.xlu0 %v6815, 96
        %v7199 = vpop.permute.xlu0 %7198
        %7216 = vrot.lane.b32.xlu0 %v6896, 32
        %v7217 = vpop.permute.xlu0 %7216
        %7218 = vrot.lane.b32.xlu0 %v6897, 32
        %v7219 = vpop.permute.xlu0 %7218
        %7220 = vrot.lane.b32.xlu0 %v6898, 32
        %v7221 = vpop.permute.xlu0 %7220
        %7222 = vrot.lane.b32.xlu0 %v6899, 32
        %v7223 = vpop.permute.xlu0 %7222
        %7224 = vrot.lane.b32.xlu0 %v6900, 32
        %v7225 = vpop.permute.xlu0 %7224
        %7226 = vrot.lane.b32.xlu0 %v6901, 32
        %v7227 = vpop.permute.xlu0 %7226
        %7228 = vrot.lane.b32.xlu0 %v6902, 32
        %v7229 = vpop.permute.xlu0 %7228
        %7230 = vrot.lane.b32.xlu0 %v6903, 32
        %v7231 = vpop.permute.xlu0 %7230
        %7232 = vrot.lane.b32.xlu0 %v6904, 32
        %v7233 = vpop.permute.xlu0 %7232
        %7234 = vrot.lane.b32.xlu0 %v6905, 32
        %v7235 = vpop.permute.xlu0 %7234
        %7236 = vrot.lane.b32.xlu0 %v6906, 32
        %v7237 = vpop.permute.xlu0 %7236
        %7238 = vrot.lane.b32.xlu0 %v6907, 32
        %v7239 = vpop.permute.xlu0 %7238
        %7240 = vrot.lane.b32.xlu0 %v6908, 32
        %v7241 = vpop.permute.xlu0 %7240
        %7242 = vrot.lane.b32.xlu0 %v6909, 32
        %v7243 = vpop.permute.xlu0 %7242
        %7244 = vrot.lane.b32.xlu0 %v6910, 32
        %v7245 = vpop.permute.xlu0 %7244
        %7246 = vrot.lane.b32.xlu0 %v6911, 32
        %v7247 = vpop.permute.xlu0 %7246
        %7264 = vrot.lane.b32.xlu0 %v6944, 64
        %v7265 = vpop.permute.xlu0 %7264
        %7266 = vrot.lane.b32.xlu0 %v6945, 64
        %v7267 = vpop.permute.xlu0 %7266
        %7268 = vrot.lane.b32.xlu0 %v6946, 64
        %v7269 = vpop.permute.xlu0 %7268
        %7270 = vrot.lane.b32.xlu0 %v6947, 64
        %v7271 = vpop.permute.xlu0 %7270
        %7272 = vrot.lane.b32.xlu0 %v6948, 64
        %v7273 = vpop.permute.xlu0 %7272
        %7274 = vrot.lane.b32.xlu0 %v6949, 64
        %v7275 = vpop.permute.xlu0 %7274
        %7276 = vrot.lane.b32.xlu0 %v6950, 64
        %v7277 = vpop.permute.xlu0 %7276
        %7278 = vrot.lane.b32.xlu0 %v6951, 64
        %v7279 = vpop.permute.xlu0 %7278
        %7280 = vrot.lane.b32.xlu0 %v6952, 64
        %v7281 = vpop.permute.xlu0 %7280
        %7282 = vrot.lane.b32.xlu0 %v6953, 64
        %v7283 = vpop.permute.xlu0 %7282
        %7284 = vrot.lane.b32.xlu0 %v6954, 64
        %v7285 = vpop.permute.xlu0 %7284
        %7286 = vrot.lane.b32.xlu0 %v6955, 64
        %v7287 = vpop.permute.xlu0 %7286
        %7288 = vrot.lane.b32.xlu0 %v6956, 64
        %v7289 = vpop.permute.xlu0 %7288
        %7290 = vrot.lane.b32.xlu0 %v6957, 64
        %v7291 = vpop.permute.xlu0 %7290
        %7292 = vrot.lane.b32.xlu0 %v6958, 64
        %v7293 = vpop.permute.xlu0 %7292
        %7294 = vrot.lane.b32.xlu0 %v6959, 64
        %v7295 = vpop.permute.xlu0 %7294
        %7312 = vrot.lane.b32.xlu0 %v6992, 96
        %v7313 = vpop.permute.xlu0 %7312
        %7314 = vrot.lane.b32.xlu0 %v6993, 96
        %v7315 = vpop.permute.xlu0 %7314
        %7316 = vrot.lane.b32.xlu0 %v6994, 96
        %v7317 = vpop.permute.xlu0 %7316
        %7318 = vrot.lane.b32.xlu0 %v6995, 96
        %v7319 = vpop.permute.xlu0 %7318
        %7320 = vrot.lane.b32.xlu0 %v6996, 96
        %v7321 = vpop.permute.xlu0 %7320
        %7322 = vrot.lane.b32.xlu0 %v6997, 96
        %v7323 = vpop.permute.xlu0 %7322
        %7324 = vrot.lane.b32.xlu0 %v6998, 96
        %v7325 = vpop.permute.xlu0 %7324
        %7326 = vrot.lane.b32.xlu0 %v6999, 96
        %v7327 = vpop.permute.xlu0 %7326
        %7328 = vrot.lane.b32.xlu0 %v7000, 96
        %v7329 = vpop.permute.xlu0 %7328
        %7330 = vrot.lane.b32.xlu0 %v7001, 96
        %v7331 = vpop.permute.xlu0 %7330
        %7332 = vrot.lane.b32.xlu0 %v7002, 96
        %v7333 = vpop.permute.xlu0 %7332
        %7334 = vrot.lane.b32.xlu0 %v7003, 96
        %v7335 = vpop.permute.xlu0 %7334
        %7336 = vrot.lane.b32.xlu0 %v7004, 96
        %v7337 = vpop.permute.xlu0 %7336
        %7338 = vrot.lane.b32.xlu0 %v7005, 96
        %v7339 = vpop.permute.xlu0 %7338
        %7340 = vrot.lane.b32.xlu0 %v7006, 96
        %v7341 = vpop.permute.xlu0 %7340
        %7342 = vrot.lane.b32.xlu0 %v7007, 96
        %v7343 = vpop.permute.xlu0 %7342
        %v7346 = vsel %vm268, %v6656, %v7073
        %v7349 = vsel %vm268, %v6657, %v7075
        %v7352 = vsel %vm268, %v6658, %v7077
        %v7355 = vsel %vm268, %v6659, %v7079
        %v7358 = vsel %vm268, %v6660, %v7081
        %v7361 = vsel %vm268, %v6661, %v7083
        %v7364 = vsel %vm268, %v6662, %v7085
        %v7367 = vsel %vm268, %v6663, %v7087
        %v7370 = vsel %vm268, %v6664, %v7089
        %v7373 = vsel %vm268, %v6665, %v7091
        %v7376 = vsel %vm268, %v6666, %v7093
        %v7379 = vsel %vm268, %v6667, %v7095
        %v7382 = vsel %vm268, %v6668, %v7097
        %v7385 = vsel %vm268, %v6669, %v7099
        %v7388 = vsel %vm268, %v6670, %v7101
        %v7391 = vsel %vm268, %v6671, %v7103
        %v7393 = vsel %vm1319, %v7346, %v7121
        %v7395 = vsel %vm1319, %v7349, %v7123
        %v7397 = vsel %vm1319, %v7352, %v7125
        %v7399 = vsel %vm1319, %v7355, %v7127
        %v7401 = vsel %vm1319, %v7358, %v7129
        %v7403 = vsel %vm1319, %v7361, %v7131
        %v7405 = vsel %vm1319, %v7364, %v7133
        %v7407 = vsel %vm1319, %v7367, %v7135
        %v7409 = vsel %vm1319, %v7370, %v7137
        %v7411 = vsel %vm1319, %v7373, %v7139
        %v7413 = vsel %vm1319, %v7376, %v7141
        %v7415 = vsel %vm1319, %v7379, %v7143
        %v7417 = vsel %vm1319, %v7382, %v7145
        %v7419 = vsel %vm1319, %v7385, %v7147
        %v7421 = vsel %vm1319, %v7388, %v7149
        %v7423 = vsel %vm1319, %v7391, %v7151
        %v7425 = vsel %vm1385, %v7393, %v7169
        %v7428 = vsel %vm1385, %v7395, %v7171
        %v7431 = vsel %vm1385, %v7397, %v7173
        %v7434 = vsel %vm1385, %v7399, %v7175
        %v7437 = vsel %vm1385, %v7401, %v7177
        %v7440 = vsel %vm1385, %v7403, %v7179
        %v7443 = vsel %vm1385, %v7405, %v7181
        %v7446 = vsel %vm1385, %v7407, %v7183
        %v7449 = vsel %vm1385, %v7409, %v7185
        %v7452 = vsel %vm1385, %v7411, %v7187
        %v7455 = vsel %vm1385, %v7413, %v7189
        %v7458 = vsel %vm1385, %v7415, %v7191
        %v7461 = vsel %vm1385, %v7417, %v7193
        %v7464 = vsel %vm1385, %v7419, %v7195
        %v7467 = vsel %vm1385, %v7421, %v7197
        %v7470 = vsel %vm1385, %v7423, %v7199
        %v7474 = vsel %vm268, %v6848, %v7217
        %v7477 = vsel %vm268, %v6849, %v7219
        %v7480 = vsel %vm268, %v6850, %v7221
        %v7483 = vsel %vm268, %v6851, %v7223
        %v7486 = vsel %vm268, %v6852, %v7225
        %v7489 = vsel %vm268, %v6853, %v7227
        %v7492 = vsel %vm268, %v6854, %v7229
        %v7495 = vsel %vm268, %v6855, %v7231
        %v7498 = vsel %vm268, %v6856, %v7233
        %v7501 = vsel %vm268, %v6857, %v7235
        %v7504 = vsel %vm268, %v6858, %v7237
        %v7507 = vsel %vm268, %v6859, %v7239
        %v7510 = vsel %vm268, %v6860, %v7241
        %v7513 = vsel %vm268, %v6861, %v7243
        %v7516 = vsel %vm268, %v6862, %v7245
        %v7519 = vsel %vm268, %v6863, %v7247
        %v7521 = vsel %vm1319, %v7474, %v7265
        %v7523 = vsel %vm1319, %v7477, %v7267
        %v7525 = vsel %vm1319, %v7480, %v7269
        %v7527 = vsel %vm1319, %v7483, %v7271
        %v7529 = vsel %vm1319, %v7486, %v7273
        %v7531 = vsel %vm1319, %v7489, %v7275
        %v7533 = vsel %vm1319, %v7492, %v7277
        %v7535 = vsel %vm1319, %v7495, %v7279
        %v7537 = vsel %vm1319, %v7498, %v7281
        %v7539 = vsel %vm1319, %v7501, %v7283
        %v7541 = vsel %vm1319, %v7504, %v7285
        %v7543 = vsel %vm1319, %v7507, %v7287
        %v7545 = vsel %vm1319, %v7510, %v7289
        %v7547 = vsel %vm1319, %v7513, %v7291
        %v7549 = vsel %vm1319, %v7516, %v7293
        %v7551 = vsel %vm1319, %v7519, %v7295
        %v7553 = vsel %vm1385, %v7521, %v7313
        %v7556 = vsel %vm1385, %v7523, %v7315
        %v7559 = vsel %vm1385, %v7525, %v7317
        %v7562 = vsel %vm1385, %v7527, %v7319
        %v7565 = vsel %vm1385, %v7529, %v7321
        %v7568 = vsel %vm1385, %v7531, %v7323
        %v7571 = vsel %vm1385, %v7533, %v7325
        %v7574 = vsel %vm1385, %v7535, %v7327
        %v7577 = vsel %vm1385, %v7537, %v7329
        %v7580 = vsel %vm1385, %v7539, %v7331
        %v7583 = vsel %vm1385, %v7541, %v7333
        %v7586 = vsel %vm1385, %v7543, %v7335
        %v7589 = vsel %vm1385, %v7545, %v7337
        %v7592 = vsel %vm1385, %v7547, %v7339
        %v7595 = vsel %vm1385, %v7549, %v7341
        %v7598 = vsel %vm1385, %v7551, %v7343
        %v7601 = vlaneseq
        %v7602 = vshrl.u32 %v7601, 7
        %v7603 = vsub.s32 0, %v7602
        %v7604 = vrot.slane %v6623, %v7603
        %v7642 = vunpack.c.l.b16 %v6586
        %v7643 = vunpack.c.l.b16 %v6587
        %v7644 = vunpack.c.l.b16 %v6588
        %v7645 = vunpack.c.l.b16 %v6589
        %v7646 = vunpack.c.l.b16 %v6590
        %v7647 = vunpack.c.l.b16 %v6591
        %v7648 = vunpack.c.l.b16 %v6592
        %v7649 = vunpack.c.l.b16 %v6593
        %v7650 = vunpack.c.l.b16 %v6594
        %v7651 = vunpack.c.l.b16 %v6595
        %v7652 = vunpack.c.l.b16 %v6596
        %v7653 = vunpack.c.l.b16 %v6597
        %v7654 = vunpack.c.l.b16 %v6598
        %v7655 = vunpack.c.l.b16 %v6599
        %v7656 = vunpack.c.l.b16 %v6600
        %v7657 = vunpack.c.l.b16 %v6601
        %v7658 = vunpack.c.l.b16 %v6602
        %v7659 = vunpack.c.l.b16 %v6603
        %v7660 = vunpack.c.l.b16 %v6604
        %v7661 = vunpack.c.l.b16 %v6605
        %v7662 = vunpack.c.l.b16 %v6606
        %v7663 = vunpack.c.l.b16 %v6607
        %v7664 = vunpack.c.l.b16 %v6608
        %v7665 = vunpack.c.l.b16 %v6609
        %v7666 = vunpack.c.l.b16 %v6610
        %v7667 = vunpack.c.l.b16 %v6611
        %v7668 = vunpack.c.l.b16 %v6612
        %v7669 = vunpack.c.l.b16 %v6613
        %v7670 = vunpack.c.l.b16 %v6614
        %v7671 = vunpack.c.l.b16 %v6615
        %v7672 = vunpack.c.l.b16 %v6616
        %v7673 = vunpack.c.l.b16 %v6617
        %v7674 = vunpack.c.l.b16 %v6618
        %v7675 = vunpack.c.l.b16 %v6619
        %v7676 = vunpack.c.l.b16 %v6620
        %v7677 = vunpack.c.l.b16 %v6621
        %v7678 = vpack.c.b16 %v7643, %v7642
        %v7679 = vpack.c.b16 %v7645, %v7644
        %v7680 = vpack.c.b16 %v7647, %v7646
        %v7681 = vpack.c.b16 %v7649, %v7648
        %v7682 = vpack.c.b16 %v7651, %v7650
        %v7683 = vpack.c.b16 %v7653, %v7652
        %v7684 = vpack.c.b16 %v7655, %v7654
        %v7685 = vpack.c.b16 %v7657, %v7656
        %v7686 = vpack.c.b16 %v7659, %v7658
        %v7687 = vpack.c.b16 %v7661, %v7660
        %v7688 = vpack.c.b16 %v7663, %v7662
        %v7689 = vpack.c.b16 %v7665, %v7664
        %v7690 = vpack.c.b16 %v7667, %v7666
        %v7691 = vpack.c.b16 %v7669, %v7668
        %v7692 = vpack.c.b16 %v7671, %v7670
        %v7693 = vpack.c.b16 %v7673, %v7672
        %v7694 = vpack.c.b16 %v7675, %v7674
        %v7695 = vpack.c.b16 %v7677, %v7676
        %v7715 = vsel %vm268, %v7040, 0
        %v7718 = vsel %vm268, %v7041, 0
        %v7721 = vsel %vm268, %v7042, 0
        %v7724 = vsel %vm268, %v7043, 0
        %v7727 = vsel %vm268, %v7044, 0
        %v7730 = vsel %vm268, %v7045, 0
        %v7733 = vsel %vm268, %v7046, 0
        %v7736 = vsel %vm268, %v7047, 0
        %v7739 = vsel %vm268, %v7048, 0
        %v7742 = vsel %vm268, %v7049, 0
        %v7745 = vsel %vm268, %v7050, 0
        %v7748 = vsel %vm268, %v7051, 0
        %v7751 = vsel %vm268, %v7052, 0
        %v7754 = vsel %vm268, %v7053, 0
        %v7757 = vsel %vm268, %v7054, 0
        %v7760 = vsel %vm268, %v7055, 0
        %7762 = vmatprep.subr.bf16.mxu0 0
        %7763 = vmatpush1.bf16.msra.mxu0 %v7678
        %7764 = vmatprep.subr.bf16.mxu0 0
        %7765 = vmatpush1.bf16.msra.mxu0 %v7679
        %7766 = vmatprep.subr.bf16.mxu0 0
        %7767 = vmatpush1.bf16.msra.mxu0 %v7680
        %7768 = vmatprep.subr.bf16.mxu0 0
        %7769 = vmatpush1.bf16.msra.mxu0 %v7681
        %7770 = vmatprep.subr.bf16.mxu0 0
        %7771 = vmatpush1.bf16.msra.mxu0 %v7682
        %7772 = vmatprep.subr.bf16.mxu0 0
        %7773 = vmatpush1.bf16.msra.mxu0 %v7683
        %7774 = vmatprep.subr.bf16.mxu0 0
        %7775 = vmatpush1.bf16.msra.mxu0 %v7684
        %7776 = vmatprep.subr.bf16.mxu0 0
        %7777 = vmatpush1.bf16.msra.mxu0 %v7685
        %7778 = vmatprep.subr.bf16.mxu0 0
        %7779 = vmatpush1.bf16.msra.mxu0 %v7686
        %7780 = vmatprep.subr.bf16.mxu0 0
        %7781 = vmatpush1.bf16.msra.mxu0 %v7687
        %7782 = vmatprep.subr.bf16.mxu0 0
        %7783 = vmatpush1.bf16.msra.mxu0 %v7688
        %7784 = vmatprep.subr.bf16.mxu0 0
        %7785 = vmatpush1.bf16.msra.mxu0 %v7689
        %7786 = vmatprep.subr.bf16.mxu0 0
        %7787 = vmatpush1.bf16.msra.mxu0 %v7690
        %7788 = vmatprep.subr.bf16.mxu0 0
        %7789 = vmatpush1.bf16.msra.mxu0 %v7691
        %7790 = vmatprep.subr.bf16.mxu0 0
        %7791 = vmatpush1.bf16.msra.mxu0 %v7692
        %7792 = vmatprep.subr.bf16.mxu0 0
        %7793 = vmatpush1.bf16.msra.mxu0 %v7693
        %7794 = vmatprep.mubr.bf16.mxu0 %v7553
        %7795 = vmatmul.mubr.bf16.gmra.mrb[0].mxu0 %v7425
        %v7796 = vpop.f32.mrb[0].mxu0
        %v7797 = vadd.f32 %v7604, %v7796
        %v7798 = vpop.f32.mrb[0].mxu0
        %v7799 = vpop.f32.mrb[0].mxu0
        %v7800 = vadd.f32 %v7604, %v7799
        %v7801 = vpop.f32.mrb[0].mxu0
        %7802 = vmatprep.mubr.bf16.mxu0 %v7556
        %7803 = vmatmul.mubr.bf16.gmra.mrb[0].mxu0 %v7428
        %v7804 = vpop.f32.mrb[0].mxu0
        %v7805 = vadd.f32 %v7604, %v7804
        %v7806 = vpop.f32.mrb[0].mxu0
        %v7807 = vpop.f32.mrb[0].mxu0
        %v7808 = vadd.f32 %v7604, %v7807
        %v7809 = vpop.f32.mrb[0].mxu0
        %7810 = vmatprep.mubr.bf16.mxu0 %v7559
        %7811 = vmatmul.mubr.bf16.gmra.mrb[0].mxu0 %v7431
        %v7812 = vpop.f32.mrb[0].mxu0
        %v7813 = vadd.f32 %v7604, %v7812
        %v7814 = vpop.f32.mrb[0].mxu0
        %v7815 = vpop.f32.mrb[0].mxu0
        %v7816 = vadd.f32 %v7604, %v7815
        %v7817 = vpop.f32.mrb[0].mxu0
        %7818 = vmatprep.mubr.bf16.mxu0 %v7562
        %7819 = vmatmul.mubr.bf16.gmra.mrb[0].mxu0 %v7434
        %v7820 = vpop.f32.mrb[0].mxu0
        %v7821 = vadd.f32 %v7604, %v7820
        %v7822 = vpop.f32.mrb[0].mxu0
        %v7823 = vpop.f32.mrb[0].mxu0
        %v7824 = vadd.f32 %v7604, %v7823
        %v7825 = vpop.f32.mrb[0].mxu0
        %7826 = vmatprep.mubr.bf16.mxu0 %v7565
        %7827 = vmatmul.mubr.bf16.gmra.mrb[0].mxu0 %v7437
        %v7828 = vpop.f32.mrb[0].mxu0
        %v7829 = vadd.f32 %v7604, %v7828
        %v7830 = vpop.f32.mrb[0].mxu0
        %v7831 = vpop.f32.mrb[0].mxu0
        %v7832 = vadd.f32 %v7604, %v7831
        %v7833 = vpop.f32.mrb[0].mxu0
        %7834 = vmatprep.mubr.bf16.mxu0 %v7568
        %7835 = vmatmul.mubr.bf16.gmra.mrb[0].mxu0 %v7440
        %v7836 = vpop.f32.mrb[0].mxu0
        %v7837 = vadd.f32 %v7604, %v7836
        %v7838 = vpop.f32.mrb[0].mxu0
        %v7839 = vpop.f32.mrb[0].mxu0
        %v7840 = vadd.f32 %v7604, %v7839
        %v7841 = vpop.f32.mrb[0].mxu0
        %7842 = vmatprep.mubr.bf16.mxu0 %v7571
        %7843 = vmatmul.mubr.bf16.gmra.mrb[0].mxu0 %v7443
        %v7844 = vpop.f32.mrb[0].mxu0
        %v7845 = vadd.f32 %v7604, %v7844
        %v7846 = vpop.f32.mrb[0].mxu0
        %v7847 = vpop.f32.mrb[0].mxu0
        %v7848 = vadd.f32 %v7604, %v7847
        %v7849 = vpop.f32.mrb[0].mxu0
        %7850 = vmatprep.mubr.bf16.mxu0 %v7574
        %7851 = vmatmul.mubr.bf16.gmra.mrb[0].mxu0 %v7446
        %v7852 = vpop.f32.mrb[0].mxu0
        %v7853 = vadd.f32 %v7604, %v7852
        %v7854 = vpop.f32.mrb[0].mxu0
        %v7855 = vpop.f32.mrb[0].mxu0
        %v7856 = vadd.f32 %v7604, %v7855
        %v7857 = vpop.f32.mrb[0].mxu0
        %7858 = vmatprep.mubr.bf16.mxu0 %v7577
        %7859 = vmatmul.mubr.bf16.gmra.mrb[0].mxu0 %v7449
        %v7860 = vpop.f32.mrb[0].mxu0
        %v7861 = vadd.f32 %v7604, %v7860
        %v7862 = vpop.f32.mrb[0].mxu0
        %v7863 = vpop.f32.mrb[0].mxu0
        %v7864 = vadd.f32 %v7604, %v7863
        %v7865 = vpop.f32.mrb[0].mxu0
        %7866 = vmatprep.mubr.bf16.mxu0 %v7580
        %7867 = vmatmul.mubr.bf16.gmra.mrb[0].mxu0 %v7452
        %v7868 = vpop.f32.mrb[0].mxu0
        %v7869 = vadd.f32 %v7604, %v7868
        %v7870 = vpop.f32.mrb[0].mxu0
        %v7871 = vpop.f32.mrb[0].mxu0
        %v7872 = vadd.f32 %v7604, %v7871
        %v7873 = vpop.f32.mrb[0].mxu0
        %7874 = vmatprep.mubr.bf16.mxu0 %v7583
        %7875 = vmatmul.mubr.bf16.gmra.mrb[0].mxu0 %v7455
        %v7876 = vpop.f32.mrb[0].mxu0
        %v7877 = vadd.f32 %v7604, %v7876
        %v7878 = vpop.f32.mrb[0].mxu0
        %v7879 = vpop.f32.mrb[0].mxu0
        %v7880 = vadd.f32 %v7604, %v7879
        %v7881 = vpop.f32.mrb[0].mxu0
        %7882 = vmatprep.mubr.bf16.mxu0 %v7586
        %7883 = vmatmul.mubr.bf16.gmra.mrb[0].mxu0 %v7458
        %v7884 = vpop.f32.mrb[0].mxu0
        %v7885 = vadd.f32 %v7604, %v7884
        %v7886 = vpop.f32.mrb[0].mxu0
        %v7887 = vpop.f32.mrb[0].mxu0
        %v7888 = vadd.f32 %v7604, %v7887
        %v7889 = vpop.f32.mrb[0].mxu0
        %7890 = vmatprep.mubr.bf16.mxu0 %v7589
        %7891 = vmatmul.mubr.bf16.gmra.mrb[0].mxu0 %v7461
        %v7892 = vpop.f32.mrb[0].mxu0
        %v7893 = vadd.f32 %v7604, %v7892
        %v7894 = vpop.f32.mrb[0].mxu0
        %v7895 = vpop.f32.mrb[0].mxu0
        %v7896 = vadd.f32 %v7604, %v7895
        %v7897 = vpop.f32.mrb[0].mxu0
        %7898 = vmatprep.mubr.bf16.mxu0 %v7592
        %7899 = vmatmul.mubr.bf16.gmra.mrb[0].mxu0 %v7464
        %v7900 = vpop.f32.mrb[0].mxu0
        %v7901 = vadd.f32 %v7604, %v7900
        %v7902 = vpop.f32.mrb[0].mxu0
        %v7903 = vpop.f32.mrb[0].mxu0
        %v7904 = vadd.f32 %v7604, %v7903
        %v7905 = vpop.f32.mrb[0].mxu0
        %7906 = vmatprep.mubr.bf16.mxu0 %v7595
        %7907 = vmatmul.mubr.bf16.gmra.mrb[0].mxu0 %v7467
        %v7908 = vpop.f32.mrb[0].mxu0
        %v7909 = vadd.f32 %v7604, %v7908
        %v7910 = vpop.f32.mrb[0].mxu0
        %v7911 = vpop.f32.mrb[0].mxu0
        %v7912 = vadd.f32 %v7604, %v7911
        %v7913 = vpop.f32.mrb[0].mxu0
        %7914 = vmatprep.mubr.bf16.mxu0 %v7598
        %7915 = vmatmul.mubr.bf16.gmra.mrb[0].mxu0 %v7470
        %v7916 = vpop.f32.mrb[0].mxu0
        %v7917 = vadd.f32 %v7604, %v7916
        %v7918 = vpop.f32.mrb[0].mxu0
        %v7919 = vpop.f32.mrb[0].mxu0
        %v7920 = vadd.f32 %v7604, %v7919
        %v7921 = vpop.f32.mrb[0].mxu0
        %7922 = vdwg.mxu0
        %7923 = vmatprep.subr.bf16.mxu0 0
        %7924 = vmatpush1.bf16.msra.mxu0 %v7694
        %7925 = vmatprep.subr.bf16.mxu0 0
        %7926 = vmatpush1.bf16.msra.mxu0 %v7695
        %7927 = vmatprep.subr.bf16.mxu0 0
        %7928 = vmatpush1.bf16.msra.mxu0 0
        %7929 = vmatprep.subr.bf16.mxu0 0
        %7930 = vmatpush1.bf16.msra.mxu0 0
        %7931 = vmatprep.subr.bf16.mxu0 0
        %7932 = vmatpush1.bf16.msra.mxu0 0
        %7933 = vmatprep.subr.bf16.mxu0 0
        %7934 = vmatpush1.bf16.msra.mxu0 0
        %7935 = vmatprep.subr.bf16.mxu0 0
        %7936 = vmatpush1.bf16.msra.mxu0 0
        %7937 = vmatprep.subr.bf16.mxu0 0
        %7938 = vmatpush1.bf16.msra.mxu0 0
        %7939 = vmatprep.subr.bf16.mxu0 0
        %7940 = vmatpush1.bf16.msra.mxu0 0
        %7941 = vmatprep.subr.bf16.mxu0 0
        %7942 = vmatpush1.bf16.msra.mxu0 0
        %7943 = vmatprep.subr.bf16.mxu0 0
        %7944 = vmatpush1.bf16.msra.mxu0 0
        %7945 = vmatprep.subr.bf16.mxu0 0
        %7946 = vmatpush1.bf16.msra.mxu0 0
        %7947 = vmatprep.subr.bf16.mxu0 0
        %7948 = vmatpush1.bf16.msra.mxu0 0
        %7949 = vmatprep.subr.bf16.mxu0 0
        %7950 = vmatpush1.bf16.msra.mxu0 0
        %7951 = vmatprep.subr.bf16.mxu0 0
        %7952 = vmatpush1.bf16.msra.mxu0 0
        %7953 = vmatprep.subr.bf16.mxu0 0
        %7954 = vmatpush1.bf16.msra.mxu0 0
        %7955 = vmatprep.mubr.bf16.mxu0 0
        %7956 = vmatmul.mubr.bf16.gmra.mrb[0].mxu0 %v7715
        %v7957 = vpop.f32.mrb[0].mxu0
        %v7958 = vadd.f32 %v7797, %v7957
        %v7959 = vpop.f32.mrb[0].mxu0
        %v7960 = vpop.f32.mrb[0].mxu0
        %v7961 = vadd.f32 %v7800, %v7960
        %v7962 = vpop.f32.mrb[0].mxu0
        %7963 = vmatprep.mubr.bf16.mxu0 0
        %7964 = vmatmul.mubr.bf16.gmra.mrb[0].mxu0 %v7718
        %v7965 = vpop.f32.mrb[0].mxu0
        %v7966 = vadd.f32 %v7805, %v7965
        %v7967 = vpop.f32.mrb[0].mxu0
        %v7968 = vpop.f32.mrb[0].mxu0
        %v7969 = vadd.f32 %v7808, %v7968
        %v7970 = vpop.f32.mrb[0].mxu0
        %7971 = vmatprep.mubr.bf16.mxu0 0
        %7972 = vmatmul.mubr.bf16.gmra.mrb[0].mxu0 %v7721
        %v7973 = vpop.f32.mrb[0].mxu0
        %v7974 = vadd.f32 %v7813, %v7973
        %v7975 = vpop.f32.mrb[0].mxu0
        %v7976 = vpop.f32.mrb[0].mxu0
        %v7977 = vadd.f32 %v7816, %v7976
        %v7978 = vpop.f32.mrb[0].mxu0
        %7979 = vmatprep.mubr.bf16.mxu0 0
        %7980 = vmatmul.mubr.bf16.gmra.mrb[0].mxu0 %v7724
        %v7981 = vpop.f32.mrb[0].mxu0
        %v7982 = vadd.f32 %v7821, %v7981
        %v7983 = vpop.f32.mrb[0].mxu0
        %v7984 = vpop.f32.mrb[0].mxu0
        %v7985 = vadd.f32 %v7824, %v7984
        %v7986 = vpop.f32.mrb[0].mxu0
        %7987 = vmatprep.mubr.bf16.mxu0 0
        %7988 = vmatmul.mubr.bf16.gmra.mrb[0].mxu0 %v7727
        %v7989 = vpop.f32.mrb[0].mxu0
        %v7990 = vadd.f32 %v7829, %v7989
        %v7991 = vpop.f32.mrb[0].mxu0
        %v7992 = vpop.f32.mrb[0].mxu0
        %v7993 = vadd.f32 %v7832, %v7992
        %v7994 = vpop.f32.mrb[0].mxu0
        %7995 = vmatprep.mubr.bf16.mxu0 0
        %7996 = vmatmul.mubr.bf16.gmra.mrb[0].mxu0 %v7730
        %v7997 = vpop.f32.mrb[0].mxu0
        %v7998 = vadd.f32 %v7837, %v7997
        %v7999 = vpop.f32.mrb[0].mxu0
        %v8000 = vpop.f32.mrb[0].mxu0
        %v8001 = vadd.f32 %v7840, %v8000
        %v8002 = vpop.f32.mrb[0].mxu0
        %8003 = vmatprep.mubr.bf16.mxu0 0
        %8004 = vmatmul.mubr.bf16.gmra.mrb[0].mxu0 %v7733
        %v8005 = vpop.f32.mrb[0].mxu0
        %v8006 = vadd.f32 %v7845, %v8005
        %v8007 = vpop.f32.mrb[0].mxu0
        %v8008 = vpop.f32.mrb[0].mxu0
        %v8009 = vadd.f32 %v7848, %v8008
        %v8010 = vpop.f32.mrb[0].mxu0
        %8011 = vmatprep.mubr.bf16.mxu0 0
        %8012 = vmatmul.mubr.bf16.gmra.mrb[0].mxu0 %v7736
        %v8013 = vpop.f32.mrb[0].mxu0
        %v8014 = vadd.f32 %v7853, %v8013
        %v8015 = vpop.f32.mrb[0].mxu0
        %v8016 = vpop.f32.mrb[0].mxu0
        %v8017 = vadd.f32 %v7856, %v8016
        %v8018 = vpop.f32.mrb[0].mxu0
        %8019 = vmatprep.mubr.bf16.mxu0 0
        %8020 = vmatmul.mubr.bf16.gmra.mrb[0].mxu0 %v7739
        %v8021 = vpop.f32.mrb[0].mxu0
        %v8022 = vadd.f32 %v7861, %v8021
        %v8023 = vpop.f32.mrb[0].mxu0
        %v8024 = vpop.f32.mrb[0].mxu0
        %v8025 = vadd.f32 %v7864, %v8024
        %v8026 = vpop.f32.mrb[0].mxu0
        %8027 = vmatprep.mubr.bf16.mxu0 0
        %8028 = vmatmul.mubr.bf16.gmra.mrb[0].mxu0 %v7742
        %v8029 = vpop.f32.mrb[0].mxu0
        %v8030 = vadd.f32 %v7869, %v8029
        %v8031 = vpop.f32.mrb[0].mxu0
        %v8032 = vpop.f32.mrb[0].mxu0
        %v8033 = vadd.f32 %v7872, %v8032
        %v8034 = vpop.f32.mrb[0].mxu0
        %8035 = vmatprep.mubr.bf16.mxu0 0
        %8036 = vmatmul.mubr.bf16.gmra.mrb[0].mxu0 %v7745
        %v8037 = vpop.f32.mrb[0].mxu0
        %v8038 = vadd.f32 %v7877, %v8037
        %v8039 = vpop.f32.mrb[0].mxu0
        %v8040 = vpop.f32.mrb[0].mxu0
        %v8041 = vadd.f32 %v7880, %v8040
        %v8042 = vpop.f32.mrb[0].mxu0
        %8043 = vmatprep.mubr.bf16.mxu0 0
        %8044 = vmatmul.mubr.bf16.gmra.mrb[0].mxu0 %v7748
        %v8045 = vpop.f32.mrb[0].mxu0
        %v8046 = vadd.f32 %v7885, %v8045
        %v8047 = vpop.f32.mrb[0].mxu0
        %v8048 = vpop.f32.mrb[0].mxu0
        %v8049 = vadd.f32 %v7888, %v8048
        %v8050 = vpop.f32.mrb[0].mxu0
        %8051 = vmatprep.mubr.bf16.mxu0 0
        %8052 = vmatmul.mubr.bf16.gmra.mrb[0].mxu0 %v7751
        %v8053 = vpop.f32.mrb[0].mxu0
        %v8054 = vadd.f32 %v7893, %v8053
        %v8055 = vpop.f32.mrb[0].mxu0
        %v8056 = vpop.f32.mrb[0].mxu0
        %v8057 = vadd.f32 %v7896, %v8056
        %v8058 = vpop.f32.mrb[0].mxu0
        %8059 = vmatprep.mubr.bf16.mxu0 0
        %8060 = vmatmul.mubr.bf16.gmra.mrb[0].mxu0 %v7754
        %v8061 = vpop.f32.mrb[0].mxu0
        %v8062 = vadd.f32 %v7901, %v8061
        %v8063 = vpop.f32.mrb[0].mxu0
        %v8064 = vpop.f32.mrb[0].mxu0
        %v8065 = vadd.f32 %v7904, %v8064
        %v8066 = vpop.f32.mrb[0].mxu0
        %8067 = vmatprep.mubr.bf16.mxu0 0
        %8068 = vmatmul.mubr.bf16.gmra.mrb[0].mxu0 %v7757
        %v8069 = vpop.f32.mrb[0].mxu0
        %v8070 = vadd.f32 %v7909, %v8069
        %v8071 = vpop.f32.mrb[0].mxu0
        %v8072 = vpop.f32.mrb[0].mxu0
        %v8073 = vadd.f32 %v7912, %v8072
        %v8074 = vpop.f32.mrb[0].mxu0
        %8075 = vmatprep.mubr.bf16.mxu0 0
        %8076 = vmatmul.mubr.bf16.gmra.mrb[0].mxu0 %v7760
        %v8077 = vpop.f32.mrb[0].mxu0
        %v8078 = vadd.f32 %v7917, %v8077
        %v8079 = vpop.f32.mrb[0].mxu0
        %v8080 = vpop.f32.mrb[0].mxu0
        %v8081 = vadd.f32 %v7920, %v8080
        %v8082 = vpop.f32.mrb[0].mxu0
        %8083 = vdwg.mxu0
        %v8084 = vadd.f32 %v7958, %v6553
        %v8085 = vadd.f32 %v7961, %v6554
        %v8086 = vadd.f32 %v7966, %v6555
        %v8087 = vadd.f32 %v7969, %v6556
        %v8088 = vadd.f32 %v7974, %v6557
        %v8089 = vadd.f32 %v7977, %v6558
        %v8090 = vadd.f32 %v7982, %v6559
        %v8091 = vadd.f32 %v7985, %v6560
        %v8092 = vadd.f32 %v7990, %v6561
        %v8093 = vadd.f32 %v7993, %v6562
        %v8094 = vadd.f32 %v7998, %v6563
        %v8095 = vadd.f32 %v8001, %v6564
        %v8096 = vadd.f32 %v8006, %v6565
        %v8097 = vadd.f32 %v8009, %v6566
        %v8098 = vadd.f32 %v8014, %v6567
        %v8099 = vadd.f32 %v8017, %v6568
        %v8100 = vadd.f32 %v8022, %v6569
        %v8101 = vadd.f32 %v8025, %v6570
        %v8102 = vadd.f32 %v8030, %v6571
        %v8103 = vadd.f32 %v8033, %v6572
        %v8104 = vadd.f32 %v8038, %v6573
        %v8105 = vadd.f32 %v8041, %v6574
        %v8106 = vadd.f32 %v8046, %v6575
        %v8107 = vadd.f32 %v8049, %v6576
        %v8108 = vadd.f32 %v8054, %v6577
        %v8109 = vadd.f32 %v8057, %v6578
        %v8110 = vadd.f32 %v8062, %v6579
        %v8111 = vadd.f32 %v8065, %v6580
        %v8112 = vadd.f32 %v8070, %v6581
        %v8113 = vadd.f32 %v8073, %v6582
        %v8114 = vadd.f32 %v8078, %v6583
        %v8115 = vadd.f32 %v8081, %v6584
        %v8116 = vmax.f32 %v8084, 0.0
        %v8117 = vmax.f32 %v8085, 0.0
        %v8118 = vmax.f32 %v8086, 0.0
        %v8119 = vmax.f32 %v8087, 0.0
        %v8120 = vmax.f32 %v8088, 0.0
        %v8121 = vmax.f32 %v8089, 0.0
        %v8122 = vmax.f32 %v8090, 0.0
        %v8123 = vmax.f32 %v8091, 0.0
        %v8124 = vmax.f32 %v8092, 0.0
        %v8125 = vmax.f32 %v8093, 0.0
        %v8126 = vmax.f32 %v8094, 0.0
        %v8127 = vmax.f32 %v8095, 0.0
        %v8128 = vmax.f32 %v8096, 0.0
        %v8129 = vmax.f32 %v8097, 0.0
        %v8130 = vmax.f32 %v8098, 0.0
        %v8131 = vmax.f32 %v8099, 0.0
        %v8132 = vmax.f32 %v8100, 0.0
        %v8133 = vmax.f32 %v8101, 0.0
        %v8134 = vmax.f32 %v8102, 0.0
        %v8135 = vmax.f32 %v8103, 0.0
        %v8136 = vmax.f32 %v8104, 0.0
        %v8137 = vmax.f32 %v8105, 0.0
        %v8138 = vmax.f32 %v8106, 0.0
        %v8139 = vmax.f32 %v8107, 0.0
        %v8140 = vmax.f32 %v8108, 0.0
        %v8141 = vmax.f32 %v8109, 0.0
        %v8142 = vmax.f32 %v8110, 0.0
        %v8143 = vmax.f32 %v8111, 0.0
        %v8144 = vmax.f32 %v8112, 0.0
        %v8145 = vmax.f32 %v8113, 0.0
        %v8146 = vmax.f32 %v8114, 0.0
        %v8147 = vmax.f32 %v8115, 0.0
        %8148 = vst.msk [vmem:[%s217] sm:$0xff] %vm268, %v8116
        %8149 = vst.msk [vmem:[%s217 + $0x8] sm:$0xff] %vm268, %v8117
        %8150 = vst.msk [vmem:[%s217 + $0x10] sm:$0xff] %vm268, %v8118
        %8151 = vst.msk [vmem:[%s217 + $0x18] sm:$0xff] %vm268, %v8119
        %8152 = vst.msk [vmem:[%s217 + $0x20] sm:$0xff] %vm268, %v8120
        %8153 = vst.msk [vmem:[%s217 + $0x28] sm:$0xff] %vm268, %v8121
        %8154 = vst.msk [vmem:[%s217 + $0x30] sm:$0xff] %vm268, %v8122
        %8155 = vst.msk [vmem:[%s217 + $0x38] sm:$0xff] %vm268, %v8123
        %8156 = vst.msk [vmem:[%s217 + $0x40] sm:$0xff] %vm268, %v8124
        %8157 = vst.msk [vmem:[%s217 + $0x48] sm:$0xff] %vm268, %v8125
        %8158 = vst.msk [vmem:[%s217 + $0x50] sm:$0xff] %vm268, %v8126
        %8159 = vst.msk [vmem:[%s217 + $0x58] sm:$0xff] %vm268, %v8127
        %8160 = vst.msk [vmem:[%s217 + $0x60] sm:$0xff] %vm268, %v8128
        %8161 = vst.msk [vmem:[%s217 + $0x68] sm:$0xff] %vm268, %v8129
        %8162 = vst.msk [vmem:[%s217 + $0x70] sm:$0xff] %vm268, %v8130
        %8163 = vst.msk [vmem:[%s217 + $0x78] sm:$0xff] %vm268, %v8131
        %8164 = vst.msk [vmem:[%s217 + $0x80] sm:$0xff] %vm268, %v8132
        %8165 = vst.msk [vmem:[%s217 + $0x88] sm:$0xff] %vm268, %v8133
        %8166 = vst.msk [vmem:[%s217 + $0x90] sm:$0xff] %vm268, %v8134
        %8167 = vst.msk [vmem:[%s217 + $0x98] sm:$0xff] %vm268, %v8135
        %8168 = vst.msk [vmem:[%s217 + $0xa0] sm:$0xff] %vm268, %v8136
        %8169 = vst.msk [vmem:[%s217 + $0xa8] sm:$0xff] %vm268, %v8137
        %8170 = vst.msk [vmem:[%s217 + $0xb0] sm:$0xff] %vm268, %v8138
        %8171 = vst.msk [vmem:[%s217 + $0xb8] sm:$0xff] %vm268, %v8139
        %8172 = vst.msk [vmem:[%s217 + $0xc0] sm:$0xff] %vm268, %v8140
        %8173 = vst.msk [vmem:[%s217 + $0xc8] sm:$0xff] %vm268, %v8141
        %8174 = vst.msk [vmem:[%s217 + $0xd0] sm:$0xff] %vm268, %v8142
        %8175 = vst.msk [vmem:[%s217 + $0xd8] sm:$0xff] %vm268, %v8143
        %8176 = vst.msk [vmem:[%s217 + $0xe0] sm:$0xff] %vm268, %v8144
        %8177 = vst.msk [vmem:[%s217 + $0xe8] sm:$0xff] %vm268, %v8145
        %8178 = vst.msk [vmem:[%s217 + $0xf0] sm:$0xff] %vm268, %v8146
        %8179 = vst.msk [vmem:[%s217 + $0xf8] sm:$0xff] %vm268, %v8147
        %s8180 = sand.u32 %s137, 1
        %s8181 = scalar_lea.sflag [#allocation6], %s8180
        %s8182 = sand.u32 %s137, 1
        %s8183 = smul.addr %s8182, 256
        %s8184 = scalar_lea.vmem [#allocation5], %s8183
        // Predicated region
        $region41: #{feature_forward.1} parent=39 // pred_check
          %p8185 = pneg %p147
        $region42: #{feature_forward.1} parent=39 // pred_check_branch
          %8187 = sbr.rel (%p8185) target = $region44
        $region43: #{feature_forward.1} parent=39 // pred_region
          %s8189 = ssub.s32 4096, 4096
          %8190 = vsyncadd %s8181, %s8189
          %s8191 = smul.addr %s19, 32
          %s8192 = smul.addr %s8191, 128
          %s8193 = scalar_lea.hbm %s5, %s8192
          %s8194 = sshll.u32 %s8184, 4
          %s8195 = int_to_ptr.vmem [resolvable:$true] %s8194
          %8200 = dma.vmem_to_hbm [thread:$0]  %s8195, 4096, %s8193, %s8181, 128, 128, 8
        $region44: #{feature_forward.1} parent=39 // pred_fallthru
          _
      $region40: #{feature_forward.1} parent=5 // pred_fallthru
        _
      %p8201 = scmp.le.s32.totalorder 2, %s14
      // Predicated region
      $region45: #{feature_forward.1} parent=5 // pred_check
        %p8202 = pneg %p8201
      $region46: #{feature_forward.1} parent=5 // pred_check_branch
        %8204 = sbr.rel (%p8202) target = $region48
      $region47: #{feature_forward.1} parent=5 // pred_region
        %s8205 = ssub.s32 %s14, 2
        // Predicated region
        $region49: #{feature_forward.1} parent=47 // pred_check
          %p8206 = pneg %p153
        $region50: #{feature_forward.1} parent=47 // pred_check_branch
          %8208 = sbr.rel (%p8206) target = $region52
        $region51: #{feature_forward.1} parent=47 // pred_region
          %s8209 = sand.u32 %s138, 1
          %s8210 = scalar_lea.sflag [#allocation6], %s8209
          %s8211 = sand.u32 %s138, 1
          %s8212 = smul.addr %s8211, 256
          %s8213 = scalar_lea.vmem [#allocation5], %s8212
          %8214 = dma.done %s8210, 4096
        $region52: #{feature_forward.1} parent=47 // pred_fallthru
          _
      $region48: #{feature_forward.1} parent=5 // pred_fallthru
        _
    $region6: #{feature_forward.1} parent=1 // loop_footer
      %s18 = sadd.s32 1, %s14
    $region7: #{feature_forward.1} parent=1 // loop_footer_branch
      %13 = sbr.rel target = $region3
    $region8: #{feature_forward.1} parent=1 // loop_exit
      _
    %8215 = vsyncpa [#allocation6], 1
    %s8216 = scalar_lea.sflag [#allocation6], 1
    %8217 = vsyncpa %s8216, 1

</llo_original>
